<compile_context>
chip_gen: v5e
topology: v5e:2x2
jax: 0.10.0
libtpu: 0.0.40
codegen_flags: <defaults>
</compile_context>

<pallas_src>
import jax
import jax.numpy as jnp
from jax import lax
from jax.experimental import pallas as pl
from jax.experimental.pallas import tpu as pltpu

# Problem sizes (small, consistent with the module: in_ch=4, U=32 -> W=32).
H = 16
W = 16
CIN = 4
WCH = 32            # self.W = alpha * U
C2 = 2 * WCH        # fused (residual || 3x3) channels
H2, W2 = H // 2, W // 2
BN_EPS = 1e-5
LN_EPS = 1e-5
NB_MAX = 8          # images per grid step (working set well under VMEM limits)

_TAPS = [(dh, dw) for dh in range(3) for dw in range(3)]


# --------------------------------- kernel -----------------------------------
def multires_kernel(xp_ref, w1_ref, s1_ref, w23_ref, s23_ref, lng_ref, lnb_ref,
                    out_ref, x1p_scr):
    nb = xp_ref.shape[0]
    xp = xp_ref[...]                       # (nb, H+2, W+2, CIN)
    w1 = w1_ref[...]                       # (3, 3, CIN), loaded once

    # one_ch: Conv2d(CIN -> 1, 3x3, SAME) + folded-BN shift + ReLU
    acc1 = xp[:, 0:H, 0:W, :] * w1[0, 0]
    for dh, dw in _TAPS[1:]:
        acc1 = acc1 + xp[:, dh:dh + H, dw:dw + W, :] * w1[dh, dw]
    x1 = jnp.sum(acc1, axis=-1, keepdims=True) + s1_ref[...]
    x1 = jnp.maximum(x1, 0.0)              # (nb, H, W, 1)

    # Zero-pad x1 spatially via a pre-zeroed VMEM scratch (no concatenations).
    x1p_scr[...] = jnp.zeros_like(x1p_scr)
    x1p_scr[:, 1:H + 1, 1:W + 1, :] = x1
    x1p = x1p_scr[...]                     # (nb, H+2, W+2, 1)

    # Fused residual_layer || conv3x3: Conv2d(1 -> 2*WCH, 3x3, SAME) + shift + ReLU
    w23 = w23_ref[...]                     # (3, 3, C2), loaded once
    acc2 = x1p[:, 0:H, 0:W, :] * w23[0, 0]
    for dh, dw in _TAPS[1:]:
        acc2 = acc2 + x1p[:, dh:dh + H, dw:dw + W, :] * w23[dh, dw]
    y = jnp.maximum(acc2 + s23_ref[...], 0.0)            # (nb, H, W, C2)

    # MaxPool2d(2, 2), vectorised: H-pool via leading-dim split, then W-pool.
    y5 = y.reshape(nb, H2, 2, W, C2)                     # last two dims unchanged
    rh = jnp.maximum(y5[:, :, 0], y5[:, :, 1])           # (nb, H2, W, C2)
    r5 = rh.reshape(nb, H2, W2, 2, C2)
    pooled = jnp.maximum(r5[:, :, :, 0], r5[:, :, :, 1])  # (nb, H2, W2, C2)

    # LayerNorm over the channel dim, per branch (normalisation over the last
    # dim commutes with the later flatten/concat).
    g = lng_ref[...]                       # (1, 1, 1, WCH)
    b = lnb_ref[...]

    def _ln(v):
        mu = jnp.mean(v, axis=-1, keepdims=True)
        d = v - mu
        var = jnp.mean(d * d, axis=-1, keepdims=True)
        return d * lax.rsqrt(var + LN_EPS) * g + b

    res_n = _ln(pooled[..., :WCH])         # (nb, H2, W2, WCH)
    sbs_n = _ln(pooled[..., WCH:])

    # Lane-dense output (last dim = W2*WCH = 256 = 2x128 -> unmasked stores):
    # rows [0:H2] = residual branch, rows [H2:2*H2] = 3x3 branch.
    out_ref[:, 0:H2, :] = res_n.reshape(nb, H2, W2 * WCH)
    out_ref[:, H2:2 * H2, :] = sbs_n.reshape(nb, H2, W2 * WCH)


# -------------------------------- wrapper -----------------------------------
def multires_block(x_nchw, kparams):
    """x_nchw: (N, CIN, H, W) float32 -> (N, 2*H2*W2, WCH) float32."""
    w1, s1, w23, s23, lng, lnb = kparams
    n = x_nchw.shape[0]
    nb = min(n, NB_MAX)                    # batch folded into the block
    n_pad = pl.cdiv(n, nb) * nb

    x = jnp.transpose(x_nchw, (0, 2, 3, 1)).astype(jnp.float32)     # NHWC
    # batch padding (to a multiple of nb) + spatial SAME padding for conv1
    xp = jnp.pad(x, ((0, n_pad - n), (1, 1), (1, 1), (0, 0)))

    def full_spec(shape):
        return pl.BlockSpec(shape, lambda i, _nd=len(shape): (0,) * _nd)

    out = pl.pallas_call(
        multires_kernel,
        out_shape=jax.ShapeDtypeStruct((n_pad, 2 * H2, W2 * WCH), jnp.float32),
        grid_spec=pltpu.PrefetchScalarGridSpec(
            num_scalar_prefetch=0,
            grid=(n_pad // nb,),
            in_specs=[
                pl.BlockSpec((nb, H + 2, W + 2, CIN), lambda i: (i, 0, 0, 0)),
                full_spec(w1.shape), full_spec(s1.shape),
                full_spec(w23.shape), full_spec(s23.shape),
                full_spec(lng.shape), full_spec(lnb.shape),
            ],
            out_specs=pl.BlockSpec((nb, 2 * H2, W2 * WCH), lambda i: (i, 0, 0)),
            scratch_shapes=[pltpu.VMEM((nb, H + 2, W + 2, 1), jnp.float32)],
        ),
        compiler_params=pltpu.CompilerParams(
            dimension_semantics=("parallel",)),
    )(xp, w1, s1, w23, s23, lng, lnb)

    out = out[:n]                                   # drop batch padding
    # (n, 2*H2, W2*WCH) -> (n, 2*H2*W2, WCH): res rows first, then 3x3 rows,
    # exactly matching torch.cat([res_flat, sbs_flat], dim=1).
    return out.reshape(n, 2 * H2 * W2, WCH)


# ----------------------- parameter init + BN folding ------------------------
def make_params():
    key = jax.random.PRNGKey(0)
    ks = jax.random.split(key, 15)

    # PyTorch-layout parameters (OIHW conv weights, per-channel BN affine).
    w1_oihw = 0.2 * jax.random.normal(ks[0], (1, CIN, 3, 3), jnp.float32)
    b1 = 0.1 * jax.random.normal(ks[1], (1,), jnp.float32)
    g1 = 1.0 + 0.1 * jax.random.normal(ks[2], (1,), jnp.float32)
    beta1 = 0.1 * jax.random.normal(ks[3], (1,), jnp.float32)

    w2_oihw = 0.2 * jax.random.normal(ks[4], (WCH, 1, 3, 3), jnp.float32)
    b2 = 0.1 * jax.random.normal(ks[5], (WCH,), jnp.float32)
    g2 = 1.0 + 0.1 * jax.random.normal(ks[6], (WCH,), jnp.float32)
    beta2 = 0.1 * jax.random.normal(ks[7], (WCH,), jnp.float32)

    w3_oihw = 0.2 * jax.random.normal(ks[8], (WCH, 1, 3, 3), jnp.float32)
    b3 = 0.1 * jax.random.normal(ks[9], (WCH,), jnp.float32)
    g3 = 1.0 + 0.1 * jax.random.normal(ks[10], (WCH,), jnp.float32)
    beta3 = 0.1 * jax.random.normal(ks[11], (WCH,), jnp.float32)

    ln_g = 1.0 + 0.1 * jax.random.normal(ks[12], (WCH,), jnp.float32)
    ln_b = 0.1 * jax.random.normal(ks[13], (WCH,), jnp.float32)

    torch_params = (w1_oihw, b1, g1, beta1, w2_oihw, b2, g2, beta2,
                    w3_oihw, b3, g3, beta3, ln_g, ln_b)

    # Fold eval-mode BN (running_mean=0, running_var=1 — PyTorch defaults):
    #   BN(conv(x)+b) = conv(x)*scale + (b*scale + beta),  scale = g/sqrt(1+eps)
    # TODO(synk): trained running stats / training-mode batch statistics are not
    # modelled; only the default eval-mode stats are folded.
    inv = 1.0 / jnp.sqrt(1.0 + BN_EPS)

    sc1 = g1 * inv
    w1k = jnp.transpose(w1_oihw, (2, 3, 1, 0))[:, :, :, 0] * sc1       # (3,3,CIN)
    s1 = (b1 * sc1 + beta1).reshape(1, 1, 1, 1)

    sc2 = g2 * inv
    w2k = jnp.transpose(w2_oihw, (2, 3, 1, 0))[:, :, 0, :] * sc2       # (3,3,WCH)
    s2 = b2 * sc2 + beta2

    sc3 = g3 * inv
    w3k = jnp.transpose(w3_oihw, (2, 3, 1, 0))[:, :, 0, :] * sc3       # (3,3,WCH)
    s3 = b3 * sc3 + beta3

    # Fused 1 -> 2*WCH conv: channels [0:WCH] = residual branch, [WCH:] = 3x3.
    w23 = jnp.concatenate([w2k, w3k], axis=-1)                         # (3,3,C2)
    s23 = jnp.concatenate([s2, s3], axis=0).reshape(1, 1, 1, C2)

    kparams = (w1k, s1, w23, s23,
               ln_g.reshape(1, 1, 1, WCH), ln_b.reshape(1, 1, 1, WCH))
    return torch_params, kparams


# ----------------------------- pure-JAX reference ---------------------------
def ref_forward(x_nchw, torch_params):
    (w1_oihw, b1, g1, beta1, w2_oihw, b2, g2, beta2,
     w3_oihw, b3, g3, beta3, ln_g, ln_b) = torch_params
    dn = ('NHWC', 'HWIO', 'NHWC')
    inv = 1.0 / jnp.sqrt(1.0 + BN_EPS)

    def conv_bn_relu(inp, w_oihw, b, g, beta):
        w_hwio = jnp.transpose(w_oihw, (2, 3, 1, 0))
        y = lax.conv_general_dilated(inp, w_hwio, (1, 1), 'SAME',
                                     dimension_numbers=dn,
                                     precision=lax.Precision.HIGHEST)
        y = (y + b) * (g * inv) + beta
        return jnp.maximum(y, 0.0)

    x = jnp.transpose(x_nchw, (0, 2, 3, 1))
    x1 = conv_bn_relu(x, w1_oihw, b1, g1, beta1)
    res = conv_bn_relu(x1, w2_oihw, b2, g2, beta2)
    sbs = conv_bn_relu(x1, w3_oihw, b3, g3, beta3)

    def pool_flat(v):
        p = lax.reduce_window(v, -jnp.inf, lax.max,
                              (1, 2, 2, 1), (1, 2, 2, 1), 'VALID')
        return p.reshape(v.shape[0], H2 * W2, WCH)

    allt = jnp.concatenate([pool_flat(res), pool_flat(sbs)], axis=1)
    mu = jnp.mean(allt, axis=-1, keepdims=True)
    var = jnp.mean((allt - mu) ** 2, axis=-1, keepdims=True)
    return (allt - mu) * lax.rsqrt(var + LN_EPS) * ln_g + ln_b


# ----------------------------------- main ------------------------------------
if __name__ == "__main__":
    torch_params, kparams = make_params()

    x_key = jax.random.split(jax.random.PRNGKey(0), 16)[15]
    x = jax.random.normal(x_key, (2, CIN, H, W), jnp.float32)

    fwd = jax.jit(multires_block)
    out = fwd(x, kparams)
    out = jax.block_until_ready(out)

    assert out.shape == (2, 2 * H2 * W2, WCH)
    ref = ref_forward(x, torch_params)
    if not bool(jnp.allclose(out, ref, atol=1e-3, rtol=1e-3)):
        raise SystemExit(1)

    print("KERNEL_OK")
</pallas_src>

<mosaic_0001>
module attributes {stable_mosaic.version = 11 : i64} {
  func.func @multires_kernel(%arg0: i32, %arg1: memref<2x18x18x4xf32, #tpu.memory_space<vmem>>, %arg2: memref<3x3x4xf32, #tpu.memory_space<vmem>>, %arg3: memref<1x1x1x1xf32, #tpu.memory_space<vmem>>, %arg4: memref<3x3x64xf32, #tpu.memory_space<vmem>>, %arg5: memref<1x1x1x64xf32, #tpu.memory_space<vmem>>, %arg6: memref<1x1x1x32xf32, #tpu.memory_space<vmem>>, %arg7: memref<1x1x1x32xf32, #tpu.memory_space<vmem>>, %arg8: memref<2x16x256xf32, #tpu.memory_space<vmem>>, %arg9: memref<2x18x18x1xf32, #tpu.memory_space<vmem>>) attributes {dimension_semantics = [#tpu.dimension_semantics<parallel>], iteration_bounds = array<i64: 1>, scalar_prefetch = 0 : i64, scratch_operands = 1 : i64, tpu.core_type = #tpu.core_type<tc>, window_params = [{transform_indices = @transform_0, window_bounds = array<i64: 2, 18, 18, 4>}, {pipeline_mode = #tpu.pipeline_mode<synchronous>, transform_indices = @transform_1, window_bounds = array<i64: 3, 3, 4>}, {pipeline_mode = #tpu.pipeline_mode<synchronous>, transform_indices = @transform_2, window_bounds = array<i64: 1, 1, 1, 1>}, {pipeline_mode = #tpu.pipeline_mode<synchronous>, transform_indices = @transform_3, window_bounds = array<i64: 3, 3, 64>}, {pipeline_mode = #tpu.pipeline_mode<synchronous>, transform_indices = @transform_4, window_bounds = array<i64: 1, 1, 1, 64>}, {pipeline_mode = #tpu.pipeline_mode<synchronous>, transform_indices = @transform_5, window_bounds = array<i64: 1, 1, 1, 32>}, {pipeline_mode = #tpu.pipeline_mode<synchronous>, transform_indices = @transform_6, window_bounds = array<i64: 1, 1, 1, 32>}, {transform_indices = @transform_7, window_bounds = array<i64: 2, 16, 256>}]} {
    %c0 = arith.constant 0 : index
    %c0_0 = arith.constant 0 : index
    %c0_1 = arith.constant 0 : index
    %c0_2 = arith.constant 0 : index
    %0 = vector.load %arg1[%c0, %c0_0, %c0_1, %c0_2] : memref<2x18x18x4xf32, #tpu.memory_space<vmem>>, vector<2x18x18x4xf32>
    %c0_3 = arith.constant 0 : index
    %c0_4 = arith.constant 0 : index
    %c0_5 = arith.constant 0 : index
    %1 = vector.load %arg2[%c0_3, %c0_4, %c0_5] : memref<3x3x4xf32, #tpu.memory_space<vmem>>, vector<3x3x4xf32>
    %2 = vector.extract_strided_slice %0 {offsets = [0, 0, 0, 0], sizes = [2, 16, 16, 4], strides = [1, 1, 1, 1]} : vector<2x18x18x4xf32> to vector<2x16x16x4xf32>
    %3 = vector.extract_strided_slice %1 {offsets = [0, 0, 0], sizes = [1, 1, 4], strides = [1, 1, 1]} : vector<3x3x4xf32> to vector<1x1x4xf32>
    %4 = vector.shape_cast %3 : vector<1x1x4xf32> to vector<4xf32>
    %5 = vector.shape_cast %4 : vector<4xf32> to vector<1x1x1x4xf32>
    %6 = vector.broadcast %5 : vector<1x1x1x4xf32> to vector<2x16x16x4xf32>
    %7 = arith.mulf %2, %6 : vector<2x16x16x4xf32>
    %8 = vector.extract_strided_slice %0 {offsets = [0, 0, 1, 0], sizes = [2, 16, 16, 4], strides = [1, 1, 1, 1]} : vector<2x18x18x4xf32> to vector<2x16x16x4xf32>
    %9 = vector.extract_strided_slice %1 {offsets = [0, 1, 0], sizes = [1, 1, 4], strides = [1, 1, 1]} : vector<3x3x4xf32> to vector<1x1x4xf32>
    %10 = vector.shape_cast %9 : vector<1x1x4xf32> to vector<4xf32>
    %11 = vector.shape_cast %10 : vector<4xf32> to vector<1x1x1x4xf32>
    %12 = vector.broadcast %11 : vector<1x1x1x4xf32> to vector<2x16x16x4xf32>
    %13 = arith.mulf %8, %12 : vector<2x16x16x4xf32>
    %14 = arith.addf %7, %13 : vector<2x16x16x4xf32>
    %15 = vector.extract_strided_slice %0 {offsets = [0, 0, 2, 0], sizes = [2, 16, 16, 4], strides = [1, 1, 1, 1]} : vector<2x18x18x4xf32> to vector<2x16x16x4xf32>
    %16 = vector.extract_strided_slice %1 {offsets = [0, 2, 0], sizes = [1, 1, 4], strides = [1, 1, 1]} : vector<3x3x4xf32> to vector<1x1x4xf32>
    %17 = vector.shape_cast %16 : vector<1x1x4xf32> to vector<4xf32>
    %18 = vector.shape_cast %17 : vector<4xf32> to vector<1x1x1x4xf32>
    %19 = vector.broadcast %18 : vector<1x1x1x4xf32> to vector<2x16x16x4xf32>
    %20 = arith.mulf %15, %19 : vector<2x16x16x4xf32>
    %21 = arith.addf %14, %20 : vector<2x16x16x4xf32>
    %22 = vector.extract_strided_slice %0 {offsets = [0, 1, 0, 0], sizes = [2, 16, 16, 4], strides = [1, 1, 1, 1]} : vector<2x18x18x4xf32> to vector<2x16x16x4xf32>
    %23 = vector.extract_strided_slice %1 {offsets = [1, 0, 0], sizes = [1, 1, 4], strides = [1, 1, 1]} : vector<3x3x4xf32> to vector<1x1x4xf32>
    %24 = vector.shape_cast %23 : vector<1x1x4xf32> to vector<4xf32>
    %25 = vector.shape_cast %24 : vector<4xf32> to vector<1x1x1x4xf32>
    %26 = vector.broadcast %25 : vector<1x1x1x4xf32> to vector<2x16x16x4xf32>
    %27 = arith.mulf %22, %26 : vector<2x16x16x4xf32>
    %28 = arith.addf %21, %27 : vector<2x16x16x4xf32>
    %29 = vector.extract_strided_slice %0 {offsets = [0, 1, 1, 0], sizes = [2, 16, 16, 4], strides = [1, 1, 1, 1]} : vector<2x18x18x4xf32> to vector<2x16x16x4xf32>
    %30 = vector.extract_strided_slice %1 {offsets = [1, 1, 0], sizes = [1, 1, 4], strides = [1, 1, 1]} : vector<3x3x4xf32> to vector<1x1x4xf32>
    %31 = vector.shape_cast %30 : vector<1x1x4xf32> to vector<4xf32>
    %32 = vector.shape_cast %31 : vector<4xf32> to vector<1x1x1x4xf32>
    %33 = vector.broadcast %32 : vector<1x1x1x4xf32> to vector<2x16x16x4xf32>
    %34 = arith.mulf %29, %33 : vector<2x16x16x4xf32>
    %35 = arith.addf %28, %34 : vector<2x16x16x4xf32>
    %36 = vector.extract_strided_slice %0 {offsets = [0, 1, 2, 0], sizes = [2, 16, 16, 4], strides = [1, 1, 1, 1]} : vector<2x18x18x4xf32> to vector<2x16x16x4xf32>
    %37 = vector.extract_strided_slice %1 {offsets = [1, 2, 0], sizes = [1, 1, 4], strides = [1, 1, 1]} : vector<3x3x4xf32> to vector<1x1x4xf32>
    %38 = vector.shape_cast %37 : vector<1x1x4xf32> to vector<4xf32>
    %39 = vector.shape_cast %38 : vector<4xf32> to vector<1x1x1x4xf32>
    %40 = vector.broadcast %39 : vector<1x1x1x4xf32> to vector<2x16x16x4xf32>
    %41 = arith.mulf %36, %40 : vector<2x16x16x4xf32>
    %42 = arith.addf %35, %41 : vector<2x16x16x4xf32>
    %43 = vector.extract_strided_slice %0 {offsets = [0, 2, 0, 0], sizes = [2, 16, 16, 4], strides = [1, 1, 1, 1]} : vector<2x18x18x4xf32> to vector<2x16x16x4xf32>
    %44 = vector.extract_strided_slice %1 {offsets = [2, 0, 0], sizes = [1, 1, 4], strides = [1, 1, 1]} : vector<3x3x4xf32> to vector<1x1x4xf32>
    %45 = vector.shape_cast %44 : vector<1x1x4xf32> to vector<4xf32>
    %46 = vector.shape_cast %45 : vector<4xf32> to vector<1x1x1x4xf32>
    %47 = vector.broadcast %46 : vector<1x1x1x4xf32> to vector<2x16x16x4xf32>
    %48 = arith.mulf %43, %47 : vector<2x16x16x4xf32>
    %49 = arith.addf %42, %48 : vector<2x16x16x4xf32>
    %50 = vector.extract_strided_slice %0 {offsets = [0, 2, 1, 0], sizes = [2, 16, 16, 4], strides = [1, 1, 1, 1]} : vector<2x18x18x4xf32> to vector<2x16x16x4xf32>
    %51 = vector.extract_strided_slice %1 {offsets = [2, 1, 0], sizes = [1, 1, 4], strides = [1, 1, 1]} : vector<3x3x4xf32> to vector<1x1x4xf32>
    %52 = vector.shape_cast %51 : vector<1x1x4xf32> to vector<4xf32>
    %53 = vector.shape_cast %52 : vector<4xf32> to vector<1x1x1x4xf32>
    %54 = vector.broadcast %53 : vector<1x1x1x4xf32> to vector<2x16x16x4xf32>
    %55 = arith.mulf %50, %54 : vector<2x16x16x4xf32>
    %56 = arith.addf %49, %55 : vector<2x16x16x4xf32>
    %57 = vector.extract_strided_slice %0 {offsets = [0, 2, 2, 0], sizes = [2, 16, 16, 4], strides = [1, 1, 1, 1]} : vector<2x18x18x4xf32> to vector<2x16x16x4xf32>
    %58 = vector.extract_strided_slice %1 {offsets = [2, 2, 0], sizes = [1, 1, 4], strides = [1, 1, 1]} : vector<3x3x4xf32> to vector<1x1x4xf32>
    %59 = vector.shape_cast %58 : vector<1x1x4xf32> to vector<4xf32>
    %60 = vector.shape_cast %59 : vector<4xf32> to vector<1x1x1x4xf32>
    %61 = vector.broadcast %60 : vector<1x1x1x4xf32> to vector<2x16x16x4xf32>
    %62 = arith.mulf %57, %61 : vector<2x16x16x4xf32>
    %63 = arith.addf %56, %62 : vector<2x16x16x4xf32>
    %cst = arith.constant dense<0.000000e+00> : vector<2x16x16xf32>
    %64 = vector.multi_reduction <add>, %63, %cst [3] : vector<2x16x16x4xf32> to vector<2x16x16xf32>
    %65 = vector.shape_cast %64 : vector<2x16x16xf32> to vector<2x16x16x1xf32>
    %c0_6 = arith.constant 0 : index
    %c0_7 = arith.constant 0 : index
    %c0_8 = arith.constant 0 : index
    %c0_9 = arith.constant 0 : index
    %66 = vector.load %arg3[%c0_6, %c0_7, %c0_8, %c0_9] : memref<1x1x1x1xf32, #tpu.memory_space<vmem>>, vector<1x1x1x1xf32>
    %67 = vector.broadcast %66 : vector<1x1x1x1xf32> to vector<2x16x16x1xf32>
    %68 = arith.addf %65, %67 : vector<2x16x16x1xf32>
    %cst_10 = arith.constant 0.000000e+00 : f32
    %69 = vector.broadcast %cst_10 : f32 to vector<2x16x16x1xf32>
    %70 = arith.maximumf %68, %69 : vector<2x16x16x1xf32>
    %cst_11 = arith.constant 0.000000e+00 : f32
    %71 = vector.broadcast %cst_11 : f32 to vector<2x18x18x1xf32>
    %c0_12 = arith.constant 0 : index
    %c0_13 = arith.constant 0 : index
    %c0_14 = arith.constant 0 : index
    %c0_15 = arith.constant 0 : index
    %72 = vector.load %arg9[%c0_12, %c0_13, %c0_14, %c0_15] : memref<2x18x18x1xf32, #tpu.memory_space<vmem>>, vector<2x18x18x1xf32>
    tpu.vector_store %arg9[%c0_12, %c0_13, %c0_14, %c0_15], %71 {strides = array<i32>} : memref<2x18x18x1xf32, #tpu.memory_space<vmem>>, vector<2x18x18x1xf32>,
    %c0_16 = arith.constant 0 : index
    %c1 = arith.constant 1 : index
    %c1_17 = arith.constant 1 : index
    %c0_18 = arith.constant 0 : index
    %73 = vector.load %arg9[%c0_16, %c1, %c1_17, %c0_18] : memref<2x18x18x1xf32, #tpu.memory_space<vmem>>, vector<2x16x16x1xf32>
    tpu.vector_store %arg9[%c0_16, %c1, %c1_17, %c0_18], %70 {strides = array<i32>} : memref<2x18x18x1xf32, #tpu.memory_space<vmem>>, vector<2x16x16x1xf32>,
    %c0_19 = arith.constant 0 : index
    %c0_20 = arith.constant 0 : index
    %c0_21 = arith.constant 0 : index
    %c0_22 = arith.constant 0 : index
    %74 = vector.load %arg9[%c0_19, %c0_20, %c0_21, %c0_22] : memref<2x18x18x1xf32, #tpu.memory_space<vmem>>, vector<2x18x18x1xf32>
    %c0_23 = arith.constant 0 : index
    %c0_24 = arith.constant 0 : index
    %c0_25 = arith.constant 0 : index
    %75 = vector.load %arg4[%c0_23, %c0_24, %c0_25] : memref<3x3x64xf32, #tpu.memory_space<vmem>>, vector<3x3x64xf32>
    %76 = vector.extract_strided_slice %74 {offsets = [0, 0, 0, 0], sizes = [2, 16, 16, 1], strides = [1, 1, 1, 1]} : vector<2x18x18x1xf32> to vector<2x16x16x1xf32>
    %77 = vector.extract_strided_slice %75 {offsets = [0, 0, 0], sizes = [1, 1, 64], strides = [1, 1, 1]} : vector<3x3x64xf32> to vector<1x1x64xf32>
    %78 = vector.shape_cast %77 : vector<1x1x64xf32> to vector<64xf32>
    %79 = vector.shape_cast %78 : vector<64xf32> to vector<1x1x1x64xf32>
    %80 = vector.broadcast %76 : vector<2x16x16x1xf32> to vector<2x16x16x64xf32>
    %81 = vector.broadcast %79 : vector<1x1x1x64xf32> to vector<2x16x16x64xf32>
    %82 = arith.mulf %80, %81 : vector<2x16x16x64xf32>
    %83 = vector.extract_strided_slice %74 {offsets = [0, 0, 1, 0], sizes = [2, 16, 16, 1], strides = [1, 1, 1, 1]} : vector<2x18x18x1xf32> to vector<2x16x16x1xf32>
    %84 = vector.extract_strided_slice %75 {offsets = [0, 1, 0], sizes = [1, 1, 64], strides = [1, 1, 1]} : vector<3x3x64xf32> to vector<1x1x64xf32>
    %85 = vector.shape_cast %84 : vector<1x1x64xf32> to vector<64xf32>
    %86 = vector.shape_cast %85 : vector<64xf32> to vector<1x1x1x64xf32>
    %87 = vector.broadcast %83 : vector<2x16x16x1xf32> to vector<2x16x16x64xf32>
    %88 = vector.broadcast %86 : vector<1x1x1x64xf32> to vector<2x16x16x64xf32>
    %89 = arith.mulf %87, %88 : vector<2x16x16x64xf32>
    %90 = arith.addf %82, %89 : vector<2x16x16x64xf32>
    %91 = vector.extract_strided_slice %74 {offsets = [0, 0, 2, 0], sizes = [2, 16, 16, 1], strides = [1, 1, 1, 1]} : vector<2x18x18x1xf32> to vector<2x16x16x1xf32>
    %92 = vector.extract_strided_slice %75 {offsets = [0, 2, 0], sizes = [1, 1, 64], strides = [1, 1, 1]} : vector<3x3x64xf32> to vector<1x1x64xf32>
    %93 = vector.shape_cast %92 : vector<1x1x64xf32> to vector<64xf32>
    %94 = vector.shape_cast %93 : vector<64xf32> to vector<1x1x1x64xf32>
    %95 = vector.broadcast %91 : vector<2x16x16x1xf32> to vector<2x16x16x64xf32>
    %96 = vector.broadcast %94 : vector<1x1x1x64xf32> to vector<2x16x16x64xf32>
    %97 = arith.mulf %95, %96 : vector<2x16x16x64xf32>
    %98 = arith.addf %90, %97 : vector<2x16x16x64xf32>
    %99 = vector.extract_strided_slice %74 {offsets = [0, 1, 0, 0], sizes = [2, 16, 16, 1], strides = [1, 1, 1, 1]} : vector<2x18x18x1xf32> to vector<2x16x16x1xf32>
    %100 = vector.extract_strided_slice %75 {offsets = [1, 0, 0], sizes = [1, 1, 64], strides = [1, 1, 1]} : vector<3x3x64xf32> to vector<1x1x64xf32>
    %101 = vector.shape_cast %100 : vector<1x1x64xf32> to vector<64xf32>
    %102 = vector.shape_cast %101 : vector<64xf32> to vector<1x1x1x64xf32>
    %103 = vector.broadcast %99 : vector<2x16x16x1xf32> to vector<2x16x16x64xf32>
    %104 = vector.broadcast %102 : vector<1x1x1x64xf32> to vector<2x16x16x64xf32>
    %105 = arith.mulf %103, %104 : vector<2x16x16x64xf32>
    %106 = arith.addf %98, %105 : vector<2x16x16x64xf32>
    %107 = vector.extract_strided_slice %74 {offsets = [0, 1, 1, 0], sizes = [2, 16, 16, 1], strides = [1, 1, 1, 1]} : vector<2x18x18x1xf32> to vector<2x16x16x1xf32>
    %108 = vector.extract_strided_slice %75 {offsets = [1, 1, 0], sizes = [1, 1, 64], strides = [1, 1, 1]} : vector<3x3x64xf32> to vector<1x1x64xf32>
    %109 = vector.shape_cast %108 : vector<1x1x64xf32> to vector<64xf32>
    %110 = vector.shape_cast %109 : vector<64xf32> to vector<1x1x1x64xf32>
    %111 = vector.broadcast %107 : vector<2x16x16x1xf32> to vector<2x16x16x64xf32>
    %112 = vector.broadcast %110 : vector<1x1x1x64xf32> to vector<2x16x16x64xf32>
    %113 = arith.mulf %111, %112 : vector<2x16x16x64xf32>
    %114 = arith.addf %106, %113 : vector<2x16x16x64xf32>
    %115 = vector.extract_strided_slice %74 {offsets = [0, 1, 2, 0], sizes = [2, 16, 16, 1], strides = [1, 1, 1, 1]} : vector<2x18x18x1xf32> to vector<2x16x16x1xf32>
    %116 = vector.extract_strided_slice %75 {offsets = [1, 2, 0], sizes = [1, 1, 64], strides = [1, 1, 1]} : vector<3x3x64xf32> to vector<1x1x64xf32>
    %117 = vector.shape_cast %116 : vector<1x1x64xf32> to vector<64xf32>
    %118 = vector.shape_cast %117 : vector<64xf32> to vector<1x1x1x64xf32>
    %119 = vector.broadcast %115 : vector<2x16x16x1xf32> to vector<2x16x16x64xf32>
    %120 = vector.broadcast %118 : vector<1x1x1x64xf32> to vector<2x16x16x64xf32>
    %121 = arith.mulf %119, %120 : vector<2x16x16x64xf32>
    %122 = arith.addf %114, %121 : vector<2x16x16x64xf32>
    %123 = vector.extract_strided_slice %74 {offsets = [0, 2, 0, 0], sizes = [2, 16, 16, 1], strides = [1, 1, 1, 1]} : vector<2x18x18x1xf32> to vector<2x16x16x1xf32>
    %124 = vector.extract_strided_slice %75 {offsets = [2, 0, 0], sizes = [1, 1, 64], strides = [1, 1, 1]} : vector<3x3x64xf32> to vector<1x1x64xf32>
    %125 = vector.shape_cast %124 : vector<1x1x64xf32> to vector<64xf32>
    %126 = vector.shape_cast %125 : vector<64xf32> to vector<1x1x1x64xf32>
    %127 = vector.broadcast %123 : vector<2x16x16x1xf32> to vector<2x16x16x64xf32>
    %128 = vector.broadcast %126 : vector<1x1x1x64xf32> to vector<2x16x16x64xf32>
    %129 = arith.mulf %127, %128 : vector<2x16x16x64xf32>
    %130 = arith.addf %122, %129 : vector<2x16x16x64xf32>
    %131 = vector.extract_strided_slice %74 {offsets = [0, 2, 1, 0], sizes = [2, 16, 16, 1], strides = [1, 1, 1, 1]} : vector<2x18x18x1xf32> to vector<2x16x16x1xf32>
    %132 = vector.extract_strided_slice %75 {offsets = [2, 1, 0], sizes = [1, 1, 64], strides = [1, 1, 1]} : vector<3x3x64xf32> to vector<1x1x64xf32>
    %133 = vector.shape_cast %132 : vector<1x1x64xf32> to vector<64xf32>
    %134 = vector.shape_cast %133 : vector<64xf32> to vector<1x1x1x64xf32>
    %135 = vector.broadcast %131 : vector<2x16x16x1xf32> to vector<2x16x16x64xf32>
    %136 = vector.broadcast %134 : vector<1x1x1x64xf32> to vector<2x16x16x64xf32>
    %137 = arith.mulf %135, %136 : vector<2x16x16x64xf32>
    %138 = arith.addf %130, %137 : vector<2x16x16x64xf32>
    %139 = vector.extract_strided_slice %74 {offsets = [0, 2, 2, 0], sizes = [2, 16, 16, 1], strides = [1, 1, 1, 1]} : vector<2x18x18x1xf32> to vector<2x16x16x1xf32>
    %140 = vector.extract_strided_slice %75 {offsets = [2, 2, 0], sizes = [1, 1, 64], strides = [1, 1, 1]} : vector<3x3x64xf32> to vector<1x1x64xf32>
    %141 = vector.shape_cast %140 : vector<1x1x64xf32> to vector<64xf32>
    %142 = vector.shape_cast %141 : vector<64xf32> to vector<1x1x1x64xf32>
    %143 = vector.broadcast %139 : vector<2x16x16x1xf32> to vector<2x16x16x64xf32>
    %144 = vector.broadcast %142 : vector<1x1x1x64xf32> to vector<2x16x16x64xf32>
    %145 = arith.mulf %143, %144 : vector<2x16x16x64xf32>
    %146 = arith.addf %138, %145 : vector<2x16x16x64xf32>
    %c0_26 = arith.constant 0 : index
    %c0_27 = arith.constant 0 : index
    %c0_28 = arith.constant 0 : index
    %c0_29 = arith.constant 0 : index
    %147 = vector.load %arg5[%c0_26, %c0_27, %c0_28, %c0_29] : memref<1x1x1x64xf32, #tpu.memory_space<vmem>>, vector<1x1x1x64xf32>
    %148 = vector.broadcast %147 : vector<1x1x1x64xf32> to vector<2x16x16x64xf32>
    %149 = arith.addf %146, %148 : vector<2x16x16x64xf32>
    %cst_30 = arith.constant 0.000000e+00 : f32
    %150 = vector.broadcast %cst_30 : f32 to vector<2x16x16x64xf32>
    %151 = arith.maximumf %149, %150 : vector<2x16x16x64xf32>
    %152 = vector.shape_cast %151 : vector<2x16x16x64xf32> to vector<2x8x2x16x64xf32>
    %153 = vector.extract_strided_slice %152 {offsets = [0, 0, 0, 0, 0], sizes = [2, 8, 1, 16, 64], strides = [1, 1, 1, 1, 1]} : vector<2x8x2x16x64xf32> to vector<2x8x1x16x64xf32>
    %154 = vector.shape_cast %153 : vector<2x8x1x16x64xf32> to vector<2x8x16x64xf32>
    %155 = vector.extract_strided_slice %152 {offsets = [0, 0, 1, 0, 0], sizes = [2, 8, 1, 16, 64], strides = [1, 1, 1, 1, 1]} : vector<2x8x2x16x64xf32> to vector<2x8x1x16x64xf32>
    %156 = vector.shape_cast %155 : vector<2x8x1x16x64xf32> to vector<2x8x16x64xf32>
    %157 = arith.maximumf %154, %156 : vector<2x8x16x64xf32>
    %158 = vector.shape_cast %157 : vector<2x8x16x64xf32> to vector<2x8x8x2x64xf32>
    %159 = vector.extract_strided_slice %158 {offsets = [0, 0, 0, 0, 0], sizes = [2, 8, 8, 1, 64], strides = [1, 1, 1, 1, 1]} : vector<2x8x8x2x64xf32> to vector<2x8x8x1x64xf32>
    %160 = vector.shape_cast %159 : vector<2x8x8x1x64xf32> to vector<2x8x8x64xf32>
    %161 = vector.extract_strided_slice %158 {offsets = [0, 0, 0, 1, 0], sizes = [2, 8, 8, 1, 64], strides = [1, 1, 1, 1, 1]} : vector<2x8x8x2x64xf32> to vector<2x8x8x1x64xf32>
    %162 = vector.shape_cast %161 : vector<2x8x8x1x64xf32> to vector<2x8x8x64xf32>
    %163 = arith.maximumf %160, %162 : vector<2x8x8x64xf32>
    %c0_31 = arith.constant 0 : index
    %c0_32 = arith.constant 0 : index
    %c0_33 = arith.constant 0 : index
    %c0_34 = arith.constant 0 : index
    %164 = vector.load %arg6[%c0_31, %c0_32, %c0_33, %c0_34] : memref<1x1x1x32xf32, #tpu.memory_space<vmem>>, vector<1x1x1x32xf32>
    %c0_35 = arith.constant 0 : index
    %c0_36 = arith.constant 0 : index
    %c0_37 = arith.constant 0 : index
    %c0_38 = arith.constant 0 : index
    %165 = vector.load %arg7[%c0_35, %c0_36, %c0_37, %c0_38] : memref<1x1x1x32xf32, #tpu.memory_space<vmem>>, vector<1x1x1x32xf32>
    %166 = vector.extract_strided_slice %163 {offsets = [0, 0, 0, 0], sizes = [2, 8, 8, 32], strides = [1, 1, 1, 1]} : vector<2x8x8x64xf32> to vector<2x8x8x32xf32>
    %cst_39 = arith.constant dense<0.000000e+00> : vector<2x8x8xf32>
    %167 = vector.multi_reduction <add>, %166, %cst_39 [3] : vector<2x8x8x32xf32> to vector<2x8x8xf32>
    %168 = vector.shape_cast %167 : vector<2x8x8xf32> to vector<2x8x8x1xf32>
    %cst_40 = arith.constant 3.200000e+01 : f32
    %169 = vector.broadcast %cst_40 : f32 to vector<2x8x8x1xf32>
    %170 = arith.divf %168, %169 : vector<2x8x8x1xf32>
    %171 = vector.broadcast %170 : vector<2x8x8x1xf32> to vector<2x8x8x32xf32>
    %172 = arith.subf %166, %171 : vector<2x8x8x32xf32>
    %173 = arith.mulf %172, %172 : vector<2x8x8x32xf32>
    %cst_41 = arith.constant dense<0.000000e+00> : vector<2x8x8xf32>
    %174 = vector.multi_reduction <add>, %173, %cst_41 [3] : vector<2x8x8x32xf32> to vector<2x8x8xf32>
    %175 = vector.shape_cast %174 : vector<2x8x8xf32> to vector<2x8x8x1xf32>
    %cst_42 = arith.constant 3.200000e+01 : f32
    %176 = vector.broadcast %cst_42 : f32 to vector<2x8x8x1xf32>
    %177 = arith.divf %175, %176 : vector<2x8x8x1xf32>
    %cst_43 = arith.constant 9.99999974E-6 : f32
    %178 = vector.broadcast %cst_43 : f32 to vector<2x8x8x1xf32>
    %179 = arith.addf %177, %178 : vector<2x8x8x1xf32>
    %180 = math.rsqrt %179 : vector<2x8x8x1xf32>
    %181 = vector.broadcast %180 : vector<2x8x8x1xf32> to vector<2x8x8x32xf32>
    %182 = arith.mulf %172, %181 : vector<2x8x8x32xf32>
    %183 = vector.broadcast %164 : vector<1x1x1x32xf32> to vector<2x8x8x32xf32>
    %184 = arith.mulf %182, %183 : vector<2x8x8x32xf32>
    %185 = vector.broadcast %165 : vector<1x1x1x32xf32> to vector<2x8x8x32xf32>
    %186 = arith.addf %184, %185 : vector<2x8x8x32xf32>
    %187 = vector.extract_strided_slice %163 {offsets = [0, 0, 0, 32], sizes = [2, 8, 8, 32], strides = [1, 1, 1, 1]} : vector<2x8x8x64xf32> to vector<2x8x8x32xf32>
    %cst_44 = arith.constant dense<0.000000e+00> : vector<2x8x8xf32>
    %188 = vector.multi_reduction <add>, %187, %cst_44 [3] : vector<2x8x8x32xf32> to vector<2x8x8xf32>
    %189 = vector.shape_cast %188 : vector<2x8x8xf32> to vector<2x8x8x1xf32>
    %cst_45 = arith.constant 3.200000e+01 : f32
    %190 = vector.broadcast %cst_45 : f32 to vector<2x8x8x1xf32>
    %191 = arith.divf %189, %190 : vector<2x8x8x1xf32>
    %192 = vector.broadcast %191 : vector<2x8x8x1xf32> to vector<2x8x8x32xf32>
    %193 = arith.subf %187, %192 : vector<2x8x8x32xf32>
    %194 = arith.mulf %193, %193 : vector<2x8x8x32xf32>
    %cst_46 = arith.constant dense<0.000000e+00> : vector<2x8x8xf32>
    %195 = vector.multi_reduction <add>, %194, %cst_46 [3] : vector<2x8x8x32xf32> to vector<2x8x8xf32>
    %196 = vector.shape_cast %195 : vector<2x8x8xf32> to vector<2x8x8x1xf32>
    %cst_47 = arith.constant 3.200000e+01 : f32
    %197 = vector.broadcast %cst_47 : f32 to vector<2x8x8x1xf32>
    %198 = arith.divf %196, %197 : vector<2x8x8x1xf32>
    %cst_48 = arith.constant 9.99999974E-6 : f32
    %199 = vector.broadcast %cst_48 : f32 to vector<2x8x8x1xf32>
    %200 = arith.addf %198, %199 : vector<2x8x8x1xf32>
    %201 = math.rsqrt %200 : vector<2x8x8x1xf32>
    %202 = vector.broadcast %201 : vector<2x8x8x1xf32> to vector<2x8x8x32xf32>
    %203 = arith.mulf %193, %202 : vector<2x8x8x32xf32>
    %204 = vector.broadcast %164 : vector<1x1x1x32xf32> to vector<2x8x8x32xf32>
    %205 = arith.mulf %203, %204 : vector<2x8x8x32xf32>
    %206 = vector.broadcast %165 : vector<1x1x1x32xf32> to vector<2x8x8x32xf32>
    %207 = arith.addf %205, %206 : vector<2x8x8x32xf32>
    %208 = vector.shape_cast %186 : vector<2x8x8x32xf32> to vector<2x8x256xf32>
    %c0_49 = arith.constant 0 : index
    %c0_50 = arith.constant 0 : index
    %c0_51 = arith.constant 0 : index
    %209 = vector.load %arg8[%c0_49, %c0_50, %c0_51] : memref<2x16x256xf32, #tpu.memory_space<vmem>>, vector<2x8x256xf32>
    tpu.vector_store %arg8[%c0_49, %c0_50, %c0_51], %208 {strides = array<i32>} : memref<2x16x256xf32, #tpu.memory_space<vmem>>, vector<2x8x256xf32>,
    %210 = vector.shape_cast %207 : vector<2x8x8x32xf32> to vector<2x8x256xf32>
    %c0_52 = arith.constant 0 : index
    %c8 = arith.constant 8 : index
    %c0_53 = arith.constant 0 : index
    %211 = vector.load %arg8[%c0_52, %c8, %c0_53] : memref<2x16x256xf32, #tpu.memory_space<vmem>>, vector<2x8x256xf32>
    tpu.vector_store %arg8[%c0_52, %c8, %c0_53], %210 {strides = array<i32>} : memref<2x16x256xf32, #tpu.memory_space<vmem>>, vector<2x8x256xf32>,
    return
  }
  func.func @transform_0(%arg0: i32) -> (i32, i32, i32, i32) {
    %c0_i32 = arith.constant 0 : i32
    %c0_i32_0 = arith.constant 0 : i32
    %c0_i32_1 = arith.constant 0 : i32
    %c0_i32_2 = arith.constant 0 : i32
    return %arg0, %c0_i32, %c0_i32_0, %c0_i32_1 : i32, i32, i32, i32
  }
  func.func @transform_1(%arg0: i32) -> (i32, i32, i32) {
    %c0_i32 = arith.constant 0 : i32
    %c0_i32_0 = arith.constant 0 : i32
    %c0_i32_1 = arith.constant 0 : i32
    %c0_i32_2 = arith.constant 0 : i32
    return %c0_i32, %c0_i32_0, %c0_i32_1 : i32, i32, i32
  }
  func.func @transform_2(%arg0: i32) -> (i32, i32, i32, i32) {
    %c0_i32 = arith.constant 0 : i32
    %c0_i32_0 = arith.constant 0 : i32
    %c0_i32_1 = arith.constant 0 : i32
    %c0_i32_2 = arith.constant 0 : i32
    %c0_i32_3 = arith.constant 0 : i32
    return %c0_i32, %c0_i32_0, %c0_i32_1, %c0_i32_2 : i32, i32, i32, i32
  }
  func.func @transform_3(%arg0: i32) -> (i32, i32, i32) {
    %c0_i32 = arith.constant 0 : i32
    %c0_i32_0 = arith.constant 0 : i32
    %c0_i32_1 = arith.constant 0 : i32
    %c0_i32_2 = arith.constant 0 : i32
    return %c0_i32, %c0_i32_0, %c0_i32_1 : i32, i32, i32
  }
  func.func @transform_4(%arg0: i32) -> (i32, i32, i32, i32) {
    %c0_i32 = arith.constant 0 : i32
    %c0_i32_0 = arith.constant 0 : i32
    %c0_i32_1 = arith.constant 0 : i32
    %c0_i32_2 = arith.constant 0 : i32
    %c0_i32_3 = arith.constant 0 : i32
    return %c0_i32, %c0_i32_0, %c0_i32_1, %c0_i32_2 : i32, i32, i32, i32
  }
  func.func @transform_5(%arg0: i32) -> (i32, i32, i32, i32) {
    %c0_i32 = arith.constant 0 : i32
    %c0_i32_0 = arith.constant 0 : i32
    %c0_i32_1 = arith.constant 0 : i32
    %c0_i32_2 = arith.constant 0 : i32
    %c0_i32_3 = arith.constant 0 : i32
    return %c0_i32, %c0_i32_0, %c0_i32_1, %c0_i32_2 : i32, i32, i32, i32
  }
  func.func @transform_6(%arg0: i32) -> (i32, i32, i32, i32) {
    %c0_i32 = arith.constant 0 : i32
    %c0_i32_0 = arith.constant 0 : i32
    %c0_i32_1 = arith.constant 0 : i32
    %c0_i32_2 = arith.constant 0 : i32
    %c0_i32_3 = arith.constant 0 : i32
    return %c0_i32, %c0_i32_0, %c0_i32_1, %c0_i32_2 : i32, i32, i32, i32
  }
  func.func @transform_7(%arg0: i32) -> (i32, i32, i32) {
    %c0_i32 = arith.constant 0 : i32
    %c0_i32_0 = arith.constant 0 : i32
    %c0_i32_1 = arith.constant 0 : i32
    return %arg0, %c0_i32, %c0_i32_0 : i32, i32, i32
  }
}

</mosaic_0001>

<llo_original>
// kernel: multires_block.1
$region0: #{multires_block.1}
  #allocation0 [shape = 'u32[]', space=smem, size = 0x4, offset = 0x4, fixed_abs, tag = 'smem constant byte address 0x4 - core index']
  #allocation1 [shape = 'u32[72,128]{1,0:T(1,128)}', space=vmem, size = 0x9000, scoped, tag = 'internal scratch']
  #allocation2 [shape = 'f32[2,18,18,1]{3,2,1,0:T(8,128)}', space=vmem, size = 0x6c000, scoped, tag = 'scratch operand']
  #allocation3 [shape = 'f32[1,1,1,1]{3,2,1,0:T(1,128)S(1)}', space=vmem, size = 0x200, scoped, tag = 'scoped memory for multires_block.1']
  %s0 = inlined_call_operand.vmem [shape: f32[2,18,18,4], index: 0, kind: input, shape index: {}]
  %s1 = inlined_call_operand.vmem [shape: f32[3,3,4], index: 1, kind: input, shape index: {}]
  %s2 = inlined_call_operand.<no memory space> [shape: f32[1,1,1,1], index: 2, kind: input, shape index: {}]
  %s3 = inlined_call_operand.vmem [shape: f32[3,3,64], index: 3, kind: input, shape index: {}]
  %s4 = inlined_call_operand.vmem [shape: f32[1,1,1,64], index: 4, kind: input, shape index: {}]
  %s5 = inlined_call_operand.vmem [shape: f32[1,1,1,32], index: 5, kind: input, shape index: {}]
  %s6 = inlined_call_operand.vmem [shape: f32[1,1,1,32], index: 6, kind: input, shape index: {}]
  %s7 = inlined_call_operand.vmem [shape: f32[2,16,256], index: 7, kind: output, shape index: {}]
  %s8 = sld [smem:[#allocation0]]
  $region38: #{multires_block.1} parent=0
    _
  %s10 = ssub.s32 1, %s8
  %s11 = scalar_select 0, %s10, %s8
  %v12 = vstv %s2
  %13 = vst [vmem:[#allocation3] sm:$0x1] %v12
  // Predicated region
  $region2: #{multires_block.1} parent=0 // pred_check
    _
  $region3: #{multires_block.1} parent=0 // pred_check_branch
    %15 = sbr.rel (0) target = $region5
  $region4: #{multires_block.1} parent=0 // pred_region
    _
  $region5: #{multires_block.1} parent=0 // pred_fallthru
    _
  // Predicated region
  $region6: #{multires_block.1} parent=0 // pred_check
    _
  $region7: #{multires_block.1} parent=0 // pred_check_branch
    %17 = sbr.rel (0) target = $region9
  $region8: #{multires_block.1} parent=0 // pred_region
    _
  $region9: #{multires_block.1} parent=0 // pred_fallthru
    _
  // Predicated region
  $region10: #{multires_block.1} parent=0 // pred_check
    _
  $region11: #{multires_block.1} parent=0 // pred_check_branch
    %19 = sbr.rel (0) target = $region13
  $region12: #{multires_block.1} parent=0 // pred_region
    _
  $region13: #{multires_block.1} parent=0 // pred_fallthru
    _
  // Predicated region
  $region14: #{multires_block.1} parent=0 // pred_check
    _
  $region15: #{multires_block.1} parent=0 // pred_check_branch
    %21 = sbr.rel (0) target = $region17
  $region16: #{multires_block.1} parent=0 // pred_region
    _
  $region17: #{multires_block.1} parent=0 // pred_fallthru
    _
  // Predicated region
  $region18: #{multires_block.1} parent=0 // pred_check
    _
  $region19: #{multires_block.1} parent=0 // pred_check_branch
    %23 = sbr.rel (0) target = $region21
  $region20: #{multires_block.1} parent=0 // pred_region
    _
  $region21: #{multires_block.1} parent=0 // pred_fallthru
    _
  // Predicated region
  $region22: #{multires_block.1} parent=0 // pred_check
    _
  $region23: #{multires_block.1} parent=0 // pred_check_branch
    %25 = sbr.rel (0) target = $region25
  $region24: #{multires_block.1} parent=0 // pred_region
    _
  $region25: #{multires_block.1} parent=0 // pred_fallthru
    _
  // Predicated region
  $region26: #{multires_block.1} parent=0 // pred_check
    _
  $region27: #{multires_block.1} parent=0 // pred_check_branch
    %27 = sbr.rel (0) target = $region29
  $region28: #{multires_block.1} parent=0 // pred_region
    _
  $region29: #{multires_block.1} parent=0 // pred_fallthru
    _
  %v28 = vld [vmem:[%s0] sm:$0xff]
  %v29 = vld [vmem:[%s0 + $0x8] sm:$0xff]
  %v30 = vld [vmem:[%s0 + $0x10] sm:$0x3]
  %v31 = vld [vmem:[%s0 + $0x18] sm:$0xff]
  %v32 = vld [vmem:[%s0 + $0x20] sm:$0xff]
  %v33 = vld [vmem:[%s0 + $0x28] sm:$0x3]
  %v34 = vld [vmem:[%s0 + $0x30] sm:$0xff]
  %v35 = vld [vmem:[%s0 + $0x38] sm:$0xff]
  %v36 = vld [vmem:[%s0 + $0x40] sm:$0x3]
  %v37 = vld [vmem:[%s0 + $0x48] sm:$0xff]
  %v38 = vld [vmem:[%s0 + $0x50] sm:$0xff]
  %v39 = vld [vmem:[%s0 + $0x58] sm:$0x3]
  %v40 = vld [vmem:[%s0 + $0x60] sm:$0xff]
  %v41 = vld [vmem:[%s0 + $0x68] sm:$0xff]
  %v42 = vld [vmem:[%s0 + $0x70] sm:$0x3]
  %v43 = vld [vmem:[%s0 + $0x78] sm:$0xff]
  %v44 = vld [vmem:[%s0 + $0x80] sm:$0xff]
  %v45 = vld [vmem:[%s0 + $0x88] sm:$0x3]
  %v46 = vld [vmem:[%s0 + $0x90] sm:$0xff]
  %v47 = vld [vmem:[%s0 + $0x98] sm:$0xff]
  %v48 = vld [vmem:[%s0 + $0xa0] sm:$0x3]
  %v49 = vld [vmem:[%s0 + $0xa8] sm:$0xff]
  %v50 = vld [vmem:[%s0 + $0xb0] sm:$0xff]
  %v51 = vld [vmem:[%s0 + $0xb8] sm:$0x3]
  %v52 = vld [vmem:[%s0 + $0xc0] sm:$0xff]
  %v53 = vld [vmem:[%s0 + $0xc8] sm:$0xff]
  %v54 = vld [vmem:[%s0 + $0xd0] sm:$0x3]
  %v55 = vld [vmem:[%s0 + $0xd8] sm:$0xff]
  %v56 = vld [vmem:[%s0 + $0xe0] sm:$0xff]
  %v57 = vld [vmem:[%s0 + $0xe8] sm:$0x3]
  %v58 = vld [vmem:[%s0 + $0xf0] sm:$0xff]
  %v59 = vld [vmem:[%s0 + $0xf8] sm:$0xff]
  %v60 = vld [vmem:[%s0 + $0x100] sm:$0x3]
  %v61 = vld [vmem:[%s0 + $0x108] sm:$0xff]
  %v62 = vld [vmem:[%s0 + $0x110] sm:$0xff]
  %v63 = vld [vmem:[%s0 + $0x118] sm:$0x3]
  %v64 = vld [vmem:[%s0 + $0x120] sm:$0xff]
  %v65 = vld [vmem:[%s0 + $0x128] sm:$0xff]
  %v66 = vld [vmem:[%s0 + $0x130] sm:$0x3]
  %v67 = vld [vmem:[%s0 + $0x138] sm:$0xff]
  %v68 = vld [vmem:[%s0 + $0x140] sm:$0xff]
  %v69 = vld [vmem:[%s0 + $0x148] sm:$0x3]
  %v70 = vld [vmem:[%s0 + $0x150] sm:$0xff]
  %v71 = vld [vmem:[%s0 + $0x158] sm:$0xff]
  %v72 = vld [vmem:[%s0 + $0x160] sm:$0x3]
  %v73 = vld [vmem:[%s0 + $0x168] sm:$0xff]
  %v74 = vld [vmem:[%s0 + $0x170] sm:$0xff]
  %v75 = vld [vmem:[%s0 + $0x178] sm:$0x3]
  %v76 = vld [vmem:[%s0 + $0x180] sm:$0xff]
  %v77 = vld [vmem:[%s0 + $0x188] sm:$0xff]
  %v78 = vld [vmem:[%s0 + $0x190] sm:$0x3]
  %v79 = vld [vmem:[%s0 + $0x198] sm:$0xff]
  %v80 = vld [vmem:[%s0 + $0x1a0] sm:$0xff]
  %v81 = vld [vmem:[%s0 + $0x1a8] sm:$0x3]
  %v82 = vld [vmem:[%s0 + $0x1b0] sm:$0xff]
  %v83 = vld [vmem:[%s0 + $0x1b8] sm:$0xff]
  %v84 = vld [vmem:[%s0 + $0x1c0] sm:$0x3]
  %v85 = vld [vmem:[%s0 + $0x1c8] sm:$0xff]
  %v86 = vld [vmem:[%s0 + $0x1d0] sm:$0xff]
  %v87 = vld [vmem:[%s0 + $0x1d8] sm:$0x3]
  %v88 = vld [vmem:[%s0 + $0x1e0] sm:$0xff]
  %v89 = vld [vmem:[%s0 + $0x1e8] sm:$0xff]
  %v90 = vld [vmem:[%s0 + $0x1f0] sm:$0x3]
  %v91 = vld [vmem:[%s0 + $0x1f8] sm:$0xff]
  %v92 = vld [vmem:[%s0 + $0x200] sm:$0xff]
  %v93 = vld [vmem:[%s0 + $0x208] sm:$0x3]
  %v94 = vld [vmem:[%s0 + $0x210] sm:$0xff]
  %v95 = vld [vmem:[%s0 + $0x218] sm:$0xff]
  %v96 = vld [vmem:[%s0 + $0x220] sm:$0x3]
  %v97 = vld [vmem:[%s0 + $0x228] sm:$0xff]
  %v98 = vld [vmem:[%s0 + $0x230] sm:$0xff]
  %v99 = vld [vmem:[%s0 + $0x238] sm:$0x3]
  %v100 = vld [vmem:[%s0 + $0x240] sm:$0xff]
  %v101 = vld [vmem:[%s0 + $0x248] sm:$0xff]
  %v102 = vld [vmem:[%s0 + $0x250] sm:$0x3]
  %v103 = vld [vmem:[%s0 + $0x258] sm:$0xff]
  %v104 = vld [vmem:[%s0 + $0x260] sm:$0xff]
  %v105 = vld [vmem:[%s0 + $0x268] sm:$0x3]
  %v106 = vld [vmem:[%s0 + $0x270] sm:$0xff]
  %v107 = vld [vmem:[%s0 + $0x278] sm:$0xff]
  %v108 = vld [vmem:[%s0 + $0x280] sm:$0x3]
  %v109 = vld [vmem:[%s0 + $0x288] sm:$0xff]
  %v110 = vld [vmem:[%s0 + $0x290] sm:$0xff]
  %v111 = vld [vmem:[%s0 + $0x298] sm:$0x3]
  %v112 = vld [vmem:[%s0 + $0x2a0] sm:$0xff]
  %v113 = vld [vmem:[%s0 + $0x2a8] sm:$0xff]
  %v114 = vld [vmem:[%s0 + $0x2b0] sm:$0x3]
  %v115 = vld [vmem:[%s0 + $0x2b8] sm:$0xff]
  %v116 = vld [vmem:[%s0 + $0x2c0] sm:$0xff]
  %v117 = vld [vmem:[%s0 + $0x2c8] sm:$0x3]
  %v118 = vld [vmem:[%s0 + $0x2d0] sm:$0xff]
  %v119 = vld [vmem:[%s0 + $0x2d8] sm:$0xff]
  %v120 = vld [vmem:[%s0 + $0x2e0] sm:$0x3]
  %v121 = vld [vmem:[%s0 + $0x2e8] sm:$0xff]
  %v122 = vld [vmem:[%s0 + $0x2f0] sm:$0xff]
  %v123 = vld [vmem:[%s0 + $0x2f8] sm:$0x3]
  %v124 = vld [vmem:[%s0 + $0x300] sm:$0xff]
  %v125 = vld [vmem:[%s0 + $0x308] sm:$0xff]
  %v126 = vld [vmem:[%s0 + $0x310] sm:$0x3]
  %v127 = vld [vmem:[%s0 + $0x318] sm:$0xff]
  %v128 = vld [vmem:[%s0 + $0x320] sm:$0xff]
  %v129 = vld [vmem:[%s0 + $0x328] sm:$0x3]
  %v130 = vld [vmem:[%s0 + $0x330] sm:$0xff]
  %v131 = vld [vmem:[%s0 + $0x338] sm:$0xff]
  %v132 = vld [vmem:[%s0 + $0x340] sm:$0x3]
  %v133 = vld [vmem:[%s0 + $0x348] sm:$0xff]
  %v134 = vld [vmem:[%s0 + $0x350] sm:$0xff]
  %v135 = vld [vmem:[%s0 + $0x358] sm:$0x3]
  %v136 = vld [vmem:[%s1] sm:$0x7]
  %v137 = vld [vmem:[%s1 + $0x4] sm:$0x7]
  %v138 = vld [vmem:[%s1 + $0x8] sm:$0x7]
  %v139 = vperm.slane %v136, 0
  %v140 = vmul.f32 %v28, %v139
  %v141 = vmul.f32 %v29, %v139
  %v142 = vmul.f32 %v31, %v139
  %v143 = vmul.f32 %v32, %v139
  %v144 = vmul.f32 %v34, %v139
  %v145 = vmul.f32 %v35, %v139
  %v146 = vmul.f32 %v37, %v139
  %v147 = vmul.f32 %v38, %v139
  %v148 = vmul.f32 %v40, %v139
  %v149 = vmul.f32 %v41, %v139
  %v150 = vmul.f32 %v43, %v139
  %v151 = vmul.f32 %v44, %v139
  %v152 = vmul.f32 %v46, %v139
  %v153 = vmul.f32 %v47, %v139
  %v154 = vmul.f32 %v49, %v139
  %v155 = vmul.f32 %v50, %v139
  %v156 = vmul.f32 %v52, %v139
  %v157 = vmul.f32 %v53, %v139
  %v158 = vmul.f32 %v55, %v139
  %v159 = vmul.f32 %v56, %v139
  %v160 = vmul.f32 %v58, %v139
  %v161 = vmul.f32 %v59, %v139
  %v162 = vmul.f32 %v61, %v139
  %v163 = vmul.f32 %v62, %v139
  %v164 = vmul.f32 %v64, %v139
  %v165 = vmul.f32 %v65, %v139
  %v166 = vmul.f32 %v67, %v139
  %v167 = vmul.f32 %v68, %v139
  %v168 = vmul.f32 %v70, %v139
  %v169 = vmul.f32 %v71, %v139
  %v170 = vmul.f32 %v73, %v139
  %v171 = vmul.f32 %v74, %v139
  %v172 = vmul.f32 %v82, %v139
  %v173 = vmul.f32 %v83, %v139
  %v174 = vmul.f32 %v85, %v139
  %v175 = vmul.f32 %v86, %v139
  %v176 = vmul.f32 %v88, %v139
  %v177 = vmul.f32 %v89, %v139
  %v178 = vmul.f32 %v91, %v139
  %v179 = vmul.f32 %v92, %v139
  %v180 = vmul.f32 %v94, %v139
  %v181 = vmul.f32 %v95, %v139
  %v182 = vmul.f32 %v97, %v139
  %v183 = vmul.f32 %v98, %v139
  %v184 = vmul.f32 %v100, %v139
  %v185 = vmul.f32 %v101, %v139
  %v186 = vmul.f32 %v103, %v139
  %v187 = vmul.f32 %v104, %v139
  %v188 = vmul.f32 %v106, %v139
  %v189 = vmul.f32 %v107, %v139
  %v190 = vmul.f32 %v109, %v139
  %v191 = vmul.f32 %v110, %v139
  %v192 = vmul.f32 %v112, %v139
  %v193 = vmul.f32 %v113, %v139
  %v194 = vmul.f32 %v115, %v139
  %v195 = vmul.f32 %v116, %v139
  %v196 = vmul.f32 %v118, %v139
  %v197 = vmul.f32 %v119, %v139
  %v198 = vmul.f32 %v121, %v139
  %v199 = vmul.f32 %v122, %v139
  %v200 = vmul.f32 %v124, %v139
  %v201 = vmul.f32 %v125, %v139
  %v202 = vmul.f32 %v127, %v139
  %v203 = vmul.f32 %v128, %v139
  %v204 = vperm.slane %v136, 1
  %v205 = vmul.f32 %v28, %v204
  %v206 = vmul.f32 %v29, %v204
  %v207 = vmul.f32 %v30, %v204
  %v208 = vmul.f32 %v31, %v204
  %v209 = vmul.f32 %v32, %v204
  %v210 = vmul.f32 %v33, %v204
  %v211 = vmul.f32 %v34, %v204
  %v212 = vmul.f32 %v35, %v204
  %v213 = vmul.f32 %v36, %v204
  %v214 = vmul.f32 %v37, %v204
  %v215 = vmul.f32 %v38, %v204
  %v216 = vmul.f32 %v39, %v204
  %v217 = vmul.f32 %v40, %v204
  %v218 = vmul.f32 %v41, %v204
  %v219 = vmul.f32 %v42, %v204
  %v220 = vmul.f32 %v43, %v204
  %v221 = vmul.f32 %v44, %v204
  %v222 = vmul.f32 %v45, %v204
  %v223 = vmul.f32 %v46, %v204
  %v224 = vmul.f32 %v47, %v204
  %v225 = vmul.f32 %v48, %v204
  %v226 = vmul.f32 %v49, %v204
  %v227 = vmul.f32 %v50, %v204
  %v228 = vmul.f32 %v51, %v204
  %v229 = vmul.f32 %v52, %v204
  %v230 = vmul.f32 %v53, %v204
  %v231 = vmul.f32 %v54, %v204
  %v232 = vmul.f32 %v55, %v204
  %v233 = vmul.f32 %v56, %v204
  %v234 = vmul.f32 %v57, %v204
  %v235 = vmul.f32 %v58, %v204
  %v236 = vmul.f32 %v59, %v204
  %v237 = vmul.f32 %v60, %v204
  %v238 = vmul.f32 %v61, %v204
  %v239 = vmul.f32 %v62, %v204
  %v240 = vmul.f32 %v63, %v204
  %v241 = vmul.f32 %v64, %v204
  %v242 = vmul.f32 %v65, %v204
  %v243 = vmul.f32 %v66, %v204
  %v244 = vmul.f32 %v67, %v204
  %v245 = vmul.f32 %v68, %v204
  %v246 = vmul.f32 %v69, %v204
  %v247 = vmul.f32 %v70, %v204
  %v248 = vmul.f32 %v71, %v204
  %v249 = vmul.f32 %v72, %v204
  %v250 = vmul.f32 %v73, %v204
  %v251 = vmul.f32 %v74, %v204
  %v252 = vmul.f32 %v75, %v204
  %v253 = vmul.f32 %v82, %v204
  %v254 = vmul.f32 %v83, %v204
  %v255 = vmul.f32 %v84, %v204
  %v256 = vmul.f32 %v85, %v204
  %v257 = vmul.f32 %v86, %v204
  %v258 = vmul.f32 %v87, %v204
  %v259 = vmul.f32 %v88, %v204
  %v260 = vmul.f32 %v89, %v204
  %v261 = vmul.f32 %v90, %v204
  %v262 = vmul.f32 %v91, %v204
  %v263 = vmul.f32 %v92, %v204
  %v264 = vmul.f32 %v93, %v204
  %v265 = vmul.f32 %v94, %v204
  %v266 = vmul.f32 %v95, %v204
  %v267 = vmul.f32 %v96, %v204
  %v268 = vmul.f32 %v97, %v204
  %v269 = vmul.f32 %v98, %v204
  %v270 = vmul.f32 %v99, %v204
  %v271 = vmul.f32 %v100, %v204
  %v272 = vmul.f32 %v101, %v204
  %v273 = vmul.f32 %v102, %v204
  %v274 = vmul.f32 %v103, %v204
  %v275 = vmul.f32 %v104, %v204
  %v276 = vmul.f32 %v105, %v204
  %v277 = vmul.f32 %v106, %v204
  %v278 = vmul.f32 %v107, %v204
  %v279 = vmul.f32 %v108, %v204
  %v280 = vmul.f32 %v109, %v204
  %v281 = vmul.f32 %v110, %v204
  %v282 = vmul.f32 %v111, %v204
  %v283 = vmul.f32 %v112, %v204
  %v284 = vmul.f32 %v113, %v204
  %v285 = vmul.f32 %v114, %v204
  %v286 = vmul.f32 %v115, %v204
  %v287 = vmul.f32 %v116, %v204
  %v288 = vmul.f32 %v117, %v204
  %v289 = vmul.f32 %v118, %v204
  %v290 = vmul.f32 %v119, %v204
  %v291 = vmul.f32 %v120, %v204
  %v292 = vmul.f32 %v121, %v204
  %v293 = vmul.f32 %v122, %v204
  %v294 = vmul.f32 %v123, %v204
  %v295 = vmul.f32 %v124, %v204
  %v296 = vmul.f32 %v125, %v204
  %v297 = vmul.f32 %v126, %v204
  %v298 = vmul.f32 %v127, %v204
  %v299 = vmul.f32 %v128, %v204
  %v300 = vmul.f32 %v129, %v204
  %vm397 = vcmask 1046528
  %v398 = vrot.slane %v205, 1
  %v399 = vrot.slane %v206, 1
  %v400 = vsel %vm397, %v398, %v399
  %v401 = vrot.slane %v207, 1
  %v402 = vsel %vm397, %v399, %v401
  %v403 = vrot.slane %v208, 1
  %v404 = vrot.slane %v209, 1
  %v405 = vsel %vm397, %v403, %v404
  %v406 = vrot.slane %v210, 1
  %v407 = vsel %vm397, %v404, %v406
  %v408 = vrot.slane %v211, 1
  %v409 = vrot.slane %v212, 1
  %v410 = vsel %vm397, %v408, %v409
  %v411 = vrot.slane %v213, 1
  %v412 = vsel %vm397, %v409, %v411
  %v413 = vrot.slane %v214, 1
  %v414 = vrot.slane %v215, 1
  %v415 = vsel %vm397, %v413, %v414
  %v416 = vrot.slane %v216, 1
  %v417 = vsel %vm397, %v414, %v416
  %v418 = vrot.slane %v217, 1
  %v419 = vrot.slane %v218, 1
  %v420 = vsel %vm397, %v418, %v419
  %v421 = vrot.slane %v219, 1
  %v422 = vsel %vm397, %v419, %v421
  %v423 = vrot.slane %v220, 1
  %v424 = vrot.slane %v221, 1
  %v425 = vsel %vm397, %v423, %v424
  %v426 = vrot.slane %v222, 1
  %v427 = vsel %vm397, %v424, %v426
  %v428 = vrot.slane %v223, 1
  %v429 = vrot.slane %v224, 1
  %v430 = vsel %vm397, %v428, %v429
  %v431 = vrot.slane %v225, 1
  %v432 = vsel %vm397, %v429, %v431
  %v433 = vrot.slane %v226, 1
  %v434 = vrot.slane %v227, 1
  %v435 = vsel %vm397, %v433, %v434
  %v436 = vrot.slane %v228, 1
  %v437 = vsel %vm397, %v434, %v436
  %v438 = vrot.slane %v229, 1
  %v439 = vrot.slane %v230, 1
  %v440 = vsel %vm397, %v438, %v439
  %v441 = vrot.slane %v231, 1
  %v442 = vsel %vm397, %v439, %v441
  %v443 = vrot.slane %v232, 1
  %v444 = vrot.slane %v233, 1
  %v445 = vsel %vm397, %v443, %v444
  %v446 = vrot.slane %v234, 1
  %v447 = vsel %vm397, %v444, %v446
  %v448 = vrot.slane %v235, 1
  %v449 = vrot.slane %v236, 1
  %v450 = vsel %vm397, %v448, %v449
  %v451 = vrot.slane %v237, 1
  %v452 = vsel %vm397, %v449, %v451
  %v453 = vrot.slane %v238, 1
  %v454 = vrot.slane %v239, 1
  %v455 = vsel %vm397, %v453, %v454
  %v456 = vrot.slane %v240, 1
  %v457 = vsel %vm397, %v454, %v456
  %v458 = vrot.slane %v241, 1
  %v459 = vrot.slane %v242, 1
  %v460 = vsel %vm397, %v458, %v459
  %v461 = vrot.slane %v243, 1
  %v462 = vsel %vm397, %v459, %v461
  %v463 = vrot.slane %v244, 1
  %v464 = vrot.slane %v245, 1
  %v465 = vsel %vm397, %v463, %v464
  %v466 = vrot.slane %v246, 1
  %v467 = vsel %vm397, %v464, %v466
  %v468 = vrot.slane %v247, 1
  %v469 = vrot.slane %v248, 1
  %v470 = vsel %vm397, %v468, %v469
  %v471 = vrot.slane %v249, 1
  %v472 = vsel %vm397, %v469, %v471
  %v473 = vrot.slane %v250, 1
  %v474 = vrot.slane %v251, 1
  %v475 = vsel %vm397, %v473, %v474
  %v476 = vrot.slane %v252, 1
  %v477 = vsel %vm397, %v474, %v476
  %v478 = vrot.slane %v253, 1
  %v479 = vrot.slane %v254, 1
  %v480 = vsel %vm397, %v478, %v479
  %v481 = vrot.slane %v255, 1
  %v482 = vsel %vm397, %v479, %v481
  %v483 = vrot.slane %v256, 1
  %v484 = vrot.slane %v257, 1
  %v485 = vsel %vm397, %v483, %v484
  %v486 = vrot.slane %v258, 1
  %v487 = vsel %vm397, %v484, %v486
  %v488 = vrot.slane %v259, 1
  %v489 = vrot.slane %v260, 1
  %v490 = vsel %vm397, %v488, %v489
  %v491 = vrot.slane %v261, 1
  %v492 = vsel %vm397, %v489, %v491
  %v493 = vrot.slane %v262, 1
  %v494 = vrot.slane %v263, 1
  %v495 = vsel %vm397, %v493, %v494
  %v496 = vrot.slane %v264, 1
  %v497 = vsel %vm397, %v494, %v496
  %v498 = vrot.slane %v265, 1
  %v499 = vrot.slane %v266, 1
  %v500 = vsel %vm397, %v498, %v499
  %v501 = vrot.slane %v267, 1
  %v502 = vsel %vm397, %v499, %v501
  %v503 = vrot.slane %v268, 1
  %v504 = vrot.slane %v269, 1
  %v505 = vsel %vm397, %v503, %v504
  %v506 = vrot.slane %v270, 1
  %v507 = vsel %vm397, %v504, %v506
  %v508 = vrot.slane %v271, 1
  %v509 = vrot.slane %v272, 1
  %v510 = vsel %vm397, %v508, %v509
  %v511 = vrot.slane %v273, 1
  %v512 = vsel %vm397, %v509, %v511
  %v513 = vrot.slane %v274, 1
  %v514 = vrot.slane %v275, 1
  %v515 = vsel %vm397, %v513, %v514
  %v516 = vrot.slane %v276, 1
  %v517 = vsel %vm397, %v514, %v516
  %v518 = vrot.slane %v277, 1
  %v519 = vrot.slane %v278, 1
  %v520 = vsel %vm397, %v518, %v519
  %v521 = vrot.slane %v279, 1
  %v522 = vsel %vm397, %v519, %v521
  %v523 = vrot.slane %v280, 1
  %v524 = vrot.slane %v281, 1
  %v525 = vsel %vm397, %v523, %v524
  %v526 = vrot.slane %v282, 1
  %v527 = vsel %vm397, %v524, %v526
  %v528 = vrot.slane %v283, 1
  %v529 = vrot.slane %v284, 1
  %v530 = vsel %vm397, %v528, %v529
  %v531 = vrot.slane %v285, 1
  %v532 = vsel %vm397, %v529, %v531
  %v533 = vrot.slane %v286, 1
  %v534 = vrot.slane %v287, 1
  %v535 = vsel %vm397, %v533, %v534
  %v536 = vrot.slane %v288, 1
  %v537 = vsel %vm397, %v534, %v536
  %v538 = vrot.slane %v289, 1
  %v539 = vrot.slane %v290, 1
  %v540 = vsel %vm397, %v538, %v539
  %v541 = vrot.slane %v291, 1
  %v542 = vsel %vm397, %v539, %v541
  %v543 = vrot.slane %v292, 1
  %v544 = vrot.slane %v293, 1
  %v545 = vsel %vm397, %v543, %v544
  %v546 = vrot.slane %v294, 1
  %v547 = vsel %vm397, %v544, %v546
  %v548 = vrot.slane %v295, 1
  %v549 = vrot.slane %v296, 1
  %v550 = vsel %vm397, %v548, %v549
  %v551 = vrot.slane %v297, 1
  %v552 = vsel %vm397, %v549, %v551
  %v553 = vrot.slane %v298, 1
  %v554 = vrot.slane %v299, 1
  %v555 = vsel %vm397, %v553, %v554
  %v556 = vrot.slane %v300, 1
  %v557 = vsel %vm397, %v554, %v556
  %v622 = vadd.f32 %v140, %v400
  %v623 = vadd.f32 %v141, %v402
  %v624 = vadd.f32 %v142, %v405
  %v625 = vadd.f32 %v143, %v407
  %v626 = vadd.f32 %v144, %v410
  %v627 = vadd.f32 %v145, %v412
  %v628 = vadd.f32 %v146, %v415
  %v629 = vadd.f32 %v147, %v417
  %v630 = vadd.f32 %v148, %v420
  %v631 = vadd.f32 %v149, %v422
  %v632 = vadd.f32 %v150, %v425
  %v633 = vadd.f32 %v151, %v427
  %v634 = vadd.f32 %v152, %v430
  %v635 = vadd.f32 %v153, %v432
  %v636 = vadd.f32 %v154, %v435
  %v637 = vadd.f32 %v155, %v437
  %v638 = vadd.f32 %v156, %v440
  %v639 = vadd.f32 %v157, %v442
  %v640 = vadd.f32 %v158, %v445
  %v641 = vadd.f32 %v159, %v447
  %v642 = vadd.f32 %v160, %v450
  %v643 = vadd.f32 %v161, %v452
  %v644 = vadd.f32 %v162, %v455
  %v645 = vadd.f32 %v163, %v457
  %v646 = vadd.f32 %v164, %v460
  %v647 = vadd.f32 %v165, %v462
  %v648 = vadd.f32 %v166, %v465
  %v649 = vadd.f32 %v167, %v467
  %v650 = vadd.f32 %v168, %v470
  %v651 = vadd.f32 %v169, %v472
  %v652 = vadd.f32 %v170, %v475
  %v653 = vadd.f32 %v171, %v477
  %v654 = vadd.f32 %v172, %v480
  %v655 = vadd.f32 %v173, %v482
  %v656 = vadd.f32 %v174, %v485
  %v657 = vadd.f32 %v175, %v487
  %v658 = vadd.f32 %v176, %v490
  %v659 = vadd.f32 %v177, %v492
  %v660 = vadd.f32 %v178, %v495
  %v661 = vadd.f32 %v179, %v497
  %v662 = vadd.f32 %v180, %v500
  %v663 = vadd.f32 %v181, %v502
  %v664 = vadd.f32 %v182, %v505
  %v665 = vadd.f32 %v183, %v507
  %v666 = vadd.f32 %v184, %v510
  %v667 = vadd.f32 %v185, %v512
  %v668 = vadd.f32 %v186, %v515
  %v669 = vadd.f32 %v187, %v517
  %v670 = vadd.f32 %v188, %v520
  %v671 = vadd.f32 %v189, %v522
  %v672 = vadd.f32 %v190, %v525
  %v673 = vadd.f32 %v191, %v527
  %v674 = vadd.f32 %v192, %v530
  %v675 = vadd.f32 %v193, %v532
  %v676 = vadd.f32 %v194, %v535
  %v677 = vadd.f32 %v195, %v537
  %v678 = vadd.f32 %v196, %v540
  %v679 = vadd.f32 %v197, %v542
  %v680 = vadd.f32 %v198, %v545
  %v681 = vadd.f32 %v199, %v547
  %v682 = vadd.f32 %v200, %v550
  %v683 = vadd.f32 %v201, %v552
  %v684 = vadd.f32 %v202, %v555
  %v685 = vadd.f32 %v203, %v557
  %v686 = vperm.slane %v136, 2
  %v687 = vmul.f32 %v28, %v686
  %v688 = vmul.f32 %v29, %v686
  %v689 = vmul.f32 %v30, %v686
  %v690 = vmul.f32 %v31, %v686
  %v691 = vmul.f32 %v32, %v686
  %v692 = vmul.f32 %v33, %v686
  %v693 = vmul.f32 %v34, %v686
  %v694 = vmul.f32 %v35, %v686
  %v695 = vmul.f32 %v36, %v686
  %v696 = vmul.f32 %v37, %v686
  %v697 = vmul.f32 %v38, %v686
  %v698 = vmul.f32 %v39, %v686
  %v699 = vmul.f32 %v40, %v686
  %v700 = vmul.f32 %v41, %v686
  %v701 = vmul.f32 %v42, %v686
  %v702 = vmul.f32 %v43, %v686
  %v703 = vmul.f32 %v44, %v686
  %v704 = vmul.f32 %v45, %v686
  %v705 = vmul.f32 %v46, %v686
  %v706 = vmul.f32 %v47, %v686
  %v707 = vmul.f32 %v48, %v686
  %v708 = vmul.f32 %v49, %v686
  %v709 = vmul.f32 %v50, %v686
  %v710 = vmul.f32 %v51, %v686
  %v711 = vmul.f32 %v52, %v686
  %v712 = vmul.f32 %v53, %v686
  %v713 = vmul.f32 %v54, %v686
  %v714 = vmul.f32 %v55, %v686
  %v715 = vmul.f32 %v56, %v686
  %v716 = vmul.f32 %v57, %v686
  %v717 = vmul.f32 %v58, %v686
  %v718 = vmul.f32 %v59, %v686
  %v719 = vmul.f32 %v60, %v686
  %v720 = vmul.f32 %v61, %v686
  %v721 = vmul.f32 %v62, %v686
  %v722 = vmul.f32 %v63, %v686
  %v723 = vmul.f32 %v64, %v686
  %v724 = vmul.f32 %v65, %v686
  %v725 = vmul.f32 %v66, %v686
  %v726 = vmul.f32 %v67, %v686
  %v727 = vmul.f32 %v68, %v686
  %v728 = vmul.f32 %v69, %v686
  %v729 = vmul.f32 %v70, %v686
  %v730 = vmul.f32 %v71, %v686
  %v731 = vmul.f32 %v72, %v686
  %v732 = vmul.f32 %v73, %v686
  %v733 = vmul.f32 %v74, %v686
  %v734 = vmul.f32 %v75, %v686
  %v735 = vmul.f32 %v82, %v686
  %v736 = vmul.f32 %v83, %v686
  %v737 = vmul.f32 %v84, %v686
  %v738 = vmul.f32 %v85, %v686
  %v739 = vmul.f32 %v86, %v686
  %v740 = vmul.f32 %v87, %v686
  %v741 = vmul.f32 %v88, %v686
  %v742 = vmul.f32 %v89, %v686
  %v743 = vmul.f32 %v90, %v686
  %v744 = vmul.f32 %v91, %v686
  %v745 = vmul.f32 %v92, %v686
  %v746 = vmul.f32 %v93, %v686
  %v747 = vmul.f32 %v94, %v686
  %v748 = vmul.f32 %v95, %v686
  %v749 = vmul.f32 %v96, %v686
  %v750 = vmul.f32 %v97, %v686
  %v751 = vmul.f32 %v98, %v686
  %v752 = vmul.f32 %v99, %v686
  %v753 = vmul.f32 %v100, %v686
  %v754 = vmul.f32 %v101, %v686
  %v755 = vmul.f32 %v102, %v686
  %v756 = vmul.f32 %v103, %v686
  %v757 = vmul.f32 %v104, %v686
  %v758 = vmul.f32 %v105, %v686
  %v759 = vmul.f32 %v106, %v686
  %v760 = vmul.f32 %v107, %v686
  %v761 = vmul.f32 %v108, %v686
  %v762 = vmul.f32 %v109, %v686
  %v763 = vmul.f32 %v110, %v686
  %v764 = vmul.f32 %v111, %v686
  %v765 = vmul.f32 %v112, %v686
  %v766 = vmul.f32 %v113, %v686
  %v767 = vmul.f32 %v114, %v686
  %v768 = vmul.f32 %v115, %v686
  %v769 = vmul.f32 %v116, %v686
  %v770 = vmul.f32 %v117, %v686
  %v771 = vmul.f32 %v118, %v686
  %v772 = vmul.f32 %v119, %v686
  %v773 = vmul.f32 %v120, %v686
  %v774 = vmul.f32 %v121, %v686
  %v775 = vmul.f32 %v122, %v686
  %v776 = vmul.f32 %v123, %v686
  %v777 = vmul.f32 %v124, %v686
  %v778 = vmul.f32 %v125, %v686
  %v779 = vmul.f32 %v126, %v686
  %v780 = vmul.f32 %v127, %v686
  %v781 = vmul.f32 %v128, %v686
  %v782 = vmul.f32 %v129, %v686
  %vm879 = vcmask 1045504
  %v880 = vrot.slane %v687, 2
  %v881 = vrot.slane %v688, 2
  %v882 = vsel %vm879, %v880, %v881
  %v883 = vrot.slane %v689, 2
  %v884 = vsel %vm879, %v881, %v883
  %v885 = vrot.slane %v690, 2
  %v886 = vrot.slane %v691, 2
  %v887 = vsel %vm879, %v885, %v886
  %v888 = vrot.slane %v692, 2
  %v889 = vsel %vm879, %v886, %v888
  %v890 = vrot.slane %v693, 2
  %v891 = vrot.slane %v694, 2
  %v892 = vsel %vm879, %v890, %v891
  %v893 = vrot.slane %v695, 2
  %v894 = vsel %vm879, %v891, %v893
  %v895 = vrot.slane %v696, 2
  %v896 = vrot.slane %v697, 2
  %v897 = vsel %vm879, %v895, %v896
  %v898 = vrot.slane %v698, 2
  %v899 = vsel %vm879, %v896, %v898
  %v900 = vrot.slane %v699, 2
  %v901 = vrot.slane %v700, 2
  %v902 = vsel %vm879, %v900, %v901
  %v903 = vrot.slane %v701, 2
  %v904 = vsel %vm879, %v901, %v903
  %v905 = vrot.slane %v702, 2
  %v906 = vrot.slane %v703, 2
  %v907 = vsel %vm879, %v905, %v906
  %v908 = vrot.slane %v704, 2
  %v909 = vsel %vm879, %v906, %v908
  %v910 = vrot.slane %v705, 2
  %v911 = vrot.slane %v706, 2
  %v912 = vsel %vm879, %v910, %v911
  %v913 = vrot.slane %v707, 2
  %v914 = vsel %vm879, %v911, %v913
  %v915 = vrot.slane %v708, 2
  %v916 = vrot.slane %v709, 2
  %v917 = vsel %vm879, %v915, %v916
  %v918 = vrot.slane %v710, 2
  %v919 = vsel %vm879, %v916, %v918
  %v920 = vrot.slane %v711, 2
  %v921 = vrot.slane %v712, 2
  %v922 = vsel %vm879, %v920, %v921
  %v923 = vrot.slane %v713, 2
  %v924 = vsel %vm879, %v921, %v923
  %v925 = vrot.slane %v714, 2
  %v926 = vrot.slane %v715, 2
  %v927 = vsel %vm879, %v925, %v926
  %v928 = vrot.slane %v716, 2
  %v929 = vsel %vm879, %v926, %v928
  %v930 = vrot.slane %v717, 2
  %v931 = vrot.slane %v718, 2
  %v932 = vsel %vm879, %v930, %v931
  %v933 = vrot.slane %v719, 2
  %v934 = vsel %vm879, %v931, %v933
  %v935 = vrot.slane %v720, 2
  %v936 = vrot.slane %v721, 2
  %v937 = vsel %vm879, %v935, %v936
  %v938 = vrot.slane %v722, 2
  %v939 = vsel %vm879, %v936, %v938
  %v940 = vrot.slane %v723, 2
  %v941 = vrot.slane %v724, 2
  %v942 = vsel %vm879, %v940, %v941
  %v943 = vrot.slane %v725, 2
  %v944 = vsel %vm879, %v941, %v943
  %v945 = vrot.slane %v726, 2
  %v946 = vrot.slane %v727, 2
  %v947 = vsel %vm879, %v945, %v946
  %v948 = vrot.slane %v728, 2
  %v949 = vsel %vm879, %v946, %v948
  %v950 = vrot.slane %v729, 2
  %v951 = vrot.slane %v730, 2
  %v952 = vsel %vm879, %v950, %v951
  %v953 = vrot.slane %v731, 2
  %v954 = vsel %vm879, %v951, %v953
  %v955 = vrot.slane %v732, 2
  %v956 = vrot.slane %v733, 2
  %v957 = vsel %vm879, %v955, %v956
  %v958 = vrot.slane %v734, 2
  %v959 = vsel %vm879, %v956, %v958
  %v960 = vrot.slane %v735, 2
  %v961 = vrot.slane %v736, 2
  %v962 = vsel %vm879, %v960, %v961
  %v963 = vrot.slane %v737, 2
  %v964 = vsel %vm879, %v961, %v963
  %v965 = vrot.slane %v738, 2
  %v966 = vrot.slane %v739, 2
  %v967 = vsel %vm879, %v965, %v966
  %v968 = vrot.slane %v740, 2
  %v969 = vsel %vm879, %v966, %v968
  %v970 = vrot.slane %v741, 2
  %v971 = vrot.slane %v742, 2
  %v972 = vsel %vm879, %v970, %v971
  %v973 = vrot.slane %v743, 2
  %v974 = vsel %vm879, %v971, %v973
  %v975 = vrot.slane %v744, 2
  %v976 = vrot.slane %v745, 2
  %v977 = vsel %vm879, %v975, %v976
  %v978 = vrot.slane %v746, 2
  %v979 = vsel %vm879, %v976, %v978
  %v980 = vrot.slane %v747, 2
  %v981 = vrot.slane %v748, 2
  %v982 = vsel %vm879, %v980, %v981
  %v983 = vrot.slane %v749, 2
  %v984 = vsel %vm879, %v981, %v983
  %v985 = vrot.slane %v750, 2
  %v986 = vrot.slane %v751, 2
  %v987 = vsel %vm879, %v985, %v986
  %v988 = vrot.slane %v752, 2
  %v989 = vsel %vm879, %v986, %v988
  %v990 = vrot.slane %v753, 2
  %v991 = vrot.slane %v754, 2
  %v992 = vsel %vm879, %v990, %v991
  %v993 = vrot.slane %v755, 2
  %v994 = vsel %vm879, %v991, %v993
  %v995 = vrot.slane %v756, 2
  %v996 = vrot.slane %v757, 2
  %v997 = vsel %vm879, %v995, %v996
  %v998 = vrot.slane %v758, 2
  %v999 = vsel %vm879, %v996, %v998
  %v1000 = vrot.slane %v759, 2
  %v1001 = vrot.slane %v760, 2
  %v1002 = vsel %vm879, %v1000, %v1001
  %v1003 = vrot.slane %v761, 2
  %v1004 = vsel %vm879, %v1001, %v1003
  %v1005 = vrot.slane %v762, 2
  %v1006 = vrot.slane %v763, 2
  %v1007 = vsel %vm879, %v1005, %v1006
  %v1008 = vrot.slane %v764, 2
  %v1009 = vsel %vm879, %v1006, %v1008
  %v1010 = vrot.slane %v765, 2
  %v1011 = vrot.slane %v766, 2
  %v1012 = vsel %vm879, %v1010, %v1011
  %v1013 = vrot.slane %v767, 2
  %v1014 = vsel %vm879, %v1011, %v1013
  %v1015 = vrot.slane %v768, 2
  %v1016 = vrot.slane %v769, 2
  %v1017 = vsel %vm879, %v1015, %v1016
  %v1018 = vrot.slane %v770, 2
  %v1019 = vsel %vm879, %v1016, %v1018
  %v1020 = vrot.slane %v771, 2
  %v1021 = vrot.slane %v772, 2
  %v1022 = vsel %vm879, %v1020, %v1021
  %v1023 = vrot.slane %v773, 2
  %v1024 = vsel %vm879, %v1021, %v1023
  %v1025 = vrot.slane %v774, 2
  %v1026 = vrot.slane %v775, 2
  %v1027 = vsel %vm879, %v1025, %v1026
  %v1028 = vrot.slane %v776, 2
  %v1029 = vsel %vm879, %v1026, %v1028
  %v1030 = vrot.slane %v777, 2
  %v1031 = vrot.slane %v778, 2
  %v1032 = vsel %vm879, %v1030, %v1031
  %v1033 = vrot.slane %v779, 2
  %v1034 = vsel %vm879, %v1031, %v1033
  %v1035 = vrot.slane %v780, 2
  %v1036 = vrot.slane %v781, 2
  %v1037 = vsel %vm879, %v1035, %v1036
  %v1038 = vrot.slane %v782, 2
  %v1039 = vsel %vm879, %v1036, %v1038
  %v1104 = vadd.f32 %v622, %v882
  %v1105 = vadd.f32 %v623, %v884
  %v1106 = vadd.f32 %v624, %v887
  %v1107 = vadd.f32 %v625, %v889
  %v1108 = vadd.f32 %v626, %v892
  %v1109 = vadd.f32 %v627, %v894
  %v1110 = vadd.f32 %v628, %v897
  %v1111 = vadd.f32 %v629, %v899
  %v1112 = vadd.f32 %v630, %v902
  %v1113 = vadd.f32 %v631, %v904
  %v1114 = vadd.f32 %v632, %v907
  %v1115 = vadd.f32 %v633, %v909
  %v1116 = vadd.f32 %v634, %v912
  %v1117 = vadd.f32 %v635, %v914
  %v1118 = vadd.f32 %v636, %v917
  %v1119 = vadd.f32 %v637, %v919
  %v1120 = vadd.f32 %v638, %v922
  %v1121 = vadd.f32 %v639, %v924
  %v1122 = vadd.f32 %v640, %v927
  %v1123 = vadd.f32 %v641, %v929
  %v1124 = vadd.f32 %v642, %v932
  %v1125 = vadd.f32 %v643, %v934
  %v1126 = vadd.f32 %v644, %v937
  %v1127 = vadd.f32 %v645, %v939
  %v1128 = vadd.f32 %v646, %v942
  %v1129 = vadd.f32 %v647, %v944
  %v1130 = vadd.f32 %v648, %v947
  %v1131 = vadd.f32 %v649, %v949
  %v1132 = vadd.f32 %v650, %v952
  %v1133 = vadd.f32 %v651, %v954
  %v1134 = vadd.f32 %v652, %v957
  %v1135 = vadd.f32 %v653, %v959
  %v1136 = vadd.f32 %v654, %v962
  %v1137 = vadd.f32 %v655, %v964
  %v1138 = vadd.f32 %v656, %v967
  %v1139 = vadd.f32 %v657, %v969
  %v1140 = vadd.f32 %v658, %v972
  %v1141 = vadd.f32 %v659, %v974
  %v1142 = vadd.f32 %v660, %v977
  %v1143 = vadd.f32 %v661, %v979
  %v1144 = vadd.f32 %v662, %v982
  %v1145 = vadd.f32 %v663, %v984
  %v1146 = vadd.f32 %v664, %v987
  %v1147 = vadd.f32 %v665, %v989
  %v1148 = vadd.f32 %v666, %v992
  %v1149 = vadd.f32 %v667, %v994
  %v1150 = vadd.f32 %v668, %v997
  %v1151 = vadd.f32 %v669, %v999
  %v1152 = vadd.f32 %v670, %v1002
  %v1153 = vadd.f32 %v671, %v1004
  %v1154 = vadd.f32 %v672, %v1007
  %v1155 = vadd.f32 %v673, %v1009
  %v1156 = vadd.f32 %v674, %v1012
  %v1157 = vadd.f32 %v675, %v1014
  %v1158 = vadd.f32 %v676, %v1017
  %v1159 = vadd.f32 %v677, %v1019
  %v1160 = vadd.f32 %v678, %v1022
  %v1161 = vadd.f32 %v679, %v1024
  %v1162 = vadd.f32 %v680, %v1027
  %v1163 = vadd.f32 %v681, %v1029
  %v1164 = vadd.f32 %v682, %v1032
  %v1165 = vadd.f32 %v683, %v1034
  %v1166 = vadd.f32 %v684, %v1037
  %v1167 = vadd.f32 %v685, %v1039
  %v1168 = vperm.slane %v137, 0
  %v1169 = vmul.f32 %v31, %v1168
  %v1170 = vmul.f32 %v32, %v1168
  %v1171 = vmul.f32 %v34, %v1168
  %v1172 = vmul.f32 %v35, %v1168
  %v1173 = vmul.f32 %v37, %v1168
  %v1174 = vmul.f32 %v38, %v1168
  %v1175 = vmul.f32 %v40, %v1168
  %v1176 = vmul.f32 %v41, %v1168
  %v1177 = vmul.f32 %v43, %v1168
  %v1178 = vmul.f32 %v44, %v1168
  %v1179 = vmul.f32 %v46, %v1168
  %v1180 = vmul.f32 %v47, %v1168
  %v1181 = vmul.f32 %v49, %v1168
  %v1182 = vmul.f32 %v50, %v1168
  %v1183 = vmul.f32 %v52, %v1168
  %v1184 = vmul.f32 %v53, %v1168
  %v1185 = vmul.f32 %v55, %v1168
  %v1186 = vmul.f32 %v56, %v1168
  %v1187 = vmul.f32 %v58, %v1168
  %v1188 = vmul.f32 %v59, %v1168
  %v1189 = vmul.f32 %v61, %v1168
  %v1190 = vmul.f32 %v62, %v1168
  %v1191 = vmul.f32 %v64, %v1168
  %v1192 = vmul.f32 %v65, %v1168
  %v1193 = vmul.f32 %v67, %v1168
  %v1194 = vmul.f32 %v68, %v1168
  %v1195 = vmul.f32 %v70, %v1168
  %v1196 = vmul.f32 %v71, %v1168
  %v1197 = vmul.f32 %v73, %v1168
  %v1198 = vmul.f32 %v74, %v1168
  %v1199 = vmul.f32 %v76, %v1168
  %v1200 = vmul.f32 %v77, %v1168
  %v1201 = vmul.f32 %v85, %v1168
  %v1202 = vmul.f32 %v86, %v1168
  %v1203 = vmul.f32 %v88, %v1168
  %v1204 = vmul.f32 %v89, %v1168
  %v1205 = vmul.f32 %v91, %v1168
  %v1206 = vmul.f32 %v92, %v1168
  %v1207 = vmul.f32 %v94, %v1168
  %v1208 = vmul.f32 %v95, %v1168
  %v1209 = vmul.f32 %v97, %v1168
  %v1210 = vmul.f32 %v98, %v1168
  %v1211 = vmul.f32 %v100, %v1168
  %v1212 = vmul.f32 %v101, %v1168
  %v1213 = vmul.f32 %v103, %v1168
  %v1214 = vmul.f32 %v104, %v1168
  %v1215 = vmul.f32 %v106, %v1168
  %v1216 = vmul.f32 %v107, %v1168
  %v1217 = vmul.f32 %v109, %v1168
  %v1218 = vmul.f32 %v110, %v1168
  %v1219 = vmul.f32 %v112, %v1168
  %v1220 = vmul.f32 %v113, %v1168
  %v1221 = vmul.f32 %v115, %v1168
  %v1222 = vmul.f32 %v116, %v1168
  %v1223 = vmul.f32 %v118, %v1168
  %v1224 = vmul.f32 %v119, %v1168
  %v1225 = vmul.f32 %v121, %v1168
  %v1226 = vmul.f32 %v122, %v1168
  %v1227 = vmul.f32 %v124, %v1168
  %v1228 = vmul.f32 %v125, %v1168
  %v1229 = vmul.f32 %v127, %v1168
  %v1230 = vmul.f32 %v128, %v1168
  %v1231 = vmul.f32 %v130, %v1168
  %v1232 = vmul.f32 %v131, %v1168
  %v1233 = vadd.f32 %v1104, %v1169
  %v1234 = vadd.f32 %v1105, %v1170
  %v1235 = vadd.f32 %v1106, %v1171
  %v1236 = vadd.f32 %v1107, %v1172
  %v1237 = vadd.f32 %v1108, %v1173
  %v1238 = vadd.f32 %v1109, %v1174
  %v1239 = vadd.f32 %v1110, %v1175
  %v1240 = vadd.f32 %v1111, %v1176
  %v1241 = vadd.f32 %v1112, %v1177
  %v1242 = vadd.f32 %v1113, %v1178
  %v1243 = vadd.f32 %v1114, %v1179
  %v1244 = vadd.f32 %v1115, %v1180
  %v1245 = vadd.f32 %v1116, %v1181
  %v1246 = vadd.f32 %v1117, %v1182
  %v1247 = vadd.f32 %v1118, %v1183
  %v1248 = vadd.f32 %v1119, %v1184
  %v1249 = vadd.f32 %v1120, %v1185
  %v1250 = vadd.f32 %v1121, %v1186
  %v1251 = vadd.f32 %v1122, %v1187
  %v1252 = vadd.f32 %v1123, %v1188
  %v1253 = vadd.f32 %v1124, %v1189
  %v1254 = vadd.f32 %v1125, %v1190
  %v1255 = vadd.f32 %v1126, %v1191
  %v1256 = vadd.f32 %v1127, %v1192
  %v1257 = vadd.f32 %v1128, %v1193
  %v1258 = vadd.f32 %v1129, %v1194
  %v1259 = vadd.f32 %v1130, %v1195
  %v1260 = vadd.f32 %v1131, %v1196
  %v1261 = vadd.f32 %v1132, %v1197
  %v1262 = vadd.f32 %v1133, %v1198
  %v1263 = vadd.f32 %v1134, %v1199
  %v1264 = vadd.f32 %v1135, %v1200
  %v1265 = vadd.f32 %v1136, %v1201
  %v1266 = vadd.f32 %v1137, %v1202
  %v1267 = vadd.f32 %v1138, %v1203
  %v1268 = vadd.f32 %v1139, %v1204
  %v1269 = vadd.f32 %v1140, %v1205
  %v1270 = vadd.f32 %v1141, %v1206
  %v1271 = vadd.f32 %v1142, %v1207
  %v1272 = vadd.f32 %v1143, %v1208
  %v1273 = vadd.f32 %v1144, %v1209
  %v1274 = vadd.f32 %v1145, %v1210
  %v1275 = vadd.f32 %v1146, %v1211
  %v1276 = vadd.f32 %v1147, %v1212
  %v1277 = vadd.f32 %v1148, %v1213
  %v1278 = vadd.f32 %v1149, %v1214
  %v1279 = vadd.f32 %v1150, %v1215
  %v1280 = vadd.f32 %v1151, %v1216
  %v1281 = vadd.f32 %v1152, %v1217
  %v1282 = vadd.f32 %v1153, %v1218
  %v1283 = vadd.f32 %v1154, %v1219
  %v1284 = vadd.f32 %v1155, %v1220
  %v1285 = vadd.f32 %v1156, %v1221
  %v1286 = vadd.f32 %v1157, %v1222
  %v1287 = vadd.f32 %v1158, %v1223
  %v1288 = vadd.f32 %v1159, %v1224
  %v1289 = vadd.f32 %v1160, %v1225
  %v1290 = vadd.f32 %v1161, %v1226
  %v1291 = vadd.f32 %v1162, %v1227
  %v1292 = vadd.f32 %v1163, %v1228
  %v1293 = vadd.f32 %v1164, %v1229
  %v1294 = vadd.f32 %v1165, %v1230
  %v1295 = vadd.f32 %v1166, %v1231
  %v1296 = vadd.f32 %v1167, %v1232
  %v1297 = vperm.slane %v137, 1
  %v1298 = vmul.f32 %v31, %v1297
  %v1299 = vmul.f32 %v32, %v1297
  %v1300 = vmul.f32 %v33, %v1297
  %v1301 = vmul.f32 %v34, %v1297
  %v1302 = vmul.f32 %v35, %v1297
  %v1303 = vmul.f32 %v36, %v1297
  %v1304 = vmul.f32 %v37, %v1297
  %v1305 = vmul.f32 %v38, %v1297
  %v1306 = vmul.f32 %v39, %v1297
  %v1307 = vmul.f32 %v40, %v1297
  %v1308 = vmul.f32 %v41, %v1297
  %v1309 = vmul.f32 %v42, %v1297
  %v1310 = vmul.f32 %v43, %v1297
  %v1311 = vmul.f32 %v44, %v1297
  %v1312 = vmul.f32 %v45, %v1297
  %v1313 = vmul.f32 %v46, %v1297
  %v1314 = vmul.f32 %v47, %v1297
  %v1315 = vmul.f32 %v48, %v1297
  %v1316 = vmul.f32 %v49, %v1297
  %v1317 = vmul.f32 %v50, %v1297
  %v1318 = vmul.f32 %v51, %v1297
  %v1319 = vmul.f32 %v52, %v1297
  %v1320 = vmul.f32 %v53, %v1297
  %v1321 = vmul.f32 %v54, %v1297
  %v1322 = vmul.f32 %v55, %v1297
  %v1323 = vmul.f32 %v56, %v1297
  %v1324 = vmul.f32 %v57, %v1297
  %v1325 = vmul.f32 %v58, %v1297
  %v1326 = vmul.f32 %v59, %v1297
  %v1327 = vmul.f32 %v60, %v1297
  %v1328 = vmul.f32 %v61, %v1297
  %v1329 = vmul.f32 %v62, %v1297
  %v1330 = vmul.f32 %v63, %v1297
  %v1331 = vmul.f32 %v64, %v1297
  %v1332 = vmul.f32 %v65, %v1297
  %v1333 = vmul.f32 %v66, %v1297
  %v1334 = vmul.f32 %v67, %v1297
  %v1335 = vmul.f32 %v68, %v1297
  %v1336 = vmul.f32 %v69, %v1297
  %v1337 = vmul.f32 %v70, %v1297
  %v1338 = vmul.f32 %v71, %v1297
  %v1339 = vmul.f32 %v72, %v1297
  %v1340 = vmul.f32 %v73, %v1297
  %v1341 = vmul.f32 %v74, %v1297
  %v1342 = vmul.f32 %v75, %v1297
  %v1343 = vmul.f32 %v76, %v1297
  %v1344 = vmul.f32 %v77, %v1297
  %v1345 = vmul.f32 %v78, %v1297
  %v1346 = vmul.f32 %v85, %v1297
  %v1347 = vmul.f32 %v86, %v1297
  %v1348 = vmul.f32 %v87, %v1297
  %v1349 = vmul.f32 %v88, %v1297
  %v1350 = vmul.f32 %v89, %v1297
  %v1351 = vmul.f32 %v90, %v1297
  %v1352 = vmul.f32 %v91, %v1297
  %v1353 = vmul.f32 %v92, %v1297
  %v1354 = vmul.f32 %v93, %v1297
  %v1355 = vmul.f32 %v94, %v1297
  %v1356 = vmul.f32 %v95, %v1297
  %v1357 = vmul.f32 %v96, %v1297
  %v1358 = vmul.f32 %v97, %v1297
  %v1359 = vmul.f32 %v98, %v1297
  %v1360 = vmul.f32 %v99, %v1297
  %v1361 = vmul.f32 %v100, %v1297
  %v1362 = vmul.f32 %v101, %v1297
  %v1363 = vmul.f32 %v102, %v1297
  %v1364 = vmul.f32 %v103, %v1297
  %v1365 = vmul.f32 %v104, %v1297
  %v1366 = vmul.f32 %v105, %v1297
  %v1367 = vmul.f32 %v106, %v1297
  %v1368 = vmul.f32 %v107, %v1297
  %v1369 = vmul.f32 %v108, %v1297
  %v1370 = vmul.f32 %v109, %v1297
  %v1371 = vmul.f32 %v110, %v1297
  %v1372 = vmul.f32 %v111, %v1297
  %v1373 = vmul.f32 %v112, %v1297
  %v1374 = vmul.f32 %v113, %v1297
  %v1375 = vmul.f32 %v114, %v1297
  %v1376 = vmul.f32 %v115, %v1297
  %v1377 = vmul.f32 %v116, %v1297
  %v1378 = vmul.f32 %v117, %v1297
  %v1379 = vmul.f32 %v118, %v1297
  %v1380 = vmul.f32 %v119, %v1297
  %v1381 = vmul.f32 %v120, %v1297
  %v1382 = vmul.f32 %v121, %v1297
  %v1383 = vmul.f32 %v122, %v1297
  %v1384 = vmul.f32 %v123, %v1297
  %v1385 = vmul.f32 %v124, %v1297
  %v1386 = vmul.f32 %v125, %v1297
  %v1387 = vmul.f32 %v126, %v1297
  %v1388 = vmul.f32 %v127, %v1297
  %v1389 = vmul.f32 %v128, %v1297
  %v1390 = vmul.f32 %v129, %v1297
  %v1391 = vmul.f32 %v130, %v1297
  %v1392 = vmul.f32 %v131, %v1297
  %v1393 = vmul.f32 %v132, %v1297
  %v1490 = vrot.slane %v1298, 1
  %v1491 = vrot.slane %v1299, 1
  %v1492 = vsel %vm397, %v1490, %v1491
  %v1493 = vrot.slane %v1300, 1
  %v1494 = vsel %vm397, %v1491, %v1493
  %v1495 = vrot.slane %v1301, 1
  %v1496 = vrot.slane %v1302, 1
  %v1497 = vsel %vm397, %v1495, %v1496
  %v1498 = vrot.slane %v1303, 1
  %v1499 = vsel %vm397, %v1496, %v1498
  %v1500 = vrot.slane %v1304, 1
  %v1501 = vrot.slane %v1305, 1
  %v1502 = vsel %vm397, %v1500, %v1501
  %v1503 = vrot.slane %v1306, 1
  %v1504 = vsel %vm397, %v1501, %v1503
  %v1505 = vrot.slane %v1307, 1
  %v1506 = vrot.slane %v1308, 1
  %v1507 = vsel %vm397, %v1505, %v1506
  %v1508 = vrot.slane %v1309, 1
  %v1509 = vsel %vm397, %v1506, %v1508
  %v1510 = vrot.slane %v1310, 1
  %v1511 = vrot.slane %v1311, 1
  %v1512 = vsel %vm397, %v1510, %v1511
  %v1513 = vrot.slane %v1312, 1
  %v1514 = vsel %vm397, %v1511, %v1513
  %v1515 = vrot.slane %v1313, 1
  %v1516 = vrot.slane %v1314, 1
  %v1517 = vsel %vm397, %v1515, %v1516
  %v1518 = vrot.slane %v1315, 1
  %v1519 = vsel %vm397, %v1516, %v1518
  %v1520 = vrot.slane %v1316, 1
  %v1521 = vrot.slane %v1317, 1
  %v1522 = vsel %vm397, %v1520, %v1521
  %v1523 = vrot.slane %v1318, 1
  %v1524 = vsel %vm397, %v1521, %v1523
  %v1525 = vrot.slane %v1319, 1
  %v1526 = vrot.slane %v1320, 1
  %v1527 = vsel %vm397, %v1525, %v1526
  %v1528 = vrot.slane %v1321, 1
  %v1529 = vsel %vm397, %v1526, %v1528
  %v1530 = vrot.slane %v1322, 1
  %v1531 = vrot.slane %v1323, 1
  %v1532 = vsel %vm397, %v1530, %v1531
  %v1533 = vrot.slane %v1324, 1
  %v1534 = vsel %vm397, %v1531, %v1533
  %v1535 = vrot.slane %v1325, 1
  %v1536 = vrot.slane %v1326, 1
  %v1537 = vsel %vm397, %v1535, %v1536
  %v1538 = vrot.slane %v1327, 1
  %v1539 = vsel %vm397, %v1536, %v1538
  %v1540 = vrot.slane %v1328, 1
  %v1541 = vrot.slane %v1329, 1
  %v1542 = vsel %vm397, %v1540, %v1541
  %v1543 = vrot.slane %v1330, 1
  %v1544 = vsel %vm397, %v1541, %v1543
  %v1545 = vrot.slane %v1331, 1
  %v1546 = vrot.slane %v1332, 1
  %v1547 = vsel %vm397, %v1545, %v1546
  %v1548 = vrot.slane %v1333, 1
  %v1549 = vsel %vm397, %v1546, %v1548
  %v1550 = vrot.slane %v1334, 1
  %v1551 = vrot.slane %v1335, 1
  %v1552 = vsel %vm397, %v1550, %v1551
  %v1553 = vrot.slane %v1336, 1
  %v1554 = vsel %vm397, %v1551, %v1553
  %v1555 = vrot.slane %v1337, 1
  %v1556 = vrot.slane %v1338, 1
  %v1557 = vsel %vm397, %v1555, %v1556
  %v1558 = vrot.slane %v1339, 1
  %v1559 = vsel %vm397, %v1556, %v1558
  %v1560 = vrot.slane %v1340, 1
  %v1561 = vrot.slane %v1341, 1
  %v1562 = vsel %vm397, %v1560, %v1561
  %v1563 = vrot.slane %v1342, 1
  %v1564 = vsel %vm397, %v1561, %v1563
  %v1565 = vrot.slane %v1343, 1
  %v1566 = vrot.slane %v1344, 1
  %v1567 = vsel %vm397, %v1565, %v1566
  %v1568 = vrot.slane %v1345, 1
  %v1569 = vsel %vm397, %v1566, %v1568
  %v1570 = vrot.slane %v1346, 1
  %v1571 = vrot.slane %v1347, 1
  %v1572 = vsel %vm397, %v1570, %v1571
  %v1573 = vrot.slane %v1348, 1
  %v1574 = vsel %vm397, %v1571, %v1573
  %v1575 = vrot.slane %v1349, 1
  %v1576 = vrot.slane %v1350, 1
  %v1577 = vsel %vm397, %v1575, %v1576
  %v1578 = vrot.slane %v1351, 1
  %v1579 = vsel %vm397, %v1576, %v1578
  %v1580 = vrot.slane %v1352, 1
  %v1581 = vrot.slane %v1353, 1
  %v1582 = vsel %vm397, %v1580, %v1581
  %v1583 = vrot.slane %v1354, 1
  %v1584 = vsel %vm397, %v1581, %v1583
  %v1585 = vrot.slane %v1355, 1
  %v1586 = vrot.slane %v1356, 1
  %v1587 = vsel %vm397, %v1585, %v1586
  %v1588 = vrot.slane %v1357, 1
  %v1589 = vsel %vm397, %v1586, %v1588
  %v1590 = vrot.slane %v1358, 1
  %v1591 = vrot.slane %v1359, 1
  %v1592 = vsel %vm397, %v1590, %v1591
  %v1593 = vrot.slane %v1360, 1
  %v1594 = vsel %vm397, %v1591, %v1593
  %v1595 = vrot.slane %v1361, 1
  %v1596 = vrot.slane %v1362, 1
  %v1597 = vsel %vm397, %v1595, %v1596
  %v1598 = vrot.slane %v1363, 1
  %v1599 = vsel %vm397, %v1596, %v1598
  %v1600 = vrot.slane %v1364, 1
  %v1601 = vrot.slane %v1365, 1
  %v1602 = vsel %vm397, %v1600, %v1601
  %v1603 = vrot.slane %v1366, 1
  %v1604 = vsel %vm397, %v1601, %v1603
  %v1605 = vrot.slane %v1367, 1
  %v1606 = vrot.slane %v1368, 1
  %v1607 = vsel %vm397, %v1605, %v1606
  %v1608 = vrot.slane %v1369, 1
  %v1609 = vsel %vm397, %v1606, %v1608
  %v1610 = vrot.slane %v1370, 1
  %v1611 = vrot.slane %v1371, 1
  %v1612 = vsel %vm397, %v1610, %v1611
  %v1613 = vrot.slane %v1372, 1
  %v1614 = vsel %vm397, %v1611, %v1613
  %v1615 = vrot.slane %v1373, 1
  %v1616 = vrot.slane %v1374, 1
  %v1617 = vsel %vm397, %v1615, %v1616
  %v1618 = vrot.slane %v1375, 1
  %v1619 = vsel %vm397, %v1616, %v1618
  %v1620 = vrot.slane %v1376, 1
  %v1621 = vrot.slane %v1377, 1
  %v1622 = vsel %vm397, %v1620, %v1621
  %v1623 = vrot.slane %v1378, 1
  %v1624 = vsel %vm397, %v1621, %v1623
  %v1625 = vrot.slane %v1379, 1
  %v1626 = vrot.slane %v1380, 1
  %v1627 = vsel %vm397, %v1625, %v1626
  %v1628 = vrot.slane %v1381, 1
  %v1629 = vsel %vm397, %v1626, %v1628
  %v1630 = vrot.slane %v1382, 1
  %v1631 = vrot.slane %v1383, 1
  %v1632 = vsel %vm397, %v1630, %v1631
  %v1633 = vrot.slane %v1384, 1
  %v1634 = vsel %vm397, %v1631, %v1633
  %v1635 = vrot.slane %v1385, 1
  %v1636 = vrot.slane %v1386, 1
  %v1637 = vsel %vm397, %v1635, %v1636
  %v1638 = vrot.slane %v1387, 1
  %v1639 = vsel %vm397, %v1636, %v1638
  %v1640 = vrot.slane %v1388, 1
  %v1641 = vrot.slane %v1389, 1
  %v1642 = vsel %vm397, %v1640, %v1641
  %v1643 = vrot.slane %v1390, 1
  %v1644 = vsel %vm397, %v1641, %v1643
  %v1645 = vrot.slane %v1391, 1
  %v1646 = vrot.slane %v1392, 1
  %v1647 = vsel %vm397, %v1645, %v1646
  %v1648 = vrot.slane %v1393, 1
  %v1649 = vsel %vm397, %v1646, %v1648
  %v1714 = vadd.f32 %v1233, %v1492
  %v1715 = vadd.f32 %v1234, %v1494
  %v1716 = vadd.f32 %v1235, %v1497
  %v1717 = vadd.f32 %v1236, %v1499
  %v1718 = vadd.f32 %v1237, %v1502
  %v1719 = vadd.f32 %v1238, %v1504
  %v1720 = vadd.f32 %v1239, %v1507
  %v1721 = vadd.f32 %v1240, %v1509
  %v1722 = vadd.f32 %v1241, %v1512
  %v1723 = vadd.f32 %v1242, %v1514
  %v1724 = vadd.f32 %v1243, %v1517
  %v1725 = vadd.f32 %v1244, %v1519
  %v1726 = vadd.f32 %v1245, %v1522
  %v1727 = vadd.f32 %v1246, %v1524
  %v1728 = vadd.f32 %v1247, %v1527
  %v1729 = vadd.f32 %v1248, %v1529
  %v1730 = vadd.f32 %v1249, %v1532
  %v1731 = vadd.f32 %v1250, %v1534
  %v1732 = vadd.f32 %v1251, %v1537
  %v1733 = vadd.f32 %v1252, %v1539
  %v1734 = vadd.f32 %v1253, %v1542
  %v1735 = vadd.f32 %v1254, %v1544
  %v1736 = vadd.f32 %v1255, %v1547
  %v1737 = vadd.f32 %v1256, %v1549
  %v1738 = vadd.f32 %v1257, %v1552
  %v1739 = vadd.f32 %v1258, %v1554
  %v1740 = vadd.f32 %v1259, %v1557
  %v1741 = vadd.f32 %v1260, %v1559
  %v1742 = vadd.f32 %v1261, %v1562
  %v1743 = vadd.f32 %v1262, %v1564
  %v1744 = vadd.f32 %v1263, %v1567
  %v1745 = vadd.f32 %v1264, %v1569
  %v1746 = vadd.f32 %v1265, %v1572
  %v1747 = vadd.f32 %v1266, %v1574
  %v1748 = vadd.f32 %v1267, %v1577
  %v1749 = vadd.f32 %v1268, %v1579
  %v1750 = vadd.f32 %v1269, %v1582
  %v1751 = vadd.f32 %v1270, %v1584
  %v1752 = vadd.f32 %v1271, %v1587
  %v1753 = vadd.f32 %v1272, %v1589
  %v1754 = vadd.f32 %v1273, %v1592
  %v1755 = vadd.f32 %v1274, %v1594
  %v1756 = vadd.f32 %v1275, %v1597
  %v1757 = vadd.f32 %v1276, %v1599
  %v1758 = vadd.f32 %v1277, %v1602
  %v1759 = vadd.f32 %v1278, %v1604
  %v1760 = vadd.f32 %v1279, %v1607
  %v1761 = vadd.f32 %v1280, %v1609
  %v1762 = vadd.f32 %v1281, %v1612
  %v1763 = vadd.f32 %v1282, %v1614
  %v1764 = vadd.f32 %v1283, %v1617
  %v1765 = vadd.f32 %v1284, %v1619
  %v1766 = vadd.f32 %v1285, %v1622
  %v1767 = vadd.f32 %v1286, %v1624
  %v1768 = vadd.f32 %v1287, %v1627
  %v1769 = vadd.f32 %v1288, %v1629
  %v1770 = vadd.f32 %v1289, %v1632
  %v1771 = vadd.f32 %v1290, %v1634
  %v1772 = vadd.f32 %v1291, %v1637
  %v1773 = vadd.f32 %v1292, %v1639
  %v1774 = vadd.f32 %v1293, %v1642
  %v1775 = vadd.f32 %v1294, %v1644
  %v1776 = vadd.f32 %v1295, %v1647
  %v1777 = vadd.f32 %v1296, %v1649
  %v1778 = vperm.slane %v137, 2
  %v1779 = vmul.f32 %v31, %v1778
  %v1780 = vmul.f32 %v32, %v1778
  %v1781 = vmul.f32 %v33, %v1778
  %v1782 = vmul.f32 %v34, %v1778
  %v1783 = vmul.f32 %v35, %v1778
  %v1784 = vmul.f32 %v36, %v1778
  %v1785 = vmul.f32 %v37, %v1778
  %v1786 = vmul.f32 %v38, %v1778
  %v1787 = vmul.f32 %v39, %v1778
  %v1788 = vmul.f32 %v40, %v1778
  %v1789 = vmul.f32 %v41, %v1778
  %v1790 = vmul.f32 %v42, %v1778
  %v1791 = vmul.f32 %v43, %v1778
  %v1792 = vmul.f32 %v44, %v1778
  %v1793 = vmul.f32 %v45, %v1778
  %v1794 = vmul.f32 %v46, %v1778
  %v1795 = vmul.f32 %v47, %v1778
  %v1796 = vmul.f32 %v48, %v1778
  %v1797 = vmul.f32 %v49, %v1778
  %v1798 = vmul.f32 %v50, %v1778
  %v1799 = vmul.f32 %v51, %v1778
  %v1800 = vmul.f32 %v52, %v1778
  %v1801 = vmul.f32 %v53, %v1778
  %v1802 = vmul.f32 %v54, %v1778
  %v1803 = vmul.f32 %v55, %v1778
  %v1804 = vmul.f32 %v56, %v1778
  %v1805 = vmul.f32 %v57, %v1778
  %v1806 = vmul.f32 %v58, %v1778
  %v1807 = vmul.f32 %v59, %v1778
  %v1808 = vmul.f32 %v60, %v1778
  %v1809 = vmul.f32 %v61, %v1778
  %v1810 = vmul.f32 %v62, %v1778
  %v1811 = vmul.f32 %v63, %v1778
  %v1812 = vmul.f32 %v64, %v1778
  %v1813 = vmul.f32 %v65, %v1778
  %v1814 = vmul.f32 %v66, %v1778
  %v1815 = vmul.f32 %v67, %v1778
  %v1816 = vmul.f32 %v68, %v1778
  %v1817 = vmul.f32 %v69, %v1778
  %v1818 = vmul.f32 %v70, %v1778
  %v1819 = vmul.f32 %v71, %v1778
  %v1820 = vmul.f32 %v72, %v1778
  %v1821 = vmul.f32 %v73, %v1778
  %v1822 = vmul.f32 %v74, %v1778
  %v1823 = vmul.f32 %v75, %v1778
  %v1824 = vmul.f32 %v76, %v1778
  %v1825 = vmul.f32 %v77, %v1778
  %v1826 = vmul.f32 %v78, %v1778
  %v1827 = vmul.f32 %v85, %v1778
  %v1828 = vmul.f32 %v86, %v1778
  %v1829 = vmul.f32 %v87, %v1778
  %v1830 = vmul.f32 %v88, %v1778
  %v1831 = vmul.f32 %v89, %v1778
  %v1832 = vmul.f32 %v90, %v1778
  %v1833 = vmul.f32 %v91, %v1778
  %v1834 = vmul.f32 %v92, %v1778
  %v1835 = vmul.f32 %v93, %v1778
  %v1836 = vmul.f32 %v94, %v1778
  %v1837 = vmul.f32 %v95, %v1778
  %v1838 = vmul.f32 %v96, %v1778
  %v1839 = vmul.f32 %v97, %v1778
  %v1840 = vmul.f32 %v98, %v1778
  %v1841 = vmul.f32 %v99, %v1778
  %v1842 = vmul.f32 %v100, %v1778
  %v1843 = vmul.f32 %v101, %v1778
  %v1844 = vmul.f32 %v102, %v1778
  %v1845 = vmul.f32 %v103, %v1778
  %v1846 = vmul.f32 %v104, %v1778
  %v1847 = vmul.f32 %v105, %v1778
  %v1848 = vmul.f32 %v106, %v1778
  %v1849 = vmul.f32 %v107, %v1778
  %v1850 = vmul.f32 %v108, %v1778
  %v1851 = vmul.f32 %v109, %v1778
  %v1852 = vmul.f32 %v110, %v1778
  %v1853 = vmul.f32 %v111, %v1778
  %v1854 = vmul.f32 %v112, %v1778
  %v1855 = vmul.f32 %v113, %v1778
  %v1856 = vmul.f32 %v114, %v1778
  %v1857 = vmul.f32 %v115, %v1778
  %v1858 = vmul.f32 %v116, %v1778
  %v1859 = vmul.f32 %v117, %v1778
  %v1860 = vmul.f32 %v118, %v1778
  %v1861 = vmul.f32 %v119, %v1778
  %v1862 = vmul.f32 %v120, %v1778
  %v1863 = vmul.f32 %v121, %v1778
  %v1864 = vmul.f32 %v122, %v1778
  %v1865 = vmul.f32 %v123, %v1778
  %v1866 = vmul.f32 %v124, %v1778
  %v1867 = vmul.f32 %v125, %v1778
  %v1868 = vmul.f32 %v126, %v1778
  %v1869 = vmul.f32 %v127, %v1778
  %v1870 = vmul.f32 %v128, %v1778
  %v1871 = vmul.f32 %v129, %v1778
  %v1872 = vmul.f32 %v130, %v1778
  %v1873 = vmul.f32 %v131, %v1778
  %v1874 = vmul.f32 %v132, %v1778
  %v1971 = vrot.slane %v1779, 2
  %v1972 = vrot.slane %v1780, 2
  %v1973 = vsel %vm879, %v1971, %v1972
  %v1974 = vrot.slane %v1781, 2
  %v1975 = vsel %vm879, %v1972, %v1974
  %v1976 = vrot.slane %v1782, 2
  %v1977 = vrot.slane %v1783, 2
  %v1978 = vsel %vm879, %v1976, %v1977
  %v1979 = vrot.slane %v1784, 2
  %v1980 = vsel %vm879, %v1977, %v1979
  %v1981 = vrot.slane %v1785, 2
  %v1982 = vrot.slane %v1786, 2
  %v1983 = vsel %vm879, %v1981, %v1982
  %v1984 = vrot.slane %v1787, 2
  %v1985 = vsel %vm879, %v1982, %v1984
  %v1986 = vrot.slane %v1788, 2
  %v1987 = vrot.slane %v1789, 2
  %v1988 = vsel %vm879, %v1986, %v1987
  %v1989 = vrot.slane %v1790, 2
  %v1990 = vsel %vm879, %v1987, %v1989
  %v1991 = vrot.slane %v1791, 2
  %v1992 = vrot.slane %v1792, 2
  %v1993 = vsel %vm879, %v1991, %v1992
  %v1994 = vrot.slane %v1793, 2
  %v1995 = vsel %vm879, %v1992, %v1994
  %v1996 = vrot.slane %v1794, 2
  %v1997 = vrot.slane %v1795, 2
  %v1998 = vsel %vm879, %v1996, %v1997
  %v1999 = vrot.slane %v1796, 2
  %v2000 = vsel %vm879, %v1997, %v1999
  %v2001 = vrot.slane %v1797, 2
  %v2002 = vrot.slane %v1798, 2
  %v2003 = vsel %vm879, %v2001, %v2002
  %v2004 = vrot.slane %v1799, 2
  %v2005 = vsel %vm879, %v2002, %v2004
  %v2006 = vrot.slane %v1800, 2
  %v2007 = vrot.slane %v1801, 2
  %v2008 = vsel %vm879, %v2006, %v2007
  %v2009 = vrot.slane %v1802, 2
  %v2010 = vsel %vm879, %v2007, %v2009
  %v2011 = vrot.slane %v1803, 2
  %v2012 = vrot.slane %v1804, 2
  %v2013 = vsel %vm879, %v2011, %v2012
  %v2014 = vrot.slane %v1805, 2
  %v2015 = vsel %vm879, %v2012, %v2014
  %v2016 = vrot.slane %v1806, 2
  %v2017 = vrot.slane %v1807, 2
  %v2018 = vsel %vm879, %v2016, %v2017
  %v2019 = vrot.slane %v1808, 2
  %v2020 = vsel %vm879, %v2017, %v2019
  %v2021 = vrot.slane %v1809, 2
  %v2022 = vrot.slane %v1810, 2
  %v2023 = vsel %vm879, %v2021, %v2022
  %v2024 = vrot.slane %v1811, 2
  %v2025 = vsel %vm879, %v2022, %v2024
  %v2026 = vrot.slane %v1812, 2
  %v2027 = vrot.slane %v1813, 2
  %v2028 = vsel %vm879, %v2026, %v2027
  %v2029 = vrot.slane %v1814, 2
  %v2030 = vsel %vm879, %v2027, %v2029
  %v2031 = vrot.slane %v1815, 2
  %v2032 = vrot.slane %v1816, 2
  %v2033 = vsel %vm879, %v2031, %v2032
  %v2034 = vrot.slane %v1817, 2
  %v2035 = vsel %vm879, %v2032, %v2034
  %v2036 = vrot.slane %v1818, 2
  %v2037 = vrot.slane %v1819, 2
  %v2038 = vsel %vm879, %v2036, %v2037
  %v2039 = vrot.slane %v1820, 2
  %v2040 = vsel %vm879, %v2037, %v2039
  %v2041 = vrot.slane %v1821, 2
  %v2042 = vrot.slane %v1822, 2
  %v2043 = vsel %vm879, %v2041, %v2042
  %v2044 = vrot.slane %v1823, 2
  %v2045 = vsel %vm879, %v2042, %v2044
  %v2046 = vrot.slane %v1824, 2
  %v2047 = vrot.slane %v1825, 2
  %v2048 = vsel %vm879, %v2046, %v2047
  %v2049 = vrot.slane %v1826, 2
  %v2050 = vsel %vm879, %v2047, %v2049
  %v2051 = vrot.slane %v1827, 2
  %v2052 = vrot.slane %v1828, 2
  %v2053 = vsel %vm879, %v2051, %v2052
  %v2054 = vrot.slane %v1829, 2
  %v2055 = vsel %vm879, %v2052, %v2054
  %v2056 = vrot.slane %v1830, 2
  %v2057 = vrot.slane %v1831, 2
  %v2058 = vsel %vm879, %v2056, %v2057
  %v2059 = vrot.slane %v1832, 2
  %v2060 = vsel %vm879, %v2057, %v2059
  %v2061 = vrot.slane %v1833, 2
  %v2062 = vrot.slane %v1834, 2
  %v2063 = vsel %vm879, %v2061, %v2062
  %v2064 = vrot.slane %v1835, 2
  %v2065 = vsel %vm879, %v2062, %v2064
  %v2066 = vrot.slane %v1836, 2
  %v2067 = vrot.slane %v1837, 2
  %v2068 = vsel %vm879, %v2066, %v2067
  %v2069 = vrot.slane %v1838, 2
  %v2070 = vsel %vm879, %v2067, %v2069
  %v2071 = vrot.slane %v1839, 2
  %v2072 = vrot.slane %v1840, 2
  %v2073 = vsel %vm879, %v2071, %v2072
  %v2074 = vrot.slane %v1841, 2
  %v2075 = vsel %vm879, %v2072, %v2074
  %v2076 = vrot.slane %v1842, 2
  %v2077 = vrot.slane %v1843, 2
  %v2078 = vsel %vm879, %v2076, %v2077
  %v2079 = vrot.slane %v1844, 2
  %v2080 = vsel %vm879, %v2077, %v2079
  %v2081 = vrot.slane %v1845, 2
  %v2082 = vrot.slane %v1846, 2
  %v2083 = vsel %vm879, %v2081, %v2082
  %v2084 = vrot.slane %v1847, 2
  %v2085 = vsel %vm879, %v2082, %v2084
  %v2086 = vrot.slane %v1848, 2
  %v2087 = vrot.slane %v1849, 2
  %v2088 = vsel %vm879, %v2086, %v2087
  %v2089 = vrot.slane %v1850, 2
  %v2090 = vsel %vm879, %v2087, %v2089
  %v2091 = vrot.slane %v1851, 2
  %v2092 = vrot.slane %v1852, 2
  %v2093 = vsel %vm879, %v2091, %v2092
  %v2094 = vrot.slane %v1853, 2
  %v2095 = vsel %vm879, %v2092, %v2094
  %v2096 = vrot.slane %v1854, 2
  %v2097 = vrot.slane %v1855, 2
  %v2098 = vsel %vm879, %v2096, %v2097
  %v2099 = vrot.slane %v1856, 2
  %v2100 = vsel %vm879, %v2097, %v2099
  %v2101 = vrot.slane %v1857, 2
  %v2102 = vrot.slane %v1858, 2
  %v2103 = vsel %vm879, %v2101, %v2102
  %v2104 = vrot.slane %v1859, 2
  %v2105 = vsel %vm879, %v2102, %v2104
  %v2106 = vrot.slane %v1860, 2
  %v2107 = vrot.slane %v1861, 2
  %v2108 = vsel %vm879, %v2106, %v2107
  %v2109 = vrot.slane %v1862, 2
  %v2110 = vsel %vm879, %v2107, %v2109
  %v2111 = vrot.slane %v1863, 2
  %v2112 = vrot.slane %v1864, 2
  %v2113 = vsel %vm879, %v2111, %v2112
  %v2114 = vrot.slane %v1865, 2
  %v2115 = vsel %vm879, %v2112, %v2114
  %v2116 = vrot.slane %v1866, 2
  %v2117 = vrot.slane %v1867, 2
  %v2118 = vsel %vm879, %v2116, %v2117
  %v2119 = vrot.slane %v1868, 2
  %v2120 = vsel %vm879, %v2117, %v2119
  %v2121 = vrot.slane %v1869, 2
  %v2122 = vrot.slane %v1870, 2
  %v2123 = vsel %vm879, %v2121, %v2122
  %v2124 = vrot.slane %v1871, 2
  %v2125 = vsel %vm879, %v2122, %v2124
  %v2126 = vrot.slane %v1872, 2
  %v2127 = vrot.slane %v1873, 2
  %v2128 = vsel %vm879, %v2126, %v2127
  %v2129 = vrot.slane %v1874, 2
  %v2130 = vsel %vm879, %v2127, %v2129
  %v2195 = vadd.f32 %v1714, %v1973
  %v2196 = vadd.f32 %v1715, %v1975
  %v2197 = vadd.f32 %v1716, %v1978
  %v2198 = vadd.f32 %v1717, %v1980
  %v2199 = vadd.f32 %v1718, %v1983
  %v2200 = vadd.f32 %v1719, %v1985
  %v2201 = vadd.f32 %v1720, %v1988
  %v2202 = vadd.f32 %v1721, %v1990
  %v2203 = vadd.f32 %v1722, %v1993
  %v2204 = vadd.f32 %v1723, %v1995
  %v2205 = vadd.f32 %v1724, %v1998
  %v2206 = vadd.f32 %v1725, %v2000
  %v2207 = vadd.f32 %v1726, %v2003
  %v2208 = vadd.f32 %v1727, %v2005
  %v2209 = vadd.f32 %v1728, %v2008
  %v2210 = vadd.f32 %v1729, %v2010
  %v2211 = vadd.f32 %v1730, %v2013
  %v2212 = vadd.f32 %v1731, %v2015
  %v2213 = vadd.f32 %v1732, %v2018
  %v2214 = vadd.f32 %v1733, %v2020
  %v2215 = vadd.f32 %v1734, %v2023
  %v2216 = vadd.f32 %v1735, %v2025
  %v2217 = vadd.f32 %v1736, %v2028
  %v2218 = vadd.f32 %v1737, %v2030
  %v2219 = vadd.f32 %v1738, %v2033
  %v2220 = vadd.f32 %v1739, %v2035
  %v2221 = vadd.f32 %v1740, %v2038
  %v2222 = vadd.f32 %v1741, %v2040
  %v2223 = vadd.f32 %v1742, %v2043
  %v2224 = vadd.f32 %v1743, %v2045
  %v2225 = vadd.f32 %v1744, %v2048
  %v2226 = vadd.f32 %v1745, %v2050
  %v2227 = vadd.f32 %v1746, %v2053
  %v2228 = vadd.f32 %v1747, %v2055
  %v2229 = vadd.f32 %v1748, %v2058
  %v2230 = vadd.f32 %v1749, %v2060
  %v2231 = vadd.f32 %v1750, %v2063
  %v2232 = vadd.f32 %v1751, %v2065
  %v2233 = vadd.f32 %v1752, %v2068
  %v2234 = vadd.f32 %v1753, %v2070
  %v2235 = vadd.f32 %v1754, %v2073
  %v2236 = vadd.f32 %v1755, %v2075
  %v2237 = vadd.f32 %v1756, %v2078
  %v2238 = vadd.f32 %v1757, %v2080
  %v2239 = vadd.f32 %v1758, %v2083
  %v2240 = vadd.f32 %v1759, %v2085
  %v2241 = vadd.f32 %v1760, %v2088
  %v2242 = vadd.f32 %v1761, %v2090
  %v2243 = vadd.f32 %v1762, %v2093
  %v2244 = vadd.f32 %v1763, %v2095
  %v2245 = vadd.f32 %v1764, %v2098
  %v2246 = vadd.f32 %v1765, %v2100
  %v2247 = vadd.f32 %v1766, %v2103
  %v2248 = vadd.f32 %v1767, %v2105
  %v2249 = vadd.f32 %v1768, %v2108
  %v2250 = vadd.f32 %v1769, %v2110
  %v2251 = vadd.f32 %v1770, %v2113
  %v2252 = vadd.f32 %v1771, %v2115
  %v2253 = vadd.f32 %v1772, %v2118
  %v2254 = vadd.f32 %v1773, %v2120
  %v2255 = vadd.f32 %v1774, %v2123
  %v2256 = vadd.f32 %v1775, %v2125
  %v2257 = vadd.f32 %v1776, %v2128
  %v2258 = vadd.f32 %v1777, %v2130
  %v2259 = vperm.slane %v138, 0
  %v2260 = vmul.f32 %v34, %v2259
  %v2261 = vmul.f32 %v35, %v2259
  %v2262 = vmul.f32 %v37, %v2259
  %v2263 = vmul.f32 %v38, %v2259
  %v2264 = vmul.f32 %v40, %v2259
  %v2265 = vmul.f32 %v41, %v2259
  %v2266 = vmul.f32 %v43, %v2259
  %v2267 = vmul.f32 %v44, %v2259
  %v2268 = vmul.f32 %v46, %v2259
  %v2269 = vmul.f32 %v47, %v2259
  %v2270 = vmul.f32 %v49, %v2259
  %v2271 = vmul.f32 %v50, %v2259
  %v2272 = vmul.f32 %v52, %v2259
  %v2273 = vmul.f32 %v53, %v2259
  %v2274 = vmul.f32 %v55, %v2259
  %v2275 = vmul.f32 %v56, %v2259
  %v2276 = vmul.f32 %v58, %v2259
  %v2277 = vmul.f32 %v59, %v2259
  %v2278 = vmul.f32 %v61, %v2259
  %v2279 = vmul.f32 %v62, %v2259
  %v2280 = vmul.f32 %v64, %v2259
  %v2281 = vmul.f32 %v65, %v2259
  %v2282 = vmul.f32 %v67, %v2259
  %v2283 = vmul.f32 %v68, %v2259
  %v2284 = vmul.f32 %v70, %v2259
  %v2285 = vmul.f32 %v71, %v2259
  %v2286 = vmul.f32 %v73, %v2259
  %v2287 = vmul.f32 %v74, %v2259
  %v2288 = vmul.f32 %v76, %v2259
  %v2289 = vmul.f32 %v77, %v2259
  %v2290 = vmul.f32 %v79, %v2259
  %v2291 = vmul.f32 %v80, %v2259
  %v2292 = vmul.f32 %v88, %v2259
  %v2293 = vmul.f32 %v89, %v2259
  %v2294 = vmul.f32 %v91, %v2259
  %v2295 = vmul.f32 %v92, %v2259
  %v2296 = vmul.f32 %v94, %v2259
  %v2297 = vmul.f32 %v95, %v2259
  %v2298 = vmul.f32 %v97, %v2259
  %v2299 = vmul.f32 %v98, %v2259
  %v2300 = vmul.f32 %v100, %v2259
  %v2301 = vmul.f32 %v101, %v2259
  %v2302 = vmul.f32 %v103, %v2259
  %v2303 = vmul.f32 %v104, %v2259
  %v2304 = vmul.f32 %v106, %v2259
  %v2305 = vmul.f32 %v107, %v2259
  %v2306 = vmul.f32 %v109, %v2259
  %v2307 = vmul.f32 %v110, %v2259
  %v2308 = vmul.f32 %v112, %v2259
  %v2309 = vmul.f32 %v113, %v2259
  %v2310 = vmul.f32 %v115, %v2259
  %v2311 = vmul.f32 %v116, %v2259
  %v2312 = vmul.f32 %v118, %v2259
  %v2313 = vmul.f32 %v119, %v2259
  %v2314 = vmul.f32 %v121, %v2259
  %v2315 = vmul.f32 %v122, %v2259
  %v2316 = vmul.f32 %v124, %v2259
  %v2317 = vmul.f32 %v125, %v2259
  %v2318 = vmul.f32 %v127, %v2259
  %v2319 = vmul.f32 %v128, %v2259
  %v2320 = vmul.f32 %v130, %v2259
  %v2321 = vmul.f32 %v131, %v2259
  %v2322 = vmul.f32 %v133, %v2259
  %v2323 = vmul.f32 %v134, %v2259
  %v2324 = vadd.f32 %v2195, %v2260
  %v2325 = vadd.f32 %v2196, %v2261
  %v2326 = vadd.f32 %v2197, %v2262
  %v2327 = vadd.f32 %v2198, %v2263
  %v2328 = vadd.f32 %v2199, %v2264
  %v2329 = vadd.f32 %v2200, %v2265
  %v2330 = vadd.f32 %v2201, %v2266
  %v2331 = vadd.f32 %v2202, %v2267
  %v2332 = vadd.f32 %v2203, %v2268
  %v2333 = vadd.f32 %v2204, %v2269
  %v2334 = vadd.f32 %v2205, %v2270
  %v2335 = vadd.f32 %v2206, %v2271
  %v2336 = vadd.f32 %v2207, %v2272
  %v2337 = vadd.f32 %v2208, %v2273
  %v2338 = vadd.f32 %v2209, %v2274
  %v2339 = vadd.f32 %v2210, %v2275
  %v2340 = vadd.f32 %v2211, %v2276
  %v2341 = vadd.f32 %v2212, %v2277
  %v2342 = vadd.f32 %v2213, %v2278
  %v2343 = vadd.f32 %v2214, %v2279
  %v2344 = vadd.f32 %v2215, %v2280
  %v2345 = vadd.f32 %v2216, %v2281
  %v2346 = vadd.f32 %v2217, %v2282
  %v2347 = vadd.f32 %v2218, %v2283
  %v2348 = vadd.f32 %v2219, %v2284
  %v2349 = vadd.f32 %v2220, %v2285
  %v2350 = vadd.f32 %v2221, %v2286
  %v2351 = vadd.f32 %v2222, %v2287
  %v2352 = vadd.f32 %v2223, %v2288
  %v2353 = vadd.f32 %v2224, %v2289
  %v2354 = vadd.f32 %v2225, %v2290
  %v2355 = vadd.f32 %v2226, %v2291
  %v2356 = vadd.f32 %v2227, %v2292
  %v2357 = vadd.f32 %v2228, %v2293
  %v2358 = vadd.f32 %v2229, %v2294
  %v2359 = vadd.f32 %v2230, %v2295
  %v2360 = vadd.f32 %v2231, %v2296
  %v2361 = vadd.f32 %v2232, %v2297
  %v2362 = vadd.f32 %v2233, %v2298
  %v2363 = vadd.f32 %v2234, %v2299
  %v2364 = vadd.f32 %v2235, %v2300
  %v2365 = vadd.f32 %v2236, %v2301
  %v2366 = vadd.f32 %v2237, %v2302
  %v2367 = vadd.f32 %v2238, %v2303
  %v2368 = vadd.f32 %v2239, %v2304
  %v2369 = vadd.f32 %v2240, %v2305
  %v2370 = vadd.f32 %v2241, %v2306
  %v2371 = vadd.f32 %v2242, %v2307
  %v2372 = vadd.f32 %v2243, %v2308
  %v2373 = vadd.f32 %v2244, %v2309
  %v2374 = vadd.f32 %v2245, %v2310
  %v2375 = vadd.f32 %v2246, %v2311
  %v2376 = vadd.f32 %v2247, %v2312
  %v2377 = vadd.f32 %v2248, %v2313
  %v2378 = vadd.f32 %v2249, %v2314
  %v2379 = vadd.f32 %v2250, %v2315
  %v2380 = vadd.f32 %v2251, %v2316
  %v2381 = vadd.f32 %v2252, %v2317
  %v2382 = vadd.f32 %v2253, %v2318
  %v2383 = vadd.f32 %v2254, %v2319
  %v2384 = vadd.f32 %v2255, %v2320
  %v2385 = vadd.f32 %v2256, %v2321
  %v2386 = vadd.f32 %v2257, %v2322
  %v2387 = vadd.f32 %v2258, %v2323
  %v2388 = vperm.slane %v138, 1
  %v2389 = vmul.f32 %v34, %v2388
  %v2390 = vmul.f32 %v35, %v2388
  %v2391 = vmul.f32 %v36, %v2388
  %v2392 = vmul.f32 %v37, %v2388
  %v2393 = vmul.f32 %v38, %v2388
  %v2394 = vmul.f32 %v39, %v2388
  %v2395 = vmul.f32 %v40, %v2388
  %v2396 = vmul.f32 %v41, %v2388
  %v2397 = vmul.f32 %v42, %v2388
  %v2398 = vmul.f32 %v43, %v2388
  %v2399 = vmul.f32 %v44, %v2388
  %v2400 = vmul.f32 %v45, %v2388
  %v2401 = vmul.f32 %v46, %v2388
  %v2402 = vmul.f32 %v47, %v2388
  %v2403 = vmul.f32 %v48, %v2388
  %v2404 = vmul.f32 %v49, %v2388
  %v2405 = vmul.f32 %v50, %v2388
  %v2406 = vmul.f32 %v51, %v2388
  %v2407 = vmul.f32 %v52, %v2388
  %v2408 = vmul.f32 %v53, %v2388
  %v2409 = vmul.f32 %v54, %v2388
  %v2410 = vmul.f32 %v55, %v2388
  %v2411 = vmul.f32 %v56, %v2388
  %v2412 = vmul.f32 %v57, %v2388
  %v2413 = vmul.f32 %v58, %v2388
  %v2414 = vmul.f32 %v59, %v2388
  %v2415 = vmul.f32 %v60, %v2388
  %v2416 = vmul.f32 %v61, %v2388
  %v2417 = vmul.f32 %v62, %v2388
  %v2418 = vmul.f32 %v63, %v2388
  %v2419 = vmul.f32 %v64, %v2388
  %v2420 = vmul.f32 %v65, %v2388
  %v2421 = vmul.f32 %v66, %v2388
  %v2422 = vmul.f32 %v67, %v2388
  %v2423 = vmul.f32 %v68, %v2388
  %v2424 = vmul.f32 %v69, %v2388
  %v2425 = vmul.f32 %v70, %v2388
  %v2426 = vmul.f32 %v71, %v2388
  %v2427 = vmul.f32 %v72, %v2388
  %v2428 = vmul.f32 %v73, %v2388
  %v2429 = vmul.f32 %v74, %v2388
  %v2430 = vmul.f32 %v75, %v2388
  %v2431 = vmul.f32 %v76, %v2388
  %v2432 = vmul.f32 %v77, %v2388
  %v2433 = vmul.f32 %v78, %v2388
  %v2434 = vmul.f32 %v79, %v2388
  %v2435 = vmul.f32 %v80, %v2388
  %v2436 = vmul.f32 %v81, %v2388
  %v2437 = vmul.f32 %v88, %v2388
  %v2438 = vmul.f32 %v89, %v2388
  %v2439 = vmul.f32 %v90, %v2388
  %v2440 = vmul.f32 %v91, %v2388
  %v2441 = vmul.f32 %v92, %v2388
  %v2442 = vmul.f32 %v93, %v2388
  %v2443 = vmul.f32 %v94, %v2388
  %v2444 = vmul.f32 %v95, %v2388
  %v2445 = vmul.f32 %v96, %v2388
  %v2446 = vmul.f32 %v97, %v2388
  %v2447 = vmul.f32 %v98, %v2388
  %v2448 = vmul.f32 %v99, %v2388
  %v2449 = vmul.f32 %v100, %v2388
  %v2450 = vmul.f32 %v101, %v2388
  %v2451 = vmul.f32 %v102, %v2388
  %v2452 = vmul.f32 %v103, %v2388
  %v2453 = vmul.f32 %v104, %v2388
  %v2454 = vmul.f32 %v105, %v2388
  %v2455 = vmul.f32 %v106, %v2388
  %v2456 = vmul.f32 %v107, %v2388
  %v2457 = vmul.f32 %v108, %v2388
  %v2458 = vmul.f32 %v109, %v2388
  %v2459 = vmul.f32 %v110, %v2388
  %v2460 = vmul.f32 %v111, %v2388
  %v2461 = vmul.f32 %v112, %v2388
  %v2462 = vmul.f32 %v113, %v2388
  %v2463 = vmul.f32 %v114, %v2388
  %v2464 = vmul.f32 %v115, %v2388
  %v2465 = vmul.f32 %v116, %v2388
  %v2466 = vmul.f32 %v117, %v2388
  %v2467 = vmul.f32 %v118, %v2388
  %v2468 = vmul.f32 %v119, %v2388
  %v2469 = vmul.f32 %v120, %v2388
  %v2470 = vmul.f32 %v121, %v2388
  %v2471 = vmul.f32 %v122, %v2388
  %v2472 = vmul.f32 %v123, %v2388
  %v2473 = vmul.f32 %v124, %v2388
  %v2474 = vmul.f32 %v125, %v2388
  %v2475 = vmul.f32 %v126, %v2388
  %v2476 = vmul.f32 %v127, %v2388
  %v2477 = vmul.f32 %v128, %v2388
  %v2478 = vmul.f32 %v129, %v2388
  %v2479 = vmul.f32 %v130, %v2388
  %v2480 = vmul.f32 %v131, %v2388
  %v2481 = vmul.f32 %v132, %v2388
  %v2482 = vmul.f32 %v133, %v2388
  %v2483 = vmul.f32 %v134, %v2388
  %v2484 = vmul.f32 %v135, %v2388
  %v2581 = vrot.slane %v2389, 1
  %v2582 = vrot.slane %v2390, 1
  %v2583 = vsel %vm397, %v2581, %v2582
  %v2584 = vrot.slane %v2391, 1
  %v2585 = vsel %vm397, %v2582, %v2584
  %v2586 = vrot.slane %v2392, 1
  %v2587 = vrot.slane %v2393, 1
  %v2588 = vsel %vm397, %v2586, %v2587
  %v2589 = vrot.slane %v2394, 1
  %v2590 = vsel %vm397, %v2587, %v2589
  %v2591 = vrot.slane %v2395, 1
  %v2592 = vrot.slane %v2396, 1
  %v2593 = vsel %vm397, %v2591, %v2592
  %v2594 = vrot.slane %v2397, 1
  %v2595 = vsel %vm397, %v2592, %v2594
  %v2596 = vrot.slane %v2398, 1
  %v2597 = vrot.slane %v2399, 1
  %v2598 = vsel %vm397, %v2596, %v2597
  %v2599 = vrot.slane %v2400, 1
  %v2600 = vsel %vm397, %v2597, %v2599
  %v2601 = vrot.slane %v2401, 1
  %v2602 = vrot.slane %v2402, 1
  %v2603 = vsel %vm397, %v2601, %v2602
  %v2604 = vrot.slane %v2403, 1
  %v2605 = vsel %vm397, %v2602, %v2604
  %v2606 = vrot.slane %v2404, 1
  %v2607 = vrot.slane %v2405, 1
  %v2608 = vsel %vm397, %v2606, %v2607
  %v2609 = vrot.slane %v2406, 1
  %v2610 = vsel %vm397, %v2607, %v2609
  %v2611 = vrot.slane %v2407, 1
  %v2612 = vrot.slane %v2408, 1
  %v2613 = vsel %vm397, %v2611, %v2612
  %v2614 = vrot.slane %v2409, 1
  %v2615 = vsel %vm397, %v2612, %v2614
  %v2616 = vrot.slane %v2410, 1
  %v2617 = vrot.slane %v2411, 1
  %v2618 = vsel %vm397, %v2616, %v2617
  %v2619 = vrot.slane %v2412, 1
  %v2620 = vsel %vm397, %v2617, %v2619
  %v2621 = vrot.slane %v2413, 1
  %v2622 = vrot.slane %v2414, 1
  %v2623 = vsel %vm397, %v2621, %v2622
  %v2624 = vrot.slane %v2415, 1
  %v2625 = vsel %vm397, %v2622, %v2624
  %v2626 = vrot.slane %v2416, 1
  %v2627 = vrot.slane %v2417, 1
  %v2628 = vsel %vm397, %v2626, %v2627
  %v2629 = vrot.slane %v2418, 1
  %v2630 = vsel %vm397, %v2627, %v2629
  %v2631 = vrot.slane %v2419, 1
  %v2632 = vrot.slane %v2420, 1
  %v2633 = vsel %vm397, %v2631, %v2632
  %v2634 = vrot.slane %v2421, 1
  %v2635 = vsel %vm397, %v2632, %v2634
  %v2636 = vrot.slane %v2422, 1
  %v2637 = vrot.slane %v2423, 1
  %v2638 = vsel %vm397, %v2636, %v2637
  %v2639 = vrot.slane %v2424, 1
  %v2640 = vsel %vm397, %v2637, %v2639
  %v2641 = vrot.slane %v2425, 1
  %v2642 = vrot.slane %v2426, 1
  %v2643 = vsel %vm397, %v2641, %v2642
  %v2644 = vrot.slane %v2427, 1
  %v2645 = vsel %vm397, %v2642, %v2644
  %v2646 = vrot.slane %v2428, 1
  %v2647 = vrot.slane %v2429, 1
  %v2648 = vsel %vm397, %v2646, %v2647
  %v2649 = vrot.slane %v2430, 1
  %v2650 = vsel %vm397, %v2647, %v2649
  %v2651 = vrot.slane %v2431, 1
  %v2652 = vrot.slane %v2432, 1
  %v2653 = vsel %vm397, %v2651, %v2652
  %v2654 = vrot.slane %v2433, 1
  %v2655 = vsel %vm397, %v2652, %v2654
  %v2656 = vrot.slane %v2434, 1
  %v2657 = vrot.slane %v2435, 1
  %v2658 = vsel %vm397, %v2656, %v2657
  %v2659 = vrot.slane %v2436, 1
  %v2660 = vsel %vm397, %v2657, %v2659
  %v2661 = vrot.slane %v2437, 1
  %v2662 = vrot.slane %v2438, 1
  %v2663 = vsel %vm397, %v2661, %v2662
  %v2664 = vrot.slane %v2439, 1
  %v2665 = vsel %vm397, %v2662, %v2664
  %v2666 = vrot.slane %v2440, 1
  %v2667 = vrot.slane %v2441, 1
  %v2668 = vsel %vm397, %v2666, %v2667
  %v2669 = vrot.slane %v2442, 1
  %v2670 = vsel %vm397, %v2667, %v2669
  %v2671 = vrot.slane %v2443, 1
  %v2672 = vrot.slane %v2444, 1
  %v2673 = vsel %vm397, %v2671, %v2672
  %v2674 = vrot.slane %v2445, 1
  %v2675 = vsel %vm397, %v2672, %v2674
  %v2676 = vrot.slane %v2446, 1
  %v2677 = vrot.slane %v2447, 1
  %v2678 = vsel %vm397, %v2676, %v2677
  %v2679 = vrot.slane %v2448, 1
  %v2680 = vsel %vm397, %v2677, %v2679
  %v2681 = vrot.slane %v2449, 1
  %v2682 = vrot.slane %v2450, 1
  %v2683 = vsel %vm397, %v2681, %v2682
  %v2684 = vrot.slane %v2451, 1
  %v2685 = vsel %vm397, %v2682, %v2684
  %v2686 = vrot.slane %v2452, 1
  %v2687 = vrot.slane %v2453, 1
  %v2688 = vsel %vm397, %v2686, %v2687
  %v2689 = vrot.slane %v2454, 1
  %v2690 = vsel %vm397, %v2687, %v2689
  %v2691 = vrot.slane %v2455, 1
  %v2692 = vrot.slane %v2456, 1
  %v2693 = vsel %vm397, %v2691, %v2692
  %v2694 = vrot.slane %v2457, 1
  %v2695 = vsel %vm397, %v2692, %v2694
  %v2696 = vrot.slane %v2458, 1
  %v2697 = vrot.slane %v2459, 1
  %v2698 = vsel %vm397, %v2696, %v2697
  %v2699 = vrot.slane %v2460, 1
  %v2700 = vsel %vm397, %v2697, %v2699
  %v2701 = vrot.slane %v2461, 1
  %v2702 = vrot.slane %v2462, 1
  %v2703 = vsel %vm397, %v2701, %v2702
  %v2704 = vrot.slane %v2463, 1
  %v2705 = vsel %vm397, %v2702, %v2704
  %v2706 = vrot.slane %v2464, 1
  %v2707 = vrot.slane %v2465, 1
  %v2708 = vsel %vm397, %v2706, %v2707
  %v2709 = vrot.slane %v2466, 1
  %v2710 = vsel %vm397, %v2707, %v2709
  %v2711 = vrot.slane %v2467, 1
  %v2712 = vrot.slane %v2468, 1
  %v2713 = vsel %vm397, %v2711, %v2712
  %v2714 = vrot.slane %v2469, 1
  %v2715 = vsel %vm397, %v2712, %v2714
  %v2716 = vrot.slane %v2470, 1
  %v2717 = vrot.slane %v2471, 1
  %v2718 = vsel %vm397, %v2716, %v2717
  %v2719 = vrot.slane %v2472, 1
  %v2720 = vsel %vm397, %v2717, %v2719
  %v2721 = vrot.slane %v2473, 1
  %v2722 = vrot.slane %v2474, 1
  %v2723 = vsel %vm397, %v2721, %v2722
  %v2724 = vrot.slane %v2475, 1
  %v2725 = vsel %vm397, %v2722, %v2724
  %v2726 = vrot.slane %v2476, 1
  %v2727 = vrot.slane %v2477, 1
  %v2728 = vsel %vm397, %v2726, %v2727
  %v2729 = vrot.slane %v2478, 1
  %v2730 = vsel %vm397, %v2727, %v2729
  %v2731 = vrot.slane %v2479, 1
  %v2732 = vrot.slane %v2480, 1
  %v2733 = vsel %vm397, %v2731, %v2732
  %v2734 = vrot.slane %v2481, 1
  %v2735 = vsel %vm397, %v2732, %v2734
  %v2736 = vrot.slane %v2482, 1
  %v2737 = vrot.slane %v2483, 1
  %v2738 = vsel %vm397, %v2736, %v2737
  %v2739 = vrot.slane %v2484, 1
  %v2740 = vsel %vm397, %v2737, %v2739
  %v2805 = vadd.f32 %v2324, %v2583
  %v2806 = vadd.f32 %v2325, %v2585
  %v2807 = vadd.f32 %v2326, %v2588
  %v2808 = vadd.f32 %v2327, %v2590
  %v2809 = vadd.f32 %v2328, %v2593
  %v2810 = vadd.f32 %v2329, %v2595
  %v2811 = vadd.f32 %v2330, %v2598
  %v2812 = vadd.f32 %v2331, %v2600
  %v2813 = vadd.f32 %v2332, %v2603
  %v2814 = vadd.f32 %v2333, %v2605
  %v2815 = vadd.f32 %v2334, %v2608
  %v2816 = vadd.f32 %v2335, %v2610
  %v2817 = vadd.f32 %v2336, %v2613
  %v2818 = vadd.f32 %v2337, %v2615
  %v2819 = vadd.f32 %v2338, %v2618
  %v2820 = vadd.f32 %v2339, %v2620
  %v2821 = vadd.f32 %v2340, %v2623
  %v2822 = vadd.f32 %v2341, %v2625
  %v2823 = vadd.f32 %v2342, %v2628
  %v2824 = vadd.f32 %v2343, %v2630
  %v2825 = vadd.f32 %v2344, %v2633
  %v2826 = vadd.f32 %v2345, %v2635
  %v2827 = vadd.f32 %v2346, %v2638
  %v2828 = vadd.f32 %v2347, %v2640
  %v2829 = vadd.f32 %v2348, %v2643
  %v2830 = vadd.f32 %v2349, %v2645
  %v2831 = vadd.f32 %v2350, %v2648
  %v2832 = vadd.f32 %v2351, %v2650
  %v2833 = vadd.f32 %v2352, %v2653
  %v2834 = vadd.f32 %v2353, %v2655
  %v2835 = vadd.f32 %v2354, %v2658
  %v2836 = vadd.f32 %v2355, %v2660
  %v2837 = vadd.f32 %v2356, %v2663
  %v2838 = vadd.f32 %v2357, %v2665
  %v2839 = vadd.f32 %v2358, %v2668
  %v2840 = vadd.f32 %v2359, %v2670
  %v2841 = vadd.f32 %v2360, %v2673
  %v2842 = vadd.f32 %v2361, %v2675
  %v2843 = vadd.f32 %v2362, %v2678
  %v2844 = vadd.f32 %v2363, %v2680
  %v2845 = vadd.f32 %v2364, %v2683
  %v2846 = vadd.f32 %v2365, %v2685
  %v2847 = vadd.f32 %v2366, %v2688
  %v2848 = vadd.f32 %v2367, %v2690
  %v2849 = vadd.f32 %v2368, %v2693
  %v2850 = vadd.f32 %v2369, %v2695
  %v2851 = vadd.f32 %v2370, %v2698
  %v2852 = vadd.f32 %v2371, %v2700
  %v2853 = vadd.f32 %v2372, %v2703
  %v2854 = vadd.f32 %v2373, %v2705
  %v2855 = vadd.f32 %v2374, %v2708
  %v2856 = vadd.f32 %v2375, %v2710
  %v2857 = vadd.f32 %v2376, %v2713
  %v2858 = vadd.f32 %v2377, %v2715
  %v2859 = vadd.f32 %v2378, %v2718
  %v2860 = vadd.f32 %v2379, %v2720
  %v2861 = vadd.f32 %v2380, %v2723
  %v2862 = vadd.f32 %v2381, %v2725
  %v2863 = vadd.f32 %v2382, %v2728
  %v2864 = vadd.f32 %v2383, %v2730
  %v2865 = vadd.f32 %v2384, %v2733
  %v2866 = vadd.f32 %v2385, %v2735
  %v2867 = vadd.f32 %v2386, %v2738
  %v2868 = vadd.f32 %v2387, %v2740
  %v2869 = vperm.slane %v138, 2
  %v2870 = vmul.f32 %v34, %v2869
  %v2871 = vmul.f32 %v35, %v2869
  %v2872 = vmul.f32 %v36, %v2869
  %v2873 = vmul.f32 %v37, %v2869
  %v2874 = vmul.f32 %v38, %v2869
  %v2875 = vmul.f32 %v39, %v2869
  %v2876 = vmul.f32 %v40, %v2869
  %v2877 = vmul.f32 %v41, %v2869
  %v2878 = vmul.f32 %v42, %v2869
  %v2879 = vmul.f32 %v43, %v2869
  %v2880 = vmul.f32 %v44, %v2869
  %v2881 = vmul.f32 %v45, %v2869
  %v2882 = vmul.f32 %v46, %v2869
  %v2883 = vmul.f32 %v47, %v2869
  %v2884 = vmul.f32 %v48, %v2869
  %v2885 = vmul.f32 %v49, %v2869
  %v2886 = vmul.f32 %v50, %v2869
  %v2887 = vmul.f32 %v51, %v2869
  %v2888 = vmul.f32 %v52, %v2869
  %v2889 = vmul.f32 %v53, %v2869
  %v2890 = vmul.f32 %v54, %v2869
  %v2891 = vmul.f32 %v55, %v2869
  %v2892 = vmul.f32 %v56, %v2869
  %v2893 = vmul.f32 %v57, %v2869
  %v2894 = vmul.f32 %v58, %v2869
  %v2895 = vmul.f32 %v59, %v2869
  %v2896 = vmul.f32 %v60, %v2869
  %v2897 = vmul.f32 %v61, %v2869
  %v2898 = vmul.f32 %v62, %v2869
  %v2899 = vmul.f32 %v63, %v2869
  %v2900 = vmul.f32 %v64, %v2869
  %v2901 = vmul.f32 %v65, %v2869
  %v2902 = vmul.f32 %v66, %v2869
  %v2903 = vmul.f32 %v67, %v2869
  %v2904 = vmul.f32 %v68, %v2869
  %v2905 = vmul.f32 %v69, %v2869
  %v2906 = vmul.f32 %v70, %v2869
  %v2907 = vmul.f32 %v71, %v2869
  %v2908 = vmul.f32 %v72, %v2869
  %v2909 = vmul.f32 %v73, %v2869
  %v2910 = vmul.f32 %v74, %v2869
  %v2911 = vmul.f32 %v75, %v2869
  %v2912 = vmul.f32 %v76, %v2869
  %v2913 = vmul.f32 %v77, %v2869
  %v2914 = vmul.f32 %v78, %v2869
  %v2915 = vmul.f32 %v79, %v2869
  %v2916 = vmul.f32 %v80, %v2869
  %v2917 = vmul.f32 %v81, %v2869
  %v2918 = vmul.f32 %v88, %v2869
  %v2919 = vmul.f32 %v89, %v2869
  %v2920 = vmul.f32 %v90, %v2869
  %v2921 = vmul.f32 %v91, %v2869
  %v2922 = vmul.f32 %v92, %v2869
  %v2923 = vmul.f32 %v93, %v2869
  %v2924 = vmul.f32 %v94, %v2869
  %v2925 = vmul.f32 %v95, %v2869
  %v2926 = vmul.f32 %v96, %v2869
  %v2927 = vmul.f32 %v97, %v2869
  %v2928 = vmul.f32 %v98, %v2869
  %v2929 = vmul.f32 %v99, %v2869
  %v2930 = vmul.f32 %v100, %v2869
  %v2931 = vmul.f32 %v101, %v2869
  %v2932 = vmul.f32 %v102, %v2869
  %v2933 = vmul.f32 %v103, %v2869
  %v2934 = vmul.f32 %v104, %v2869
  %v2935 = vmul.f32 %v105, %v2869
  %v2936 = vmul.f32 %v106, %v2869
  %v2937 = vmul.f32 %v107, %v2869
  %v2938 = vmul.f32 %v108, %v2869
  %v2939 = vmul.f32 %v109, %v2869
  %v2940 = vmul.f32 %v110, %v2869
  %v2941 = vmul.f32 %v111, %v2869
  %v2942 = vmul.f32 %v112, %v2869
  %v2943 = vmul.f32 %v113, %v2869
  %v2944 = vmul.f32 %v114, %v2869
  %v2945 = vmul.f32 %v115, %v2869
  %v2946 = vmul.f32 %v116, %v2869
  %v2947 = vmul.f32 %v117, %v2869
  %v2948 = vmul.f32 %v118, %v2869
  %v2949 = vmul.f32 %v119, %v2869
  %v2950 = vmul.f32 %v120, %v2869
  %v2951 = vmul.f32 %v121, %v2869
  %v2952 = vmul.f32 %v122, %v2869
  %v2953 = vmul.f32 %v123, %v2869
  %v2954 = vmul.f32 %v124, %v2869
  %v2955 = vmul.f32 %v125, %v2869
  %v2956 = vmul.f32 %v126, %v2869
  %v2957 = vmul.f32 %v127, %v2869
  %v2958 = vmul.f32 %v128, %v2869
  %v2959 = vmul.f32 %v129, %v2869
  %v2960 = vmul.f32 %v130, %v2869
  %v2961 = vmul.f32 %v131, %v2869
  %v2962 = vmul.f32 %v132, %v2869
  %v2963 = vmul.f32 %v133, %v2869
  %v2964 = vmul.f32 %v134, %v2869
  %v2965 = vmul.f32 %v135, %v2869
  %v3062 = vrot.slane %v2870, 2
  %v3063 = vrot.slane %v2871, 2
  %v3064 = vsel %vm879, %v3062, %v3063
  %v3065 = vrot.slane %v2872, 2
  %v3066 = vsel %vm879, %v3063, %v3065
  %v3067 = vrot.slane %v2873, 2
  %v3068 = vrot.slane %v2874, 2
  %v3069 = vsel %vm879, %v3067, %v3068
  %v3070 = vrot.slane %v2875, 2
  %v3071 = vsel %vm879, %v3068, %v3070
  %v3072 = vrot.slane %v2876, 2
  %v3073 = vrot.slane %v2877, 2
  %v3074 = vsel %vm879, %v3072, %v3073
  %v3075 = vrot.slane %v2878, 2
  %v3076 = vsel %vm879, %v3073, %v3075
  %v3077 = vrot.slane %v2879, 2
  %v3078 = vrot.slane %v2880, 2
  %v3079 = vsel %vm879, %v3077, %v3078
  %v3080 = vrot.slane %v2881, 2
  %v3081 = vsel %vm879, %v3078, %v3080
  %v3082 = vrot.slane %v2882, 2
  %v3083 = vrot.slane %v2883, 2
  %v3084 = vsel %vm879, %v3082, %v3083
  %v3085 = vrot.slane %v2884, 2
  %v3086 = vsel %vm879, %v3083, %v3085
  %v3087 = vrot.slane %v2885, 2
  %v3088 = vrot.slane %v2886, 2
  %v3089 = vsel %vm879, %v3087, %v3088
  %v3090 = vrot.slane %v2887, 2
  %v3091 = vsel %vm879, %v3088, %v3090
  %v3092 = vrot.slane %v2888, 2
  %v3093 = vrot.slane %v2889, 2
  %v3094 = vsel %vm879, %v3092, %v3093
  %v3095 = vrot.slane %v2890, 2
  %v3096 = vsel %vm879, %v3093, %v3095
  %v3097 = vrot.slane %v2891, 2
  %v3098 = vrot.slane %v2892, 2
  %v3099 = vsel %vm879, %v3097, %v3098
  %v3100 = vrot.slane %v2893, 2
  %v3101 = vsel %vm879, %v3098, %v3100
  %v3102 = vrot.slane %v2894, 2
  %v3103 = vrot.slane %v2895, 2
  %v3104 = vsel %vm879, %v3102, %v3103
  %v3105 = vrot.slane %v2896, 2
  %v3106 = vsel %vm879, %v3103, %v3105
  %v3107 = vrot.slane %v2897, 2
  %v3108 = vrot.slane %v2898, 2
  %v3109 = vsel %vm879, %v3107, %v3108
  %v3110 = vrot.slane %v2899, 2
  %v3111 = vsel %vm879, %v3108, %v3110
  %v3112 = vrot.slane %v2900, 2
  %v3113 = vrot.slane %v2901, 2
  %v3114 = vsel %vm879, %v3112, %v3113
  %v3115 = vrot.slane %v2902, 2
  %v3116 = vsel %vm879, %v3113, %v3115
  %v3117 = vrot.slane %v2903, 2
  %v3118 = vrot.slane %v2904, 2
  %v3119 = vsel %vm879, %v3117, %v3118
  %v3120 = vrot.slane %v2905, 2
  %v3121 = vsel %vm879, %v3118, %v3120
  %v3122 = vrot.slane %v2906, 2
  %v3123 = vrot.slane %v2907, 2
  %v3124 = vsel %vm879, %v3122, %v3123
  %v3125 = vrot.slane %v2908, 2
  %v3126 = vsel %vm879, %v3123, %v3125
  %v3127 = vrot.slane %v2909, 2
  %v3128 = vrot.slane %v2910, 2
  %v3129 = vsel %vm879, %v3127, %v3128
  %v3130 = vrot.slane %v2911, 2
  %v3131 = vsel %vm879, %v3128, %v3130
  %v3132 = vrot.slane %v2912, 2
  %v3133 = vrot.slane %v2913, 2
  %v3134 = vsel %vm879, %v3132, %v3133
  %v3135 = vrot.slane %v2914, 2
  %v3136 = vsel %vm879, %v3133, %v3135
  %v3137 = vrot.slane %v2915, 2
  %v3138 = vrot.slane %v2916, 2
  %v3139 = vsel %vm879, %v3137, %v3138
  %v3140 = vrot.slane %v2917, 2
  %v3141 = vsel %vm879, %v3138, %v3140
  %v3142 = vrot.slane %v2918, 2
  %v3143 = vrot.slane %v2919, 2
  %v3144 = vsel %vm879, %v3142, %v3143
  %v3145 = vrot.slane %v2920, 2
  %v3146 = vsel %vm879, %v3143, %v3145
  %v3147 = vrot.slane %v2921, 2
  %v3148 = vrot.slane %v2922, 2
  %v3149 = vsel %vm879, %v3147, %v3148
  %v3150 = vrot.slane %v2923, 2
  %v3151 = vsel %vm879, %v3148, %v3150
  %v3152 = vrot.slane %v2924, 2
  %v3153 = vrot.slane %v2925, 2
  %v3154 = vsel %vm879, %v3152, %v3153
  %v3155 = vrot.slane %v2926, 2
  %v3156 = vsel %vm879, %v3153, %v3155
  %v3157 = vrot.slane %v2927, 2
  %v3158 = vrot.slane %v2928, 2
  %v3159 = vsel %vm879, %v3157, %v3158
  %v3160 = vrot.slane %v2929, 2
  %v3161 = vsel %vm879, %v3158, %v3160
  %v3162 = vrot.slane %v2930, 2
  %v3163 = vrot.slane %v2931, 2
  %v3164 = vsel %vm879, %v3162, %v3163
  %v3165 = vrot.slane %v2932, 2
  %v3166 = vsel %vm879, %v3163, %v3165
  %v3167 = vrot.slane %v2933, 2
  %v3168 = vrot.slane %v2934, 2
  %v3169 = vsel %vm879, %v3167, %v3168
  %v3170 = vrot.slane %v2935, 2
  %v3171 = vsel %vm879, %v3168, %v3170
  %v3172 = vrot.slane %v2936, 2
  %v3173 = vrot.slane %v2937, 2
  %v3174 = vsel %vm879, %v3172, %v3173
  %v3175 = vrot.slane %v2938, 2
  %v3176 = vsel %vm879, %v3173, %v3175
  %v3177 = vrot.slane %v2939, 2
  %v3178 = vrot.slane %v2940, 2
  %v3179 = vsel %vm879, %v3177, %v3178
  %v3180 = vrot.slane %v2941, 2
  %v3181 = vsel %vm879, %v3178, %v3180
  %v3182 = vrot.slane %v2942, 2
  %v3183 = vrot.slane %v2943, 2
  %v3184 = vsel %vm879, %v3182, %v3183
  %v3185 = vrot.slane %v2944, 2
  %v3186 = vsel %vm879, %v3183, %v3185
  %v3187 = vrot.slane %v2945, 2
  %v3188 = vrot.slane %v2946, 2
  %v3189 = vsel %vm879, %v3187, %v3188
  %v3190 = vrot.slane %v2947, 2
  %v3191 = vsel %vm879, %v3188, %v3190
  %v3192 = vrot.slane %v2948, 2
  %v3193 = vrot.slane %v2949, 2
  %v3194 = vsel %vm879, %v3192, %v3193
  %v3195 = vrot.slane %v2950, 2
  %v3196 = vsel %vm879, %v3193, %v3195
  %v3197 = vrot.slane %v2951, 2
  %v3198 = vrot.slane %v2952, 2
  %v3199 = vsel %vm879, %v3197, %v3198
  %v3200 = vrot.slane %v2953, 2
  %v3201 = vsel %vm879, %v3198, %v3200
  %v3202 = vrot.slane %v2954, 2
  %v3203 = vrot.slane %v2955, 2
  %v3204 = vsel %vm879, %v3202, %v3203
  %v3205 = vrot.slane %v2956, 2
  %v3206 = vsel %vm879, %v3203, %v3205
  %v3207 = vrot.slane %v2957, 2
  %v3208 = vrot.slane %v2958, 2
  %v3209 = vsel %vm879, %v3207, %v3208
  %v3210 = vrot.slane %v2959, 2
  %v3211 = vsel %vm879, %v3208, %v3210
  %v3212 = vrot.slane %v2960, 2
  %v3213 = vrot.slane %v2961, 2
  %v3214 = vsel %vm879, %v3212, %v3213
  %v3215 = vrot.slane %v2962, 2
  %v3216 = vsel %vm879, %v3213, %v3215
  %v3217 = vrot.slane %v2963, 2
  %v3218 = vrot.slane %v2964, 2
  %v3219 = vsel %vm879, %v3217, %v3218
  %v3220 = vrot.slane %v2965, 2
  %v3221 = vsel %vm879, %v3218, %v3220
  %v3286 = vadd.f32 %v2805, %v3064
  %v3287 = vadd.f32 %v2806, %v3066
  %v3288 = vadd.f32 %v2807, %v3069
  %v3289 = vadd.f32 %v2808, %v3071
  %v3290 = vadd.f32 %v2809, %v3074
  %v3291 = vadd.f32 %v2810, %v3076
  %v3292 = vadd.f32 %v2811, %v3079
  %v3293 = vadd.f32 %v2812, %v3081
  %v3294 = vadd.f32 %v2813, %v3084
  %v3295 = vadd.f32 %v2814, %v3086
  %v3296 = vadd.f32 %v2815, %v3089
  %v3297 = vadd.f32 %v2816, %v3091
  %v3298 = vadd.f32 %v2817, %v3094
  %v3299 = vadd.f32 %v2818, %v3096
  %v3300 = vadd.f32 %v2819, %v3099
  %v3301 = vadd.f32 %v2820, %v3101
  %v3302 = vadd.f32 %v2821, %v3104
  %v3303 = vadd.f32 %v2822, %v3106
  %v3304 = vadd.f32 %v2823, %v3109
  %v3305 = vadd.f32 %v2824, %v3111
  %v3306 = vadd.f32 %v2825, %v3114
  %v3307 = vadd.f32 %v2826, %v3116
  %v3308 = vadd.f32 %v2827, %v3119
  %v3309 = vadd.f32 %v2828, %v3121
  %v3310 = vadd.f32 %v2829, %v3124
  %v3311 = vadd.f32 %v2830, %v3126
  %v3312 = vadd.f32 %v2831, %v3129
  %v3313 = vadd.f32 %v2832, %v3131
  %v3314 = vadd.f32 %v2833, %v3134
  %v3315 = vadd.f32 %v2834, %v3136
  %v3316 = vadd.f32 %v2835, %v3139
  %v3317 = vadd.f32 %v2836, %v3141
  %v3318 = vadd.f32 %v2837, %v3144
  %v3319 = vadd.f32 %v2838, %v3146
  %v3320 = vadd.f32 %v2839, %v3149
  %v3321 = vadd.f32 %v2840, %v3151
  %v3322 = vadd.f32 %v2841, %v3154
  %v3323 = vadd.f32 %v2842, %v3156
  %v3324 = vadd.f32 %v2843, %v3159
  %v3325 = vadd.f32 %v2844, %v3161
  %v3326 = vadd.f32 %v2845, %v3164
  %v3327 = vadd.f32 %v2846, %v3166
  %v3328 = vadd.f32 %v2847, %v3169
  %v3329 = vadd.f32 %v2848, %v3171
  %v3330 = vadd.f32 %v2849, %v3174
  %v3331 = vadd.f32 %v2850, %v3176
  %v3332 = vadd.f32 %v2851, %v3179
  %v3333 = vadd.f32 %v2852, %v3181
  %v3334 = vadd.f32 %v2853, %v3184
  %v3335 = vadd.f32 %v2854, %v3186
  %v3336 = vadd.f32 %v2855, %v3189
  %v3337 = vadd.f32 %v2856, %v3191
  %v3338 = vadd.f32 %v2857, %v3194
  %v3339 = vadd.f32 %v2858, %v3196
  %v3340 = vadd.f32 %v2859, %v3199
  %v3341 = vadd.f32 %v2860, %v3201
  %v3342 = vadd.f32 %v2861, %v3204
  %v3343 = vadd.f32 %v2862, %v3206
  %v3344 = vadd.f32 %v2863, %v3209
  %v3345 = vadd.f32 %v2864, %v3211
  %v3346 = vadd.f32 %v2865, %v3214
  %v3347 = vadd.f32 %v2866, %v3216
  %v3348 = vadd.f32 %v2867, %v3219
  %v3349 = vadd.f32 %v2868, %v3221
  %vm3350 = vcmask 31744
  %v3351 = vsel %vm3350, %v3286, 0.0
  %3352 = vadd.xlane.f32.xlu0 %v3351
  %v3353 = vpop.xlane.xlu0 %3352
  %v3354 = vsel %vm3350, %v3287, 0.0
  %3355 = vadd.xlane.f32.xlu0 %v3354
  %v3356 = vpop.xlane.xlu0 %3355
  %v3357 = vsel %vm3350, %v3288, 0.0
  %3358 = vadd.xlane.f32.xlu0 %v3357
  %v3359 = vpop.xlane.xlu0 %3358
  %v3360 = vsel %vm3350, %v3289, 0.0
  %3361 = vadd.xlane.f32.xlu0 %v3360
  %v3362 = vpop.xlane.xlu0 %3361
  %v3363 = vsel %vm3350, %v3290, 0.0
  %3364 = vadd.xlane.f32.xlu0 %v3363
  %v3365 = vpop.xlane.xlu0 %3364
  %v3366 = vsel %vm3350, %v3291, 0.0
  %3367 = vadd.xlane.f32.xlu0 %v3366
  %v3368 = vpop.xlane.xlu0 %3367
  %v3369 = vsel %vm3350, %v3292, 0.0
  %3370 = vadd.xlane.f32.xlu0 %v3369
  %v3371 = vpop.xlane.xlu0 %3370
  %v3372 = vsel %vm3350, %v3293, 0.0
  %3373 = vadd.xlane.f32.xlu0 %v3372
  %v3374 = vpop.xlane.xlu0 %3373
  %v3375 = vsel %vm3350, %v3294, 0.0
  %3376 = vadd.xlane.f32.xlu0 %v3375
  %v3377 = vpop.xlane.xlu0 %3376
  %v3378 = vsel %vm3350, %v3295, 0.0
  %3379 = vadd.xlane.f32.xlu0 %v3378
  %v3380 = vpop.xlane.xlu0 %3379
  %v3381 = vsel %vm3350, %v3296, 0.0
  %3382 = vadd.xlane.f32.xlu0 %v3381
  %v3383 = vpop.xlane.xlu0 %3382
  %v3384 = vsel %vm3350, %v3297, 0.0
  %3385 = vadd.xlane.f32.xlu0 %v3384
  %v3386 = vpop.xlane.xlu0 %3385
  %v3387 = vsel %vm3350, %v3298, 0.0
  %3388 = vadd.xlane.f32.xlu0 %v3387
  %v3389 = vpop.xlane.xlu0 %3388
  %v3390 = vsel %vm3350, %v3299, 0.0
  %3391 = vadd.xlane.f32.xlu0 %v3390
  %v3392 = vpop.xlane.xlu0 %3391
  %v3393 = vsel %vm3350, %v3300, 0.0
  %3394 = vadd.xlane.f32.xlu0 %v3393
  %v3395 = vpop.xlane.xlu0 %3394
  %v3396 = vsel %vm3350, %v3301, 0.0
  %3397 = vadd.xlane.f32.xlu0 %v3396
  %v3398 = vpop.xlane.xlu0 %3397
  %v3399 = vsel %vm3350, %v3302, 0.0
  %3400 = vadd.xlane.f32.xlu0 %v3399
  %v3401 = vpop.xlane.xlu0 %3400
  %v3402 = vsel %vm3350, %v3303, 0.0
  %3403 = vadd.xlane.f32.xlu0 %v3402
  %v3404 = vpop.xlane.xlu0 %3403
  %v3405 = vsel %vm3350, %v3304, 0.0
  %3406 = vadd.xlane.f32.xlu0 %v3405
  %v3407 = vpop.xlane.xlu0 %3406
  %v3408 = vsel %vm3350, %v3305, 0.0
  %3409 = vadd.xlane.f32.xlu0 %v3408
  %v3410 = vpop.xlane.xlu0 %3409
  %v3411 = vsel %vm3350, %v3306, 0.0
  %3412 = vadd.xlane.f32.xlu0 %v3411
  %v3413 = vpop.xlane.xlu0 %3412
  %v3414 = vsel %vm3350, %v3307, 0.0
  %3415 = vadd.xlane.f32.xlu0 %v3414
  %v3416 = vpop.xlane.xlu0 %3415
  %v3417 = vsel %vm3350, %v3308, 0.0
  %3418 = vadd.xlane.f32.xlu0 %v3417
  %v3419 = vpop.xlane.xlu0 %3418
  %v3420 = vsel %vm3350, %v3309, 0.0
  %3421 = vadd.xlane.f32.xlu0 %v3420
  %v3422 = vpop.xlane.xlu0 %3421
  %v3423 = vsel %vm3350, %v3310, 0.0
  %3424 = vadd.xlane.f32.xlu0 %v3423
  %v3425 = vpop.xlane.xlu0 %3424
  %v3426 = vsel %vm3350, %v3311, 0.0
  %3427 = vadd.xlane.f32.xlu0 %v3426
  %v3428 = vpop.xlane.xlu0 %3427
  %v3429 = vsel %vm3350, %v3312, 0.0
  %3430 = vadd.xlane.f32.xlu0 %v3429
  %v3431 = vpop.xlane.xlu0 %3430
  %v3432 = vsel %vm3350, %v3313, 0.0
  %3433 = vadd.xlane.f32.xlu0 %v3432
  %v3434 = vpop.xlane.xlu0 %3433
  %v3435 = vsel %vm3350, %v3314, 0.0
  %3436 = vadd.xlane.f32.xlu0 %v3435
  %v3437 = vpop.xlane.xlu0 %3436
  %v3438 = vsel %vm3350, %v3315, 0.0
  %3439 = vadd.xlane.f32.xlu0 %v3438
  %v3440 = vpop.xlane.xlu0 %3439
  %v3441 = vsel %vm3350, %v3316, 0.0
  %3442 = vadd.xlane.f32.xlu0 %v3441
  %v3443 = vpop.xlane.xlu0 %3442
  %v3444 = vsel %vm3350, %v3317, 0.0
  %3445 = vadd.xlane.f32.xlu0 %v3444
  %v3446 = vpop.xlane.xlu0 %3445
  %v3447 = vsel %vm3350, %v3318, 0.0
  %3448 = vadd.xlane.f32.xlu0 %v3447
  %v3449 = vpop.xlane.xlu0 %3448
  %v3450 = vsel %vm3350, %v3319, 0.0
  %3451 = vadd.xlane.f32.xlu0 %v3450
  %v3452 = vpop.xlane.xlu0 %3451
  %v3453 = vsel %vm3350, %v3320, 0.0
  %3454 = vadd.xlane.f32.xlu0 %v3453
  %v3455 = vpop.xlane.xlu0 %3454
  %v3456 = vsel %vm3350, %v3321, 0.0
  %3457 = vadd.xlane.f32.xlu0 %v3456
  %v3458 = vpop.xlane.xlu0 %3457
  %v3459 = vsel %vm3350, %v3322, 0.0
  %3460 = vadd.xlane.f32.xlu0 %v3459
  %v3461 = vpop.xlane.xlu0 %3460
  %v3462 = vsel %vm3350, %v3323, 0.0
  %3463 = vadd.xlane.f32.xlu0 %v3462
  %v3464 = vpop.xlane.xlu0 %3463
  %v3465 = vsel %vm3350, %v3324, 0.0
  %3466 = vadd.xlane.f32.xlu0 %v3465
  %v3467 = vpop.xlane.xlu0 %3466
  %v3468 = vsel %vm3350, %v3325, 0.0
  %3469 = vadd.xlane.f32.xlu0 %v3468
  %v3470 = vpop.xlane.xlu0 %3469
  %v3471 = vsel %vm3350, %v3326, 0.0
  %3472 = vadd.xlane.f32.xlu0 %v3471
  %v3473 = vpop.xlane.xlu0 %3472
  %v3474 = vsel %vm3350, %v3327, 0.0
  %3475 = vadd.xlane.f32.xlu0 %v3474
  %v3476 = vpop.xlane.xlu0 %3475
  %v3477 = vsel %vm3350, %v3328, 0.0
  %3478 = vadd.xlane.f32.xlu0 %v3477
  %v3479 = vpop.xlane.xlu0 %3478
  %v3480 = vsel %vm3350, %v3329, 0.0
  %3481 = vadd.xlane.f32.xlu0 %v3480
  %v3482 = vpop.xlane.xlu0 %3481
  %v3483 = vsel %vm3350, %v3330, 0.0
  %3484 = vadd.xlane.f32.xlu0 %v3483
  %v3485 = vpop.xlane.xlu0 %3484
  %v3486 = vsel %vm3350, %v3331, 0.0
  %3487 = vadd.xlane.f32.xlu0 %v3486
  %v3488 = vpop.xlane.xlu0 %3487
  %v3489 = vsel %vm3350, %v3332, 0.0
  %3490 = vadd.xlane.f32.xlu0 %v3489
  %v3491 = vpop.xlane.xlu0 %3490
  %v3492 = vsel %vm3350, %v3333, 0.0
  %3493 = vadd.xlane.f32.xlu0 %v3492
  %v3494 = vpop.xlane.xlu0 %3493
  %v3495 = vsel %vm3350, %v3334, 0.0
  %3496 = vadd.xlane.f32.xlu0 %v3495
  %v3497 = vpop.xlane.xlu0 %3496
  %v3498 = vsel %vm3350, %v3335, 0.0
  %3499 = vadd.xlane.f32.xlu0 %v3498
  %v3500 = vpop.xlane.xlu0 %3499
  %v3501 = vsel %vm3350, %v3336, 0.0
  %3502 = vadd.xlane.f32.xlu0 %v3501
  %v3503 = vpop.xlane.xlu0 %3502
  %v3504 = vsel %vm3350, %v3337, 0.0
  %3505 = vadd.xlane.f32.xlu0 %v3504
  %v3506 = vpop.xlane.xlu0 %3505
  %v3507 = vsel %vm3350, %v3338, 0.0
  %3508 = vadd.xlane.f32.xlu0 %v3507
  %v3509 = vpop.xlane.xlu0 %3508
  %v3510 = vsel %vm3350, %v3339, 0.0
  %3511 = vadd.xlane.f32.xlu0 %v3510
  %v3512 = vpop.xlane.xlu0 %3511
  %v3513 = vsel %vm3350, %v3340, 0.0
  %3514 = vadd.xlane.f32.xlu0 %v3513
  %v3515 = vpop.xlane.xlu0 %3514
  %v3516 = vsel %vm3350, %v3341, 0.0
  %3517 = vadd.xlane.f32.xlu0 %v3516
  %v3518 = vpop.xlane.xlu0 %3517
  %v3519 = vsel %vm3350, %v3342, 0.0
  %3520 = vadd.xlane.f32.xlu0 %v3519
  %v3521 = vpop.xlane.xlu0 %3520
  %v3522 = vsel %vm3350, %v3343, 0.0
  %3523 = vadd.xlane.f32.xlu0 %v3522
  %v3524 = vpop.xlane.xlu0 %3523
  %v3525 = vsel %vm3350, %v3344, 0.0
  %3526 = vadd.xlane.f32.xlu0 %v3525
  %v3527 = vpop.xlane.xlu0 %3526
  %v3528 = vsel %vm3350, %v3345, 0.0
  %3529 = vadd.xlane.f32.xlu0 %v3528
  %v3530 = vpop.xlane.xlu0 %3529
  %v3531 = vsel %vm3350, %v3346, 0.0
  %3532 = vadd.xlane.f32.xlu0 %v3531
  %v3533 = vpop.xlane.xlu0 %3532
  %v3534 = vsel %vm3350, %v3347, 0.0
  %3535 = vadd.xlane.f32.xlu0 %v3534
  %v3536 = vpop.xlane.xlu0 %3535
  %v3537 = vsel %vm3350, %v3348, 0.0
  %3538 = vadd.xlane.f32.xlu0 %v3537
  %v3539 = vpop.xlane.xlu0 %3538
  %v3540 = vsel %vm3350, %v3349, 0.0
  %3541 = vadd.xlane.f32.xlu0 %v3540
  %v3542 = vpop.xlane.xlu0 %3541
  %v3543 = vld [vmem:[#allocation3] sm:$0x1]
  %v3545 = vperm.slane %v3543, 0
  %v3547 = vadd.f32 %v3353, %v3545
  %v3548 = vadd.f32 %v3356, %v3545
  %v3549 = vadd.f32 %v3359, %v3545
  %v3550 = vadd.f32 %v3362, %v3545
  %v3551 = vadd.f32 %v3365, %v3545
  %v3552 = vadd.f32 %v3368, %v3545
  %v3553 = vadd.f32 %v3371, %v3545
  %v3554 = vadd.f32 %v3374, %v3545
  %v3555 = vadd.f32 %v3377, %v3545
  %v3556 = vadd.f32 %v3380, %v3545
  %v3557 = vadd.f32 %v3383, %v3545
  %v3558 = vadd.f32 %v3386, %v3545
  %v3559 = vadd.f32 %v3389, %v3545
  %v3560 = vadd.f32 %v3392, %v3545
  %v3561 = vadd.f32 %v3395, %v3545
  %v3562 = vadd.f32 %v3398, %v3545
  %v3563 = vadd.f32 %v3401, %v3545
  %v3564 = vadd.f32 %v3404, %v3545
  %v3565 = vadd.f32 %v3407, %v3545
  %v3566 = vadd.f32 %v3410, %v3545
  %v3567 = vadd.f32 %v3413, %v3545
  %v3568 = vadd.f32 %v3416, %v3545
  %v3569 = vadd.f32 %v3419, %v3545
  %v3570 = vadd.f32 %v3422, %v3545
  %v3571 = vadd.f32 %v3425, %v3545
  %v3572 = vadd.f32 %v3428, %v3545
  %v3573 = vadd.f32 %v3431, %v3545
  %v3574 = vadd.f32 %v3434, %v3545
  %v3575 = vadd.f32 %v3437, %v3545
  %v3576 = vadd.f32 %v3440, %v3545
  %v3577 = vadd.f32 %v3443, %v3545
  %v3578 = vadd.f32 %v3446, %v3545
  %v3579 = vadd.f32 %v3449, %v3545
  %v3580 = vadd.f32 %v3452, %v3545
  %v3581 = vadd.f32 %v3455, %v3545
  %v3582 = vadd.f32 %v3458, %v3545
  %v3583 = vadd.f32 %v3461, %v3545
  %v3584 = vadd.f32 %v3464, %v3545
  %v3585 = vadd.f32 %v3467, %v3545
  %v3586 = vadd.f32 %v3470, %v3545
  %v3587 = vadd.f32 %v3473, %v3545
  %v3588 = vadd.f32 %v3476, %v3545
  %v3589 = vadd.f32 %v3479, %v3545
  %v3590 = vadd.f32 %v3482, %v3545
  %v3591 = vadd.f32 %v3485, %v3545
  %v3592 = vadd.f32 %v3488, %v3545
  %v3593 = vadd.f32 %v3491, %v3545
  %v3594 = vadd.f32 %v3494, %v3545
  %v3595 = vadd.f32 %v3497, %v3545
  %v3596 = vadd.f32 %v3500, %v3545
  %v3597 = vadd.f32 %v3503, %v3545
  %v3598 = vadd.f32 %v3506, %v3545
  %v3599 = vadd.f32 %v3509, %v3545
  %v3600 = vadd.f32 %v3512, %v3545
  %v3601 = vadd.f32 %v3515, %v3545
  %v3602 = vadd.f32 %v3518, %v3545
  %v3603 = vadd.f32 %v3521, %v3545
  %v3604 = vadd.f32 %v3524, %v3545
  %v3605 = vadd.f32 %v3527, %v3545
  %v3606 = vadd.f32 %v3530, %v3545
  %v3607 = vadd.f32 %v3533, %v3545
  %v3608 = vadd.f32 %v3536, %v3545
  %v3609 = vadd.f32 %v3539, %v3545
  %v3610 = vadd.f32 %v3542, %v3545
  %v3611 = vmax.f32 %v3547, 0.0
  %v3612 = vmax.f32 %v3548, 0.0
  %v3613 = vmax.f32 %v3549, 0.0
  %v3614 = vmax.f32 %v3550, 0.0
  %v3615 = vmax.f32 %v3551, 0.0
  %v3616 = vmax.f32 %v3552, 0.0
  %v3617 = vmax.f32 %v3553, 0.0
  %v3618 = vmax.f32 %v3554, 0.0
  %v3619 = vmax.f32 %v3555, 0.0
  %v3620 = vmax.f32 %v3556, 0.0
  %v3621 = vmax.f32 %v3557, 0.0
  %v3622 = vmax.f32 %v3558, 0.0
  %v3623 = vmax.f32 %v3559, 0.0
  %v3624 = vmax.f32 %v3560, 0.0
  %v3625 = vmax.f32 %v3561, 0.0
  %v3626 = vmax.f32 %v3562, 0.0
  %v3627 = vmax.f32 %v3563, 0.0
  %v3628 = vmax.f32 %v3564, 0.0
  %v3629 = vmax.f32 %v3565, 0.0
  %v3630 = vmax.f32 %v3566, 0.0
  %v3631 = vmax.f32 %v3567, 0.0
  %v3632 = vmax.f32 %v3568, 0.0
  %v3633 = vmax.f32 %v3569, 0.0
  %v3634 = vmax.f32 %v3570, 0.0
  %v3635 = vmax.f32 %v3571, 0.0
  %v3636 = vmax.f32 %v3572, 0.0
  %v3637 = vmax.f32 %v3573, 0.0
  %v3638 = vmax.f32 %v3574, 0.0
  %v3639 = vmax.f32 %v3575, 0.0
  %v3640 = vmax.f32 %v3576, 0.0
  %v3641 = vmax.f32 %v3577, 0.0
  %v3642 = vmax.f32 %v3578, 0.0
  %v3643 = vmax.f32 %v3579, 0.0
  %v3644 = vmax.f32 %v3580, 0.0
  %v3645 = vmax.f32 %v3581, 0.0
  %v3646 = vmax.f32 %v3582, 0.0
  %v3647 = vmax.f32 %v3583, 0.0
  %v3648 = vmax.f32 %v3584, 0.0
  %v3649 = vmax.f32 %v3585, 0.0
  %v3650 = vmax.f32 %v3586, 0.0
  %v3651 = vmax.f32 %v3587, 0.0
  %v3652 = vmax.f32 %v3588, 0.0
  %v3653 = vmax.f32 %v3589, 0.0
  %v3654 = vmax.f32 %v3590, 0.0
  %v3655 = vmax.f32 %v3591, 0.0
  %v3656 = vmax.f32 %v3592, 0.0
  %v3657 = vmax.f32 %v3593, 0.0
  %v3658 = vmax.f32 %v3594, 0.0
  %v3659 = vmax.f32 %v3595, 0.0
  %v3660 = vmax.f32 %v3596, 0.0
  %v3661 = vmax.f32 %v3597, 0.0
  %v3662 = vmax.f32 %v3598, 0.0
  %v3663 = vmax.f32 %v3599, 0.0
  %v3664 = vmax.f32 %v3600, 0.0
  %v3665 = vmax.f32 %v3601, 0.0
  %v3666 = vmax.f32 %v3602, 0.0
  %v3667 = vmax.f32 %v3603, 0.0
  %v3668 = vmax.f32 %v3604, 0.0
  %v3669 = vmax.f32 %v3605, 0.0
  %v3670 = vmax.f32 %v3606, 0.0
  %v3671 = vmax.f32 %v3607, 0.0
  %v3672 = vmax.f32 %v3608, 0.0
  %v3673 = vmax.f32 %v3609, 0.0
  %v3674 = vmax.f32 %v3610, 0.0
  %vm3675 = vcmask 7168
  %3676 = vst.msk [vmem:[#allocation2] sm:$0xff] %vm3675, 0.0
  %3677 = vst.msk [vmem:[#allocation2 + $0x8] sm:$0xff] %vm3675, 0.0
  %vm3678 = vcmask 1024
  %3679 = vst.msk [vmem:[#allocation2 + $0x10] sm:$0x3] %vm3678, 0.0
  %3680 = vst.msk [vmem:[#allocation2 + $0x18] sm:$0xff] %vm3675, 0.0
  %3681 = vst.msk [vmem:[#allocation2 + $0x20] sm:$0xff] %vm3675, 0.0
  %3682 = vst.msk [vmem:[#allocation2 + $0x28] sm:$0x3] %vm3678, 0.0
  %3683 = vst.msk [vmem:[#allocation2 + $0x30] sm:$0xff] %vm3675, 0.0
  %3684 = vst.msk [vmem:[#allocation2 + $0x38] sm:$0xff] %vm3675, 0.0
  %3685 = vst.msk [vmem:[#allocation2 + $0x40] sm:$0x3] %vm3678, 0.0
  %3686 = vst.msk [vmem:[#allocation2 + $0x48] sm:$0xff] %vm3675, 0.0
  %3687 = vst.msk [vmem:[#allocation2 + $0x50] sm:$0xff] %vm3675, 0.0
  %3688 = vst.msk [vmem:[#allocation2 + $0x58] sm:$0x3] %vm3678, 0.0
  %3689 = vst.msk [vmem:[#allocation2 + $0x60] sm:$0xff] %vm3675, 0.0
  %3690 = vst.msk [vmem:[#allocation2 + $0x68] sm:$0xff] %vm3675, 0.0
  %3691 = vst.msk [vmem:[#allocation2 + $0x70] sm:$0x3] %vm3678, 0.0
  %3692 = vst.msk [vmem:[#allocation2 + $0x78] sm:$0xff] %vm3675, 0.0
  %3693 = vst.msk [vmem:[#allocation2 + $0x80] sm:$0xff] %vm3675, 0.0
  %3694 = vst.msk [vmem:[#allocation2 + $0x88] sm:$0x3] %vm3678, 0.0
  %3695 = vst.msk [vmem:[#allocation2 + $0x90] sm:$0xff] %vm3675, 0.0
  %3696 = vst.msk [vmem:[#allocation2 + $0x98] sm:$0xff] %vm3675, 0.0
  %3697 = vst.msk [vmem:[#allocation2 + $0xa0] sm:$0x3] %vm3678, 0.0
  %3698 = vst.msk [vmem:[#allocation2 + $0xa8] sm:$0xff] %vm3675, 0.0
  %3699 = vst.msk [vmem:[#allocation2 + $0xb0] sm:$0xff] %vm3675, 0.0
  %3700 = vst.msk [vmem:[#allocation2 + $0xb8] sm:$0x3] %vm3678, 0.0
  %3701 = vst.msk [vmem:[#allocation2 + $0xc0] sm:$0xff] %vm3675, 0.0
  %3702 = vst.msk [vmem:[#allocation2 + $0xc8] sm:$0xff] %vm3675, 0.0
  %3703 = vst.msk [vmem:[#allocation2 + $0xd0] sm:$0x3] %vm3678, 0.0
  %3704 = vst.msk [vmem:[#allocation2 + $0xd8] sm:$0xff] %vm3675, 0.0
  %3705 = vst.msk [vmem:[#allocation2 + $0xe0] sm:$0xff] %vm3675, 0.0
  %3706 = vst.msk [vmem:[#allocation2 + $0xe8] sm:$0x3] %vm3678, 0.0
  %3707 = vst.msk [vmem:[#allocation2 + $0xf0] sm:$0xff] %vm3675, 0.0
  %3708 = vst.msk [vmem:[#allocation2 + $0xf8] sm:$0xff] %vm3675, 0.0
  %3709 = vst.msk [vmem:[#allocation2 + $0x100] sm:$0x3] %vm3678, 0.0
  %3710 = vst.msk [vmem:[#allocation2 + $0x108] sm:$0xff] %vm3675, 0.0
  %3711 = vst.msk [vmem:[#allocation2 + $0x110] sm:$0xff] %vm3675, 0.0
  %3712 = vst.msk [vmem:[#allocation2 + $0x118] sm:$0x3] %vm3678, 0.0
  %3713 = vst.msk [vmem:[#allocation2 + $0x120] sm:$0xff] %vm3675, 0.0
  %3714 = vst.msk [vmem:[#allocation2 + $0x128] sm:$0xff] %vm3675, 0.0
  %3715 = vst.msk [vmem:[#allocation2 + $0x130] sm:$0x3] %vm3678, 0.0
  %3716 = vst.msk [vmem:[#allocation2 + $0x138] sm:$0xff] %vm3675, 0.0
  %3717 = vst.msk [vmem:[#allocation2 + $0x140] sm:$0xff] %vm3675, 0.0
  %3718 = vst.msk [vmem:[#allocation2 + $0x148] sm:$0x3] %vm3678, 0.0
  %3719 = vst.msk [vmem:[#allocation2 + $0x150] sm:$0xff] %vm3675, 0.0
  %3720 = vst.msk [vmem:[#allocation2 + $0x158] sm:$0xff] %vm3675, 0.0
  %3721 = vst.msk [vmem:[#allocation2 + $0x160] sm:$0x3] %vm3678, 0.0
  %3722 = vst.msk [vmem:[#allocation2 + $0x168] sm:$0xff] %vm3675, 0.0
  %3723 = vst.msk [vmem:[#allocation2 + $0x170] sm:$0xff] %vm3675, 0.0
  %3724 = vst.msk [vmem:[#allocation2 + $0x178] sm:$0x3] %vm3678, 0.0
  %3725 = vst.msk [vmem:[#allocation2 + $0x180] sm:$0xff] %vm3675, 0.0
  %3726 = vst.msk [vmem:[#allocation2 + $0x188] sm:$0xff] %vm3675, 0.0
  %3727 = vst.msk [vmem:[#allocation2 + $0x190] sm:$0x3] %vm3678, 0.0
  %3728 = vst.msk [vmem:[#allocation2 + $0x198] sm:$0xff] %vm3675, 0.0
  %3729 = vst.msk [vmem:[#allocation2 + $0x1a0] sm:$0xff] %vm3675, 0.0
  %3730 = vst.msk [vmem:[#allocation2 + $0x1a8] sm:$0x3] %vm3678, 0.0
  %3731 = vst.msk [vmem:[#allocation2 + $0x1b0] sm:$0xff] %vm3675, 0.0
  %3732 = vst.msk [vmem:[#allocation2 + $0x1b8] sm:$0xff] %vm3675, 0.0
  %3733 = vst.msk [vmem:[#allocation2 + $0x1c0] sm:$0x3] %vm3678, 0.0
  %3734 = vst.msk [vmem:[#allocation2 + $0x1c8] sm:$0xff] %vm3675, 0.0
  %3735 = vst.msk [vmem:[#allocation2 + $0x1d0] sm:$0xff] %vm3675, 0.0
  %3736 = vst.msk [vmem:[#allocation2 + $0x1d8] sm:$0x3] %vm3678, 0.0
  %3737 = vst.msk [vmem:[#allocation2 + $0x1e0] sm:$0xff] %vm3675, 0.0
  %3738 = vst.msk [vmem:[#allocation2 + $0x1e8] sm:$0xff] %vm3675, 0.0
  %3739 = vst.msk [vmem:[#allocation2 + $0x1f0] sm:$0x3] %vm3678, 0.0
  %3740 = vst.msk [vmem:[#allocation2 + $0x1f8] sm:$0xff] %vm3675, 0.0
  %3741 = vst.msk [vmem:[#allocation2 + $0x200] sm:$0xff] %vm3675, 0.0
  %3742 = vst.msk [vmem:[#allocation2 + $0x208] sm:$0x3] %vm3678, 0.0
  %3743 = vst.msk [vmem:[#allocation2 + $0x210] sm:$0xff] %vm3675, 0.0
  %3744 = vst.msk [vmem:[#allocation2 + $0x218] sm:$0xff] %vm3675, 0.0
  %3745 = vst.msk [vmem:[#allocation2 + $0x220] sm:$0x3] %vm3678, 0.0
  %3746 = vst.msk [vmem:[#allocation2 + $0x228] sm:$0xff] %vm3675, 0.0
  %3747 = vst.msk [vmem:[#allocation2 + $0x230] sm:$0xff] %vm3675, 0.0
  %3748 = vst.msk [vmem:[#allocation2 + $0x238] sm:$0x3] %vm3678, 0.0
  %3749 = vst.msk [vmem:[#allocation2 + $0x240] sm:$0xff] %vm3675, 0.0
  %3750 = vst.msk [vmem:[#allocation2 + $0x248] sm:$0xff] %vm3675, 0.0
  %3751 = vst.msk [vmem:[#allocation2 + $0x250] sm:$0x3] %vm3678, 0.0
  %3752 = vst.msk [vmem:[#allocation2 + $0x258] sm:$0xff] %vm3675, 0.0
  %3753 = vst.msk [vmem:[#allocation2 + $0x260] sm:$0xff] %vm3675, 0.0
  %3754 = vst.msk [vmem:[#allocation2 + $0x268] sm:$0x3] %vm3678, 0.0
  %3755 = vst.msk [vmem:[#allocation2 + $0x270] sm:$0xff] %vm3675, 0.0
  %3756 = vst.msk [vmem:[#allocation2 + $0x278] sm:$0xff] %vm3675, 0.0
  %3757 = vst.msk [vmem:[#allocation2 + $0x280] sm:$0x3] %vm3678, 0.0
  %3758 = vst.msk [vmem:[#allocation2 + $0x288] sm:$0xff] %vm3675, 0.0
  %3759 = vst.msk [vmem:[#allocation2 + $0x290] sm:$0xff] %vm3675, 0.0
  %3760 = vst.msk [vmem:[#allocation2 + $0x298] sm:$0x3] %vm3678, 0.0
  %3761 = vst.msk [vmem:[#allocation2 + $0x2a0] sm:$0xff] %vm3675, 0.0
  %3762 = vst.msk [vmem:[#allocation2 + $0x2a8] sm:$0xff] %vm3675, 0.0
  %3763 = vst.msk [vmem:[#allocation2 + $0x2b0] sm:$0x3] %vm3678, 0.0
  %3764 = vst.msk [vmem:[#allocation2 + $0x2b8] sm:$0xff] %vm3675, 0.0
  %3765 = vst.msk [vmem:[#allocation2 + $0x2c0] sm:$0xff] %vm3675, 0.0
  %3766 = vst.msk [vmem:[#allocation2 + $0x2c8] sm:$0x3] %vm3678, 0.0
  %3767 = vst.msk [vmem:[#allocation2 + $0x2d0] sm:$0xff] %vm3675, 0.0
  %3768 = vst.msk [vmem:[#allocation2 + $0x2d8] sm:$0xff] %vm3675, 0.0
  %3769 = vst.msk [vmem:[#allocation2 + $0x2e0] sm:$0x3] %vm3678, 0.0
  %3770 = vst.msk [vmem:[#allocation2 + $0x2e8] sm:$0xff] %vm3675, 0.0
  %3771 = vst.msk [vmem:[#allocation2 + $0x2f0] sm:$0xff] %vm3675, 0.0
  %3772 = vst.msk [vmem:[#allocation2 + $0x2f8] sm:$0x3] %vm3678, 0.0
  %3773 = vst.msk [vmem:[#allocation2 + $0x300] sm:$0xff] %vm3675, 0.0
  %3774 = vst.msk [vmem:[#allocation2 + $0x308] sm:$0xff] %vm3675, 0.0
  %3775 = vst.msk [vmem:[#allocation2 + $0x310] sm:$0x3] %vm3678, 0.0
  %3776 = vst.msk [vmem:[#allocation2 + $0x318] sm:$0xff] %vm3675, 0.0
  %3777 = vst.msk [vmem:[#allocation2 + $0x320] sm:$0xff] %vm3675, 0.0
  %3778 = vst.msk [vmem:[#allocation2 + $0x328] sm:$0x3] %vm3678, 0.0
  %3779 = vst.msk [vmem:[#allocation2 + $0x330] sm:$0xff] %vm3675, 0.0
  %3780 = vst.msk [vmem:[#allocation2 + $0x338] sm:$0xff] %vm3675, 0.0
  %3781 = vst.msk [vmem:[#allocation2 + $0x340] sm:$0x3] %vm3678, 0.0
  %3782 = vst.msk [vmem:[#allocation2 + $0x348] sm:$0xff] %vm3675, 0.0
  %3783 = vst.msk [vmem:[#allocation2 + $0x350] sm:$0xff] %vm3675, 0.0
  %3784 = vst.msk [vmem:[#allocation2 + $0x358] sm:$0x3] %vm3678, 0.0
  %s3785 = scalar_lea.vmem [#allocation2], 24
  %3786 = vst.msk [vmem:[%s3785 + $0x1] sm:$0xff] %vm3675, %v3611
  %3787 = vst.msk [vmem:[%s3785 + $0x9] sm:$0xff] %vm3675, %v3612
  %3788 = vst.msk [vmem:[%s3785 + $0x19] sm:$0xff] %vm3675, %v3613
  %3789 = vst.msk [vmem:[%s3785 + $0x21] sm:$0xff] %vm3675, %v3614
  %3790 = vst.msk [vmem:[%s3785 + $0x31] sm:$0xff] %vm3675, %v3615
  %3791 = vst.msk [vmem:[%s3785 + $0x39] sm:$0xff] %vm3675, %v3616
  %3792 = vst.msk [vmem:[%s3785 + $0x49] sm:$0xff] %vm3675, %v3617
  %3793 = vst.msk [vmem:[%s3785 + $0x51] sm:$0xff] %vm3675, %v3618
  %3794 = vst.msk [vmem:[%s3785 + $0x61] sm:$0xff] %vm3675, %v3619
  %3795 = vst.msk [vmem:[%s3785 + $0x69] sm:$0xff] %vm3675, %v3620
  %3796 = vst.msk [vmem:[%s3785 + $0x79] sm:$0xff] %vm3675, %v3621
  %3797 = vst.msk [vmem:[%s3785 + $0x81] sm:$0xff] %vm3675, %v3622
  %3798 = vst.msk [vmem:[%s3785 + $0x91] sm:$0xff] %vm3675, %v3623
  %3799 = vst.msk [vmem:[%s3785 + $0x99] sm:$0xff] %vm3675, %v3624
  %3800 = vst.msk [vmem:[%s3785 + $0xa9] sm:$0xff] %vm3675, %v3625
  %3801 = vst.msk [vmem:[%s3785 + $0xb1] sm:$0xff] %vm3675, %v3626
  %3802 = vst.msk [vmem:[%s3785 + $0xc1] sm:$0xff] %vm3675, %v3627
  %3803 = vst.msk [vmem:[%s3785 + $0xc9] sm:$0xff] %vm3675, %v3628
  %3804 = vst.msk [vmem:[%s3785 + $0xd9] sm:$0xff] %vm3675, %v3629
  %3805 = vst.msk [vmem:[%s3785 + $0xe1] sm:$0xff] %vm3675, %v3630
  %3806 = vst.msk [vmem:[%s3785 + $0xf1] sm:$0xff] %vm3675, %v3631
  %3807 = vst.msk [vmem:[%s3785 + $0xf9] sm:$0xff] %vm3675, %v3632
  %3808 = vst.msk [vmem:[%s3785 + $0x109] sm:$0xff] %vm3675, %v3633
  %3809 = vst.msk [vmem:[%s3785 + $0x111] sm:$0xff] %vm3675, %v3634
  %3810 = vst.msk [vmem:[%s3785 + $0x121] sm:$0xff] %vm3675, %v3635
  %3811 = vst.msk [vmem:[%s3785 + $0x129] sm:$0xff] %vm3675, %v3636
  %3812 = vst.msk [vmem:[%s3785 + $0x139] sm:$0xff] %vm3675, %v3637
  %3813 = vst.msk [vmem:[%s3785 + $0x141] sm:$0xff] %vm3675, %v3638
  %3814 = vst.msk [vmem:[%s3785 + $0x151] sm:$0xff] %vm3675, %v3639
  %3815 = vst.msk [vmem:[%s3785 + $0x159] sm:$0xff] %vm3675, %v3640
  %3816 = vst.msk [vmem:[%s3785 + $0x169] sm:$0xff] %vm3675, %v3641
  %3817 = vst.msk [vmem:[%s3785 + $0x171] sm:$0xff] %vm3675, %v3642
  %3818 = vst.msk [vmem:[%s3785 + $0x1b1] sm:$0xff] %vm3675, %v3643
  %3819 = vst.msk [vmem:[%s3785 + $0x1b9] sm:$0xff] %vm3675, %v3644
  %3820 = vst.msk [vmem:[%s3785 + $0x1c9] sm:$0xff] %vm3675, %v3645
  %3821 = vst.msk [vmem:[%s3785 + $0x1d1] sm:$0xff] %vm3675, %v3646
  %3822 = vst.msk [vmem:[%s3785 + $0x1e1] sm:$0xff] %vm3675, %v3647
  %3823 = vst.msk [vmem:[%s3785 + $0x1e9] sm:$0xff] %vm3675, %v3648
  %3824 = vst.msk [vmem:[%s3785 + $0x1f9] sm:$0xff] %vm3675, %v3649
  %3825 = vst.msk [vmem:[%s3785 + $0x201] sm:$0xff] %vm3675, %v3650
  %3826 = vst.msk [vmem:[%s3785 + $0x211] sm:$0xff] %vm3675, %v3651
  %3827 = vst.msk [vmem:[%s3785 + $0x219] sm:$0xff] %vm3675, %v3652
  %3828 = vst.msk [vmem:[%s3785 + $0x229] sm:$0xff] %vm3675, %v3653
  %3829 = vst.msk [vmem:[%s3785 + $0x231] sm:$0xff] %vm3675, %v3654
  %3830 = vst.msk [vmem:[%s3785 + $0x241] sm:$0xff] %vm3675, %v3655
  %3831 = vst.msk [vmem:[%s3785 + $0x249] sm:$0xff] %vm3675, %v3656
  %3832 = vst.msk [vmem:[%s3785 + $0x259] sm:$0xff] %vm3675, %v3657
  %3833 = vst.msk [vmem:[%s3785 + $0x261] sm:$0xff] %vm3675, %v3658
  %3834 = vst.msk [vmem:[%s3785 + $0x271] sm:$0xff] %vm3675, %v3659
  %3835 = vst.msk [vmem:[%s3785 + $0x279] sm:$0xff] %vm3675, %v3660
  %3836 = vst.msk [vmem:[%s3785 + $0x289] sm:$0xff] %vm3675, %v3661
  %3837 = vst.msk [vmem:[%s3785 + $0x291] sm:$0xff] %vm3675, %v3662
  %3838 = vst.msk [vmem:[%s3785 + $0x2a1] sm:$0xff] %vm3675, %v3663
  %3839 = vst.msk [vmem:[%s3785 + $0x2a9] sm:$0xff] %vm3675, %v3664
  %3840 = vst.msk [vmem:[%s3785 + $0x2b9] sm:$0xff] %vm3675, %v3665
  %3841 = vst.msk [vmem:[%s3785 + $0x2c1] sm:$0xff] %vm3675, %v3666
  %3842 = vst.msk [vmem:[%s3785 + $0x2d1] sm:$0xff] %vm3675, %v3667
  %3843 = vst.msk [vmem:[%s3785 + $0x2d9] sm:$0xff] %vm3675, %v3668
  %3844 = vst.msk [vmem:[%s3785 + $0x2e9] sm:$0xff] %vm3675, %v3669
  %3845 = vst.msk [vmem:[%s3785 + $0x2f1] sm:$0xff] %vm3675, %v3670
  %3846 = vst.msk [vmem:[%s3785 + $0x301] sm:$0xff] %vm3675, %v3671
  %3847 = vst.msk [vmem:[%s3785 + $0x309] sm:$0xff] %vm3675, %v3672
  %3848 = vst.msk [vmem:[%s3785 + $0x319] sm:$0xff] %vm3675, %v3673
  %3849 = vst.msk [vmem:[%s3785 + $0x321] sm:$0xff] %vm3675, %v3674
  %v3850 = vld [vmem:[#allocation2] sm:$0xff]
  %v3851 = vld [vmem:[#allocation2 + $0x8] sm:$0xff]
  %v3852 = vld [vmem:[#allocation2 + $0x10] sm:$0x3]
  %v3853 = vld [vmem:[#allocation2 + $0x18] sm:$0xff]
  %v3854 = vld [vmem:[#allocation2 + $0x20] sm:$0xff]
  %v3855 = vld [vmem:[#allocation2 + $0x28] sm:$0x3]
  %v3856 = vld [vmem:[#allocation2 + $0x30] sm:$0xff]
  %v3857 = vld [vmem:[#allocation2 + $0x38] sm:$0xff]
  %v3858 = vld [vmem:[#allocation2 + $0x40] sm:$0x3]
  %v3859 = vld [vmem:[#allocation2 + $0x48] sm:$0xff]
  %v3860 = vld [vmem:[#allocation2 + $0x50] sm:$0xff]
  %v3861 = vld [vmem:[#allocation2 + $0x58] sm:$0x3]
  %v3862 = vld [vmem:[#allocation2 + $0x60] sm:$0xff]
  %v3863 = vld [vmem:[#allocation2 + $0x68] sm:$0xff]
  %v3864 = vld [vmem:[#allocation2 + $0x70] sm:$0x3]
  %v3865 = vld [vmem:[#allocation2 + $0x78] sm:$0xff]
  %v3866 = vld [vmem:[#allocation2 + $0x80] sm:$0xff]
  %v3867 = vld [vmem:[#allocation2 + $0x88] sm:$0x3]
  %v3868 = vld [vmem:[#allocation2 + $0x90] sm:$0xff]
  %v3869 = vld [vmem:[#allocation2 + $0x98] sm:$0xff]
  %v3870 = vld [vmem:[#allocation2 + $0xa0] sm:$0x3]
  %v3871 = vld [vmem:[#allocation2 + $0xa8] sm:$0xff]
  %v3872 = vld [vmem:[#allocation2 + $0xb0] sm:$0xff]
  %v3873 = vld [vmem:[#allocation2 + $0xb8] sm:$0x3]
  %v3874 = vld [vmem:[#allocation2 + $0xc0] sm:$0xff]
  %v3875 = vld [vmem:[#allocation2 + $0xc8] sm:$0xff]
  %v3876 = vld [vmem:[#allocation2 + $0xd0] sm:$0x3]
  %v3877 = vld [vmem:[#allocation2 + $0xd8] sm:$0xff]
  %v3878 = vld [vmem:[#allocation2 + $0xe0] sm:$0xff]
  %v3879 = vld [vmem:[#allocation2 + $0xe8] sm:$0x3]
  %v3880 = vld [vmem:[#allocation2 + $0xf0] sm:$0xff]
  %v3881 = vld [vmem:[#allocation2 + $0xf8] sm:$0xff]
  %v3882 = vld [vmem:[#allocation2 + $0x100] sm:$0x3]
  %v3883 = vld [vmem:[#allocation2 + $0x108] sm:$0xff]
  %v3884 = vld [vmem:[#allocation2 + $0x110] sm:$0xff]
  %v3885 = vld [vmem:[#allocation2 + $0x118] sm:$0x3]
  %v3886 = vld [vmem:[#allocation2 + $0x120] sm:$0xff]
  %v3887 = vld [vmem:[#allocation2 + $0x128] sm:$0xff]
  %v3888 = vld [vmem:[#allocation2 + $0x130] sm:$0x3]
  %v3889 = vld [vmem:[#allocation2 + $0x138] sm:$0xff]
  %v3890 = vld [vmem:[#allocation2 + $0x140] sm:$0xff]
  %v3891 = vld [vmem:[#allocation2 + $0x148] sm:$0x3]
  %v3892 = vld [vmem:[#allocation2 + $0x150] sm:$0xff]
  %v3893 = vld [vmem:[#allocation2 + $0x158] sm:$0xff]
  %v3894 = vld [vmem:[#allocation2 + $0x160] sm:$0x3]
  %v3895 = vld [vmem:[#allocation2 + $0x168] sm:$0xff]
  %v3896 = vld [vmem:[#allocation2 + $0x170] sm:$0xff]
  %v3897 = vld [vmem:[#allocation2 + $0x178] sm:$0x3]
  %v3898 = vld [vmem:[#allocation2 + $0x180] sm:$0xff]
  %v3899 = vld [vmem:[#allocation2 + $0x188] sm:$0xff]
  %v3900 = vld [vmem:[#allocation2 + $0x190] sm:$0x3]
  %v3901 = vld [vmem:[#allocation2 + $0x198] sm:$0xff]
  %v3902 = vld [vmem:[#allocation2 + $0x1a0] sm:$0xff]
  %v3903 = vld [vmem:[#allocation2 + $0x1a8] sm:$0x3]
  %v3904 = vld [vmem:[#allocation2 + $0x1b0] sm:$0xff]
  %v3905 = vld [vmem:[#allocation2 + $0x1b8] sm:$0xff]
  %v3906 = vld [vmem:[#allocation2 + $0x1c0] sm:$0x3]
  %v3907 = vld [vmem:[#allocation2 + $0x1c8] sm:$0xff]
  %v3908 = vld [vmem:[#allocation2 + $0x1d0] sm:$0xff]
  %v3909 = vld [vmem:[#allocation2 + $0x1d8] sm:$0x3]
  %v3910 = vld [vmem:[#allocation2 + $0x1e0] sm:$0xff]
  %v3911 = vld [vmem:[#allocation2 + $0x1e8] sm:$0xff]
  %v3912 = vld [vmem:[#allocation2 + $0x1f0] sm:$0x3]
  %v3913 = vld [vmem:[#allocation2 + $0x1f8] sm:$0xff]
  %v3914 = vld [vmem:[#allocation2 + $0x200] sm:$0xff]
  %v3915 = vld [vmem:[#allocation2 + $0x208] sm:$0x3]
  %v3916 = vld [vmem:[#allocation2 + $0x210] sm:$0xff]
  %v3917 = vld [vmem:[#allocation2 + $0x218] sm:$0xff]
  %v3918 = vld [vmem:[#allocation2 + $0x220] sm:$0x3]
  %v3919 = vld [vmem:[#allocation2 + $0x228] sm:$0xff]
  %v3920 = vld [vmem:[#allocation2 + $0x230] sm:$0xff]
  %v3921 = vld [vmem:[#allocation2 + $0x238] sm:$0x3]
  %v3922 = vld [vmem:[#allocation2 + $0x240] sm:$0xff]
  %v3923 = vld [vmem:[#allocation2 + $0x248] sm:$0xff]
  %v3924 = vld [vmem:[#allocation2 + $0x250] sm:$0x3]
  %v3925 = vld [vmem:[#allocation2 + $0x258] sm:$0xff]
  %v3926 = vld [vmem:[#allocation2 + $0x260] sm:$0xff]
  %v3927 = vld [vmem:[#allocation2 + $0x268] sm:$0x3]
  %v3928 = vld [vmem:[#allocation2 + $0x270] sm:$0xff]
  %v3929 = vld [vmem:[#allocation2 + $0x278] sm:$0xff]
  %v3930 = vld [vmem:[#allocation2 + $0x280] sm:$0x3]
  %v3931 = vld [vmem:[#allocation2 + $0x288] sm:$0xff]
  %v3932 = vld [vmem:[#allocation2 + $0x290] sm:$0xff]
  %v3933 = vld [vmem:[#allocation2 + $0x298] sm:$0x3]
  %v3934 = vld [vmem:[#allocation2 + $0x2a0] sm:$0xff]
  %v3935 = vld [vmem:[#allocation2 + $0x2a8] sm:$0xff]
  %v3936 = vld [vmem:[#allocation2 + $0x2b0] sm:$0x3]
  %v3937 = vld [vmem:[#allocation2 + $0x2b8] sm:$0xff]
  %v3938 = vld [vmem:[#allocation2 + $0x2c0] sm:$0xff]
  %v3939 = vld [vmem:[#allocation2 + $0x2c8] sm:$0x3]
  %v3940 = vld [vmem:[#allocation2 + $0x2d0] sm:$0xff]
  %v3941 = vld [vmem:[#allocation2 + $0x2d8] sm:$0xff]
  %v3942 = vld [vmem:[#allocation2 + $0x2e0] sm:$0x3]
  %v3943 = vld [vmem:[#allocation2 + $0x2e8] sm:$0xff]
  %v3944 = vld [vmem:[#allocation2 + $0x2f0] sm:$0xff]
  %v3945 = vld [vmem:[#allocation2 + $0x2f8] sm:$0x3]
  %v3946 = vld [vmem:[#allocation2 + $0x300] sm:$0xff]
  %v3947 = vld [vmem:[#allocation2 + $0x308] sm:$0xff]
  %v3948 = vld [vmem:[#allocation2 + $0x310] sm:$0x3]
  %v3949 = vld [vmem:[#allocation2 + $0x318] sm:$0xff]
  %v3950 = vld [vmem:[#allocation2 + $0x320] sm:$0xff]
  %v3951 = vld [vmem:[#allocation2 + $0x328] sm:$0x3]
  %v3952 = vld [vmem:[#allocation2 + $0x330] sm:$0xff]
  %v3953 = vld [vmem:[#allocation2 + $0x338] sm:$0xff]
  %v3954 = vld [vmem:[#allocation2 + $0x340] sm:$0x3]
  %v3955 = vld [vmem:[#allocation2 + $0x348] sm:$0xff]
  %v3956 = vld [vmem:[#allocation2 + $0x350] sm:$0xff]
  %v3957 = vld [vmem:[#allocation2 + $0x358] sm:$0x3]
  %v3958 = vld [vmem:[%s3] sm:$0x7]
  %v3959 = vld [vmem:[%s3 + $0x4] sm:$0x7]
  %v3960 = vld [vmem:[%s3 + $0x8] sm:$0x7]
  %3962 = vset.pattern.permute.xlu0 0
  %3963 = vperm.xlu0 %3962, %v3850
  %v3964 = vpop.permute.xlu0 %3963
  %3967 = vset.pattern.permute.xlu0 0
  %3968 = vperm.xlu0 %3967, %v3851
  %v3969 = vpop.permute.xlu0 %3968
  %3972 = vset.pattern.permute.xlu0 0
  %3973 = vperm.xlu0 %3972, %v3853
  %v3974 = vpop.permute.xlu0 %3973
  %3977 = vset.pattern.permute.xlu0 0
  %3978 = vperm.xlu0 %3977, %v3854
  %v3979 = vpop.permute.xlu0 %3978
  %3982 = vset.pattern.permute.xlu0 0
  %3983 = vperm.xlu0 %3982, %v3856
  %v3984 = vpop.permute.xlu0 %3983
  %3987 = vset.pattern.permute.xlu0 0
  %3988 = vperm.xlu0 %3987, %v3857
  %v3989 = vpop.permute.xlu0 %3988
  %3992 = vset.pattern.permute.xlu0 0
  %3993 = vperm.xlu0 %3992, %v3859
  %v3994 = vpop.permute.xlu0 %3993
  %3997 = vset.pattern.permute.xlu0 0
  %3998 = vperm.xlu0 %3997, %v3860
  %v3999 = vpop.permute.xlu0 %3998
  %4002 = vset.pattern.permute.xlu0 0
  %4003 = vperm.xlu0 %4002, %v3862
  %v4004 = vpop.permute.xlu0 %4003
  %4007 = vset.pattern.permute.xlu0 0
  %4008 = vperm.xlu0 %4007, %v3863
  %v4009 = vpop.permute.xlu0 %4008
  %4012 = vset.pattern.permute.xlu0 0
  %4013 = vperm.xlu0 %4012, %v3865
  %v4014 = vpop.permute.xlu0 %4013
  %4017 = vset.pattern.permute.xlu0 0
  %4018 = vperm.xlu0 %4017, %v3866
  %v4019 = vpop.permute.xlu0 %4018
  %4022 = vset.pattern.permute.xlu0 0
  %4023 = vperm.xlu0 %4022, %v3868
  %v4024 = vpop.permute.xlu0 %4023
  %4027 = vset.pattern.permute.xlu0 0
  %4028 = vperm.xlu0 %4027, %v3869
  %v4029 = vpop.permute.xlu0 %4028
  %4032 = vset.pattern.permute.xlu0 0
  %4033 = vperm.xlu0 %4032, %v3871
  %v4034 = vpop.permute.xlu0 %4033
  %4037 = vset.pattern.permute.xlu0 0
  %4038 = vperm.xlu0 %4037, %v3872
  %v4039 = vpop.permute.xlu0 %4038
  %4042 = vset.pattern.permute.xlu0 0
  %4043 = vperm.xlu0 %4042, %v3874
  %v4044 = vpop.permute.xlu0 %4043
  %4047 = vset.pattern.permute.xlu0 0
  %4048 = vperm.xlu0 %4047, %v3875
  %v4049 = vpop.permute.xlu0 %4048
  %4052 = vset.pattern.permute.xlu0 0
  %4053 = vperm.xlu0 %4052, %v3877
  %v4054 = vpop.permute.xlu0 %4053
  %4057 = vset.pattern.permute.xlu0 0
  %4058 = vperm.xlu0 %4057, %v3878
  %v4059 = vpop.permute.xlu0 %4058
  %4062 = vset.pattern.permute.xlu0 0
  %4063 = vperm.xlu0 %4062, %v3880
  %v4064 = vpop.permute.xlu0 %4063
  %4067 = vset.pattern.permute.xlu0 0
  %4068 = vperm.xlu0 %4067, %v3881
  %v4069 = vpop.permute.xlu0 %4068
  %4072 = vset.pattern.permute.xlu0 0
  %4073 = vperm.xlu0 %4072, %v3883
  %v4074 = vpop.permute.xlu0 %4073
  %4077 = vset.pattern.permute.xlu0 0
  %4078 = vperm.xlu0 %4077, %v3884
  %v4079 = vpop.permute.xlu0 %4078
  %4082 = vset.pattern.permute.xlu0 0
  %4083 = vperm.xlu0 %4082, %v3886
  %v4084 = vpop.permute.xlu0 %4083
  %4087 = vset.pattern.permute.xlu0 0
  %4088 = vperm.xlu0 %4087, %v3887
  %v4089 = vpop.permute.xlu0 %4088
  %4092 = vset.pattern.permute.xlu0 0
  %4093 = vperm.xlu0 %4092, %v3889
  %v4094 = vpop.permute.xlu0 %4093
  %4097 = vset.pattern.permute.xlu0 0
  %4098 = vperm.xlu0 %4097, %v3890
  %v4099 = vpop.permute.xlu0 %4098
  %4102 = vset.pattern.permute.xlu0 0
  %4103 = vperm.xlu0 %4102, %v3892
  %v4104 = vpop.permute.xlu0 %4103
  %4107 = vset.pattern.permute.xlu0 0
  %4108 = vperm.xlu0 %4107, %v3893
  %v4109 = vpop.permute.xlu0 %4108
  %4112 = vset.pattern.permute.xlu0 0
  %4113 = vperm.xlu0 %4112, %v3895
  %v4114 = vpop.permute.xlu0 %4113
  %4117 = vset.pattern.permute.xlu0 0
  %4118 = vperm.xlu0 %4117, %v3896
  %v4119 = vpop.permute.xlu0 %4118
  %4122 = vset.pattern.permute.xlu0 0
  %4123 = vperm.xlu0 %4122, %v3904
  %v4124 = vpop.permute.xlu0 %4123
  %4127 = vset.pattern.permute.xlu0 0
  %4128 = vperm.xlu0 %4127, %v3905
  %v4129 = vpop.permute.xlu0 %4128
  %4132 = vset.pattern.permute.xlu0 0
  %4133 = vperm.xlu0 %4132, %v3907
  %v4134 = vpop.permute.xlu0 %4133
  %4137 = vset.pattern.permute.xlu0 0
  %4138 = vperm.xlu0 %4137, %v3908
  %v4139 = vpop.permute.xlu0 %4138
  %4142 = vset.pattern.permute.xlu0 0
  %4143 = vperm.xlu0 %4142, %v3910
  %v4144 = vpop.permute.xlu0 %4143
  %4147 = vset.pattern.permute.xlu0 0
  %4148 = vperm.xlu0 %4147, %v3911
  %v4149 = vpop.permute.xlu0 %4148
  %4152 = vset.pattern.permute.xlu0 0
  %4153 = vperm.xlu0 %4152, %v3913
  %v4154 = vpop.permute.xlu0 %4153
  %4157 = vset.pattern.permute.xlu0 0
  %4158 = vperm.xlu0 %4157, %v3914
  %v4159 = vpop.permute.xlu0 %4158
  %4162 = vset.pattern.permute.xlu0 0
  %4163 = vperm.xlu0 %4162, %v3916
  %v4164 = vpop.permute.xlu0 %4163
  %4167 = vset.pattern.permute.xlu0 0
  %4168 = vperm.xlu0 %4167, %v3917
  %v4169 = vpop.permute.xlu0 %4168
  %4172 = vset.pattern.permute.xlu0 0
  %4173 = vperm.xlu0 %4172, %v3919
  %v4174 = vpop.permute.xlu0 %4173
  %4177 = vset.pattern.permute.xlu0 0
  %4178 = vperm.xlu0 %4177, %v3920
  %v4179 = vpop.permute.xlu0 %4178
  %4182 = vset.pattern.permute.xlu0 0
  %4183 = vperm.xlu0 %4182, %v3922
  %v4184 = vpop.permute.xlu0 %4183
  %4187 = vset.pattern.permute.xlu0 0
  %4188 = vperm.xlu0 %4187, %v3923
  %v4189 = vpop.permute.xlu0 %4188
  %4192 = vset.pattern.permute.xlu0 0
  %4193 = vperm.xlu0 %4192, %v3925
  %v4194 = vpop.permute.xlu0 %4193
  %4197 = vset.pattern.permute.xlu0 0
  %4198 = vperm.xlu0 %4197, %v3926
  %v4199 = vpop.permute.xlu0 %4198
  %4202 = vset.pattern.permute.xlu0 0
  %4203 = vperm.xlu0 %4202, %v3928
  %v4204 = vpop.permute.xlu0 %4203
  %4207 = vset.pattern.permute.xlu0 0
  %4208 = vperm.xlu0 %4207, %v3929
  %v4209 = vpop.permute.xlu0 %4208
  %4212 = vset.pattern.permute.xlu0 0
  %4213 = vperm.xlu0 %4212, %v3931
  %v4214 = vpop.permute.xlu0 %4213
  %4217 = vset.pattern.permute.xlu0 0
  %4218 = vperm.xlu0 %4217, %v3932
  %v4219 = vpop.permute.xlu0 %4218
  %4222 = vset.pattern.permute.xlu0 0
  %4223 = vperm.xlu0 %4222, %v3934
  %v4224 = vpop.permute.xlu0 %4223
  %4227 = vset.pattern.permute.xlu0 0
  %4228 = vperm.xlu0 %4227, %v3935
  %v4229 = vpop.permute.xlu0 %4228
  %4232 = vset.pattern.permute.xlu0 0
  %4233 = vperm.xlu0 %4232, %v3937
  %v4234 = vpop.permute.xlu0 %4233
  %4237 = vset.pattern.permute.xlu0 0
  %4238 = vperm.xlu0 %4237, %v3938
  %v4239 = vpop.permute.xlu0 %4238
  %4242 = vset.pattern.permute.xlu0 0
  %4243 = vperm.xlu0 %4242, %v3940
  %v4244 = vpop.permute.xlu0 %4243
  %4247 = vset.pattern.permute.xlu0 0
  %4248 = vperm.xlu0 %4247, %v3941
  %v4249 = vpop.permute.xlu0 %4248
  %4252 = vset.pattern.permute.xlu0 0
  %4253 = vperm.xlu0 %4252, %v3943
  %v4254 = vpop.permute.xlu0 %4253
  %4257 = vset.pattern.permute.xlu0 0
  %4258 = vperm.xlu0 %4257, %v3944
  %v4259 = vpop.permute.xlu0 %4258
  %4262 = vset.pattern.permute.xlu0 0
  %4263 = vperm.xlu0 %4262, %v3946
  %v4264 = vpop.permute.xlu0 %4263
  %4267 = vset.pattern.permute.xlu0 0
  %4268 = vperm.xlu0 %4267, %v3947
  %v4269 = vpop.permute.xlu0 %4268
  %4272 = vset.pattern.permute.xlu0 0
  %4273 = vperm.xlu0 %4272, %v3949
  %v4274 = vpop.permute.xlu0 %4273
  %4277 = vset.pattern.permute.xlu0 0
  %4278 = vperm.xlu0 %4277, %v3950
  %v4279 = vpop.permute.xlu0 %4278
  %v4281 = vperm.slane %v3958, 0
  %v4282 = vmul.f32 %v3964, %v4281
  %v4283 = vmul.f32 %v3969, %v4281
  %v4284 = vmul.f32 %v3974, %v4281
  %v4285 = vmul.f32 %v3979, %v4281
  %v4286 = vmul.f32 %v3984, %v4281
  %v4287 = vmul.f32 %v3989, %v4281
  %v4288 = vmul.f32 %v3994, %v4281
  %v4289 = vmul.f32 %v3999, %v4281
  %v4290 = vmul.f32 %v4004, %v4281
  %v4291 = vmul.f32 %v4009, %v4281
  %v4292 = vmul.f32 %v4014, %v4281
  %v4293 = vmul.f32 %v4019, %v4281
  %v4294 = vmul.f32 %v4024, %v4281
  %v4295 = vmul.f32 %v4029, %v4281
  %v4296 = vmul.f32 %v4034, %v4281
  %v4297 = vmul.f32 %v4039, %v4281
  %v4298 = vmul.f32 %v4044, %v4281
  %v4299 = vmul.f32 %v4049, %v4281
  %v4300 = vmul.f32 %v4054, %v4281
  %v4301 = vmul.f32 %v4059, %v4281
  %v4302 = vmul.f32 %v4064, %v4281
  %v4303 = vmul.f32 %v4069, %v4281
  %v4304 = vmul.f32 %v4074, %v4281
  %v4305 = vmul.f32 %v4079, %v4281
  %v4306 = vmul.f32 %v4084, %v4281
  %v4307 = vmul.f32 %v4089, %v4281
  %v4308 = vmul.f32 %v4094, %v4281
  %v4309 = vmul.f32 %v4099, %v4281
  %v4310 = vmul.f32 %v4104, %v4281
  %v4311 = vmul.f32 %v4109, %v4281
  %v4312 = vmul.f32 %v4114, %v4281
  %v4313 = vmul.f32 %v4119, %v4281
  %v4314 = vmul.f32 %v4124, %v4281
  %v4315 = vmul.f32 %v4129, %v4281
  %v4316 = vmul.f32 %v4134, %v4281
  %v4317 = vmul.f32 %v4139, %v4281
  %v4318 = vmul.f32 %v4144, %v4281
  %v4319 = vmul.f32 %v4149, %v4281
  %v4320 = vmul.f32 %v4154, %v4281
  %v4321 = vmul.f32 %v4159, %v4281
  %v4322 = vmul.f32 %v4164, %v4281
  %v4323 = vmul.f32 %v4169, %v4281
  %v4324 = vmul.f32 %v4174, %v4281
  %v4325 = vmul.f32 %v4179, %v4281
  %v4326 = vmul.f32 %v4184, %v4281
  %v4327 = vmul.f32 %v4189, %v4281
  %v4328 = vmul.f32 %v4194, %v4281
  %v4329 = vmul.f32 %v4199, %v4281
  %v4330 = vmul.f32 %v4204, %v4281
  %v4331 = vmul.f32 %v4209, %v4281
  %v4332 = vmul.f32 %v4214, %v4281
  %v4333 = vmul.f32 %v4219, %v4281
  %v4334 = vmul.f32 %v4224, %v4281
  %v4335 = vmul.f32 %v4229, %v4281
  %v4336 = vmul.f32 %v4234, %v4281
  %v4337 = vmul.f32 %v4239, %v4281
  %v4338 = vmul.f32 %v4244, %v4281
  %v4339 = vmul.f32 %v4249, %v4281
  %v4340 = vmul.f32 %v4254, %v4281
  %v4341 = vmul.f32 %v4259, %v4281
  %v4342 = vmul.f32 %v4264, %v4281
  %v4343 = vmul.f32 %v4269, %v4281
  %v4344 = vmul.f32 %v4274, %v4281
  %v4345 = vmul.f32 %v4279, %v4281
  %4347 = vset.pattern.permute.xlu0 0
  %4348 = vperm.xlu0 %4347, %v3852
  %v4349 = vpop.permute.xlu0 %4348
  %4352 = vset.pattern.permute.xlu0 0
  %4353 = vperm.xlu0 %4352, %v3855
  %v4354 = vpop.permute.xlu0 %4353
  %4357 = vset.pattern.permute.xlu0 0
  %4358 = vperm.xlu0 %4357, %v3858
  %v4359 = vpop.permute.xlu0 %4358
  %4362 = vset.pattern.permute.xlu0 0
  %4363 = vperm.xlu0 %4362, %v3861
  %v4364 = vpop.permute.xlu0 %4363
  %4367 = vset.pattern.permute.xlu0 0
  %4368 = vperm.xlu0 %4367, %v3864
  %v4369 = vpop.permute.xlu0 %4368
  %4372 = vset.pattern.permute.xlu0 0
  %4373 = vperm.xlu0 %4372, %v3867
  %v4374 = vpop.permute.xlu0 %4373
  %4377 = vset.pattern.permute.xlu0 0
  %4378 = vperm.xlu0 %4377, %v3870
  %v4379 = vpop.permute.xlu0 %4378
  %4382 = vset.pattern.permute.xlu0 0
  %4383 = vperm.xlu0 %4382, %v3873
  %v4384 = vpop.permute.xlu0 %4383
  %4387 = vset.pattern.permute.xlu0 0
  %4388 = vperm.xlu0 %4387, %v3876
  %v4389 = vpop.permute.xlu0 %4388
  %4392 = vset.pattern.permute.xlu0 0
  %4393 = vperm.xlu0 %4392, %v3879
  %v4394 = vpop.permute.xlu0 %4393
  %4397 = vset.pattern.permute.xlu0 0
  %4398 = vperm.xlu0 %4397, %v3882
  %v4399 = vpop.permute.xlu0 %4398
  %4402 = vset.pattern.permute.xlu0 0
  %4403 = vperm.xlu0 %4402, %v3885
  %v4404 = vpop.permute.xlu0 %4403
  %4407 = vset.pattern.permute.xlu0 0
  %4408 = vperm.xlu0 %4407, %v3888
  %v4409 = vpop.permute.xlu0 %4408
  %4412 = vset.pattern.permute.xlu0 0
  %4413 = vperm.xlu0 %4412, %v3891
  %v4414 = vpop.permute.xlu0 %4413
  %4417 = vset.pattern.permute.xlu0 0
  %4418 = vperm.xlu0 %4417, %v3894
  %v4419 = vpop.permute.xlu0 %4418
  %4422 = vset.pattern.permute.xlu0 0
  %4423 = vperm.xlu0 %4422, %v3897
  %v4424 = vpop.permute.xlu0 %4423
  %4427 = vset.pattern.permute.xlu0 0
  %4428 = vperm.xlu0 %4427, %v3906
  %v4429 = vpop.permute.xlu0 %4428
  %4432 = vset.pattern.permute.xlu0 0
  %4433 = vperm.xlu0 %4432, %v3909
  %v4434 = vpop.permute.xlu0 %4433
  %4437 = vset.pattern.permute.xlu0 0
  %4438 = vperm.xlu0 %4437, %v3912
  %v4439 = vpop.permute.xlu0 %4438
  %4442 = vset.pattern.permute.xlu0 0
  %4443 = vperm.xlu0 %4442, %v3915
  %v4444 = vpop.permute.xlu0 %4443
  %4447 = vset.pattern.permute.xlu0 0
  %4448 = vperm.xlu0 %4447, %v3918
  %v4449 = vpop.permute.xlu0 %4448
  %4452 = vset.pattern.permute.xlu0 0
  %4453 = vperm.xlu0 %4452, %v3921
  %v4454 = vpop.permute.xlu0 %4453
  %4457 = vset.pattern.permute.xlu0 0
  %4458 = vperm.xlu0 %4457, %v3924
  %v4459 = vpop.permute.xlu0 %4458
  %4462 = vset.pattern.permute.xlu0 0
  %4463 = vperm.xlu0 %4462, %v3927
  %v4464 = vpop.permute.xlu0 %4463
  %4467 = vset.pattern.permute.xlu0 0
  %4468 = vperm.xlu0 %4467, %v3930
  %v4469 = vpop.permute.xlu0 %4468
  %4472 = vset.pattern.permute.xlu0 0
  %4473 = vperm.xlu0 %4472, %v3933
  %v4474 = vpop.permute.xlu0 %4473
  %4477 = vset.pattern.permute.xlu0 0
  %4478 = vperm.xlu0 %4477, %v3936
  %v4479 = vpop.permute.xlu0 %4478
  %4482 = vset.pattern.permute.xlu0 0
  %4483 = vperm.xlu0 %4482, %v3939
  %v4484 = vpop.permute.xlu0 %4483
  %4487 = vset.pattern.permute.xlu0 0
  %4488 = vperm.xlu0 %4487, %v3942
  %v4489 = vpop.permute.xlu0 %4488
  %4492 = vset.pattern.permute.xlu0 0
  %4493 = vperm.xlu0 %4492, %v3945
  %v4494 = vpop.permute.xlu0 %4493
  %4497 = vset.pattern.permute.xlu0 0
  %4498 = vperm.xlu0 %4497, %v3948
  %v4499 = vpop.permute.xlu0 %4498
  %4502 = vset.pattern.permute.xlu0 0
  %4503 = vperm.xlu0 %4502, %v3951
  %v4504 = vpop.permute.xlu0 %4503
  %v4506 = vperm.slane %v3958, 1
  %v4507 = vmul.f32 %v3964, %v4506
  %v4508 = vmul.f32 %v3969, %v4506
  %v4509 = vmul.f32 %v4349, %v4506
  %v4510 = vmul.f32 %v3974, %v4506
  %v4511 = vmul.f32 %v3979, %v4506
  %v4512 = vmul.f32 %v4354, %v4506
  %v4513 = vmul.f32 %v3984, %v4506
  %v4514 = vmul.f32 %v3989, %v4506
  %v4515 = vmul.f32 %v4359, %v4506
  %v4516 = vmul.f32 %v3994, %v4506
  %v4517 = vmul.f32 %v3999, %v4506
  %v4518 = vmul.f32 %v4364, %v4506
  %v4519 = vmul.f32 %v4004, %v4506
  %v4520 = vmul.f32 %v4009, %v4506
  %v4521 = vmul.f32 %v4369, %v4506
  %v4522 = vmul.f32 %v4014, %v4506
  %v4523 = vmul.f32 %v4019, %v4506
  %v4524 = vmul.f32 %v4374, %v4506
  %v4525 = vmul.f32 %v4024, %v4506
  %v4526 = vmul.f32 %v4029, %v4506
  %v4527 = vmul.f32 %v4379, %v4506
  %v4528 = vmul.f32 %v4034, %v4506
  %v4529 = vmul.f32 %v4039, %v4506
  %v4530 = vmul.f32 %v4384, %v4506
  %v4531 = vmul.f32 %v4044, %v4506
  %v4532 = vmul.f32 %v4049, %v4506
  %v4533 = vmul.f32 %v4389, %v4506
  %v4534 = vmul.f32 %v4054, %v4506
  %v4535 = vmul.f32 %v4059, %v4506
  %v4536 = vmul.f32 %v4394, %v4506
  %v4537 = vmul.f32 %v4064, %v4506
  %v4538 = vmul.f32 %v4069, %v4506
  %v4539 = vmul.f32 %v4399, %v4506
  %v4540 = vmul.f32 %v4074, %v4506
  %v4541 = vmul.f32 %v4079, %v4506
  %v4542 = vmul.f32 %v4404, %v4506
  %v4543 = vmul.f32 %v4084, %v4506
  %v4544 = vmul.f32 %v4089, %v4506
  %v4545 = vmul.f32 %v4409, %v4506
  %v4546 = vmul.f32 %v4094, %v4506
  %v4547 = vmul.f32 %v4099, %v4506
  %v4548 = vmul.f32 %v4414, %v4506
  %v4549 = vmul.f32 %v4104, %v4506
  %v4550 = vmul.f32 %v4109, %v4506
  %v4551 = vmul.f32 %v4419, %v4506
  %v4552 = vmul.f32 %v4114, %v4506
  %v4553 = vmul.f32 %v4119, %v4506
  %v4554 = vmul.f32 %v4424, %v4506
  %v4555 = vmul.f32 %v4124, %v4506
  %v4556 = vmul.f32 %v4129, %v4506
  %v4557 = vmul.f32 %v4429, %v4506
  %v4558 = vmul.f32 %v4134, %v4506
  %v4559 = vmul.f32 %v4139, %v4506
  %v4560 = vmul.f32 %v4434, %v4506
  %v4561 = vmul.f32 %v4144, %v4506
  %v4562 = vmul.f32 %v4149, %v4506
  %v4563 = vmul.f32 %v4439, %v4506
  %v4564 = vmul.f32 %v4154, %v4506
  %v4565 = vmul.f32 %v4159, %v4506
  %v4566 = vmul.f32 %v4444, %v4506
  %v4567 = vmul.f32 %v4164, %v4506
  %v4568 = vmul.f32 %v4169, %v4506
  %v4569 = vmul.f32 %v4449, %v4506
  %v4570 = vmul.f32 %v4174, %v4506
  %v4571 = vmul.f32 %v4179, %v4506
  %v4572 = vmul.f32 %v4454, %v4506
  %v4573 = vmul.f32 %v4184, %v4506
  %v4574 = vmul.f32 %v4189, %v4506
  %v4575 = vmul.f32 %v4459, %v4506
  %v4576 = vmul.f32 %v4194, %v4506
  %v4577 = vmul.f32 %v4199, %v4506
  %v4578 = vmul.f32 %v4464, %v4506
  %v4579 = vmul.f32 %v4204, %v4506
  %v4580 = vmul.f32 %v4209, %v4506
  %v4581 = vmul.f32 %v4469, %v4506
  %v4582 = vmul.f32 %v4214, %v4506
  %v4583 = vmul.f32 %v4219, %v4506
  %v4584 = vmul.f32 %v4474, %v4506
  %v4585 = vmul.f32 %v4224, %v4506
  %v4586 = vmul.f32 %v4229, %v4506
  %v4587 = vmul.f32 %v4479, %v4506
  %v4588 = vmul.f32 %v4234, %v4506
  %v4589 = vmul.f32 %v4239, %v4506
  %v4590 = vmul.f32 %v4484, %v4506
  %v4591 = vmul.f32 %v4244, %v4506
  %v4592 = vmul.f32 %v4249, %v4506
  %v4593 = vmul.f32 %v4489, %v4506
  %v4594 = vmul.f32 %v4254, %v4506
  %v4595 = vmul.f32 %v4259, %v4506
  %v4596 = vmul.f32 %v4494, %v4506
  %v4597 = vmul.f32 %v4264, %v4506
  %v4598 = vmul.f32 %v4269, %v4506
  %v4599 = vmul.f32 %v4499, %v4506
  %v4600 = vmul.f32 %v4274, %v4506
  %v4601 = vmul.f32 %v4279, %v4506
  %v4602 = vmul.f32 %v4504, %v4506
  %v4699 = vrot.slane %v4507, 1
  %v4700 = vrot.slane %v4508, 1
  %v4701 = vsel %vm397, %v4699, %v4700
  %v4702 = vrot.slane %v4509, 1
  %v4703 = vsel %vm397, %v4700, %v4702
  %v4704 = vrot.slane %v4510, 1
  %v4705 = vrot.slane %v4511, 1
  %v4706 = vsel %vm397, %v4704, %v4705
  %v4707 = vrot.slane %v4512, 1
  %v4708 = vsel %vm397, %v4705, %v4707
  %v4709 = vrot.slane %v4513, 1
  %v4710 = vrot.slane %v4514, 1
  %v4711 = vsel %vm397, %v4709, %v4710
  %v4712 = vrot.slane %v4515, 1
  %v4713 = vsel %vm397, %v4710, %v4712
  %v4714 = vrot.slane %v4516, 1
  %v4715 = vrot.slane %v4517, 1
  %v4716 = vsel %vm397, %v4714, %v4715
  %v4717 = vrot.slane %v4518, 1
  %v4718 = vsel %vm397, %v4715, %v4717
  %v4719 = vrot.slane %v4519, 1
  %v4720 = vrot.slane %v4520, 1
  %v4721 = vsel %vm397, %v4719, %v4720
  %v4722 = vrot.slane %v4521, 1
  %v4723 = vsel %vm397, %v4720, %v4722
  %v4724 = vrot.slane %v4522, 1
  %v4725 = vrot.slane %v4523, 1
  %v4726 = vsel %vm397, %v4724, %v4725
  %v4727 = vrot.slane %v4524, 1
  %v4728 = vsel %vm397, %v4725, %v4727
  %v4729 = vrot.slane %v4525, 1
  %v4730 = vrot.slane %v4526, 1
  %v4731 = vsel %vm397, %v4729, %v4730
  %v4732 = vrot.slane %v4527, 1
  %v4733 = vsel %vm397, %v4730, %v4732
  %v4734 = vrot.slane %v4528, 1
  %v4735 = vrot.slane %v4529, 1
  %v4736 = vsel %vm397, %v4734, %v4735
  %v4737 = vrot.slane %v4530, 1
  %v4738 = vsel %vm397, %v4735, %v4737
  %v4739 = vrot.slane %v4531, 1
  %v4740 = vrot.slane %v4532, 1
  %v4741 = vsel %vm397, %v4739, %v4740
  %v4742 = vrot.slane %v4533, 1
  %v4743 = vsel %vm397, %v4740, %v4742
  %v4744 = vrot.slane %v4534, 1
  %v4745 = vrot.slane %v4535, 1
  %v4746 = vsel %vm397, %v4744, %v4745
  %v4747 = vrot.slane %v4536, 1
  %v4748 = vsel %vm397, %v4745, %v4747
  %v4749 = vrot.slane %v4537, 1
  %v4750 = vrot.slane %v4538, 1
  %v4751 = vsel %vm397, %v4749, %v4750
  %v4752 = vrot.slane %v4539, 1
  %v4753 = vsel %vm397, %v4750, %v4752
  %v4754 = vrot.slane %v4540, 1
  %v4755 = vrot.slane %v4541, 1
  %v4756 = vsel %vm397, %v4754, %v4755
  %v4757 = vrot.slane %v4542, 1
  %v4758 = vsel %vm397, %v4755, %v4757
  %v4759 = vrot.slane %v4543, 1
  %v4760 = vrot.slane %v4544, 1
  %v4761 = vsel %vm397, %v4759, %v4760
  %v4762 = vrot.slane %v4545, 1
  %v4763 = vsel %vm397, %v4760, %v4762
  %v4764 = vrot.slane %v4546, 1
  %v4765 = vrot.slane %v4547, 1
  %v4766 = vsel %vm397, %v4764, %v4765
  %v4767 = vrot.slane %v4548, 1
  %v4768 = vsel %vm397, %v4765, %v4767
  %v4769 = vrot.slane %v4549, 1
  %v4770 = vrot.slane %v4550, 1
  %v4771 = vsel %vm397, %v4769, %v4770
  %v4772 = vrot.slane %v4551, 1
  %v4773 = vsel %vm397, %v4770, %v4772
  %v4774 = vrot.slane %v4552, 1
  %v4775 = vrot.slane %v4553, 1
  %v4776 = vsel %vm397, %v4774, %v4775
  %v4777 = vrot.slane %v4554, 1
  %v4778 = vsel %vm397, %v4775, %v4777
  %v4779 = vrot.slane %v4555, 1
  %v4780 = vrot.slane %v4556, 1
  %v4781 = vsel %vm397, %v4779, %v4780
  %v4782 = vrot.slane %v4557, 1
  %v4783 = vsel %vm397, %v4780, %v4782
  %v4784 = vrot.slane %v4558, 1
  %v4785 = vrot.slane %v4559, 1
  %v4786 = vsel %vm397, %v4784, %v4785
  %v4787 = vrot.slane %v4560, 1
  %v4788 = vsel %vm397, %v4785, %v4787
  %v4789 = vrot.slane %v4561, 1
  %v4790 = vrot.slane %v4562, 1
  %v4791 = vsel %vm397, %v4789, %v4790
  %v4792 = vrot.slane %v4563, 1
  %v4793 = vsel %vm397, %v4790, %v4792
  %v4794 = vrot.slane %v4564, 1
  %v4795 = vrot.slane %v4565, 1
  %v4796 = vsel %vm397, %v4794, %v4795
  %v4797 = vrot.slane %v4566, 1
  %v4798 = vsel %vm397, %v4795, %v4797
  %v4799 = vrot.slane %v4567, 1
  %v4800 = vrot.slane %v4568, 1
  %v4801 = vsel %vm397, %v4799, %v4800
  %v4802 = vrot.slane %v4569, 1
  %v4803 = vsel %vm397, %v4800, %v4802
  %v4804 = vrot.slane %v4570, 1
  %v4805 = vrot.slane %v4571, 1
  %v4806 = vsel %vm397, %v4804, %v4805
  %v4807 = vrot.slane %v4572, 1
  %v4808 = vsel %vm397, %v4805, %v4807
  %v4809 = vrot.slane %v4573, 1
  %v4810 = vrot.slane %v4574, 1
  %v4811 = vsel %vm397, %v4809, %v4810
  %v4812 = vrot.slane %v4575, 1
  %v4813 = vsel %vm397, %v4810, %v4812
  %v4814 = vrot.slane %v4576, 1
  %v4815 = vrot.slane %v4577, 1
  %v4816 = vsel %vm397, %v4814, %v4815
  %v4817 = vrot.slane %v4578, 1
  %v4818 = vsel %vm397, %v4815, %v4817
  %v4819 = vrot.slane %v4579, 1
  %v4820 = vrot.slane %v4580, 1
  %v4821 = vsel %vm397, %v4819, %v4820
  %v4822 = vrot.slane %v4581, 1
  %v4823 = vsel %vm397, %v4820, %v4822
  %v4824 = vrot.slane %v4582, 1
  %v4825 = vrot.slane %v4583, 1
  %v4826 = vsel %vm397, %v4824, %v4825
  %v4827 = vrot.slane %v4584, 1
  %v4828 = vsel %vm397, %v4825, %v4827
  %v4829 = vrot.slane %v4585, 1
  %v4830 = vrot.slane %v4586, 1
  %v4831 = vsel %vm397, %v4829, %v4830
  %v4832 = vrot.slane %v4587, 1
  %v4833 = vsel %vm397, %v4830, %v4832
  %v4834 = vrot.slane %v4588, 1
  %v4835 = vrot.slane %v4589, 1
  %v4836 = vsel %vm397, %v4834, %v4835
  %v4837 = vrot.slane %v4590, 1
  %v4838 = vsel %vm397, %v4835, %v4837
  %v4839 = vrot.slane %v4591, 1
  %v4840 = vrot.slane %v4592, 1
  %v4841 = vsel %vm397, %v4839, %v4840
  %v4842 = vrot.slane %v4593, 1
  %v4843 = vsel %vm397, %v4840, %v4842
  %v4844 = vrot.slane %v4594, 1
  %v4845 = vrot.slane %v4595, 1
  %v4846 = vsel %vm397, %v4844, %v4845
  %v4847 = vrot.slane %v4596, 1
  %v4848 = vsel %vm397, %v4845, %v4847
  %v4849 = vrot.slane %v4597, 1
  %v4850 = vrot.slane %v4598, 1
  %v4851 = vsel %vm397, %v4849, %v4850
  %v4852 = vrot.slane %v4599, 1
  %v4853 = vsel %vm397, %v4850, %v4852
  %v4854 = vrot.slane %v4600, 1
  %v4855 = vrot.slane %v4601, 1
  %v4856 = vsel %vm397, %v4854, %v4855
  %v4857 = vrot.slane %v4602, 1
  %v4858 = vsel %vm397, %v4855, %v4857
  %v4923 = vadd.f32 %v4282, %v4701
  %v4924 = vadd.f32 %v4283, %v4703
  %v4925 = vadd.f32 %v4284, %v4706
  %v4926 = vadd.f32 %v4285, %v4708
  %v4927 = vadd.f32 %v4286, %v4711
  %v4928 = vadd.f32 %v4287, %v4713
  %v4929 = vadd.f32 %v4288, %v4716
  %v4930 = vadd.f32 %v4289, %v4718
  %v4931 = vadd.f32 %v4290, %v4721
  %v4932 = vadd.f32 %v4291, %v4723
  %v4933 = vadd.f32 %v4292, %v4726
  %v4934 = vadd.f32 %v4293, %v4728
  %v4935 = vadd.f32 %v4294, %v4731
  %v4936 = vadd.f32 %v4295, %v4733
  %v4937 = vadd.f32 %v4296, %v4736
  %v4938 = vadd.f32 %v4297, %v4738
  %v4939 = vadd.f32 %v4298, %v4741
  %v4940 = vadd.f32 %v4299, %v4743
  %v4941 = vadd.f32 %v4300, %v4746
  %v4942 = vadd.f32 %v4301, %v4748
  %v4943 = vadd.f32 %v4302, %v4751
  %v4944 = vadd.f32 %v4303, %v4753
  %v4945 = vadd.f32 %v4304, %v4756
  %v4946 = vadd.f32 %v4305, %v4758
  %v4947 = vadd.f32 %v4306, %v4761
  %v4948 = vadd.f32 %v4307, %v4763
  %v4949 = vadd.f32 %v4308, %v4766
  %v4950 = vadd.f32 %v4309, %v4768
  %v4951 = vadd.f32 %v4310, %v4771
  %v4952 = vadd.f32 %v4311, %v4773
  %v4953 = vadd.f32 %v4312, %v4776
  %v4954 = vadd.f32 %v4313, %v4778
  %v4955 = vadd.f32 %v4314, %v4781
  %v4956 = vadd.f32 %v4315, %v4783
  %v4957 = vadd.f32 %v4316, %v4786
  %v4958 = vadd.f32 %v4317, %v4788
  %v4959 = vadd.f32 %v4318, %v4791
  %v4960 = vadd.f32 %v4319, %v4793
  %v4961 = vadd.f32 %v4320, %v4796
  %v4962 = vadd.f32 %v4321, %v4798
  %v4963 = vadd.f32 %v4322, %v4801
  %v4964 = vadd.f32 %v4323, %v4803
  %v4965 = vadd.f32 %v4324, %v4806
  %v4966 = vadd.f32 %v4325, %v4808
  %v4967 = vadd.f32 %v4326, %v4811
  %v4968 = vadd.f32 %v4327, %v4813
  %v4969 = vadd.f32 %v4328, %v4816
  %v4970 = vadd.f32 %v4329, %v4818
  %v4971 = vadd.f32 %v4330, %v4821
  %v4972 = vadd.f32 %v4331, %v4823
  %v4973 = vadd.f32 %v4332, %v4826
  %v4974 = vadd.f32 %v4333, %v4828
  %v4975 = vadd.f32 %v4334, %v4831
  %v4976 = vadd.f32 %v4335, %v4833
  %v4977 = vadd.f32 %v4336, %v4836
  %v4978 = vadd.f32 %v4337, %v4838
  %v4979 = vadd.f32 %v4338, %v4841
  %v4980 = vadd.f32 %v4339, %v4843
  %v4981 = vadd.f32 %v4340, %v4846
  %v4982 = vadd.f32 %v4341, %v4848
  %v4983 = vadd.f32 %v4342, %v4851
  %v4984 = vadd.f32 %v4343, %v4853
  %v4985 = vadd.f32 %v4344, %v4856
  %v4986 = vadd.f32 %v4345, %v4858
  %v4987 = vperm.slane %v3958, 2
  %v4988 = vmul.f32 %v3964, %v4987
  %v4989 = vmul.f32 %v3969, %v4987
  %v4990 = vmul.f32 %v4349, %v4987
  %v4991 = vmul.f32 %v3974, %v4987
  %v4992 = vmul.f32 %v3979, %v4987
  %v4993 = vmul.f32 %v4354, %v4987
  %v4994 = vmul.f32 %v3984, %v4987
  %v4995 = vmul.f32 %v3989, %v4987
  %v4996 = vmul.f32 %v4359, %v4987
  %v4997 = vmul.f32 %v3994, %v4987
  %v4998 = vmul.f32 %v3999, %v4987
  %v4999 = vmul.f32 %v4364, %v4987
  %v5000 = vmul.f32 %v4004, %v4987
  %v5001 = vmul.f32 %v4009, %v4987
  %v5002 = vmul.f32 %v4369, %v4987
  %v5003 = vmul.f32 %v4014, %v4987
  %v5004 = vmul.f32 %v4019, %v4987
  %v5005 = vmul.f32 %v4374, %v4987
  %v5006 = vmul.f32 %v4024, %v4987
  %v5007 = vmul.f32 %v4029, %v4987
  %v5008 = vmul.f32 %v4379, %v4987
  %v5009 = vmul.f32 %v4034, %v4987
  %v5010 = vmul.f32 %v4039, %v4987
  %v5011 = vmul.f32 %v4384, %v4987
  %v5012 = vmul.f32 %v4044, %v4987
  %v5013 = vmul.f32 %v4049, %v4987
  %v5014 = vmul.f32 %v4389, %v4987
  %v5015 = vmul.f32 %v4054, %v4987
  %v5016 = vmul.f32 %v4059, %v4987
  %v5017 = vmul.f32 %v4394, %v4987
  %v5018 = vmul.f32 %v4064, %v4987
  %v5019 = vmul.f32 %v4069, %v4987
  %v5020 = vmul.f32 %v4399, %v4987
  %v5021 = vmul.f32 %v4074, %v4987
  %v5022 = vmul.f32 %v4079, %v4987
  %v5023 = vmul.f32 %v4404, %v4987
  %v5024 = vmul.f32 %v4084, %v4987
  %v5025 = vmul.f32 %v4089, %v4987
  %v5026 = vmul.f32 %v4409, %v4987
  %v5027 = vmul.f32 %v4094, %v4987
  %v5028 = vmul.f32 %v4099, %v4987
  %v5029 = vmul.f32 %v4414, %v4987
  %v5030 = vmul.f32 %v4104, %v4987
  %v5031 = vmul.f32 %v4109, %v4987
  %v5032 = vmul.f32 %v4419, %v4987
  %v5033 = vmul.f32 %v4114, %v4987
  %v5034 = vmul.f32 %v4119, %v4987
  %v5035 = vmul.f32 %v4424, %v4987
  %v5036 = vmul.f32 %v4124, %v4987
  %v5037 = vmul.f32 %v4129, %v4987
  %v5038 = vmul.f32 %v4429, %v4987
  %v5039 = vmul.f32 %v4134, %v4987
  %v5040 = vmul.f32 %v4139, %v4987
  %v5041 = vmul.f32 %v4434, %v4987
  %v5042 = vmul.f32 %v4144, %v4987
  %v5043 = vmul.f32 %v4149, %v4987
  %v5044 = vmul.f32 %v4439, %v4987
  %v5045 = vmul.f32 %v4154, %v4987
  %v5046 = vmul.f32 %v4159, %v4987
  %v5047 = vmul.f32 %v4444, %v4987
  %v5048 = vmul.f32 %v4164, %v4987
  %v5049 = vmul.f32 %v4169, %v4987
  %v5050 = vmul.f32 %v4449, %v4987
  %v5051 = vmul.f32 %v4174, %v4987
  %v5052 = vmul.f32 %v4179, %v4987
  %v5053 = vmul.f32 %v4454, %v4987
  %v5054 = vmul.f32 %v4184, %v4987
  %v5055 = vmul.f32 %v4189, %v4987
  %v5056 = vmul.f32 %v4459, %v4987
  %v5057 = vmul.f32 %v4194, %v4987
  %v5058 = vmul.f32 %v4199, %v4987
  %v5059 = vmul.f32 %v4464, %v4987
  %v5060 = vmul.f32 %v4204, %v4987
  %v5061 = vmul.f32 %v4209, %v4987
  %v5062 = vmul.f32 %v4469, %v4987
  %v5063 = vmul.f32 %v4214, %v4987
  %v5064 = vmul.f32 %v4219, %v4987
  %v5065 = vmul.f32 %v4474, %v4987
  %v5066 = vmul.f32 %v4224, %v4987
  %v5067 = vmul.f32 %v4229, %v4987
  %v5068 = vmul.f32 %v4479, %v4987
  %v5069 = vmul.f32 %v4234, %v4987
  %v5070 = vmul.f32 %v4239, %v4987
  %v5071 = vmul.f32 %v4484, %v4987
  %v5072 = vmul.f32 %v4244, %v4987
  %v5073 = vmul.f32 %v4249, %v4987
  %v5074 = vmul.f32 %v4489, %v4987
  %v5075 = vmul.f32 %v4254, %v4987
  %v5076 = vmul.f32 %v4259, %v4987
  %v5077 = vmul.f32 %v4494, %v4987
  %v5078 = vmul.f32 %v4264, %v4987
  %v5079 = vmul.f32 %v4269, %v4987
  %v5080 = vmul.f32 %v4499, %v4987
  %v5081 = vmul.f32 %v4274, %v4987
  %v5082 = vmul.f32 %v4279, %v4987
  %v5083 = vmul.f32 %v4504, %v4987
  %v5180 = vrot.slane %v4988, 2
  %v5181 = vrot.slane %v4989, 2
  %v5182 = vsel %vm879, %v5180, %v5181
  %v5183 = vrot.slane %v4990, 2
  %v5184 = vsel %vm879, %v5181, %v5183
  %v5185 = vrot.slane %v4991, 2
  %v5186 = vrot.slane %v4992, 2
  %v5187 = vsel %vm879, %v5185, %v5186
  %v5188 = vrot.slane %v4993, 2
  %v5189 = vsel %vm879, %v5186, %v5188
  %v5190 = vrot.slane %v4994, 2
  %v5191 = vrot.slane %v4995, 2
  %v5192 = vsel %vm879, %v5190, %v5191
  %v5193 = vrot.slane %v4996, 2
  %v5194 = vsel %vm879, %v5191, %v5193
  %v5195 = vrot.slane %v4997, 2
  %v5196 = vrot.slane %v4998, 2
  %v5197 = vsel %vm879, %v5195, %v5196
  %v5198 = vrot.slane %v4999, 2
  %v5199 = vsel %vm879, %v5196, %v5198
  %v5200 = vrot.slane %v5000, 2
  %v5201 = vrot.slane %v5001, 2
  %v5202 = vsel %vm879, %v5200, %v5201
  %v5203 = vrot.slane %v5002, 2
  %v5204 = vsel %vm879, %v5201, %v5203
  %v5205 = vrot.slane %v5003, 2
  %v5206 = vrot.slane %v5004, 2
  %v5207 = vsel %vm879, %v5205, %v5206
  %v5208 = vrot.slane %v5005, 2
  %v5209 = vsel %vm879, %v5206, %v5208
  %v5210 = vrot.slane %v5006, 2
  %v5211 = vrot.slane %v5007, 2
  %v5212 = vsel %vm879, %v5210, %v5211
  %v5213 = vrot.slane %v5008, 2
  %v5214 = vsel %vm879, %v5211, %v5213
  %v5215 = vrot.slane %v5009, 2
  %v5216 = vrot.slane %v5010, 2
  %v5217 = vsel %vm879, %v5215, %v5216
  %v5218 = vrot.slane %v5011, 2
  %v5219 = vsel %vm879, %v5216, %v5218
  %v5220 = vrot.slane %v5012, 2
  %v5221 = vrot.slane %v5013, 2
  %v5222 = vsel %vm879, %v5220, %v5221
  %v5223 = vrot.slane %v5014, 2
  %v5224 = vsel %vm879, %v5221, %v5223
  %v5225 = vrot.slane %v5015, 2
  %v5226 = vrot.slane %v5016, 2
  %v5227 = vsel %vm879, %v5225, %v5226
  %v5228 = vrot.slane %v5017, 2
  %v5229 = vsel %vm879, %v5226, %v5228
  %v5230 = vrot.slane %v5018, 2
  %v5231 = vrot.slane %v5019, 2
  %v5232 = vsel %vm879, %v5230, %v5231
  %v5233 = vrot.slane %v5020, 2
  %v5234 = vsel %vm879, %v5231, %v5233
  %v5235 = vrot.slane %v5021, 2
  %v5236 = vrot.slane %v5022, 2
  %v5237 = vsel %vm879, %v5235, %v5236
  %v5238 = vrot.slane %v5023, 2
  %v5239 = vsel %vm879, %v5236, %v5238
  %v5240 = vrot.slane %v5024, 2
  %v5241 = vrot.slane %v5025, 2
  %v5242 = vsel %vm879, %v5240, %v5241
  %v5243 = vrot.slane %v5026, 2
  %v5244 = vsel %vm879, %v5241, %v5243
  %v5245 = vrot.slane %v5027, 2
  %v5246 = vrot.slane %v5028, 2
  %v5247 = vsel %vm879, %v5245, %v5246
  %v5248 = vrot.slane %v5029, 2
  %v5249 = vsel %vm879, %v5246, %v5248
  %v5250 = vrot.slane %v5030, 2
  %v5251 = vrot.slane %v5031, 2
  %v5252 = vsel %vm879, %v5250, %v5251
  %v5253 = vrot.slane %v5032, 2
  %v5254 = vsel %vm879, %v5251, %v5253
  %v5255 = vrot.slane %v5033, 2
  %v5256 = vrot.slane %v5034, 2
  %v5257 = vsel %vm879, %v5255, %v5256
  %v5258 = vrot.slane %v5035, 2
  %v5259 = vsel %vm879, %v5256, %v5258
  %v5260 = vrot.slane %v5036, 2
  %v5261 = vrot.slane %v5037, 2
  %v5262 = vsel %vm879, %v5260, %v5261
  %v5263 = vrot.slane %v5038, 2
  %v5264 = vsel %vm879, %v5261, %v5263
  %v5265 = vrot.slane %v5039, 2
  %v5266 = vrot.slane %v5040, 2
  %v5267 = vsel %vm879, %v5265, %v5266
  %v5268 = vrot.slane %v5041, 2
  %v5269 = vsel %vm879, %v5266, %v5268
  %v5270 = vrot.slane %v5042, 2
  %v5271 = vrot.slane %v5043, 2
  %v5272 = vsel %vm879, %v5270, %v5271
  %v5273 = vrot.slane %v5044, 2
  %v5274 = vsel %vm879, %v5271, %v5273
  %v5275 = vrot.slane %v5045, 2
  %v5276 = vrot.slane %v5046, 2
  %v5277 = vsel %vm879, %v5275, %v5276
  %v5278 = vrot.slane %v5047, 2
  %v5279 = vsel %vm879, %v5276, %v5278
  %v5280 = vrot.slane %v5048, 2
  %v5281 = vrot.slane %v5049, 2
  %v5282 = vsel %vm879, %v5280, %v5281
  %v5283 = vrot.slane %v5050, 2
  %v5284 = vsel %vm879, %v5281, %v5283
  %v5285 = vrot.slane %v5051, 2
  %v5286 = vrot.slane %v5052, 2
  %v5287 = vsel %vm879, %v5285, %v5286
  %v5288 = vrot.slane %v5053, 2
  %v5289 = vsel %vm879, %v5286, %v5288
  %v5290 = vrot.slane %v5054, 2
  %v5291 = vrot.slane %v5055, 2
  %v5292 = vsel %vm879, %v5290, %v5291
  %v5293 = vrot.slane %v5056, 2
  %v5294 = vsel %vm879, %v5291, %v5293
  %v5295 = vrot.slane %v5057, 2
  %v5296 = vrot.slane %v5058, 2
  %v5297 = vsel %vm879, %v5295, %v5296
  %v5298 = vrot.slane %v5059, 2
  %v5299 = vsel %vm879, %v5296, %v5298
  %v5300 = vrot.slane %v5060, 2
  %v5301 = vrot.slane %v5061, 2
  %v5302 = vsel %vm879, %v5300, %v5301
  %v5303 = vrot.slane %v5062, 2
  %v5304 = vsel %vm879, %v5301, %v5303
  %v5305 = vrot.slane %v5063, 2
  %v5306 = vrot.slane %v5064, 2
  %v5307 = vsel %vm879, %v5305, %v5306
  %v5308 = vrot.slane %v5065, 2
  %v5309 = vsel %vm879, %v5306, %v5308
  %v5310 = vrot.slane %v5066, 2
  %v5311 = vrot.slane %v5067, 2
  %v5312 = vsel %vm879, %v5310, %v5311
  %v5313 = vrot.slane %v5068, 2
  %v5314 = vsel %vm879, %v5311, %v5313
  %v5315 = vrot.slane %v5069, 2
  %v5316 = vrot.slane %v5070, 2
  %v5317 = vsel %vm879, %v5315, %v5316
  %v5318 = vrot.slane %v5071, 2
  %v5319 = vsel %vm879, %v5316, %v5318
  %v5320 = vrot.slane %v5072, 2
  %v5321 = vrot.slane %v5073, 2
  %v5322 = vsel %vm879, %v5320, %v5321
  %v5323 = vrot.slane %v5074, 2
  %v5324 = vsel %vm879, %v5321, %v5323
  %v5325 = vrot.slane %v5075, 2
  %v5326 = vrot.slane %v5076, 2
  %v5327 = vsel %vm879, %v5325, %v5326
  %v5328 = vrot.slane %v5077, 2
  %v5329 = vsel %vm879, %v5326, %v5328
  %v5330 = vrot.slane %v5078, 2
  %v5331 = vrot.slane %v5079, 2
  %v5332 = vsel %vm879, %v5330, %v5331
  %v5333 = vrot.slane %v5080, 2
  %v5334 = vsel %vm879, %v5331, %v5333
  %v5335 = vrot.slane %v5081, 2
  %v5336 = vrot.slane %v5082, 2
  %v5337 = vsel %vm879, %v5335, %v5336
  %v5338 = vrot.slane %v5083, 2
  %v5339 = vsel %vm879, %v5336, %v5338
  %v5404 = vadd.f32 %v4923, %v5182
  %v5405 = vadd.f32 %v4924, %v5184
  %v5406 = vadd.f32 %v4925, %v5187
  %v5407 = vadd.f32 %v4926, %v5189
  %v5408 = vadd.f32 %v4927, %v5192
  %v5409 = vadd.f32 %v4928, %v5194
  %v5410 = vadd.f32 %v4929, %v5197
  %v5411 = vadd.f32 %v4930, %v5199
  %v5412 = vadd.f32 %v4931, %v5202
  %v5413 = vadd.f32 %v4932, %v5204
  %v5414 = vadd.f32 %v4933, %v5207
  %v5415 = vadd.f32 %v4934, %v5209
  %v5416 = vadd.f32 %v4935, %v5212
  %v5417 = vadd.f32 %v4936, %v5214
  %v5418 = vadd.f32 %v4937, %v5217
  %v5419 = vadd.f32 %v4938, %v5219
  %v5420 = vadd.f32 %v4939, %v5222
  %v5421 = vadd.f32 %v4940, %v5224
  %v5422 = vadd.f32 %v4941, %v5227
  %v5423 = vadd.f32 %v4942, %v5229
  %v5424 = vadd.f32 %v4943, %v5232
  %v5425 = vadd.f32 %v4944, %v5234
  %v5426 = vadd.f32 %v4945, %v5237
  %v5427 = vadd.f32 %v4946, %v5239
  %v5428 = vadd.f32 %v4947, %v5242
  %v5429 = vadd.f32 %v4948, %v5244
  %v5430 = vadd.f32 %v4949, %v5247
  %v5431 = vadd.f32 %v4950, %v5249
  %v5432 = vadd.f32 %v4951, %v5252
  %v5433 = vadd.f32 %v4952, %v5254
  %v5434 = vadd.f32 %v4953, %v5257
  %v5435 = vadd.f32 %v4954, %v5259
  %v5436 = vadd.f32 %v4955, %v5262
  %v5437 = vadd.f32 %v4956, %v5264
  %v5438 = vadd.f32 %v4957, %v5267
  %v5439 = vadd.f32 %v4958, %v5269
  %v5440 = vadd.f32 %v4959, %v5272
  %v5441 = vadd.f32 %v4960, %v5274
  %v5442 = vadd.f32 %v4961, %v5277
  %v5443 = vadd.f32 %v4962, %v5279
  %v5444 = vadd.f32 %v4963, %v5282
  %v5445 = vadd.f32 %v4964, %v5284
  %v5446 = vadd.f32 %v4965, %v5287
  %v5447 = vadd.f32 %v4966, %v5289
  %v5448 = vadd.f32 %v4967, %v5292
  %v5449 = vadd.f32 %v4968, %v5294
  %v5450 = vadd.f32 %v4969, %v5297
  %v5451 = vadd.f32 %v4970, %v5299
  %v5452 = vadd.f32 %v4971, %v5302
  %v5453 = vadd.f32 %v4972, %v5304
  %v5454 = vadd.f32 %v4973, %v5307
  %v5455 = vadd.f32 %v4974, %v5309
  %v5456 = vadd.f32 %v4975, %v5312
  %v5457 = vadd.f32 %v4976, %v5314
  %v5458 = vadd.f32 %v4977, %v5317
  %v5459 = vadd.f32 %v4978, %v5319
  %v5460 = vadd.f32 %v4979, %v5322
  %v5461 = vadd.f32 %v4980, %v5324
  %v5462 = vadd.f32 %v4981, %v5327
  %v5463 = vadd.f32 %v4982, %v5329
  %v5464 = vadd.f32 %v4983, %v5332
  %v5465 = vadd.f32 %v4984, %v5334
  %v5466 = vadd.f32 %v4985, %v5337
  %v5467 = vadd.f32 %v4986, %v5339
  %5469 = vset.pattern.permute.xlu0 0
  %5470 = vperm.xlu0 %5469, %v3898
  %v5471 = vpop.permute.xlu0 %5470
  %5474 = vset.pattern.permute.xlu0 0
  %5475 = vperm.xlu0 %5474, %v3899
  %v5476 = vpop.permute.xlu0 %5475
  %5479 = vset.pattern.permute.xlu0 0
  %5480 = vperm.xlu0 %5479, %v3952
  %v5481 = vpop.permute.xlu0 %5480
  %5484 = vset.pattern.permute.xlu0 0
  %5485 = vperm.xlu0 %5484, %v3953
  %v5486 = vpop.permute.xlu0 %5485
  %v5488 = vperm.slane %v3959, 0
  %v5489 = vmul.f32 %v3974, %v5488
  %v5490 = vmul.f32 %v3979, %v5488
  %v5491 = vmul.f32 %v3984, %v5488
  %v5492 = vmul.f32 %v3989, %v5488
  %v5493 = vmul.f32 %v3994, %v5488
  %v5494 = vmul.f32 %v3999, %v5488
  %v5495 = vmul.f32 %v4004, %v5488
  %v5496 = vmul.f32 %v4009, %v5488
  %v5497 = vmul.f32 %v4014, %v5488
  %v5498 = vmul.f32 %v4019, %v5488
  %v5499 = vmul.f32 %v4024, %v5488
  %v5500 = vmul.f32 %v4029, %v5488
  %v5501 = vmul.f32 %v4034, %v5488
  %v5502 = vmul.f32 %v4039, %v5488
  %v5503 = vmul.f32 %v4044, %v5488
  %v5504 = vmul.f32 %v4049, %v5488
  %v5505 = vmul.f32 %v4054, %v5488
  %v5506 = vmul.f32 %v4059, %v5488
  %v5507 = vmul.f32 %v4064, %v5488
  %v5508 = vmul.f32 %v4069, %v5488
  %v5509 = vmul.f32 %v4074, %v5488
  %v5510 = vmul.f32 %v4079, %v5488
  %v5511 = vmul.f32 %v4084, %v5488
  %v5512 = vmul.f32 %v4089, %v5488
  %v5513 = vmul.f32 %v4094, %v5488
  %v5514 = vmul.f32 %v4099, %v5488
  %v5515 = vmul.f32 %v4104, %v5488
  %v5516 = vmul.f32 %v4109, %v5488
  %v5517 = vmul.f32 %v4114, %v5488
  %v5518 = vmul.f32 %v4119, %v5488
  %v5519 = vmul.f32 %v5471, %v5488
  %v5520 = vmul.f32 %v5476, %v5488
  %v5521 = vmul.f32 %v4134, %v5488
  %v5522 = vmul.f32 %v4139, %v5488
  %v5523 = vmul.f32 %v4144, %v5488
  %v5524 = vmul.f32 %v4149, %v5488
  %v5525 = vmul.f32 %v4154, %v5488
  %v5526 = vmul.f32 %v4159, %v5488
  %v5527 = vmul.f32 %v4164, %v5488
  %v5528 = vmul.f32 %v4169, %v5488
  %v5529 = vmul.f32 %v4174, %v5488
  %v5530 = vmul.f32 %v4179, %v5488
  %v5531 = vmul.f32 %v4184, %v5488
  %v5532 = vmul.f32 %v4189, %v5488
  %v5533 = vmul.f32 %v4194, %v5488
  %v5534 = vmul.f32 %v4199, %v5488
  %v5535 = vmul.f32 %v4204, %v5488
  %v5536 = vmul.f32 %v4209, %v5488
  %v5537 = vmul.f32 %v4214, %v5488
  %v5538 = vmul.f32 %v4219, %v5488
  %v5539 = vmul.f32 %v4224, %v5488
  %v5540 = vmul.f32 %v4229, %v5488
  %v5541 = vmul.f32 %v4234, %v5488
  %v5542 = vmul.f32 %v4239, %v5488
  %v5543 = vmul.f32 %v4244, %v5488
  %v5544 = vmul.f32 %v4249, %v5488
  %v5545 = vmul.f32 %v4254, %v5488
  %v5546 = vmul.f32 %v4259, %v5488
  %v5547 = vmul.f32 %v4264, %v5488
  %v5548 = vmul.f32 %v4269, %v5488
  %v5549 = vmul.f32 %v4274, %v5488
  %v5550 = vmul.f32 %v4279, %v5488
  %v5551 = vmul.f32 %v5481, %v5488
  %v5552 = vmul.f32 %v5486, %v5488
  %v5553 = vadd.f32 %v5404, %v5489
  %v5554 = vadd.f32 %v5405, %v5490
  %v5555 = vadd.f32 %v5406, %v5491
  %v5556 = vadd.f32 %v5407, %v5492
  %v5557 = vadd.f32 %v5408, %v5493
  %v5558 = vadd.f32 %v5409, %v5494
  %v5559 = vadd.f32 %v5410, %v5495
  %v5560 = vadd.f32 %v5411, %v5496
  %v5561 = vadd.f32 %v5412, %v5497
  %v5562 = vadd.f32 %v5413, %v5498
  %v5563 = vadd.f32 %v5414, %v5499
  %v5564 = vadd.f32 %v5415, %v5500
  %v5565 = vadd.f32 %v5416, %v5501
  %v5566 = vadd.f32 %v5417, %v5502
  %v5567 = vadd.f32 %v5418, %v5503
  %v5568 = vadd.f32 %v5419, %v5504
  %v5569 = vadd.f32 %v5420, %v5505
  %v5570 = vadd.f32 %v5421, %v5506
  %v5571 = vadd.f32 %v5422, %v5507
  %v5572 = vadd.f32 %v5423, %v5508
  %v5573 = vadd.f32 %v5424, %v5509
  %v5574 = vadd.f32 %v5425, %v5510
  %v5575 = vadd.f32 %v5426, %v5511
  %v5576 = vadd.f32 %v5427, %v5512
  %v5577 = vadd.f32 %v5428, %v5513
  %v5578 = vadd.f32 %v5429, %v5514
  %v5579 = vadd.f32 %v5430, %v5515
  %v5580 = vadd.f32 %v5431, %v5516
  %v5581 = vadd.f32 %v5432, %v5517
  %v5582 = vadd.f32 %v5433, %v5518
  %v5583 = vadd.f32 %v5434, %v5519
  %v5584 = vadd.f32 %v5435, %v5520
  %v5585 = vadd.f32 %v5436, %v5521
  %v5586 = vadd.f32 %v5437, %v5522
  %v5587 = vadd.f32 %v5438, %v5523
  %v5588 = vadd.f32 %v5439, %v5524
  %v5589 = vadd.f32 %v5440, %v5525
  %v5590 = vadd.f32 %v5441, %v5526
  %v5591 = vadd.f32 %v5442, %v5527
  %v5592 = vadd.f32 %v5443, %v5528
  %v5593 = vadd.f32 %v5444, %v5529
  %v5594 = vadd.f32 %v5445, %v5530
  %v5595 = vadd.f32 %v5446, %v5531
  %v5596 = vadd.f32 %v5447, %v5532
  %v5597 = vadd.f32 %v5448, %v5533
  %v5598 = vadd.f32 %v5449, %v5534
  %v5599 = vadd.f32 %v5450, %v5535
  %v5600 = vadd.f32 %v5451, %v5536
  %v5601 = vadd.f32 %v5452, %v5537
  %v5602 = vadd.f32 %v5453, %v5538
  %v5603 = vadd.f32 %v5454, %v5539
  %v5604 = vadd.f32 %v5455, %v5540
  %v5605 = vadd.f32 %v5456, %v5541
  %v5606 = vadd.f32 %v5457, %v5542
  %v5607 = vadd.f32 %v5458, %v5543
  %v5608 = vadd.f32 %v5459, %v5544
  %v5609 = vadd.f32 %v5460, %v5545
  %v5610 = vadd.f32 %v5461, %v5546
  %v5611 = vadd.f32 %v5462, %v5547
  %v5612 = vadd.f32 %v5463, %v5548
  %v5613 = vadd.f32 %v5464, %v5549
  %v5614 = vadd.f32 %v5465, %v5550
  %v5615 = vadd.f32 %v5466, %v5551
  %v5616 = vadd.f32 %v5467, %v5552
  %5618 = vset.pattern.permute.xlu0 0
  %5619 = vperm.xlu0 %5618, %v3900
  %v5620 = vpop.permute.xlu0 %5619
  %5623 = vset.pattern.permute.xlu0 0
  %5624 = vperm.xlu0 %5623, %v3954
  %v5625 = vpop.permute.xlu0 %5624
  %v5627 = vperm.slane %v3959, 1
  %v5628 = vmul.f32 %v3974, %v5627
  %v5629 = vmul.f32 %v3979, %v5627
  %v5630 = vmul.f32 %v4354, %v5627
  %v5631 = vmul.f32 %v3984, %v5627
  %v5632 = vmul.f32 %v3989, %v5627
  %v5633 = vmul.f32 %v4359, %v5627
  %v5634 = vmul.f32 %v3994, %v5627
  %v5635 = vmul.f32 %v3999, %v5627
  %v5636 = vmul.f32 %v4364, %v5627
  %v5637 = vmul.f32 %v4004, %v5627
  %v5638 = vmul.f32 %v4009, %v5627
  %v5639 = vmul.f32 %v4369, %v5627
  %v5640 = vmul.f32 %v4014, %v5627
  %v5641 = vmul.f32 %v4019, %v5627
  %v5642 = vmul.f32 %v4374, %v5627
  %v5643 = vmul.f32 %v4024, %v5627
  %v5644 = vmul.f32 %v4029, %v5627
  %v5645 = vmul.f32 %v4379, %v5627
  %v5646 = vmul.f32 %v4034, %v5627
  %v5647 = vmul.f32 %v4039, %v5627
  %v5648 = vmul.f32 %v4384, %v5627
  %v5649 = vmul.f32 %v4044, %v5627
  %v5650 = vmul.f32 %v4049, %v5627
  %v5651 = vmul.f32 %v4389, %v5627
  %v5652 = vmul.f32 %v4054, %v5627
  %v5653 = vmul.f32 %v4059, %v5627
  %v5654 = vmul.f32 %v4394, %v5627
  %v5655 = vmul.f32 %v4064, %v5627
  %v5656 = vmul.f32 %v4069, %v5627
  %v5657 = vmul.f32 %v4399, %v5627
  %v5658 = vmul.f32 %v4074, %v5627
  %v5659 = vmul.f32 %v4079, %v5627
  %v5660 = vmul.f32 %v4404, %v5627
  %v5661 = vmul.f32 %v4084, %v5627
  %v5662 = vmul.f32 %v4089, %v5627
  %v5663 = vmul.f32 %v4409, %v5627
  %v5664 = vmul.f32 %v4094, %v5627
  %v5665 = vmul.f32 %v4099, %v5627
  %v5666 = vmul.f32 %v4414, %v5627
  %v5667 = vmul.f32 %v4104, %v5627
  %v5668 = vmul.f32 %v4109, %v5627
  %v5669 = vmul.f32 %v4419, %v5627
  %v5670 = vmul.f32 %v4114, %v5627
  %v5671 = vmul.f32 %v4119, %v5627
  %v5672 = vmul.f32 %v4424, %v5627
  %v5673 = vmul.f32 %v5471, %v5627
  %v5674 = vmul.f32 %v5476, %v5627
  %v5675 = vmul.f32 %v5620, %v5627
  %v5676 = vmul.f32 %v4134, %v5627
  %v5677 = vmul.f32 %v4139, %v5627
  %v5678 = vmul.f32 %v4434, %v5627
  %v5679 = vmul.f32 %v4144, %v5627
  %v5680 = vmul.f32 %v4149, %v5627
  %v5681 = vmul.f32 %v4439, %v5627
  %v5682 = vmul.f32 %v4154, %v5627
  %v5683 = vmul.f32 %v4159, %v5627
  %v5684 = vmul.f32 %v4444, %v5627
  %v5685 = vmul.f32 %v4164, %v5627
  %v5686 = vmul.f32 %v4169, %v5627
  %v5687 = vmul.f32 %v4449, %v5627
  %v5688 = vmul.f32 %v4174, %v5627
  %v5689 = vmul.f32 %v4179, %v5627
  %v5690 = vmul.f32 %v4454, %v5627
  %v5691 = vmul.f32 %v4184, %v5627
  %v5692 = vmul.f32 %v4189, %v5627
  %v5693 = vmul.f32 %v4459, %v5627
  %v5694 = vmul.f32 %v4194, %v5627
  %v5695 = vmul.f32 %v4199, %v5627
  %v5696 = vmul.f32 %v4464, %v5627
  %v5697 = vmul.f32 %v4204, %v5627
  %v5698 = vmul.f32 %v4209, %v5627
  %v5699 = vmul.f32 %v4469, %v5627
  %v5700 = vmul.f32 %v4214, %v5627
  %v5701 = vmul.f32 %v4219, %v5627
  %v5702 = vmul.f32 %v4474, %v5627
  %v5703 = vmul.f32 %v4224, %v5627
  %v5704 = vmul.f32 %v4229, %v5627
  %v5705 = vmul.f32 %v4479, %v5627
  %v5706 = vmul.f32 %v4234, %v5627
  %v5707 = vmul.f32 %v4239, %v5627
  %v5708 = vmul.f32 %v4484, %v5627
  %v5709 = vmul.f32 %v4244, %v5627
  %v5710 = vmul.f32 %v4249, %v5627
  %v5711 = vmul.f32 %v4489, %v5627
  %v5712 = vmul.f32 %v4254, %v5627
  %v5713 = vmul.f32 %v4259, %v5627
  %v5714 = vmul.f32 %v4494, %v5627
  %v5715 = vmul.f32 %v4264, %v5627
  %v5716 = vmul.f32 %v4269, %v5627
  %v5717 = vmul.f32 %v4499, %v5627
  %v5718 = vmul.f32 %v4274, %v5627
  %v5719 = vmul.f32 %v4279, %v5627
  %v5720 = vmul.f32 %v4504, %v5627
  %v5721 = vmul.f32 %v5481, %v5627
  %v5722 = vmul.f32 %v5486, %v5627
  %v5723 = vmul.f32 %v5625, %v5627
  %v5820 = vrot.slane %v5628, 1
  %v5821 = vrot.slane %v5629, 1
  %v5822 = vsel %vm397, %v5820, %v5821
  %v5823 = vrot.slane %v5630, 1
  %v5824 = vsel %vm397, %v5821, %v5823
  %v5825 = vrot.slane %v5631, 1
  %v5826 = vrot.slane %v5632, 1
  %v5827 = vsel %vm397, %v5825, %v5826
  %v5828 = vrot.slane %v5633, 1
  %v5829 = vsel %vm397, %v5826, %v5828
  %v5830 = vrot.slane %v5634, 1
  %v5831 = vrot.slane %v5635, 1
  %v5832 = vsel %vm397, %v5830, %v5831
  %v5833 = vrot.slane %v5636, 1
  %v5834 = vsel %vm397, %v5831, %v5833
  %v5835 = vrot.slane %v5637, 1
  %v5836 = vrot.slane %v5638, 1
  %v5837 = vsel %vm397, %v5835, %v5836
  %v5838 = vrot.slane %v5639, 1
  %v5839 = vsel %vm397, %v5836, %v5838
  %v5840 = vrot.slane %v5640, 1
  %v5841 = vrot.slane %v5641, 1
  %v5842 = vsel %vm397, %v5840, %v5841
  %v5843 = vrot.slane %v5642, 1
  %v5844 = vsel %vm397, %v5841, %v5843
  %v5845 = vrot.slane %v5643, 1
  %v5846 = vrot.slane %v5644, 1
  %v5847 = vsel %vm397, %v5845, %v5846
  %v5848 = vrot.slane %v5645, 1
  %v5849 = vsel %vm397, %v5846, %v5848
  %v5850 = vrot.slane %v5646, 1
  %v5851 = vrot.slane %v5647, 1
  %v5852 = vsel %vm397, %v5850, %v5851
  %v5853 = vrot.slane %v5648, 1
  %v5854 = vsel %vm397, %v5851, %v5853
  %v5855 = vrot.slane %v5649, 1
  %v5856 = vrot.slane %v5650, 1
  %v5857 = vsel %vm397, %v5855, %v5856
  %v5858 = vrot.slane %v5651, 1
  %v5859 = vsel %vm397, %v5856, %v5858
  %v5860 = vrot.slane %v5652, 1
  %v5861 = vrot.slane %v5653, 1
  %v5862 = vsel %vm397, %v5860, %v5861
  %v5863 = vrot.slane %v5654, 1
  %v5864 = vsel %vm397, %v5861, %v5863
  %v5865 = vrot.slane %v5655, 1
  %v5866 = vrot.slane %v5656, 1
  %v5867 = vsel %vm397, %v5865, %v5866
  %v5868 = vrot.slane %v5657, 1
  %v5869 = vsel %vm397, %v5866, %v5868
  %v5870 = vrot.slane %v5658, 1
  %v5871 = vrot.slane %v5659, 1
  %v5872 = vsel %vm397, %v5870, %v5871
  %v5873 = vrot.slane %v5660, 1
  %v5874 = vsel %vm397, %v5871, %v5873
  %v5875 = vrot.slane %v5661, 1
  %v5876 = vrot.slane %v5662, 1
  %v5877 = vsel %vm397, %v5875, %v5876
  %v5878 = vrot.slane %v5663, 1
  %v5879 = vsel %vm397, %v5876, %v5878
  %v5880 = vrot.slane %v5664, 1
  %v5881 = vrot.slane %v5665, 1
  %v5882 = vsel %vm397, %v5880, %v5881
  %v5883 = vrot.slane %v5666, 1
  %v5884 = vsel %vm397, %v5881, %v5883
  %v5885 = vrot.slane %v5667, 1
  %v5886 = vrot.slane %v5668, 1
  %v5887 = vsel %vm397, %v5885, %v5886
  %v5888 = vrot.slane %v5669, 1
  %v5889 = vsel %vm397, %v5886, %v5888
  %v5890 = vrot.slane %v5670, 1
  %v5891 = vrot.slane %v5671, 1
  %v5892 = vsel %vm397, %v5890, %v5891
  %v5893 = vrot.slane %v5672, 1
  %v5894 = vsel %vm397, %v5891, %v5893
  %v5895 = vrot.slane %v5673, 1
  %v5896 = vrot.slane %v5674, 1
  %v5897 = vsel %vm397, %v5895, %v5896
  %v5898 = vrot.slane %v5675, 1
  %v5899 = vsel %vm397, %v5896, %v5898
  %v5900 = vrot.slane %v5676, 1
  %v5901 = vrot.slane %v5677, 1
  %v5902 = vsel %vm397, %v5900, %v5901
  %v5903 = vrot.slane %v5678, 1
  %v5904 = vsel %vm397, %v5901, %v5903
  %v5905 = vrot.slane %v5679, 1
  %v5906 = vrot.slane %v5680, 1
  %v5907 = vsel %vm397, %v5905, %v5906
  %v5908 = vrot.slane %v5681, 1
  %v5909 = vsel %vm397, %v5906, %v5908
  %v5910 = vrot.slane %v5682, 1
  %v5911 = vrot.slane %v5683, 1
  %v5912 = vsel %vm397, %v5910, %v5911
  %v5913 = vrot.slane %v5684, 1
  %v5914 = vsel %vm397, %v5911, %v5913
  %v5915 = vrot.slane %v5685, 1
  %v5916 = vrot.slane %v5686, 1
  %v5917 = vsel %vm397, %v5915, %v5916
  %v5918 = vrot.slane %v5687, 1
  %v5919 = vsel %vm397, %v5916, %v5918
  %v5920 = vrot.slane %v5688, 1
  %v5921 = vrot.slane %v5689, 1
  %v5922 = vsel %vm397, %v5920, %v5921
  %v5923 = vrot.slane %v5690, 1
  %v5924 = vsel %vm397, %v5921, %v5923
  %v5925 = vrot.slane %v5691, 1
  %v5926 = vrot.slane %v5692, 1
  %v5927 = vsel %vm397, %v5925, %v5926
  %v5928 = vrot.slane %v5693, 1
  %v5929 = vsel %vm397, %v5926, %v5928
  %v5930 = vrot.slane %v5694, 1
  %v5931 = vrot.slane %v5695, 1
  %v5932 = vsel %vm397, %v5930, %v5931
  %v5933 = vrot.slane %v5696, 1
  %v5934 = vsel %vm397, %v5931, %v5933
  %v5935 = vrot.slane %v5697, 1
  %v5936 = vrot.slane %v5698, 1
  %v5937 = vsel %vm397, %v5935, %v5936
  %v5938 = vrot.slane %v5699, 1
  %v5939 = vsel %vm397, %v5936, %v5938
  %v5940 = vrot.slane %v5700, 1
  %v5941 = vrot.slane %v5701, 1
  %v5942 = vsel %vm397, %v5940, %v5941
  %v5943 = vrot.slane %v5702, 1
  %v5944 = vsel %vm397, %v5941, %v5943
  %v5945 = vrot.slane %v5703, 1
  %v5946 = vrot.slane %v5704, 1
  %v5947 = vsel %vm397, %v5945, %v5946
  %v5948 = vrot.slane %v5705, 1
  %v5949 = vsel %vm397, %v5946, %v5948
  %v5950 = vrot.slane %v5706, 1
  %v5951 = vrot.slane %v5707, 1
  %v5952 = vsel %vm397, %v5950, %v5951
  %v5953 = vrot.slane %v5708, 1
  %v5954 = vsel %vm397, %v5951, %v5953
  %v5955 = vrot.slane %v5709, 1
  %v5956 = vrot.slane %v5710, 1
  %v5957 = vsel %vm397, %v5955, %v5956
  %v5958 = vrot.slane %v5711, 1
  %v5959 = vsel %vm397, %v5956, %v5958
  %v5960 = vrot.slane %v5712, 1
  %v5961 = vrot.slane %v5713, 1
  %v5962 = vsel %vm397, %v5960, %v5961
  %v5963 = vrot.slane %v5714, 1
  %v5964 = vsel %vm397, %v5961, %v5963
  %v5965 = vrot.slane %v5715, 1
  %v5966 = vrot.slane %v5716, 1
  %v5967 = vsel %vm397, %v5965, %v5966
  %v5968 = vrot.slane %v5717, 1
  %v5969 = vsel %vm397, %v5966, %v5968
  %v5970 = vrot.slane %v5718, 1
  %v5971 = vrot.slane %v5719, 1
  %v5972 = vsel %vm397, %v5970, %v5971
  %v5973 = vrot.slane %v5720, 1
  %v5974 = vsel %vm397, %v5971, %v5973
  %v5975 = vrot.slane %v5721, 1
  %v5976 = vrot.slane %v5722, 1
  %v5977 = vsel %vm397, %v5975, %v5976
  %v5978 = vrot.slane %v5723, 1
  %v5979 = vsel %vm397, %v5976, %v5978
  %v6044 = vadd.f32 %v5553, %v5822
  %v6045 = vadd.f32 %v5554, %v5824
  %v6046 = vadd.f32 %v5555, %v5827
  %v6047 = vadd.f32 %v5556, %v5829
  %v6048 = vadd.f32 %v5557, %v5832
  %v6049 = vadd.f32 %v5558, %v5834
  %v6050 = vadd.f32 %v5559, %v5837
  %v6051 = vadd.f32 %v5560, %v5839
  %v6052 = vadd.f32 %v5561, %v5842
  %v6053 = vadd.f32 %v5562, %v5844
  %v6054 = vadd.f32 %v5563, %v5847
  %v6055 = vadd.f32 %v5564, %v5849
  %v6056 = vadd.f32 %v5565, %v5852
  %v6057 = vadd.f32 %v5566, %v5854
  %v6058 = vadd.f32 %v5567, %v5857
  %v6059 = vadd.f32 %v5568, %v5859
  %v6060 = vadd.f32 %v5569, %v5862
  %v6061 = vadd.f32 %v5570, %v5864
  %v6062 = vadd.f32 %v5571, %v5867
  %v6063 = vadd.f32 %v5572, %v5869
  %v6064 = vadd.f32 %v5573, %v5872
  %v6065 = vadd.f32 %v5574, %v5874
  %v6066 = vadd.f32 %v5575, %v5877
  %v6067 = vadd.f32 %v5576, %v5879
  %v6068 = vadd.f32 %v5577, %v5882
  %v6069 = vadd.f32 %v5578, %v5884
  %v6070 = vadd.f32 %v5579, %v5887
  %v6071 = vadd.f32 %v5580, %v5889
  %v6072 = vadd.f32 %v5581, %v5892
  %v6073 = vadd.f32 %v5582, %v5894
  %v6074 = vadd.f32 %v5583, %v5897
  %v6075 = vadd.f32 %v5584, %v5899
  %v6076 = vadd.f32 %v5585, %v5902
  %v6077 = vadd.f32 %v5586, %v5904
  %v6078 = vadd.f32 %v5587, %v5907
  %v6079 = vadd.f32 %v5588, %v5909
  %v6080 = vadd.f32 %v5589, %v5912
  %v6081 = vadd.f32 %v5590, %v5914
  %v6082 = vadd.f32 %v5591, %v5917
  %v6083 = vadd.f32 %v5592, %v5919
  %v6084 = vadd.f32 %v5593, %v5922
  %v6085 = vadd.f32 %v5594, %v5924
  %v6086 = vadd.f32 %v5595, %v5927
  %v6087 = vadd.f32 %v5596, %v5929
  %v6088 = vadd.f32 %v5597, %v5932
  %v6089 = vadd.f32 %v5598, %v5934
  %v6090 = vadd.f32 %v5599, %v5937
  %v6091 = vadd.f32 %v5600, %v5939
  %v6092 = vadd.f32 %v5601, %v5942
  %v6093 = vadd.f32 %v5602, %v5944
  %v6094 = vadd.f32 %v5603, %v5947
  %v6095 = vadd.f32 %v5604, %v5949
  %v6096 = vadd.f32 %v5605, %v5952
  %v6097 = vadd.f32 %v5606, %v5954
  %v6098 = vadd.f32 %v5607, %v5957
  %v6099 = vadd.f32 %v5608, %v5959
  %v6100 = vadd.f32 %v5609, %v5962
  %v6101 = vadd.f32 %v5610, %v5964
  %v6102 = vadd.f32 %v5611, %v5967
  %v6103 = vadd.f32 %v5612, %v5969
  %v6104 = vadd.f32 %v5613, %v5972
  %v6105 = vadd.f32 %v5614, %v5974
  %v6106 = vadd.f32 %v5615, %v5977
  %v6107 = vadd.f32 %v5616, %v5979
  %v6108 = vperm.slane %v3959, 2
  %v6109 = vmul.f32 %v3974, %v6108
  %v6110 = vmul.f32 %v3979, %v6108
  %v6111 = vmul.f32 %v4354, %v6108
  %v6112 = vmul.f32 %v3984, %v6108
  %v6113 = vmul.f32 %v3989, %v6108
  %v6114 = vmul.f32 %v4359, %v6108
  %v6115 = vmul.f32 %v3994, %v6108
  %v6116 = vmul.f32 %v3999, %v6108
  %v6117 = vmul.f32 %v4364, %v6108
  %v6118 = vmul.f32 %v4004, %v6108
  %v6119 = vmul.f32 %v4009, %v6108
  %v6120 = vmul.f32 %v4369, %v6108
  %v6121 = vmul.f32 %v4014, %v6108
  %v6122 = vmul.f32 %v4019, %v6108
  %v6123 = vmul.f32 %v4374, %v6108
  %v6124 = vmul.f32 %v4024, %v6108
  %v6125 = vmul.f32 %v4029, %v6108
  %v6126 = vmul.f32 %v4379, %v6108
  %v6127 = vmul.f32 %v4034, %v6108
  %v6128 = vmul.f32 %v4039, %v6108
  %v6129 = vmul.f32 %v4384, %v6108
  %v6130 = vmul.f32 %v4044, %v6108
  %v6131 = vmul.f32 %v4049, %v6108
  %v6132 = vmul.f32 %v4389, %v6108
  %v6133 = vmul.f32 %v4054, %v6108
  %v6134 = vmul.f32 %v4059, %v6108
  %v6135 = vmul.f32 %v4394, %v6108
  %v6136 = vmul.f32 %v4064, %v6108
  %v6137 = vmul.f32 %v4069, %v6108
  %v6138 = vmul.f32 %v4399, %v6108
  %v6139 = vmul.f32 %v4074, %v6108
  %v6140 = vmul.f32 %v4079, %v6108
  %v6141 = vmul.f32 %v4404, %v6108
  %v6142 = vmul.f32 %v4084, %v6108
  %v6143 = vmul.f32 %v4089, %v6108
  %v6144 = vmul.f32 %v4409, %v6108
  %v6145 = vmul.f32 %v4094, %v6108
  %v6146 = vmul.f32 %v4099, %v6108
  %v6147 = vmul.f32 %v4414, %v6108
  %v6148 = vmul.f32 %v4104, %v6108
  %v6149 = vmul.f32 %v4109, %v6108
  %v6150 = vmul.f32 %v4419, %v6108
  %v6151 = vmul.f32 %v4114, %v6108
  %v6152 = vmul.f32 %v4119, %v6108
  %v6153 = vmul.f32 %v4424, %v6108
  %v6154 = vmul.f32 %v5471, %v6108
  %v6155 = vmul.f32 %v5476, %v6108
  %v6156 = vmul.f32 %v5620, %v6108
  %v6157 = vmul.f32 %v4134, %v6108
  %v6158 = vmul.f32 %v4139, %v6108
  %v6159 = vmul.f32 %v4434, %v6108
  %v6160 = vmul.f32 %v4144, %v6108
  %v6161 = vmul.f32 %v4149, %v6108
  %v6162 = vmul.f32 %v4439, %v6108
  %v6163 = vmul.f32 %v4154, %v6108
  %v6164 = vmul.f32 %v4159, %v6108
  %v6165 = vmul.f32 %v4444, %v6108
  %v6166 = vmul.f32 %v4164, %v6108
  %v6167 = vmul.f32 %v4169, %v6108
  %v6168 = vmul.f32 %v4449, %v6108
  %v6169 = vmul.f32 %v4174, %v6108
  %v6170 = vmul.f32 %v4179, %v6108
  %v6171 = vmul.f32 %v4454, %v6108
  %v6172 = vmul.f32 %v4184, %v6108
  %v6173 = vmul.f32 %v4189, %v6108
  %v6174 = vmul.f32 %v4459, %v6108
  %v6175 = vmul.f32 %v4194, %v6108
  %v6176 = vmul.f32 %v4199, %v6108
  %v6177 = vmul.f32 %v4464, %v6108
  %v6178 = vmul.f32 %v4204, %v6108
  %v6179 = vmul.f32 %v4209, %v6108
  %v6180 = vmul.f32 %v4469, %v6108
  %v6181 = vmul.f32 %v4214, %v6108
  %v6182 = vmul.f32 %v4219, %v6108
  %v6183 = vmul.f32 %v4474, %v6108
  %v6184 = vmul.f32 %v4224, %v6108
  %v6185 = vmul.f32 %v4229, %v6108
  %v6186 = vmul.f32 %v4479, %v6108
  %v6187 = vmul.f32 %v4234, %v6108
  %v6188 = vmul.f32 %v4239, %v6108
  %v6189 = vmul.f32 %v4484, %v6108
  %v6190 = vmul.f32 %v4244, %v6108
  %v6191 = vmul.f32 %v4249, %v6108
  %v6192 = vmul.f32 %v4489, %v6108
  %v6193 = vmul.f32 %v4254, %v6108
  %v6194 = vmul.f32 %v4259, %v6108
  %v6195 = vmul.f32 %v4494, %v6108
  %v6196 = vmul.f32 %v4264, %v6108
  %v6197 = vmul.f32 %v4269, %v6108
  %v6198 = vmul.f32 %v4499, %v6108
  %v6199 = vmul.f32 %v4274, %v6108
  %v6200 = vmul.f32 %v4279, %v6108
  %v6201 = vmul.f32 %v4504, %v6108
  %v6202 = vmul.f32 %v5481, %v6108
  %v6203 = vmul.f32 %v5486, %v6108
  %v6204 = vmul.f32 %v5625, %v6108
  %v6301 = vrot.slane %v6109, 2
  %v6302 = vrot.slane %v6110, 2
  %v6303 = vsel %vm879, %v6301, %v6302
  %v6304 = vrot.slane %v6111, 2
  %v6305 = vsel %vm879, %v6302, %v6304
  %v6306 = vrot.slane %v6112, 2
  %v6307 = vrot.slane %v6113, 2
  %v6308 = vsel %vm879, %v6306, %v6307
  %v6309 = vrot.slane %v6114, 2
  %v6310 = vsel %vm879, %v6307, %v6309
  %v6311 = vrot.slane %v6115, 2
  %v6312 = vrot.slane %v6116, 2
  %v6313 = vsel %vm879, %v6311, %v6312
  %v6314 = vrot.slane %v6117, 2
  %v6315 = vsel %vm879, %v6312, %v6314
  %v6316 = vrot.slane %v6118, 2
  %v6317 = vrot.slane %v6119, 2
  %v6318 = vsel %vm879, %v6316, %v6317
  %v6319 = vrot.slane %v6120, 2
  %v6320 = vsel %vm879, %v6317, %v6319
  %v6321 = vrot.slane %v6121, 2
  %v6322 = vrot.slane %v6122, 2
  %v6323 = vsel %vm879, %v6321, %v6322
  %v6324 = vrot.slane %v6123, 2
  %v6325 = vsel %vm879, %v6322, %v6324
  %v6326 = vrot.slane %v6124, 2
  %v6327 = vrot.slane %v6125, 2
  %v6328 = vsel %vm879, %v6326, %v6327
  %v6329 = vrot.slane %v6126, 2
  %v6330 = vsel %vm879, %v6327, %v6329
  %v6331 = vrot.slane %v6127, 2
  %v6332 = vrot.slane %v6128, 2
  %v6333 = vsel %vm879, %v6331, %v6332
  %v6334 = vrot.slane %v6129, 2
  %v6335 = vsel %vm879, %v6332, %v6334
  %v6336 = vrot.slane %v6130, 2
  %v6337 = vrot.slane %v6131, 2
  %v6338 = vsel %vm879, %v6336, %v6337
  %v6339 = vrot.slane %v6132, 2
  %v6340 = vsel %vm879, %v6337, %v6339
  %v6341 = vrot.slane %v6133, 2
  %v6342 = vrot.slane %v6134, 2
  %v6343 = vsel %vm879, %v6341, %v6342
  %v6344 = vrot.slane %v6135, 2
  %v6345 = vsel %vm879, %v6342, %v6344
  %v6346 = vrot.slane %v6136, 2
  %v6347 = vrot.slane %v6137, 2
  %v6348 = vsel %vm879, %v6346, %v6347
  %v6349 = vrot.slane %v6138, 2
  %v6350 = vsel %vm879, %v6347, %v6349
  %v6351 = vrot.slane %v6139, 2
  %v6352 = vrot.slane %v6140, 2
  %v6353 = vsel %vm879, %v6351, %v6352
  %v6354 = vrot.slane %v6141, 2
  %v6355 = vsel %vm879, %v6352, %v6354
  %v6356 = vrot.slane %v6142, 2
  %v6357 = vrot.slane %v6143, 2
  %v6358 = vsel %vm879, %v6356, %v6357
  %v6359 = vrot.slane %v6144, 2
  %v6360 = vsel %vm879, %v6357, %v6359
  %v6361 = vrot.slane %v6145, 2
  %v6362 = vrot.slane %v6146, 2
  %v6363 = vsel %vm879, %v6361, %v6362
  %v6364 = vrot.slane %v6147, 2
  %v6365 = vsel %vm879, %v6362, %v6364
  %v6366 = vrot.slane %v6148, 2
  %v6367 = vrot.slane %v6149, 2
  %v6368 = vsel %vm879, %v6366, %v6367
  %v6369 = vrot.slane %v6150, 2
  %v6370 = vsel %vm879, %v6367, %v6369
  %v6371 = vrot.slane %v6151, 2
  %v6372 = vrot.slane %v6152, 2
  %v6373 = vsel %vm879, %v6371, %v6372
  %v6374 = vrot.slane %v6153, 2
  %v6375 = vsel %vm879, %v6372, %v6374
  %v6376 = vrot.slane %v6154, 2
  %v6377 = vrot.slane %v6155, 2
  %v6378 = vsel %vm879, %v6376, %v6377
  %v6379 = vrot.slane %v6156, 2
  %v6380 = vsel %vm879, %v6377, %v6379
  %v6381 = vrot.slane %v6157, 2
  %v6382 = vrot.slane %v6158, 2
  %v6383 = vsel %vm879, %v6381, %v6382
  %v6384 = vrot.slane %v6159, 2
  %v6385 = vsel %vm879, %v6382, %v6384
  %v6386 = vrot.slane %v6160, 2
  %v6387 = vrot.slane %v6161, 2
  %v6388 = vsel %vm879, %v6386, %v6387
  %v6389 = vrot.slane %v6162, 2
  %v6390 = vsel %vm879, %v6387, %v6389
  %v6391 = vrot.slane %v6163, 2
  %v6392 = vrot.slane %v6164, 2
  %v6393 = vsel %vm879, %v6391, %v6392
  %v6394 = vrot.slane %v6165, 2
  %v6395 = vsel %vm879, %v6392, %v6394
  %v6396 = vrot.slane %v6166, 2
  %v6397 = vrot.slane %v6167, 2
  %v6398 = vsel %vm879, %v6396, %v6397
  %v6399 = vrot.slane %v6168, 2
  %v6400 = vsel %vm879, %v6397, %v6399
  %v6401 = vrot.slane %v6169, 2
  %v6402 = vrot.slane %v6170, 2
  %v6403 = vsel %vm879, %v6401, %v6402
  %v6404 = vrot.slane %v6171, 2
  %v6405 = vsel %vm879, %v6402, %v6404
  %v6406 = vrot.slane %v6172, 2
  %v6407 = vrot.slane %v6173, 2
  %v6408 = vsel %vm879, %v6406, %v6407
  %v6409 = vrot.slane %v6174, 2
  %v6410 = vsel %vm879, %v6407, %v6409
  %v6411 = vrot.slane %v6175, 2
  %v6412 = vrot.slane %v6176, 2
  %v6413 = vsel %vm879, %v6411, %v6412
  %v6414 = vrot.slane %v6177, 2
  %v6415 = vsel %vm879, %v6412, %v6414
  %v6416 = vrot.slane %v6178, 2
  %v6417 = vrot.slane %v6179, 2
  %v6418 = vsel %vm879, %v6416, %v6417
  %v6419 = vrot.slane %v6180, 2
  %v6420 = vsel %vm879, %v6417, %v6419
  %v6421 = vrot.slane %v6181, 2
  %v6422 = vrot.slane %v6182, 2
  %v6423 = vsel %vm879, %v6421, %v6422
  %v6424 = vrot.slane %v6183, 2
  %v6425 = vsel %vm879, %v6422, %v6424
  %v6426 = vrot.slane %v6184, 2
  %v6427 = vrot.slane %v6185, 2
  %v6428 = vsel %vm879, %v6426, %v6427
  %v6429 = vrot.slane %v6186, 2
  %v6430 = vsel %vm879, %v6427, %v6429
  %v6431 = vrot.slane %v6187, 2
  %v6432 = vrot.slane %v6188, 2
  %v6433 = vsel %vm879, %v6431, %v6432
  %v6434 = vrot.slane %v6189, 2
  %v6435 = vsel %vm879, %v6432, %v6434
  %v6436 = vrot.slane %v6190, 2
  %v6437 = vrot.slane %v6191, 2
  %v6438 = vsel %vm879, %v6436, %v6437
  %v6439 = vrot.slane %v6192, 2
  %v6440 = vsel %vm879, %v6437, %v6439
  %v6441 = vrot.slane %v6193, 2
  %v6442 = vrot.slane %v6194, 2
  %v6443 = vsel %vm879, %v6441, %v6442
  %v6444 = vrot.slane %v6195, 2
  %v6445 = vsel %vm879, %v6442, %v6444
  %v6446 = vrot.slane %v6196, 2
  %v6447 = vrot.slane %v6197, 2
  %v6448 = vsel %vm879, %v6446, %v6447
  %v6449 = vrot.slane %v6198, 2
  %v6450 = vsel %vm879, %v6447, %v6449
  %v6451 = vrot.slane %v6199, 2
  %v6452 = vrot.slane %v6200, 2
  %v6453 = vsel %vm879, %v6451, %v6452
  %v6454 = vrot.slane %v6201, 2
  %v6455 = vsel %vm879, %v6452, %v6454
  %v6456 = vrot.slane %v6202, 2
  %v6457 = vrot.slane %v6203, 2
  %v6458 = vsel %vm879, %v6456, %v6457
  %v6459 = vrot.slane %v6204, 2
  %v6460 = vsel %vm879, %v6457, %v6459
  %v6525 = vadd.f32 %v6044, %v6303
  %v6526 = vadd.f32 %v6045, %v6305
  %v6527 = vadd.f32 %v6046, %v6308
  %v6528 = vadd.f32 %v6047, %v6310
  %v6529 = vadd.f32 %v6048, %v6313
  %v6530 = vadd.f32 %v6049, %v6315
  %v6531 = vadd.f32 %v6050, %v6318
  %v6532 = vadd.f32 %v6051, %v6320
  %v6533 = vadd.f32 %v6052, %v6323
  %v6534 = vadd.f32 %v6053, %v6325
  %v6535 = vadd.f32 %v6054, %v6328
  %v6536 = vadd.f32 %v6055, %v6330
  %v6537 = vadd.f32 %v6056, %v6333
  %v6538 = vadd.f32 %v6057, %v6335
  %v6539 = vadd.f32 %v6058, %v6338
  %v6540 = vadd.f32 %v6059, %v6340
  %v6541 = vadd.f32 %v6060, %v6343
  %v6542 = vadd.f32 %v6061, %v6345
  %v6543 = vadd.f32 %v6062, %v6348
  %v6544 = vadd.f32 %v6063, %v6350
  %v6545 = vadd.f32 %v6064, %v6353
  %v6546 = vadd.f32 %v6065, %v6355
  %v6547 = vadd.f32 %v6066, %v6358
  %v6548 = vadd.f32 %v6067, %v6360
  %v6549 = vadd.f32 %v6068, %v6363
  %v6550 = vadd.f32 %v6069, %v6365
  %v6551 = vadd.f32 %v6070, %v6368
  %v6552 = vadd.f32 %v6071, %v6370
  %v6553 = vadd.f32 %v6072, %v6373
  %v6554 = vadd.f32 %v6073, %v6375
  %v6555 = vadd.f32 %v6074, %v6378
  %v6556 = vadd.f32 %v6075, %v6380
  %v6557 = vadd.f32 %v6076, %v6383
  %v6558 = vadd.f32 %v6077, %v6385
  %v6559 = vadd.f32 %v6078, %v6388
  %v6560 = vadd.f32 %v6079, %v6390
  %v6561 = vadd.f32 %v6080, %v6393
  %v6562 = vadd.f32 %v6081, %v6395
  %v6563 = vadd.f32 %v6082, %v6398
  %v6564 = vadd.f32 %v6083, %v6400
  %v6565 = vadd.f32 %v6084, %v6403
  %v6566 = vadd.f32 %v6085, %v6405
  %v6567 = vadd.f32 %v6086, %v6408
  %v6568 = vadd.f32 %v6087, %v6410
  %v6569 = vadd.f32 %v6088, %v6413
  %v6570 = vadd.f32 %v6089, %v6415
  %v6571 = vadd.f32 %v6090, %v6418
  %v6572 = vadd.f32 %v6091, %v6420
  %v6573 = vadd.f32 %v6092, %v6423
  %v6574 = vadd.f32 %v6093, %v6425
  %v6575 = vadd.f32 %v6094, %v6428
  %v6576 = vadd.f32 %v6095, %v6430
  %v6577 = vadd.f32 %v6096, %v6433
  %v6578 = vadd.f32 %v6097, %v6435
  %v6579 = vadd.f32 %v6098, %v6438
  %v6580 = vadd.f32 %v6099, %v6440
  %v6581 = vadd.f32 %v6100, %v6443
  %v6582 = vadd.f32 %v6101, %v6445
  %v6583 = vadd.f32 %v6102, %v6448
  %v6584 = vadd.f32 %v6103, %v6450
  %v6585 = vadd.f32 %v6104, %v6453
  %v6586 = vadd.f32 %v6105, %v6455
  %v6587 = vadd.f32 %v6106, %v6458
  %v6588 = vadd.f32 %v6107, %v6460
  %6590 = vset.pattern.permute.xlu0 0
  %6591 = vperm.xlu0 %6590, %v3901
  %v6592 = vpop.permute.xlu0 %6591
  %6595 = vset.pattern.permute.xlu0 0
  %6596 = vperm.xlu0 %6595, %v3902
  %v6597 = vpop.permute.xlu0 %6596
  %6600 = vset.pattern.permute.xlu0 0
  %6601 = vperm.xlu0 %6600, %v3955
  %v6602 = vpop.permute.xlu0 %6601
  %6605 = vset.pattern.permute.xlu0 0
  %6606 = vperm.xlu0 %6605, %v3956
  %v6607 = vpop.permute.xlu0 %6606
  %v6609 = vperm.slane %v3960, 0
  %v6610 = vmul.f32 %v3984, %v6609
  %v6611 = vmul.f32 %v3989, %v6609
  %v6612 = vmul.f32 %v3994, %v6609
  %v6613 = vmul.f32 %v3999, %v6609
  %v6614 = vmul.f32 %v4004, %v6609
  %v6615 = vmul.f32 %v4009, %v6609
  %v6616 = vmul.f32 %v4014, %v6609
  %v6617 = vmul.f32 %v4019, %v6609
  %v6618 = vmul.f32 %v4024, %v6609
  %v6619 = vmul.f32 %v4029, %v6609
  %v6620 = vmul.f32 %v4034, %v6609
  %v6621 = vmul.f32 %v4039, %v6609
  %v6622 = vmul.f32 %v4044, %v6609
  %v6623 = vmul.f32 %v4049, %v6609
  %v6624 = vmul.f32 %v4054, %v6609
  %v6625 = vmul.f32 %v4059, %v6609
  %v6626 = vmul.f32 %v4064, %v6609
  %v6627 = vmul.f32 %v4069, %v6609
  %v6628 = vmul.f32 %v4074, %v6609
  %v6629 = vmul.f32 %v4079, %v6609
  %v6630 = vmul.f32 %v4084, %v6609
  %v6631 = vmul.f32 %v4089, %v6609
  %v6632 = vmul.f32 %v4094, %v6609
  %v6633 = vmul.f32 %v4099, %v6609
  %v6634 = vmul.f32 %v4104, %v6609
  %v6635 = vmul.f32 %v4109, %v6609
  %v6636 = vmul.f32 %v4114, %v6609
  %v6637 = vmul.f32 %v4119, %v6609
  %v6638 = vmul.f32 %v5471, %v6609
  %v6639 = vmul.f32 %v5476, %v6609
  %v6640 = vmul.f32 %v6592, %v6609
  %v6641 = vmul.f32 %v6597, %v6609
  %v6642 = vmul.f32 %v4144, %v6609
  %v6643 = vmul.f32 %v4149, %v6609
  %v6644 = vmul.f32 %v4154, %v6609
  %v6645 = vmul.f32 %v4159, %v6609
  %v6646 = vmul.f32 %v4164, %v6609
  %v6647 = vmul.f32 %v4169, %v6609
  %v6648 = vmul.f32 %v4174, %v6609
  %v6649 = vmul.f32 %v4179, %v6609
  %v6650 = vmul.f32 %v4184, %v6609
  %v6651 = vmul.f32 %v4189, %v6609
  %v6652 = vmul.f32 %v4194, %v6609
  %v6653 = vmul.f32 %v4199, %v6609
  %v6654 = vmul.f32 %v4204, %v6609
  %v6655 = vmul.f32 %v4209, %v6609
  %v6656 = vmul.f32 %v4214, %v6609
  %v6657 = vmul.f32 %v4219, %v6609
  %v6658 = vmul.f32 %v4224, %v6609
  %v6659 = vmul.f32 %v4229, %v6609
  %v6660 = vmul.f32 %v4234, %v6609
  %v6661 = vmul.f32 %v4239, %v6609
  %v6662 = vmul.f32 %v4244, %v6609
  %v6663 = vmul.f32 %v4249, %v6609
  %v6664 = vmul.f32 %v4254, %v6609
  %v6665 = vmul.f32 %v4259, %v6609
  %v6666 = vmul.f32 %v4264, %v6609
  %v6667 = vmul.f32 %v4269, %v6609
  %v6668 = vmul.f32 %v4274, %v6609
  %v6669 = vmul.f32 %v4279, %v6609
  %v6670 = vmul.f32 %v5481, %v6609
  %v6671 = vmul.f32 %v5486, %v6609
  %v6672 = vmul.f32 %v6602, %v6609
  %v6673 = vmul.f32 %v6607, %v6609
  %v6674 = vadd.f32 %v6525, %v6610
  %v6675 = vadd.f32 %v6526, %v6611
  %v6676 = vadd.f32 %v6527, %v6612
  %v6677 = vadd.f32 %v6528, %v6613
  %v6678 = vadd.f32 %v6529, %v6614
  %v6679 = vadd.f32 %v6530, %v6615
  %v6680 = vadd.f32 %v6531, %v6616
  %v6681 = vadd.f32 %v6532, %v6617
  %v6682 = vadd.f32 %v6533, %v6618
  %v6683 = vadd.f32 %v6534, %v6619
  %v6684 = vadd.f32 %v6535, %v6620
  %v6685 = vadd.f32 %v6536, %v6621
  %v6686 = vadd.f32 %v6537, %v6622
  %v6687 = vadd.f32 %v6538, %v6623
  %v6688 = vadd.f32 %v6539, %v6624
  %v6689 = vadd.f32 %v6540, %v6625
  %v6690 = vadd.f32 %v6541, %v6626
  %v6691 = vadd.f32 %v6542, %v6627
  %v6692 = vadd.f32 %v6543, %v6628
  %v6693 = vadd.f32 %v6544, %v6629
  %v6694 = vadd.f32 %v6545, %v6630
  %v6695 = vadd.f32 %v6546, %v6631
  %v6696 = vadd.f32 %v6547, %v6632
  %v6697 = vadd.f32 %v6548, %v6633
  %v6698 = vadd.f32 %v6549, %v6634
  %v6699 = vadd.f32 %v6550, %v6635
  %v6700 = vadd.f32 %v6551, %v6636
  %v6701 = vadd.f32 %v6552, %v6637
  %v6702 = vadd.f32 %v6553, %v6638
  %v6703 = vadd.f32 %v6554, %v6639
  %v6704 = vadd.f32 %v6555, %v6640
  %v6705 = vadd.f32 %v6556, %v6641
  %v6706 = vadd.f32 %v6557, %v6642
  %v6707 = vadd.f32 %v6558, %v6643
  %v6708 = vadd.f32 %v6559, %v6644
  %v6709 = vadd.f32 %v6560, %v6645
  %v6710 = vadd.f32 %v6561, %v6646
  %v6711 = vadd.f32 %v6562, %v6647
  %v6712 = vadd.f32 %v6563, %v6648
  %v6713 = vadd.f32 %v6564, %v6649
  %v6714 = vadd.f32 %v6565, %v6650
  %v6715 = vadd.f32 %v6566, %v6651
  %v6716 = vadd.f32 %v6567, %v6652
  %v6717 = vadd.f32 %v6568, %v6653
  %v6718 = vadd.f32 %v6569, %v6654
  %v6719 = vadd.f32 %v6570, %v6655
  %v6720 = vadd.f32 %v6571, %v6656
  %v6721 = vadd.f32 %v6572, %v6657
  %v6722 = vadd.f32 %v6573, %v6658
  %v6723 = vadd.f32 %v6574, %v6659
  %v6724 = vadd.f32 %v6575, %v6660
  %v6725 = vadd.f32 %v6576, %v6661
  %v6726 = vadd.f32 %v6577, %v6662
  %v6727 = vadd.f32 %v6578, %v6663
  %v6728 = vadd.f32 %v6579, %v6664
  %v6729 = vadd.f32 %v6580, %v6665
  %v6730 = vadd.f32 %v6581, %v6666
  %v6731 = vadd.f32 %v6582, %v6667
  %v6732 = vadd.f32 %v6583, %v6668
  %v6733 = vadd.f32 %v6584, %v6669
  %v6734 = vadd.f32 %v6585, %v6670
  %v6735 = vadd.f32 %v6586, %v6671
  %v6736 = vadd.f32 %v6587, %v6672
  %v6737 = vadd.f32 %v6588, %v6673
  %6739 = vset.pattern.permute.xlu0 0
  %6740 = vperm.xlu0 %6739, %v3903
  %v6741 = vpop.permute.xlu0 %6740
  %6744 = vset.pattern.permute.xlu0 0
  %6745 = vperm.xlu0 %6744, %v3957
  %v6746 = vpop.permute.xlu0 %6745
  %v6748 = vperm.slane %v3960, 1
  %v6749 = vmul.f32 %v3984, %v6748
  %v6750 = vmul.f32 %v3989, %v6748
  %v6751 = vmul.f32 %v4359, %v6748
  %v6752 = vmul.f32 %v3994, %v6748
  %v6753 = vmul.f32 %v3999, %v6748
  %v6754 = vmul.f32 %v4364, %v6748
  %v6755 = vmul.f32 %v4004, %v6748
  %v6756 = vmul.f32 %v4009, %v6748
  %v6757 = vmul.f32 %v4369, %v6748
  %v6758 = vmul.f32 %v4014, %v6748
  %v6759 = vmul.f32 %v4019, %v6748
  %v6760 = vmul.f32 %v4374, %v6748
  %v6761 = vmul.f32 %v4024, %v6748
  %v6762 = vmul.f32 %v4029, %v6748
  %v6763 = vmul.f32 %v4379, %v6748
  %v6764 = vmul.f32 %v4034, %v6748
  %v6765 = vmul.f32 %v4039, %v6748
  %v6766 = vmul.f32 %v4384, %v6748
  %v6767 = vmul.f32 %v4044, %v6748
  %v6768 = vmul.f32 %v4049, %v6748
  %v6769 = vmul.f32 %v4389, %v6748
  %v6770 = vmul.f32 %v4054, %v6748
  %v6771 = vmul.f32 %v4059, %v6748
  %v6772 = vmul.f32 %v4394, %v6748
  %v6773 = vmul.f32 %v4064, %v6748
  %v6774 = vmul.f32 %v4069, %v6748
  %v6775 = vmul.f32 %v4399, %v6748
  %v6776 = vmul.f32 %v4074, %v6748
  %v6777 = vmul.f32 %v4079, %v6748
  %v6778 = vmul.f32 %v4404, %v6748
  %v6779 = vmul.f32 %v4084, %v6748
  %v6780 = vmul.f32 %v4089, %v6748
  %v6781 = vmul.f32 %v4409, %v6748
  %v6782 = vmul.f32 %v4094, %v6748
  %v6783 = vmul.f32 %v4099, %v6748
  %v6784 = vmul.f32 %v4414, %v6748
  %v6785 = vmul.f32 %v4104, %v6748
  %v6786 = vmul.f32 %v4109, %v6748
  %v6787 = vmul.f32 %v4419, %v6748
  %v6788 = vmul.f32 %v4114, %v6748
  %v6789 = vmul.f32 %v4119, %v6748
  %v6790 = vmul.f32 %v4424, %v6748
  %v6791 = vmul.f32 %v5471, %v6748
  %v6792 = vmul.f32 %v5476, %v6748
  %v6793 = vmul.f32 %v5620, %v6748
  %v6794 = vmul.f32 %v6592, %v6748
  %v6795 = vmul.f32 %v6597, %v6748
  %v6796 = vmul.f32 %v6741, %v6748
  %v6797 = vmul.f32 %v4144, %v6748
  %v6798 = vmul.f32 %v4149, %v6748
  %v6799 = vmul.f32 %v4439, %v6748
  %v6800 = vmul.f32 %v4154, %v6748
  %v6801 = vmul.f32 %v4159, %v6748
  %v6802 = vmul.f32 %v4444, %v6748
  %v6803 = vmul.f32 %v4164, %v6748
  %v6804 = vmul.f32 %v4169, %v6748
  %v6805 = vmul.f32 %v4449, %v6748
  %v6806 = vmul.f32 %v4174, %v6748
  %v6807 = vmul.f32 %v4179, %v6748
  %v6808 = vmul.f32 %v4454, %v6748
  %v6809 = vmul.f32 %v4184, %v6748
  %v6810 = vmul.f32 %v4189, %v6748
  %v6811 = vmul.f32 %v4459, %v6748
  %v6812 = vmul.f32 %v4194, %v6748
  %v6813 = vmul.f32 %v4199, %v6748
  %v6814 = vmul.f32 %v4464, %v6748
  %v6815 = vmul.f32 %v4204, %v6748
  %v6816 = vmul.f32 %v4209, %v6748
  %v6817 = vmul.f32 %v4469, %v6748
  %v6818 = vmul.f32 %v4214, %v6748
  %v6819 = vmul.f32 %v4219, %v6748
  %v6820 = vmul.f32 %v4474, %v6748
  %v6821 = vmul.f32 %v4224, %v6748
  %v6822 = vmul.f32 %v4229, %v6748
  %v6823 = vmul.f32 %v4479, %v6748
  %v6824 = vmul.f32 %v4234, %v6748
  %v6825 = vmul.f32 %v4239, %v6748
  %v6826 = vmul.f32 %v4484, %v6748
  %v6827 = vmul.f32 %v4244, %v6748
  %v6828 = vmul.f32 %v4249, %v6748
  %v6829 = vmul.f32 %v4489, %v6748
  %v6830 = vmul.f32 %v4254, %v6748
  %v6831 = vmul.f32 %v4259, %v6748
  %v6832 = vmul.f32 %v4494, %v6748
  %v6833 = vmul.f32 %v4264, %v6748
  %v6834 = vmul.f32 %v4269, %v6748
  %v6835 = vmul.f32 %v4499, %v6748
  %v6836 = vmul.f32 %v4274, %v6748
  %v6837 = vmul.f32 %v4279, %v6748
  %v6838 = vmul.f32 %v4504, %v6748
  %v6839 = vmul.f32 %v5481, %v6748
  %v6840 = vmul.f32 %v5486, %v6748
  %v6841 = vmul.f32 %v5625, %v6748
  %v6842 = vmul.f32 %v6602, %v6748
  %v6843 = vmul.f32 %v6607, %v6748
  %v6844 = vmul.f32 %v6746, %v6748
  %v6941 = vrot.slane %v6749, 1
  %v6942 = vrot.slane %v6750, 1
  %v6943 = vsel %vm397, %v6941, %v6942
  %v6944 = vrot.slane %v6751, 1
  %v6945 = vsel %vm397, %v6942, %v6944
  %v6946 = vrot.slane %v6752, 1
  %v6947 = vrot.slane %v6753, 1
  %v6948 = vsel %vm397, %v6946, %v6947
  %v6949 = vrot.slane %v6754, 1
  %v6950 = vsel %vm397, %v6947, %v6949
  %v6951 = vrot.slane %v6755, 1
  %v6952 = vrot.slane %v6756, 1
  %v6953 = vsel %vm397, %v6951, %v6952
  %v6954 = vrot.slane %v6757, 1
  %v6955 = vsel %vm397, %v6952, %v6954
  %v6956 = vrot.slane %v6758, 1
  %v6957 = vrot.slane %v6759, 1
  %v6958 = vsel %vm397, %v6956, %v6957
  %v6959 = vrot.slane %v6760, 1
  %v6960 = vsel %vm397, %v6957, %v6959
  %v6961 = vrot.slane %v6761, 1
  %v6962 = vrot.slane %v6762, 1
  %v6963 = vsel %vm397, %v6961, %v6962
  %v6964 = vrot.slane %v6763, 1
  %v6965 = vsel %vm397, %v6962, %v6964
  %v6966 = vrot.slane %v6764, 1
  %v6967 = vrot.slane %v6765, 1
  %v6968 = vsel %vm397, %v6966, %v6967
  %v6969 = vrot.slane %v6766, 1
  %v6970 = vsel %vm397, %v6967, %v6969
  %v6971 = vrot.slane %v6767, 1
  %v6972 = vrot.slane %v6768, 1
  %v6973 = vsel %vm397, %v6971, %v6972
  %v6974 = vrot.slane %v6769, 1
  %v6975 = vsel %vm397, %v6972, %v6974
  %v6976 = vrot.slane %v6770, 1
  %v6977 = vrot.slane %v6771, 1
  %v6978 = vsel %vm397, %v6976, %v6977
  %v6979 = vrot.slane %v6772, 1
  %v6980 = vsel %vm397, %v6977, %v6979
  %v6981 = vrot.slane %v6773, 1
  %v6982 = vrot.slane %v6774, 1
  %v6983 = vsel %vm397, %v6981, %v6982
  %v6984 = vrot.slane %v6775, 1
  %v6985 = vsel %vm397, %v6982, %v6984
  %v6986 = vrot.slane %v6776, 1
  %v6987 = vrot.slane %v6777, 1
  %v6988 = vsel %vm397, %v6986, %v6987
  %v6989 = vrot.slane %v6778, 1
  %v6990 = vsel %vm397, %v6987, %v6989
  %v6991 = vrot.slane %v6779, 1
  %v6992 = vrot.slane %v6780, 1
  %v6993 = vsel %vm397, %v6991, %v6992
  %v6994 = vrot.slane %v6781, 1
  %v6995 = vsel %vm397, %v6992, %v6994
  %v6996 = vrot.slane %v6782, 1
  %v6997 = vrot.slane %v6783, 1
  %v6998 = vsel %vm397, %v6996, %v6997
  %v6999 = vrot.slane %v6784, 1
  %v7000 = vsel %vm397, %v6997, %v6999
  %v7001 = vrot.slane %v6785, 1
  %v7002 = vrot.slane %v6786, 1
  %v7003 = vsel %vm397, %v7001, %v7002
  %v7004 = vrot.slane %v6787, 1
  %v7005 = vsel %vm397, %v7002, %v7004
  %v7006 = vrot.slane %v6788, 1
  %v7007 = vrot.slane %v6789, 1
  %v7008 = vsel %vm397, %v7006, %v7007
  %v7009 = vrot.slane %v6790, 1
  %v7010 = vsel %vm397, %v7007, %v7009
  %v7011 = vrot.slane %v6791, 1
  %v7012 = vrot.slane %v6792, 1
  %v7013 = vsel %vm397, %v7011, %v7012
  %v7014 = vrot.slane %v6793, 1
  %v7015 = vsel %vm397, %v7012, %v7014
  %v7016 = vrot.slane %v6794, 1
  %v7017 = vrot.slane %v6795, 1
  %v7018 = vsel %vm397, %v7016, %v7017
  %v7019 = vrot.slane %v6796, 1
  %v7020 = vsel %vm397, %v7017, %v7019
  %v7021 = vrot.slane %v6797, 1
  %v7022 = vrot.slane %v6798, 1
  %v7023 = vsel %vm397, %v7021, %v7022
  %v7024 = vrot.slane %v6799, 1
  %v7025 = vsel %vm397, %v7022, %v7024
  %v7026 = vrot.slane %v6800, 1
  %v7027 = vrot.slane %v6801, 1
  %v7028 = vsel %vm397, %v7026, %v7027
  %v7029 = vrot.slane %v6802, 1
  %v7030 = vsel %vm397, %v7027, %v7029
  %v7031 = vrot.slane %v6803, 1
  %v7032 = vrot.slane %v6804, 1
  %v7033 = vsel %vm397, %v7031, %v7032
  %v7034 = vrot.slane %v6805, 1
  %v7035 = vsel %vm397, %v7032, %v7034
  %v7036 = vrot.slane %v6806, 1
  %v7037 = vrot.slane %v6807, 1
  %v7038 = vsel %vm397, %v7036, %v7037
  %v7039 = vrot.slane %v6808, 1
  %v7040 = vsel %vm397, %v7037, %v7039
  %v7041 = vrot.slane %v6809, 1
  %v7042 = vrot.slane %v6810, 1
  %v7043 = vsel %vm397, %v7041, %v7042
  %v7044 = vrot.slane %v6811, 1
  %v7045 = vsel %vm397, %v7042, %v7044
  %v7046 = vrot.slane %v6812, 1
  %v7047 = vrot.slane %v6813, 1
  %v7048 = vsel %vm397, %v7046, %v7047
  %v7049 = vrot.slane %v6814, 1
  %v7050 = vsel %vm397, %v7047, %v7049
  %v7051 = vrot.slane %v6815, 1
  %v7052 = vrot.slane %v6816, 1
  %v7053 = vsel %vm397, %v7051, %v7052
  %v7054 = vrot.slane %v6817, 1
  %v7055 = vsel %vm397, %v7052, %v7054
  %v7056 = vrot.slane %v6818, 1
  %v7057 = vrot.slane %v6819, 1
  %v7058 = vsel %vm397, %v7056, %v7057
  %v7059 = vrot.slane %v6820, 1
  %v7060 = vsel %vm397, %v7057, %v7059
  %v7061 = vrot.slane %v6821, 1
  %v7062 = vrot.slane %v6822, 1
  %v7063 = vsel %vm397, %v7061, %v7062
  %v7064 = vrot.slane %v6823, 1
  %v7065 = vsel %vm397, %v7062, %v7064
  %v7066 = vrot.slane %v6824, 1
  %v7067 = vrot.slane %v6825, 1
  %v7068 = vsel %vm397, %v7066, %v7067
  %v7069 = vrot.slane %v6826, 1
  %v7070 = vsel %vm397, %v7067, %v7069
  %v7071 = vrot.slane %v6827, 1
  %v7072 = vrot.slane %v6828, 1
  %v7073 = vsel %vm397, %v7071, %v7072
  %v7074 = vrot.slane %v6829, 1
  %v7075 = vsel %vm397, %v7072, %v7074
  %v7076 = vrot.slane %v6830, 1
  %v7077 = vrot.slane %v6831, 1
  %v7078 = vsel %vm397, %v7076, %v7077
  %v7079 = vrot.slane %v6832, 1
  %v7080 = vsel %vm397, %v7077, %v7079
  %v7081 = vrot.slane %v6833, 1
  %v7082 = vrot.slane %v6834, 1
  %v7083 = vsel %vm397, %v7081, %v7082
  %v7084 = vrot.slane %v6835, 1
  %v7085 = vsel %vm397, %v7082, %v7084
  %v7086 = vrot.slane %v6836, 1
  %v7087 = vrot.slane %v6837, 1
  %v7088 = vsel %vm397, %v7086, %v7087
  %v7089 = vrot.slane %v6838, 1
  %v7090 = vsel %vm397, %v7087, %v7089
  %v7091 = vrot.slane %v6839, 1
  %v7092 = vrot.slane %v6840, 1
  %v7093 = vsel %vm397, %v7091, %v7092
  %v7094 = vrot.slane %v6841, 1
  %v7095 = vsel %vm397, %v7092, %v7094
  %v7096 = vrot.slane %v6842, 1
  %v7097 = vrot.slane %v6843, 1
  %v7098 = vsel %vm397, %v7096, %v7097
  %v7099 = vrot.slane %v6844, 1
  %v7100 = vsel %vm397, %v7097, %v7099
  %v7165 = vadd.f32 %v6674, %v6943
  %v7166 = vadd.f32 %v6675, %v6945
  %v7167 = vadd.f32 %v6676, %v6948
  %v7168 = vadd.f32 %v6677, %v6950
  %v7169 = vadd.f32 %v6678, %v6953
  %v7170 = vadd.f32 %v6679, %v6955
  %v7171 = vadd.f32 %v6680, %v6958
  %v7172 = vadd.f32 %v6681, %v6960
  %v7173 = vadd.f32 %v6682, %v6963
  %v7174 = vadd.f32 %v6683, %v6965
  %v7175 = vadd.f32 %v6684, %v6968
  %v7176 = vadd.f32 %v6685, %v6970
  %v7177 = vadd.f32 %v6686, %v6973
  %v7178 = vadd.f32 %v6687, %v6975
  %v7179 = vadd.f32 %v6688, %v6978
  %v7180 = vadd.f32 %v6689, %v6980
  %v7181 = vadd.f32 %v6690, %v6983
  %v7182 = vadd.f32 %v6691, %v6985
  %v7183 = vadd.f32 %v6692, %v6988
  %v7184 = vadd.f32 %v6693, %v6990
  %v7185 = vadd.f32 %v6694, %v6993
  %v7186 = vadd.f32 %v6695, %v6995
  %v7187 = vadd.f32 %v6696, %v6998
  %v7188 = vadd.f32 %v6697, %v7000
  %v7189 = vadd.f32 %v6698, %v7003
  %v7190 = vadd.f32 %v6699, %v7005
  %v7191 = vadd.f32 %v6700, %v7008
  %v7192 = vadd.f32 %v6701, %v7010
  %v7193 = vadd.f32 %v6702, %v7013
  %v7194 = vadd.f32 %v6703, %v7015
  %v7195 = vadd.f32 %v6704, %v7018
  %v7196 = vadd.f32 %v6705, %v7020
  %v7197 = vadd.f32 %v6706, %v7023
  %v7198 = vadd.f32 %v6707, %v7025
  %v7199 = vadd.f32 %v6708, %v7028
  %v7200 = vadd.f32 %v6709, %v7030
  %v7201 = vadd.f32 %v6710, %v7033
  %v7202 = vadd.f32 %v6711, %v7035
  %v7203 = vadd.f32 %v6712, %v7038
  %v7204 = vadd.f32 %v6713, %v7040
  %v7205 = vadd.f32 %v6714, %v7043
  %v7206 = vadd.f32 %v6715, %v7045
  %v7207 = vadd.f32 %v6716, %v7048
  %v7208 = vadd.f32 %v6717, %v7050
  %v7209 = vadd.f32 %v6718, %v7053
  %v7210 = vadd.f32 %v6719, %v7055
  %v7211 = vadd.f32 %v6720, %v7058
  %v7212 = vadd.f32 %v6721, %v7060
  %v7213 = vadd.f32 %v6722, %v7063
  %v7214 = vadd.f32 %v6723, %v7065
  %v7215 = vadd.f32 %v6724, %v7068
  %v7216 = vadd.f32 %v6725, %v7070
  %v7217 = vadd.f32 %v6726, %v7073
  %v7218 = vadd.f32 %v6727, %v7075
  %v7219 = vadd.f32 %v6728, %v7078
  %v7220 = vadd.f32 %v6729, %v7080
  %v7221 = vadd.f32 %v6730, %v7083
  %v7222 = vadd.f32 %v6731, %v7085
  %v7223 = vadd.f32 %v6732, %v7088
  %v7224 = vadd.f32 %v6733, %v7090
  %v7225 = vadd.f32 %v6734, %v7093
  %v7226 = vadd.f32 %v6735, %v7095
  %v7227 = vadd.f32 %v6736, %v7098
  %v7228 = vadd.f32 %v6737, %v7100
  %v7229 = vperm.slane %v3960, 2
  %v7230 = vmul.f32 %v3984, %v7229
  %v7231 = vmul.f32 %v3989, %v7229
  %v7232 = vmul.f32 %v4359, %v7229
  %v7233 = vmul.f32 %v3994, %v7229
  %v7234 = vmul.f32 %v3999, %v7229
  %v7235 = vmul.f32 %v4364, %v7229
  %v7236 = vmul.f32 %v4004, %v7229
  %v7237 = vmul.f32 %v4009, %v7229
  %v7238 = vmul.f32 %v4369, %v7229
  %v7239 = vmul.f32 %v4014, %v7229
  %v7240 = vmul.f32 %v4019, %v7229
  %v7241 = vmul.f32 %v4374, %v7229
  %v7242 = vmul.f32 %v4024, %v7229
  %v7243 = vmul.f32 %v4029, %v7229
  %v7244 = vmul.f32 %v4379, %v7229
  %v7245 = vmul.f32 %v4034, %v7229
  %v7246 = vmul.f32 %v4039, %v7229
  %v7247 = vmul.f32 %v4384, %v7229
  %v7248 = vmul.f32 %v4044, %v7229
  %v7249 = vmul.f32 %v4049, %v7229
  %v7250 = vmul.f32 %v4389, %v7229
  %v7251 = vmul.f32 %v4054, %v7229
  %v7252 = vmul.f32 %v4059, %v7229
  %v7253 = vmul.f32 %v4394, %v7229
  %v7254 = vmul.f32 %v4064, %v7229
  %v7255 = vmul.f32 %v4069, %v7229
  %v7256 = vmul.f32 %v4399, %v7229
  %v7257 = vmul.f32 %v4074, %v7229
  %v7258 = vmul.f32 %v4079, %v7229
  %v7259 = vmul.f32 %v4404, %v7229
  %v7260 = vmul.f32 %v4084, %v7229
  %v7261 = vmul.f32 %v4089, %v7229
  %v7262 = vmul.f32 %v4409, %v7229
  %v7263 = vmul.f32 %v4094, %v7229
  %v7264 = vmul.f32 %v4099, %v7229
  %v7265 = vmul.f32 %v4414, %v7229
  %v7266 = vmul.f32 %v4104, %v7229
  %v7267 = vmul.f32 %v4109, %v7229
  %v7268 = vmul.f32 %v4419, %v7229
  %v7269 = vmul.f32 %v4114, %v7229
  %v7270 = vmul.f32 %v4119, %v7229
  %v7271 = vmul.f32 %v4424, %v7229
  %v7272 = vmul.f32 %v5471, %v7229
  %v7273 = vmul.f32 %v5476, %v7229
  %v7274 = vmul.f32 %v5620, %v7229
  %v7275 = vmul.f32 %v6592, %v7229
  %v7276 = vmul.f32 %v6597, %v7229
  %v7277 = vmul.f32 %v6741, %v7229
  %v7278 = vmul.f32 %v4144, %v7229
  %v7279 = vmul.f32 %v4149, %v7229
  %v7280 = vmul.f32 %v4439, %v7229
  %v7281 = vmul.f32 %v4154, %v7229
  %v7282 = vmul.f32 %v4159, %v7229
  %v7283 = vmul.f32 %v4444, %v7229
  %v7284 = vmul.f32 %v4164, %v7229
  %v7285 = vmul.f32 %v4169, %v7229
  %v7286 = vmul.f32 %v4449, %v7229
  %v7287 = vmul.f32 %v4174, %v7229
  %v7288 = vmul.f32 %v4179, %v7229
  %v7289 = vmul.f32 %v4454, %v7229
  %v7290 = vmul.f32 %v4184, %v7229
  %v7291 = vmul.f32 %v4189, %v7229
  %v7292 = vmul.f32 %v4459, %v7229
  %v7293 = vmul.f32 %v4194, %v7229
  %v7294 = vmul.f32 %v4199, %v7229
  %v7295 = vmul.f32 %v4464, %v7229
  %v7296 = vmul.f32 %v4204, %v7229
  %v7297 = vmul.f32 %v4209, %v7229
  %v7298 = vmul.f32 %v4469, %v7229
  %v7299 = vmul.f32 %v4214, %v7229
  %v7300 = vmul.f32 %v4219, %v7229
  %v7301 = vmul.f32 %v4474, %v7229
  %v7302 = vmul.f32 %v4224, %v7229
  %v7303 = vmul.f32 %v4229, %v7229
  %v7304 = vmul.f32 %v4479, %v7229
  %v7305 = vmul.f32 %v4234, %v7229
  %v7306 = vmul.f32 %v4239, %v7229
  %v7307 = vmul.f32 %v4484, %v7229
  %v7308 = vmul.f32 %v4244, %v7229
  %v7309 = vmul.f32 %v4249, %v7229
  %v7310 = vmul.f32 %v4489, %v7229
  %v7311 = vmul.f32 %v4254, %v7229
  %v7312 = vmul.f32 %v4259, %v7229
  %v7313 = vmul.f32 %v4494, %v7229
  %v7314 = vmul.f32 %v4264, %v7229
  %v7315 = vmul.f32 %v4269, %v7229
  %v7316 = vmul.f32 %v4499, %v7229
  %v7317 = vmul.f32 %v4274, %v7229
  %v7318 = vmul.f32 %v4279, %v7229
  %v7319 = vmul.f32 %v4504, %v7229
  %v7320 = vmul.f32 %v5481, %v7229
  %v7321 = vmul.f32 %v5486, %v7229
  %v7322 = vmul.f32 %v5625, %v7229
  %v7323 = vmul.f32 %v6602, %v7229
  %v7324 = vmul.f32 %v6607, %v7229
  %v7325 = vmul.f32 %v6746, %v7229
  %v7422 = vrot.slane %v7230, 2
  %v7423 = vrot.slane %v7231, 2
  %v7424 = vsel %vm879, %v7422, %v7423
  %v7425 = vrot.slane %v7232, 2
  %v7426 = vsel %vm879, %v7423, %v7425
  %v7427 = vrot.slane %v7233, 2
  %v7428 = vrot.slane %v7234, 2
  %v7429 = vsel %vm879, %v7427, %v7428
  %v7430 = vrot.slane %v7235, 2
  %v7431 = vsel %vm879, %v7428, %v7430
  %v7432 = vrot.slane %v7236, 2
  %v7433 = vrot.slane %v7237, 2
  %v7434 = vsel %vm879, %v7432, %v7433
  %v7435 = vrot.slane %v7238, 2
  %v7436 = vsel %vm879, %v7433, %v7435
  %v7437 = vrot.slane %v7239, 2
  %v7438 = vrot.slane %v7240, 2
  %v7439 = vsel %vm879, %v7437, %v7438
  %v7440 = vrot.slane %v7241, 2
  %v7441 = vsel %vm879, %v7438, %v7440
  %v7442 = vrot.slane %v7242, 2
  %v7443 = vrot.slane %v7243, 2
  %v7444 = vsel %vm879, %v7442, %v7443
  %v7445 = vrot.slane %v7244, 2
  %v7446 = vsel %vm879, %v7443, %v7445
  %v7447 = vrot.slane %v7245, 2
  %v7448 = vrot.slane %v7246, 2
  %v7449 = vsel %vm879, %v7447, %v7448
  %v7450 = vrot.slane %v7247, 2
  %v7451 = vsel %vm879, %v7448, %v7450
  %v7452 = vrot.slane %v7248, 2
  %v7453 = vrot.slane %v7249, 2
  %v7454 = vsel %vm879, %v7452, %v7453
  %v7455 = vrot.slane %v7250, 2
  %v7456 = vsel %vm879, %v7453, %v7455
  %v7457 = vrot.slane %v7251, 2
  %v7458 = vrot.slane %v7252, 2
  %v7459 = vsel %vm879, %v7457, %v7458
  %v7460 = vrot.slane %v7253, 2
  %v7461 = vsel %vm879, %v7458, %v7460
  %v7462 = vrot.slane %v7254, 2
  %v7463 = vrot.slane %v7255, 2
  %v7464 = vsel %vm879, %v7462, %v7463
  %v7465 = vrot.slane %v7256, 2
  %v7466 = vsel %vm879, %v7463, %v7465
  %v7467 = vrot.slane %v7257, 2
  %v7468 = vrot.slane %v7258, 2
  %v7469 = vsel %vm879, %v7467, %v7468
  %v7470 = vrot.slane %v7259, 2
  %v7471 = vsel %vm879, %v7468, %v7470
  %v7472 = vrot.slane %v7260, 2
  %v7473 = vrot.slane %v7261, 2
  %v7474 = vsel %vm879, %v7472, %v7473
  %v7475 = vrot.slane %v7262, 2
  %v7476 = vsel %vm879, %v7473, %v7475
  %v7477 = vrot.slane %v7263, 2
  %v7478 = vrot.slane %v7264, 2
  %v7479 = vsel %vm879, %v7477, %v7478
  %v7480 = vrot.slane %v7265, 2
  %v7481 = vsel %vm879, %v7478, %v7480
  %v7482 = vrot.slane %v7266, 2
  %v7483 = vrot.slane %v7267, 2
  %v7484 = vsel %vm879, %v7482, %v7483
  %v7485 = vrot.slane %v7268, 2
  %v7486 = vsel %vm879, %v7483, %v7485
  %v7487 = vrot.slane %v7269, 2
  %v7488 = vrot.slane %v7270, 2
  %v7489 = vsel %vm879, %v7487, %v7488
  %v7490 = vrot.slane %v7271, 2
  %v7491 = vsel %vm879, %v7488, %v7490
  %v7492 = vrot.slane %v7272, 2
  %v7493 = vrot.slane %v7273, 2
  %v7494 = vsel %vm879, %v7492, %v7493
  %v7495 = vrot.slane %v7274, 2
  %v7496 = vsel %vm879, %v7493, %v7495
  %v7497 = vrot.slane %v7275, 2
  %v7498 = vrot.slane %v7276, 2
  %v7499 = vsel %vm879, %v7497, %v7498
  %v7500 = vrot.slane %v7277, 2
  %v7501 = vsel %vm879, %v7498, %v7500
  %v7502 = vrot.slane %v7278, 2
  %v7503 = vrot.slane %v7279, 2
  %v7504 = vsel %vm879, %v7502, %v7503
  %v7505 = vrot.slane %v7280, 2
  %v7506 = vsel %vm879, %v7503, %v7505
  %v7507 = vrot.slane %v7281, 2
  %v7508 = vrot.slane %v7282, 2
  %v7509 = vsel %vm879, %v7507, %v7508
  %v7510 = vrot.slane %v7283, 2
  %v7511 = vsel %vm879, %v7508, %v7510
  %v7512 = vrot.slane %v7284, 2
  %v7513 = vrot.slane %v7285, 2
  %v7514 = vsel %vm879, %v7512, %v7513
  %v7515 = vrot.slane %v7286, 2
  %v7516 = vsel %vm879, %v7513, %v7515
  %v7517 = vrot.slane %v7287, 2
  %v7518 = vrot.slane %v7288, 2
  %v7519 = vsel %vm879, %v7517, %v7518
  %v7520 = vrot.slane %v7289, 2
  %v7521 = vsel %vm879, %v7518, %v7520
  %v7522 = vrot.slane %v7290, 2
  %v7523 = vrot.slane %v7291, 2
  %v7524 = vsel %vm879, %v7522, %v7523
  %v7525 = vrot.slane %v7292, 2
  %v7526 = vsel %vm879, %v7523, %v7525
  %v7527 = vrot.slane %v7293, 2
  %v7528 = vrot.slane %v7294, 2
  %v7529 = vsel %vm879, %v7527, %v7528
  %v7530 = vrot.slane %v7295, 2
  %v7531 = vsel %vm879, %v7528, %v7530
  %v7532 = vrot.slane %v7296, 2
  %v7533 = vrot.slane %v7297, 2
  %v7534 = vsel %vm879, %v7532, %v7533
  %v7535 = vrot.slane %v7298, 2
  %v7536 = vsel %vm879, %v7533, %v7535
  %v7537 = vrot.slane %v7299, 2
  %v7538 = vrot.slane %v7300, 2
  %v7539 = vsel %vm879, %v7537, %v7538
  %v7540 = vrot.slane %v7301, 2
  %v7541 = vsel %vm879, %v7538, %v7540
  %v7542 = vrot.slane %v7302, 2
  %v7543 = vrot.slane %v7303, 2
  %v7544 = vsel %vm879, %v7542, %v7543
  %v7545 = vrot.slane %v7304, 2
  %v7546 = vsel %vm879, %v7543, %v7545
  %v7547 = vrot.slane %v7305, 2
  %v7548 = vrot.slane %v7306, 2
  %v7549 = vsel %vm879, %v7547, %v7548
  %v7550 = vrot.slane %v7307, 2
  %v7551 = vsel %vm879, %v7548, %v7550
  %v7552 = vrot.slane %v7308, 2
  %v7553 = vrot.slane %v7309, 2
  %v7554 = vsel %vm879, %v7552, %v7553
  %v7555 = vrot.slane %v7310, 2
  %v7556 = vsel %vm879, %v7553, %v7555
  %v7557 = vrot.slane %v7311, 2
  %v7558 = vrot.slane %v7312, 2
  %v7559 = vsel %vm879, %v7557, %v7558
  %v7560 = vrot.slane %v7313, 2
  %v7561 = vsel %vm879, %v7558, %v7560
  %v7562 = vrot.slane %v7314, 2
  %v7563 = vrot.slane %v7315, 2
  %v7564 = vsel %vm879, %v7562, %v7563
  %v7565 = vrot.slane %v7316, 2
  %v7566 = vsel %vm879, %v7563, %v7565
  %v7567 = vrot.slane %v7317, 2
  %v7568 = vrot.slane %v7318, 2
  %v7569 = vsel %vm879, %v7567, %v7568
  %v7570 = vrot.slane %v7319, 2
  %v7571 = vsel %vm879, %v7568, %v7570
  %v7572 = vrot.slane %v7320, 2
  %v7573 = vrot.slane %v7321, 2
  %v7574 = vsel %vm879, %v7572, %v7573
  %v7575 = vrot.slane %v7322, 2
  %v7576 = vsel %vm879, %v7573, %v7575
  %v7577 = vrot.slane %v7323, 2
  %v7578 = vrot.slane %v7324, 2
  %v7579 = vsel %vm879, %v7577, %v7578
  %v7580 = vrot.slane %v7325, 2
  %v7581 = vsel %vm879, %v7578, %v7580
  %v7646 = vadd.f32 %v7165, %v7424
  %v7647 = vadd.f32 %v7166, %v7426
  %v7648 = vadd.f32 %v7167, %v7429
  %v7649 = vadd.f32 %v7168, %v7431
  %v7650 = vadd.f32 %v7169, %v7434
  %v7651 = vadd.f32 %v7170, %v7436
  %v7652 = vadd.f32 %v7171, %v7439
  %v7653 = vadd.f32 %v7172, %v7441
  %v7654 = vadd.f32 %v7173, %v7444
  %v7655 = vadd.f32 %v7174, %v7446
  %v7656 = vadd.f32 %v7175, %v7449
  %v7657 = vadd.f32 %v7176, %v7451
  %v7658 = vadd.f32 %v7177, %v7454
  %v7659 = vadd.f32 %v7178, %v7456
  %v7660 = vadd.f32 %v7179, %v7459
  %v7661 = vadd.f32 %v7180, %v7461
  %v7662 = vadd.f32 %v7181, %v7464
  %v7663 = vadd.f32 %v7182, %v7466
  %v7664 = vadd.f32 %v7183, %v7469
  %v7665 = vadd.f32 %v7184, %v7471
  %v7666 = vadd.f32 %v7185, %v7474
  %v7667 = vadd.f32 %v7186, %v7476
  %v7668 = vadd.f32 %v7187, %v7479
  %v7669 = vadd.f32 %v7188, %v7481
  %v7670 = vadd.f32 %v7189, %v7484
  %v7671 = vadd.f32 %v7190, %v7486
  %v7672 = vadd.f32 %v7191, %v7489
  %v7673 = vadd.f32 %v7192, %v7491
  %v7674 = vadd.f32 %v7193, %v7494
  %v7675 = vadd.f32 %v7194, %v7496
  %v7676 = vadd.f32 %v7195, %v7499
  %v7677 = vadd.f32 %v7196, %v7501
  %v7678 = vadd.f32 %v7197, %v7504
  %v7679 = vadd.f32 %v7198, %v7506
  %v7680 = vadd.f32 %v7199, %v7509
  %v7681 = vadd.f32 %v7200, %v7511
  %v7682 = vadd.f32 %v7201, %v7514
  %v7683 = vadd.f32 %v7202, %v7516
  %v7684 = vadd.f32 %v7203, %v7519
  %v7685 = vadd.f32 %v7204, %v7521
  %v7686 = vadd.f32 %v7205, %v7524
  %v7687 = vadd.f32 %v7206, %v7526
  %v7688 = vadd.f32 %v7207, %v7529
  %v7689 = vadd.f32 %v7208, %v7531
  %v7690 = vadd.f32 %v7209, %v7534
  %v7691 = vadd.f32 %v7210, %v7536
  %v7692 = vadd.f32 %v7211, %v7539
  %v7693 = vadd.f32 %v7212, %v7541
  %v7694 = vadd.f32 %v7213, %v7544
  %v7695 = vadd.f32 %v7214, %v7546
  %v7696 = vadd.f32 %v7215, %v7549
  %v7697 = vadd.f32 %v7216, %v7551
  %v7698 = vadd.f32 %v7217, %v7554
  %v7699 = vadd.f32 %v7218, %v7556
  %v7700 = vadd.f32 %v7219, %v7559
  %v7701 = vadd.f32 %v7220, %v7561
  %v7702 = vadd.f32 %v7221, %v7564
  %v7703 = vadd.f32 %v7222, %v7566
  %v7704 = vadd.f32 %v7223, %v7569
  %v7705 = vadd.f32 %v7224, %v7571
  %v7706 = vadd.f32 %v7225, %v7574
  %v7707 = vadd.f32 %v7226, %v7576
  %v7708 = vadd.f32 %v7227, %v7579
  %v7709 = vadd.f32 %v7228, %v7581
  %v7710 = vld [vmem:[%s4] sm:$0x1]
  %v7712 = vperm.slane %v7710, 0
  %v7714 = vadd.f32 %v7646, %v7712
  %v7715 = vadd.f32 %v7647, %v7712
  %v7716 = vadd.f32 %v7648, %v7712
  %v7717 = vadd.f32 %v7649, %v7712
  %v7718 = vadd.f32 %v7650, %v7712
  %v7719 = vadd.f32 %v7651, %v7712
  %v7720 = vadd.f32 %v7652, %v7712
  %v7721 = vadd.f32 %v7653, %v7712
  %v7722 = vadd.f32 %v7654, %v7712
  %v7723 = vadd.f32 %v7655, %v7712
  %v7724 = vadd.f32 %v7656, %v7712
  %v7725 = vadd.f32 %v7657, %v7712
  %v7726 = vadd.f32 %v7658, %v7712
  %v7727 = vadd.f32 %v7659, %v7712
  %v7728 = vadd.f32 %v7660, %v7712
  %v7729 = vadd.f32 %v7661, %v7712
  %v7730 = vadd.f32 %v7662, %v7712
  %v7731 = vadd.f32 %v7663, %v7712
  %v7732 = vadd.f32 %v7664, %v7712
  %v7733 = vadd.f32 %v7665, %v7712
  %v7734 = vadd.f32 %v7666, %v7712
  %v7735 = vadd.f32 %v7667, %v7712
  %v7736 = vadd.f32 %v7668, %v7712
  %v7737 = vadd.f32 %v7669, %v7712
  %v7738 = vadd.f32 %v7670, %v7712
  %v7739 = vadd.f32 %v7671, %v7712
  %v7740 = vadd.f32 %v7672, %v7712
  %v7741 = vadd.f32 %v7673, %v7712
  %v7742 = vadd.f32 %v7674, %v7712
  %v7743 = vadd.f32 %v7675, %v7712
  %v7744 = vadd.f32 %v7676, %v7712
  %v7745 = vadd.f32 %v7677, %v7712
  %v7746 = vadd.f32 %v7678, %v7712
  %v7747 = vadd.f32 %v7679, %v7712
  %v7748 = vadd.f32 %v7680, %v7712
  %v7749 = vadd.f32 %v7681, %v7712
  %v7750 = vadd.f32 %v7682, %v7712
  %v7751 = vadd.f32 %v7683, %v7712
  %v7752 = vadd.f32 %v7684, %v7712
  %v7753 = vadd.f32 %v7685, %v7712
  %v7754 = vadd.f32 %v7686, %v7712
  %v7755 = vadd.f32 %v7687, %v7712
  %v7756 = vadd.f32 %v7688, %v7712
  %v7757 = vadd.f32 %v7689, %v7712
  %v7758 = vadd.f32 %v7690, %v7712
  %v7759 = vadd.f32 %v7691, %v7712
  %v7760 = vadd.f32 %v7692, %v7712
  %v7761 = vadd.f32 %v7693, %v7712
  %v7762 = vadd.f32 %v7694, %v7712
  %v7763 = vadd.f32 %v7695, %v7712
  %v7764 = vadd.f32 %v7696, %v7712
  %v7765 = vadd.f32 %v7697, %v7712
  %v7766 = vadd.f32 %v7698, %v7712
  %v7767 = vadd.f32 %v7699, %v7712
  %v7768 = vadd.f32 %v7700, %v7712
  %v7769 = vadd.f32 %v7701, %v7712
  %v7770 = vadd.f32 %v7702, %v7712
  %v7771 = vadd.f32 %v7703, %v7712
  %v7772 = vadd.f32 %v7704, %v7712
  %v7773 = vadd.f32 %v7705, %v7712
  %v7774 = vadd.f32 %v7706, %v7712
  %v7775 = vadd.f32 %v7707, %v7712
  %v7776 = vadd.f32 %v7708, %v7712
  %v7777 = vadd.f32 %v7709, %v7712
  %v7778 = vmax.f32 %v7714, 0.0
  %v7779 = vmax.f32 %v7715, 0.0
  %v7780 = vmax.f32 %v7716, 0.0
  %v7781 = vmax.f32 %v7717, 0.0
  %v7782 = vmax.f32 %v7718, 0.0
  %v7783 = vmax.f32 %v7719, 0.0
  %v7784 = vmax.f32 %v7720, 0.0
  %v7785 = vmax.f32 %v7721, 0.0
  %v7786 = vmax.f32 %v7722, 0.0
  %v7787 = vmax.f32 %v7723, 0.0
  %v7788 = vmax.f32 %v7724, 0.0
  %v7789 = vmax.f32 %v7725, 0.0
  %v7790 = vmax.f32 %v7726, 0.0
  %v7791 = vmax.f32 %v7727, 0.0
  %v7792 = vmax.f32 %v7728, 0.0
  %v7793 = vmax.f32 %v7729, 0.0
  %v7794 = vmax.f32 %v7730, 0.0
  %v7795 = vmax.f32 %v7731, 0.0
  %v7796 = vmax.f32 %v7732, 0.0
  %v7797 = vmax.f32 %v7733, 0.0
  %v7798 = vmax.f32 %v7734, 0.0
  %v7799 = vmax.f32 %v7735, 0.0
  %v7800 = vmax.f32 %v7736, 0.0
  %v7801 = vmax.f32 %v7737, 0.0
  %v7802 = vmax.f32 %v7738, 0.0
  %v7803 = vmax.f32 %v7739, 0.0
  %v7804 = vmax.f32 %v7740, 0.0
  %v7805 = vmax.f32 %v7741, 0.0
  %v7806 = vmax.f32 %v7742, 0.0
  %v7807 = vmax.f32 %v7743, 0.0
  %v7808 = vmax.f32 %v7744, 0.0
  %v7809 = vmax.f32 %v7745, 0.0
  %v7810 = vmax.f32 %v7746, 0.0
  %v7811 = vmax.f32 %v7747, 0.0
  %v7812 = vmax.f32 %v7748, 0.0
  %v7813 = vmax.f32 %v7749, 0.0
  %v7814 = vmax.f32 %v7750, 0.0
  %v7815 = vmax.f32 %v7751, 0.0
  %v7816 = vmax.f32 %v7752, 0.0
  %v7817 = vmax.f32 %v7753, 0.0
  %v7818 = vmax.f32 %v7754, 0.0
  %v7819 = vmax.f32 %v7755, 0.0
  %v7820 = vmax.f32 %v7756, 0.0
  %v7821 = vmax.f32 %v7757, 0.0
  %v7822 = vmax.f32 %v7758, 0.0
  %v7823 = vmax.f32 %v7759, 0.0
  %v7824 = vmax.f32 %v7760, 0.0
  %v7825 = vmax.f32 %v7761, 0.0
  %v7826 = vmax.f32 %v7762, 0.0
  %v7827 = vmax.f32 %v7763, 0.0
  %v7828 = vmax.f32 %v7764, 0.0
  %v7829 = vmax.f32 %v7765, 0.0
  %v7830 = vmax.f32 %v7766, 0.0
  %v7831 = vmax.f32 %v7767, 0.0
  %v7832 = vmax.f32 %v7768, 0.0
  %v7833 = vmax.f32 %v7769, 0.0
  %v7834 = vmax.f32 %v7770, 0.0
  %v7835 = vmax.f32 %v7771, 0.0
  %v7836 = vmax.f32 %v7772, 0.0
  %v7837 = vmax.f32 %v7773, 0.0
  %v7838 = vmax.f32 %v7774, 0.0
  %v7839 = vmax.f32 %v7775, 0.0
  %v7840 = vmax.f32 %v7776, 0.0
  %v7841 = vmax.f32 %v7777, 0.0
  %v7842 = vmax.f32 %v7778, %v7780
  %v7843 = vmax.f32 %v7779, %v7781
  %v7844 = vmax.f32 %v7782, %v7784
  %v7845 = vmax.f32 %v7783, %v7785
  %v7846 = vmax.f32 %v7786, %v7788
  %v7847 = vmax.f32 %v7787, %v7789
  %v7848 = vmax.f32 %v7790, %v7792
  %v7849 = vmax.f32 %v7791, %v7793
  %v7850 = vmax.f32 %v7794, %v7796
  %v7851 = vmax.f32 %v7795, %v7797
  %v7852 = vmax.f32 %v7798, %v7800
  %v7853 = vmax.f32 %v7799, %v7801
  %v7854 = vmax.f32 %v7802, %v7804
  %v7855 = vmax.f32 %v7803, %v7805
  %v7856 = vmax.f32 %v7806, %v7808
  %v7857 = vmax.f32 %v7807, %v7809
  %v7858 = vmax.f32 %v7810, %v7812
  %v7859 = vmax.f32 %v7811, %v7813
  %v7860 = vmax.f32 %v7814, %v7816
  %v7861 = vmax.f32 %v7815, %v7817
  %v7862 = vmax.f32 %v7818, %v7820
  %v7863 = vmax.f32 %v7819, %v7821
  %v7864 = vmax.f32 %v7822, %v7824
  %v7865 = vmax.f32 %v7823, %v7825
  %v7866 = vmax.f32 %v7826, %v7828
  %v7867 = vmax.f32 %v7827, %v7829
  %v7868 = vmax.f32 %v7830, %v7832
  %v7869 = vmax.f32 %v7831, %v7833
  %v7870 = vmax.f32 %v7834, %v7836
  %v7871 = vmax.f32 %v7835, %v7837
  %v7872 = vmax.f32 %v7838, %v7840
  %v7873 = vmax.f32 %v7839, %v7841
  %v7906 = vrot.slane %v7842, 2
  %v7907 = vrot.slane %v7842, 4
  %v7908 = vrot.slane %v7842, 6
  %v7909 = vrot.slane %v7843, 2
  %v7910 = vrot.slane %v7843, 4
  %v7911 = vrot.slane %v7843, 6
  %v7912 = vrot.slane %v7844, 2
  %v7913 = vrot.slane %v7844, 4
  %v7914 = vrot.slane %v7844, 6
  %v7915 = vrot.slane %v7845, 2
  %v7916 = vrot.slane %v7845, 4
  %v7917 = vrot.slane %v7845, 6
  %v7918 = vrot.slane %v7846, 2
  %v7919 = vrot.slane %v7846, 4
  %v7920 = vrot.slane %v7846, 6
  %v7921 = vrot.slane %v7847, 2
  %v7922 = vrot.slane %v7847, 4
  %v7923 = vrot.slane %v7847, 6
  %v7924 = vrot.slane %v7848, 2
  %v7925 = vrot.slane %v7848, 4
  %v7926 = vrot.slane %v7848, 6
  %v7927 = vrot.slane %v7849, 2
  %v7928 = vrot.slane %v7849, 4
  %v7929 = vrot.slane %v7849, 6
  %v7930 = vrot.slane %v7850, 2
  %v7931 = vrot.slane %v7850, 4
  %v7932 = vrot.slane %v7850, 6
  %v7933 = vrot.slane %v7851, 2
  %v7934 = vrot.slane %v7851, 4
  %v7935 = vrot.slane %v7851, 6
  %v7936 = vrot.slane %v7852, 2
  %v7937 = vrot.slane %v7852, 4
  %v7938 = vrot.slane %v7852, 6
  %v7939 = vrot.slane %v7853, 2
  %v7940 = vrot.slane %v7853, 4
  %v7941 = vrot.slane %v7853, 6
  %v7942 = vrot.slane %v7854, 2
  %v7943 = vrot.slane %v7854, 4
  %v7944 = vrot.slane %v7854, 6
  %v7945 = vrot.slane %v7855, 2
  %v7946 = vrot.slane %v7855, 4
  %v7947 = vrot.slane %v7855, 6
  %v7948 = vrot.slane %v7856, 2
  %v7949 = vrot.slane %v7856, 4
  %v7950 = vrot.slane %v7856, 6
  %v7951 = vrot.slane %v7857, 2
  %v7952 = vrot.slane %v7857, 4
  %v7953 = vrot.slane %v7857, 6
  %v7954 = vrot.slane %v7858, 2
  %v7955 = vrot.slane %v7858, 4
  %v7956 = vrot.slane %v7858, 6
  %v7957 = vrot.slane %v7859, 2
  %v7958 = vrot.slane %v7859, 4
  %v7959 = vrot.slane %v7859, 6
  %v7960 = vrot.slane %v7860, 2
  %v7961 = vrot.slane %v7860, 4
  %v7962 = vrot.slane %v7860, 6
  %v7963 = vrot.slane %v7861, 2
  %v7964 = vrot.slane %v7861, 4
  %v7965 = vrot.slane %v7861, 6
  %v7966 = vrot.slane %v7862, 2
  %v7967 = vrot.slane %v7862, 4
  %v7968 = vrot.slane %v7862, 6
  %v7969 = vrot.slane %v7863, 2
  %v7970 = vrot.slane %v7863, 4
  %v7971 = vrot.slane %v7863, 6
  %v7972 = vrot.slane %v7864, 2
  %v7973 = vrot.slane %v7864, 4
  %v7974 = vrot.slane %v7864, 6
  %v7975 = vrot.slane %v7865, 2
  %v7976 = vrot.slane %v7865, 4
  %v7977 = vrot.slane %v7865, 6
  %v7978 = vrot.slane %v7866, 2
  %v7979 = vrot.slane %v7866, 4
  %v7980 = vrot.slane %v7866, 6
  %v7981 = vrot.slane %v7867, 2
  %v7982 = vrot.slane %v7867, 4
  %v7983 = vrot.slane %v7867, 6
  %v7984 = vrot.slane %v7868, 2
  %v7985 = vrot.slane %v7868, 4
  %v7986 = vrot.slane %v7868, 6
  %v7987 = vrot.slane %v7869, 2
  %v7988 = vrot.slane %v7869, 4
  %v7989 = vrot.slane %v7869, 6
  %v7990 = vrot.slane %v7870, 2
  %v7991 = vrot.slane %v7870, 4
  %v7992 = vrot.slane %v7870, 6
  %v7993 = vrot.slane %v7871, 2
  %v7994 = vrot.slane %v7871, 4
  %v7995 = vrot.slane %v7871, 6
  %v7996 = vrot.slane %v7872, 2
  %v7997 = vrot.slane %v7872, 4
  %v7998 = vrot.slane %v7872, 6
  %v7999 = vrot.slane %v7873, 2
  %v8000 = vrot.slane %v7873, 4
  %v8001 = vrot.slane %v7873, 6
  %v8098 = vrot.slane %v7842, 7
  %v8099 = vrot.slane %v8098, 2
  %v8100 = vrot.slane %v7906, 7
  %v8101 = vrot.slane %v8100, 2
  %v8102 = vrot.slane %v7907, 7
  %v8103 = vrot.slane %v8102, 2
  %v8104 = vrot.slane %v7908, 7
  %v8105 = vrot.slane %v8104, 2
  %v8106 = vrot.slane %v7843, 7
  %v8107 = vrot.slane %v8106, 2
  %v8108 = vrot.slane %v7909, 7
  %v8109 = vrot.slane %v8108, 2
  %v8110 = vrot.slane %v7910, 7
  %v8111 = vrot.slane %v8110, 2
  %v8112 = vrot.slane %v7911, 7
  %v8113 = vrot.slane %v8112, 2
  %v8114 = vrot.slane %v7844, 7
  %v8115 = vrot.slane %v8114, 2
  %v8116 = vrot.slane %v7912, 7
  %v8117 = vrot.slane %v8116, 2
  %v8118 = vrot.slane %v7913, 7
  %v8119 = vrot.slane %v8118, 2
  %v8120 = vrot.slane %v7914, 7
  %v8121 = vrot.slane %v8120, 2
  %v8122 = vrot.slane %v7845, 7
  %v8123 = vrot.slane %v8122, 2
  %v8124 = vrot.slane %v7915, 7
  %v8125 = vrot.slane %v8124, 2
  %v8126 = vrot.slane %v7916, 7
  %v8127 = vrot.slane %v8126, 2
  %v8128 = vrot.slane %v7917, 7
  %v8129 = vrot.slane %v8128, 2
  %v8130 = vrot.slane %v7846, 7
  %v8131 = vrot.slane %v8130, 2
  %v8132 = vrot.slane %v7918, 7
  %v8133 = vrot.slane %v8132, 2
  %v8134 = vrot.slane %v7919, 7
  %v8135 = vrot.slane %v8134, 2
  %v8136 = vrot.slane %v7920, 7
  %v8137 = vrot.slane %v8136, 2
  %v8138 = vrot.slane %v7847, 7
  %v8139 = vrot.slane %v8138, 2
  %v8140 = vrot.slane %v7921, 7
  %v8141 = vrot.slane %v8140, 2
  %v8142 = vrot.slane %v7922, 7
  %v8143 = vrot.slane %v8142, 2
  %v8144 = vrot.slane %v7923, 7
  %v8145 = vrot.slane %v8144, 2
  %v8146 = vrot.slane %v7848, 7
  %v8147 = vrot.slane %v8146, 2
  %v8148 = vrot.slane %v7924, 7
  %v8149 = vrot.slane %v8148, 2
  %v8150 = vrot.slane %v7925, 7
  %v8151 = vrot.slane %v8150, 2
  %v8152 = vrot.slane %v7926, 7
  %v8153 = vrot.slane %v8152, 2
  %v8154 = vrot.slane %v7849, 7
  %v8155 = vrot.slane %v8154, 2
  %v8156 = vrot.slane %v7927, 7
  %v8157 = vrot.slane %v8156, 2
  %v8158 = vrot.slane %v7928, 7
  %v8159 = vrot.slane %v8158, 2
  %v8160 = vrot.slane %v7929, 7
  %v8161 = vrot.slane %v8160, 2
  %v8162 = vrot.slane %v7850, 7
  %v8163 = vrot.slane %v8162, 2
  %v8164 = vrot.slane %v7930, 7
  %v8165 = vrot.slane %v8164, 2
  %v8166 = vrot.slane %v7931, 7
  %v8167 = vrot.slane %v8166, 2
  %v8168 = vrot.slane %v7932, 7
  %v8169 = vrot.slane %v8168, 2
  %v8170 = vrot.slane %v7851, 7
  %v8171 = vrot.slane %v8170, 2
  %v8172 = vrot.slane %v7933, 7
  %v8173 = vrot.slane %v8172, 2
  %v8174 = vrot.slane %v7934, 7
  %v8175 = vrot.slane %v8174, 2
  %v8176 = vrot.slane %v7935, 7
  %v8177 = vrot.slane %v8176, 2
  %v8178 = vrot.slane %v7852, 7
  %v8179 = vrot.slane %v8178, 2
  %v8180 = vrot.slane %v7936, 7
  %v8181 = vrot.slane %v8180, 2
  %v8182 = vrot.slane %v7937, 7
  %v8183 = vrot.slane %v8182, 2
  %v8184 = vrot.slane %v7938, 7
  %v8185 = vrot.slane %v8184, 2
  %v8186 = vrot.slane %v7853, 7
  %v8187 = vrot.slane %v8186, 2
  %v8188 = vrot.slane %v7939, 7
  %v8189 = vrot.slane %v8188, 2
  %v8190 = vrot.slane %v7940, 7
  %v8191 = vrot.slane %v8190, 2
  %v8192 = vrot.slane %v7941, 7
  %v8193 = vrot.slane %v8192, 2
  %v8194 = vrot.slane %v7854, 7
  %v8195 = vrot.slane %v8194, 2
  %v8196 = vrot.slane %v7942, 7
  %v8197 = vrot.slane %v8196, 2
  %v8198 = vrot.slane %v7943, 7
  %v8199 = vrot.slane %v8198, 2
  %v8200 = vrot.slane %v7944, 7
  %v8201 = vrot.slane %v8200, 2
  %v8202 = vrot.slane %v7855, 7
  %v8203 = vrot.slane %v8202, 2
  %v8204 = vrot.slane %v7945, 7
  %v8205 = vrot.slane %v8204, 2
  %v8206 = vrot.slane %v7946, 7
  %v8207 = vrot.slane %v8206, 2
  %v8208 = vrot.slane %v7947, 7
  %v8209 = vrot.slane %v8208, 2
  %v8210 = vrot.slane %v7856, 7
  %v8211 = vrot.slane %v8210, 2
  %v8212 = vrot.slane %v7948, 7
  %v8213 = vrot.slane %v8212, 2
  %v8214 = vrot.slane %v7949, 7
  %v8215 = vrot.slane %v8214, 2
  %v8216 = vrot.slane %v7950, 7
  %v8217 = vrot.slane %v8216, 2
  %v8218 = vrot.slane %v7857, 7
  %v8219 = vrot.slane %v8218, 2
  %v8220 = vrot.slane %v7951, 7
  %v8221 = vrot.slane %v8220, 2
  %v8222 = vrot.slane %v7952, 7
  %v8223 = vrot.slane %v8222, 2
  %v8224 = vrot.slane %v7953, 7
  %v8225 = vrot.slane %v8224, 2
  %v8226 = vrot.slane %v7858, 7
  %v8227 = vrot.slane %v8226, 2
  %v8228 = vrot.slane %v7954, 7
  %v8229 = vrot.slane %v8228, 2
  %v8230 = vrot.slane %v7955, 7
  %v8231 = vrot.slane %v8230, 2
  %v8232 = vrot.slane %v7956, 7
  %v8233 = vrot.slane %v8232, 2
  %v8234 = vrot.slane %v7859, 7
  %v8235 = vrot.slane %v8234, 2
  %v8236 = vrot.slane %v7957, 7
  %v8237 = vrot.slane %v8236, 2
  %v8238 = vrot.slane %v7958, 7
  %v8239 = vrot.slane %v8238, 2
  %v8240 = vrot.slane %v7959, 7
  %v8241 = vrot.slane %v8240, 2
  %v8242 = vrot.slane %v7860, 7
  %v8243 = vrot.slane %v8242, 2
  %v8244 = vrot.slane %v7960, 7
  %v8245 = vrot.slane %v8244, 2
  %v8246 = vrot.slane %v7961, 7
  %v8247 = vrot.slane %v8246, 2
  %v8248 = vrot.slane %v7962, 7
  %v8249 = vrot.slane %v8248, 2
  %v8250 = vrot.slane %v7861, 7
  %v8251 = vrot.slane %v8250, 2
  %v8252 = vrot.slane %v7963, 7
  %v8253 = vrot.slane %v8252, 2
  %v8254 = vrot.slane %v7964, 7
  %v8255 = vrot.slane %v8254, 2
  %v8256 = vrot.slane %v7965, 7
  %v8257 = vrot.slane %v8256, 2
  %v8258 = vrot.slane %v7862, 7
  %v8259 = vrot.slane %v8258, 2
  %v8260 = vrot.slane %v7966, 7
  %v8261 = vrot.slane %v8260, 2
  %v8262 = vrot.slane %v7967, 7
  %v8263 = vrot.slane %v8262, 2
  %v8264 = vrot.slane %v7968, 7
  %v8265 = vrot.slane %v8264, 2
  %v8266 = vrot.slane %v7863, 7
  %v8267 = vrot.slane %v8266, 2
  %v8268 = vrot.slane %v7969, 7
  %v8269 = vrot.slane %v8268, 2
  %v8270 = vrot.slane %v7970, 7
  %v8271 = vrot.slane %v8270, 2
  %v8272 = vrot.slane %v7971, 7
  %v8273 = vrot.slane %v8272, 2
  %v8274 = vrot.slane %v7864, 7
  %v8275 = vrot.slane %v8274, 2
  %v8276 = vrot.slane %v7972, 7
  %v8277 = vrot.slane %v8276, 2
  %v8278 = vrot.slane %v7973, 7
  %v8279 = vrot.slane %v8278, 2
  %v8280 = vrot.slane %v7974, 7
  %v8281 = vrot.slane %v8280, 2
  %v8282 = vrot.slane %v7865, 7
  %v8283 = vrot.slane %v8282, 2
  %v8284 = vrot.slane %v7975, 7
  %v8285 = vrot.slane %v8284, 2
  %v8286 = vrot.slane %v7976, 7
  %v8287 = vrot.slane %v8286, 2
  %v8288 = vrot.slane %v7977, 7
  %v8289 = vrot.slane %v8288, 2
  %v8290 = vrot.slane %v7866, 7
  %v8291 = vrot.slane %v8290, 2
  %v8292 = vrot.slane %v7978, 7
  %v8293 = vrot.slane %v8292, 2
  %v8294 = vrot.slane %v7979, 7
  %v8295 = vrot.slane %v8294, 2
  %v8296 = vrot.slane %v7980, 7
  %v8297 = vrot.slane %v8296, 2
  %v8298 = vrot.slane %v7867, 7
  %v8299 = vrot.slane %v8298, 2
  %v8300 = vrot.slane %v7981, 7
  %v8301 = vrot.slane %v8300, 2
  %v8302 = vrot.slane %v7982, 7
  %v8303 = vrot.slane %v8302, 2
  %v8304 = vrot.slane %v7983, 7
  %v8305 = vrot.slane %v8304, 2
  %v8306 = vrot.slane %v7868, 7
  %v8307 = vrot.slane %v8306, 2
  %v8308 = vrot.slane %v7984, 7
  %v8309 = vrot.slane %v8308, 2
  %v8310 = vrot.slane %v7985, 7
  %v8311 = vrot.slane %v8310, 2
  %v8312 = vrot.slane %v7986, 7
  %v8313 = vrot.slane %v8312, 2
  %v8314 = vrot.slane %v7869, 7
  %v8315 = vrot.slane %v8314, 2
  %v8316 = vrot.slane %v7987, 7
  %v8317 = vrot.slane %v8316, 2
  %v8318 = vrot.slane %v7988, 7
  %v8319 = vrot.slane %v8318, 2
  %v8320 = vrot.slane %v7989, 7
  %v8321 = vrot.slane %v8320, 2
  %v8322 = vrot.slane %v7870, 7
  %v8323 = vrot.slane %v8322, 2
  %v8324 = vrot.slane %v7990, 7
  %v8325 = vrot.slane %v8324, 2
  %v8326 = vrot.slane %v7991, 7
  %v8327 = vrot.slane %v8326, 2
  %v8328 = vrot.slane %v7992, 7
  %v8329 = vrot.slane %v8328, 2
  %v8330 = vrot.slane %v7871, 7
  %v8331 = vrot.slane %v8330, 2
  %v8332 = vrot.slane %v7993, 7
  %v8333 = vrot.slane %v8332, 2
  %v8334 = vrot.slane %v7994, 7
  %v8335 = vrot.slane %v8334, 2
  %v8336 = vrot.slane %v7995, 7
  %v8337 = vrot.slane %v8336, 2
  %v8338 = vrot.slane %v7872, 7
  %v8339 = vrot.slane %v8338, 2
  %v8340 = vrot.slane %v7996, 7
  %v8341 = vrot.slane %v8340, 2
  %v8342 = vrot.slane %v7997, 7
  %v8343 = vrot.slane %v8342, 2
  %v8344 = vrot.slane %v7998, 7
  %v8345 = vrot.slane %v8344, 2
  %v8346 = vrot.slane %v7873, 7
  %v8347 = vrot.slane %v8346, 2
  %v8348 = vrot.slane %v7999, 7
  %v8349 = vrot.slane %v8348, 2
  %v8350 = vrot.slane %v8000, 7
  %v8351 = vrot.slane %v8350, 2
  %v8352 = vrot.slane %v8001, 7
  %v8353 = vrot.slane %v8352, 2
  %v8482 = vmax.f32 %v7842, %v8099
  %v8483 = vmax.f32 %v7906, %v8101
  %v8484 = vmax.f32 %v7907, %v8103
  %v8485 = vmax.f32 %v7908, %v8105
  %v8486 = vmax.f32 %v7843, %v8107
  %v8487 = vmax.f32 %v7909, %v8109
  %v8488 = vmax.f32 %v7910, %v8111
  %v8489 = vmax.f32 %v7911, %v8113
  %v8490 = vmax.f32 %v7844, %v8115
  %v8491 = vmax.f32 %v7912, %v8117
  %v8492 = vmax.f32 %v7913, %v8119
  %v8493 = vmax.f32 %v7914, %v8121
  %v8494 = vmax.f32 %v7845, %v8123
  %v8495 = vmax.f32 %v7915, %v8125
  %v8496 = vmax.f32 %v7916, %v8127
  %v8497 = vmax.f32 %v7917, %v8129
  %v8498 = vmax.f32 %v7846, %v8131
  %v8499 = vmax.f32 %v7918, %v8133
  %v8500 = vmax.f32 %v7919, %v8135
  %v8501 = vmax.f32 %v7920, %v8137
  %v8502 = vmax.f32 %v7847, %v8139
  %v8503 = vmax.f32 %v7921, %v8141
  %v8504 = vmax.f32 %v7922, %v8143
  %v8505 = vmax.f32 %v7923, %v8145
  %v8506 = vmax.f32 %v7848, %v8147
  %v8507 = vmax.f32 %v7924, %v8149
  %v8508 = vmax.f32 %v7925, %v8151
  %v8509 = vmax.f32 %v7926, %v8153
  %v8510 = vmax.f32 %v7849, %v8155
  %v8511 = vmax.f32 %v7927, %v8157
  %v8512 = vmax.f32 %v7928, %v8159
  %v8513 = vmax.f32 %v7929, %v8161
  %v8514 = vmax.f32 %v7850, %v8163
  %v8515 = vmax.f32 %v7930, %v8165
  %v8516 = vmax.f32 %v7931, %v8167
  %v8517 = vmax.f32 %v7932, %v8169
  %v8518 = vmax.f32 %v7851, %v8171
  %v8519 = vmax.f32 %v7933, %v8173
  %v8520 = vmax.f32 %v7934, %v8175
  %v8521 = vmax.f32 %v7935, %v8177
  %v8522 = vmax.f32 %v7852, %v8179
  %v8523 = vmax.f32 %v7936, %v8181
  %v8524 = vmax.f32 %v7937, %v8183
  %v8525 = vmax.f32 %v7938, %v8185
  %v8526 = vmax.f32 %v7853, %v8187
  %v8527 = vmax.f32 %v7939, %v8189
  %v8528 = vmax.f32 %v7940, %v8191
  %v8529 = vmax.f32 %v7941, %v8193
  %v8530 = vmax.f32 %v7854, %v8195
  %v8531 = vmax.f32 %v7942, %v8197
  %v8532 = vmax.f32 %v7943, %v8199
  %v8533 = vmax.f32 %v7944, %v8201
  %v8534 = vmax.f32 %v7855, %v8203
  %v8535 = vmax.f32 %v7945, %v8205
  %v8536 = vmax.f32 %v7946, %v8207
  %v8537 = vmax.f32 %v7947, %v8209
  %v8538 = vmax.f32 %v7856, %v8211
  %v8539 = vmax.f32 %v7948, %v8213
  %v8540 = vmax.f32 %v7949, %v8215
  %v8541 = vmax.f32 %v7950, %v8217
  %v8542 = vmax.f32 %v7857, %v8219
  %v8543 = vmax.f32 %v7951, %v8221
  %v8544 = vmax.f32 %v7952, %v8223
  %v8545 = vmax.f32 %v7953, %v8225
  %v8546 = vmax.f32 %v7858, %v8227
  %v8547 = vmax.f32 %v7954, %v8229
  %v8548 = vmax.f32 %v7955, %v8231
  %v8549 = vmax.f32 %v7956, %v8233
  %v8550 = vmax.f32 %v7859, %v8235
  %v8551 = vmax.f32 %v7957, %v8237
  %v8552 = vmax.f32 %v7958, %v8239
  %v8553 = vmax.f32 %v7959, %v8241
  %v8554 = vmax.f32 %v7860, %v8243
  %v8555 = vmax.f32 %v7960, %v8245
  %v8556 = vmax.f32 %v7961, %v8247
  %v8557 = vmax.f32 %v7962, %v8249
  %v8558 = vmax.f32 %v7861, %v8251
  %v8559 = vmax.f32 %v7963, %v8253
  %v8560 = vmax.f32 %v7964, %v8255
  %v8561 = vmax.f32 %v7965, %v8257
  %v8562 = vmax.f32 %v7862, %v8259
  %v8563 = vmax.f32 %v7966, %v8261
  %v8564 = vmax.f32 %v7967, %v8263
  %v8565 = vmax.f32 %v7968, %v8265
  %v8566 = vmax.f32 %v7863, %v8267
  %v8567 = vmax.f32 %v7969, %v8269
  %v8568 = vmax.f32 %v7970, %v8271
  %v8569 = vmax.f32 %v7971, %v8273
  %v8570 = vmax.f32 %v7864, %v8275
  %v8571 = vmax.f32 %v7972, %v8277
  %v8572 = vmax.f32 %v7973, %v8279
  %v8573 = vmax.f32 %v7974, %v8281
  %v8574 = vmax.f32 %v7865, %v8283
  %v8575 = vmax.f32 %v7975, %v8285
  %v8576 = vmax.f32 %v7976, %v8287
  %v8577 = vmax.f32 %v7977, %v8289
  %v8578 = vmax.f32 %v7866, %v8291
  %v8579 = vmax.f32 %v7978, %v8293
  %v8580 = vmax.f32 %v7979, %v8295
  %v8581 = vmax.f32 %v7980, %v8297
  %v8582 = vmax.f32 %v7867, %v8299
  %v8583 = vmax.f32 %v7981, %v8301
  %v8584 = vmax.f32 %v7982, %v8303
  %v8585 = vmax.f32 %v7983, %v8305
  %v8586 = vmax.f32 %v7868, %v8307
  %v8587 = vmax.f32 %v7984, %v8309
  %v8588 = vmax.f32 %v7985, %v8311
  %v8589 = vmax.f32 %v7986, %v8313
  %v8590 = vmax.f32 %v7869, %v8315
  %v8591 = vmax.f32 %v7987, %v8317
  %v8592 = vmax.f32 %v7988, %v8319
  %v8593 = vmax.f32 %v7989, %v8321
  %v8594 = vmax.f32 %v7870, %v8323
  %v8595 = vmax.f32 %v7990, %v8325
  %v8596 = vmax.f32 %v7991, %v8327
  %v8597 = vmax.f32 %v7992, %v8329
  %v8598 = vmax.f32 %v7871, %v8331
  %v8599 = vmax.f32 %v7993, %v8333
  %v8600 = vmax.f32 %v7994, %v8335
  %v8601 = vmax.f32 %v7995, %v8337
  %v8602 = vmax.f32 %v7872, %v8339
  %v8603 = vmax.f32 %v7996, %v8341
  %v8604 = vmax.f32 %v7997, %v8343
  %v8605 = vmax.f32 %v7998, %v8345
  %v8606 = vmax.f32 %v7873, %v8347
  %v8607 = vmax.f32 %v7999, %v8349
  %v8608 = vmax.f32 %v8000, %v8351
  %v8609 = vmax.f32 %v8001, %v8353
  %v8610 = vld [vmem:[%s5] sm:$0x1]
  %v8611 = vld [vmem:[%s6] sm:$0x1]
  %v8740 = vperm.slane %v8482, 0
  %v8741 = vperm.slane %v8483, 0
  %v8742 = vperm.slane %v8484, 0
  %v8743 = vperm.slane %v8485, 0
  %v8744 = vperm.slane %v8486, 0
  %v8745 = vperm.slane %v8487, 0
  %v8746 = vperm.slane %v8488, 0
  %v8747 = vperm.slane %v8489, 0
  %v8748 = vperm.slane %v8490, 0
  %v8749 = vperm.slane %v8491, 0
  %v8750 = vperm.slane %v8492, 0
  %v8751 = vperm.slane %v8493, 0
  %v8752 = vperm.slane %v8494, 0
  %v8753 = vperm.slane %v8495, 0
  %v8754 = vperm.slane %v8496, 0
  %v8755 = vperm.slane %v8497, 0
  %v8756 = vperm.slane %v8498, 0
  %v8757 = vperm.slane %v8499, 0
  %v8758 = vperm.slane %v8500, 0
  %v8759 = vperm.slane %v8501, 0
  %v8760 = vperm.slane %v8502, 0
  %v8761 = vperm.slane %v8503, 0
  %v8762 = vperm.slane %v8504, 0
  %v8763 = vperm.slane %v8505, 0
  %v8764 = vperm.slane %v8506, 0
  %v8765 = vperm.slane %v8507, 0
  %v8766 = vperm.slane %v8508, 0
  %v8767 = vperm.slane %v8509, 0
  %v8768 = vperm.slane %v8510, 0
  %v8769 = vperm.slane %v8511, 0
  %v8770 = vperm.slane %v8512, 0
  %v8771 = vperm.slane %v8513, 0
  %v8772 = vperm.slane %v8514, 0
  %v8773 = vperm.slane %v8515, 0
  %v8774 = vperm.slane %v8516, 0
  %v8775 = vperm.slane %v8517, 0
  %v8776 = vperm.slane %v8518, 0
  %v8777 = vperm.slane %v8519, 0
  %v8778 = vperm.slane %v8520, 0
  %v8779 = vperm.slane %v8521, 0
  %v8780 = vperm.slane %v8522, 0
  %v8781 = vperm.slane %v8523, 0
  %v8782 = vperm.slane %v8524, 0
  %v8783 = vperm.slane %v8525, 0
  %v8784 = vperm.slane %v8526, 0
  %v8785 = vperm.slane %v8527, 0
  %v8786 = vperm.slane %v8528, 0
  %v8787 = vperm.slane %v8529, 0
  %v8788 = vperm.slane %v8530, 0
  %v8789 = vperm.slane %v8531, 0
  %v8790 = vperm.slane %v8532, 0
  %v8791 = vperm.slane %v8533, 0
  %v8792 = vperm.slane %v8534, 0
  %v8793 = vperm.slane %v8535, 0
  %v8794 = vperm.slane %v8536, 0
  %v8795 = vperm.slane %v8537, 0
  %v8796 = vperm.slane %v8538, 0
  %v8797 = vperm.slane %v8539, 0
  %v8798 = vperm.slane %v8540, 0
  %v8799 = vperm.slane %v8541, 0
  %v8800 = vperm.slane %v8542, 0
  %v8801 = vperm.slane %v8543, 0
  %v8802 = vperm.slane %v8544, 0
  %v8803 = vperm.slane %v8545, 0
  %v8804 = vperm.slane %v8546, 0
  %v8805 = vperm.slane %v8547, 0
  %v8806 = vperm.slane %v8548, 0
  %v8807 = vperm.slane %v8549, 0
  %v8808 = vperm.slane %v8550, 0
  %v8809 = vperm.slane %v8551, 0
  %v8810 = vperm.slane %v8552, 0
  %v8811 = vperm.slane %v8553, 0
  %v8812 = vperm.slane %v8554, 0
  %v8813 = vperm.slane %v8555, 0
  %v8814 = vperm.slane %v8556, 0
  %v8815 = vperm.slane %v8557, 0
  %v8816 = vperm.slane %v8558, 0
  %v8817 = vperm.slane %v8559, 0
  %v8818 = vperm.slane %v8560, 0
  %v8819 = vperm.slane %v8561, 0
  %v8820 = vperm.slane %v8562, 0
  %v8821 = vperm.slane %v8563, 0
  %v8822 = vperm.slane %v8564, 0
  %v8823 = vperm.slane %v8565, 0
  %v8824 = vperm.slane %v8566, 0
  %v8825 = vperm.slane %v8567, 0
  %v8826 = vperm.slane %v8568, 0
  %v8827 = vperm.slane %v8569, 0
  %v8828 = vperm.slane %v8570, 0
  %v8829 = vperm.slane %v8571, 0
  %v8830 = vperm.slane %v8572, 0
  %v8831 = vperm.slane %v8573, 0
  %v8832 = vperm.slane %v8574, 0
  %v8833 = vperm.slane %v8575, 0
  %v8834 = vperm.slane %v8576, 0
  %v8835 = vperm.slane %v8577, 0
  %v8836 = vperm.slane %v8578, 0
  %v8837 = vperm.slane %v8579, 0
  %v8838 = vperm.slane %v8580, 0
  %v8839 = vperm.slane %v8581, 0
  %v8840 = vperm.slane %v8582, 0
  %v8841 = vperm.slane %v8583, 0
  %v8842 = vperm.slane %v8584, 0
  %v8843 = vperm.slane %v8585, 0
  %v8844 = vperm.slane %v8586, 0
  %v8845 = vperm.slane %v8587, 0
  %v8846 = vperm.slane %v8588, 0
  %v8847 = vperm.slane %v8589, 0
  %v8848 = vperm.slane %v8590, 0
  %v8849 = vperm.slane %v8591, 0
  %v8850 = vperm.slane %v8592, 0
  %v8851 = vperm.slane %v8593, 0
  %v8852 = vperm.slane %v8594, 0
  %v8853 = vperm.slane %v8595, 0
  %v8854 = vperm.slane %v8596, 0
  %v8855 = vperm.slane %v8597, 0
  %v8856 = vperm.slane %v8598, 0
  %v8857 = vperm.slane %v8599, 0
  %v8858 = vperm.slane %v8600, 0
  %v8859 = vperm.slane %v8601, 0
  %v8860 = vperm.slane %v8602, 0
  %v8861 = vperm.slane %v8603, 0
  %v8862 = vperm.slane %v8604, 0
  %v8863 = vperm.slane %v8605, 0
  %v8864 = vperm.slane %v8606, 0
  %v8865 = vperm.slane %v8607, 0
  %v8866 = vperm.slane %v8608, 0
  %v8867 = vperm.slane %v8609, 0
  %vm8868 = vcmask 1041409
  %v8869 = vsel %vm8868, %v8741, %v8740
  %vm8870 = vcmask 1042434
  %v8871 = vsel %vm8870, %v8742, %v8869
  %vm8872 = vcmask 1043459
  %v8873 = vsel %vm8872, %v8743, %v8871
  %vm8874 = vcmask 1044484
  %v8875 = vsel %vm8874, %v8744, %v8873
  %vm8876 = vcmask 1045509
  %v8877 = vsel %vm8876, %v8745, %v8875
  %vm8878 = vcmask 1046534
  %v8879 = vsel %vm8878, %v8746, %v8877
  %vm8880 = vcmask 1047559
  %v8881 = vsel %vm8880, %v8747, %v8879
  %v8882 = vsel %vm8868, %v8749, %v8748
  %v8883 = vsel %vm8870, %v8750, %v8882
  %v8884 = vsel %vm8872, %v8751, %v8883
  %v8885 = vsel %vm8874, %v8752, %v8884
  %v8886 = vsel %vm8876, %v8753, %v8885
  %v8887 = vsel %vm8878, %v8754, %v8886
  %v8888 = vsel %vm8880, %v8755, %v8887
  %v8889 = vsel %vm8868, %v8757, %v8756
  %v8890 = vsel %vm8870, %v8758, %v8889
  %v8891 = vsel %vm8872, %v8759, %v8890
  %v8892 = vsel %vm8874, %v8760, %v8891
  %v8893 = vsel %vm8876, %v8761, %v8892
  %v8894 = vsel %vm8878, %v8762, %v8893
  %v8895 = vsel %vm8880, %v8763, %v8894
  %v8896 = vsel %vm8868, %v8765, %v8764
  %v8897 = vsel %vm8870, %v8766, %v8896
  %v8898 = vsel %vm8872, %v8767, %v8897
  %v8899 = vsel %vm8874, %v8768, %v8898
  %v8900 = vsel %vm8876, %v8769, %v8899
  %v8901 = vsel %vm8878, %v8770, %v8900
  %v8902 = vsel %vm8880, %v8771, %v8901
  %v8903 = vsel %vm8868, %v8773, %v8772
  %v8904 = vsel %vm8870, %v8774, %v8903
  %v8905 = vsel %vm8872, %v8775, %v8904
  %v8906 = vsel %vm8874, %v8776, %v8905
  %v8907 = vsel %vm8876, %v8777, %v8906
  %v8908 = vsel %vm8878, %v8778, %v8907
  %v8909 = vsel %vm8880, %v8779, %v8908
  %v8910 = vsel %vm8868, %v8781, %v8780
  %v8911 = vsel %vm8870, %v8782, %v8910
  %v8912 = vsel %vm8872, %v8783, %v8911
  %v8913 = vsel %vm8874, %v8784, %v8912
  %v8914 = vsel %vm8876, %v8785, %v8913
  %v8915 = vsel %vm8878, %v8786, %v8914
  %v8916 = vsel %vm8880, %v8787, %v8915
  %v8917 = vsel %vm8868, %v8789, %v8788
  %v8918 = vsel %vm8870, %v8790, %v8917
  %v8919 = vsel %vm8872, %v8791, %v8918
  %v8920 = vsel %vm8874, %v8792, %v8919
  %v8921 = vsel %vm8876, %v8793, %v8920
  %v8922 = vsel %vm8878, %v8794, %v8921
  %v8923 = vsel %vm8880, %v8795, %v8922
  %v8924 = vsel %vm8868, %v8797, %v8796
  %v8925 = vsel %vm8870, %v8798, %v8924
  %v8926 = vsel %vm8872, %v8799, %v8925
  %v8927 = vsel %vm8874, %v8800, %v8926
  %v8928 = vsel %vm8876, %v8801, %v8927
  %v8929 = vsel %vm8878, %v8802, %v8928
  %v8930 = vsel %vm8880, %v8803, %v8929
  %v8931 = vsel %vm8868, %v8805, %v8804
  %v8932 = vsel %vm8870, %v8806, %v8931
  %v8933 = vsel %vm8872, %v8807, %v8932
  %v8934 = vsel %vm8874, %v8808, %v8933
  %v8935 = vsel %vm8876, %v8809, %v8934
  %v8936 = vsel %vm8878, %v8810, %v8935
  %v8937 = vsel %vm8880, %v8811, %v8936
  %v8938 = vsel %vm8868, %v8813, %v8812
  %v8939 = vsel %vm8870, %v8814, %v8938
  %v8940 = vsel %vm8872, %v8815, %v8939
  %v8941 = vsel %vm8874, %v8816, %v8940
  %v8942 = vsel %vm8876, %v8817, %v8941
  %v8943 = vsel %vm8878, %v8818, %v8942
  %v8944 = vsel %vm8880, %v8819, %v8943
  %v8945 = vsel %vm8868, %v8821, %v8820
  %v8946 = vsel %vm8870, %v8822, %v8945
  %v8947 = vsel %vm8872, %v8823, %v8946
  %v8948 = vsel %vm8874, %v8824, %v8947
  %v8949 = vsel %vm8876, %v8825, %v8948
  %v8950 = vsel %vm8878, %v8826, %v8949
  %v8951 = vsel %vm8880, %v8827, %v8950
  %v8952 = vsel %vm8868, %v8829, %v8828
  %v8953 = vsel %vm8870, %v8830, %v8952
  %v8954 = vsel %vm8872, %v8831, %v8953
  %v8955 = vsel %vm8874, %v8832, %v8954
  %v8956 = vsel %vm8876, %v8833, %v8955
  %v8957 = vsel %vm8878, %v8834, %v8956
  %v8958 = vsel %vm8880, %v8835, %v8957
  %v8959 = vsel %vm8868, %v8837, %v8836
  %v8960 = vsel %vm8870, %v8838, %v8959
  %v8961 = vsel %vm8872, %v8839, %v8960
  %v8962 = vsel %vm8874, %v8840, %v8961
  %v8963 = vsel %vm8876, %v8841, %v8962
  %v8964 = vsel %vm8878, %v8842, %v8963
  %v8965 = vsel %vm8880, %v8843, %v8964
  %v8966 = vsel %vm8868, %v8845, %v8844
  %v8967 = vsel %vm8870, %v8846, %v8966
  %v8968 = vsel %vm8872, %v8847, %v8967
  %v8969 = vsel %vm8874, %v8848, %v8968
  %v8970 = vsel %vm8876, %v8849, %v8969
  %v8971 = vsel %vm8878, %v8850, %v8970
  %v8972 = vsel %vm8880, %v8851, %v8971
  %v8973 = vsel %vm8868, %v8853, %v8852
  %v8974 = vsel %vm8870, %v8854, %v8973
  %v8975 = vsel %vm8872, %v8855, %v8974
  %v8976 = vsel %vm8874, %v8856, %v8975
  %v8977 = vsel %vm8876, %v8857, %v8976
  %v8978 = vsel %vm8878, %v8858, %v8977
  %v8979 = vsel %vm8880, %v8859, %v8978
  %v8980 = vsel %vm8868, %v8861, %v8860
  %v8981 = vsel %vm8870, %v8862, %v8980
  %v8982 = vsel %vm8872, %v8863, %v8981
  %v8983 = vsel %vm8874, %v8864, %v8982
  %v8984 = vsel %vm8876, %v8865, %v8983
  %v8985 = vsel %vm8878, %v8866, %v8984
  %v8986 = vsel %vm8880, %v8867, %v8985
  %vm9003 = vcmask 261120
  %v9004 = vsel %vm9003, %v8881, 0.0
  %9005 = vadd.xlane.f32.xlu0 %v9004
  %v9006 = vpop.xlane.xlu0 %9005
  %v9007 = vsel %vm9003, %v8888, 0.0
  %9008 = vadd.xlane.f32.xlu0 %v9007
  %v9009 = vpop.xlane.xlu0 %9008
  %v9010 = vsel %vm9003, %v8895, 0.0
  %9011 = vadd.xlane.f32.xlu0 %v9010
  %v9012 = vpop.xlane.xlu0 %9011
  %v9013 = vsel %vm9003, %v8902, 0.0
  %9014 = vadd.xlane.f32.xlu0 %v9013
  %v9015 = vpop.xlane.xlu0 %9014
  %v9016 = vsel %vm9003, %v8909, 0.0
  %9017 = vadd.xlane.f32.xlu0 %v9016
  %v9018 = vpop.xlane.xlu0 %9017
  %v9019 = vsel %vm9003, %v8916, 0.0
  %9020 = vadd.xlane.f32.xlu0 %v9019
  %v9021 = vpop.xlane.xlu0 %9020
  %v9022 = vsel %vm9003, %v8923, 0.0
  %9023 = vadd.xlane.f32.xlu0 %v9022
  %v9024 = vpop.xlane.xlu0 %9023
  %v9025 = vsel %vm9003, %v8930, 0.0
  %9026 = vadd.xlane.f32.xlu0 %v9025
  %v9027 = vpop.xlane.xlu0 %9026
  %v9028 = vsel %vm9003, %v8937, 0.0
  %9029 = vadd.xlane.f32.xlu0 %v9028
  %v9030 = vpop.xlane.xlu0 %9029
  %v9031 = vsel %vm9003, %v8944, 0.0
  %9032 = vadd.xlane.f32.xlu0 %v9031
  %v9033 = vpop.xlane.xlu0 %9032
  %v9034 = vsel %vm9003, %v8951, 0.0
  %9035 = vadd.xlane.f32.xlu0 %v9034
  %v9036 = vpop.xlane.xlu0 %9035
  %v9037 = vsel %vm9003, %v8958, 0.0
  %9038 = vadd.xlane.f32.xlu0 %v9037
  %v9039 = vpop.xlane.xlu0 %9038
  %v9040 = vsel %vm9003, %v8965, 0.0
  %9041 = vadd.xlane.f32.xlu0 %v9040
  %v9042 = vpop.xlane.xlu0 %9041
  %v9043 = vsel %vm9003, %v8972, 0.0
  %9044 = vadd.xlane.f32.xlu0 %v9043
  %v9045 = vpop.xlane.xlu0 %9044
  %v9046 = vsel %vm9003, %v8979, 0.0
  %9047 = vadd.xlane.f32.xlu0 %v9046
  %v9048 = vpop.xlane.xlu0 %9047
  %v9049 = vsel %vm9003, %v8986, 0.0
  %9050 = vadd.xlane.f32.xlu0 %v9049
  %v9051 = vpop.xlane.xlu0 %9050
  %v9052 = vrcp.pop 32.0
  %v9053 = vmul.f32 32.0, %v9052
  %v9054 = vsub.f32 1.0, %v9053
  %v9055 = vmul.f32 %v9052, %v9054
  %v9056 = vadd.f32 %v9052, %v9055
  %vm9057 = vweird.f32 %v9052
  %v9058 = vsel %vm9057, %v9052, %v9056
  %v9059 = vmul.f32 %v9006, %v9058
  %v9060 = vmul.f32 %v9009, %v9058
  %v9061 = vmul.f32 %v9012, %v9058
  %v9062 = vmul.f32 %v9015, %v9058
  %v9063 = vmul.f32 %v9018, %v9058
  %v9064 = vmul.f32 %v9021, %v9058
  %v9065 = vmul.f32 %v9024, %v9058
  %v9066 = vmul.f32 %v9027, %v9058
  %v9067 = vmul.f32 %v9030, %v9058
  %v9068 = vmul.f32 %v9033, %v9058
  %v9069 = vmul.f32 %v9036, %v9058
  %v9070 = vmul.f32 %v9039, %v9058
  %v9071 = vmul.f32 %v9042, %v9058
  %v9072 = vmul.f32 %v9045, %v9058
  %v9073 = vmul.f32 %v9048, %v9058
  %v9074 = vmul.f32 %v9051, %v9058
  %v9092 = vunpack.c.l.s4 269488144
  %v9093 = vunpack.c.0.s8 %v9092
  %v9094 = vperm.slane %v9059, %v9093
  %v9096 = vunpack.c.l.s4 842150450
  %v9097 = vunpack.c.0.s8 %v9096
  %v9098 = vperm.slane %v9059, %v9097
  %v9100 = vunpack.c.l.s4 1414812756
  %v9101 = vunpack.c.0.s8 %v9100
  %v9102 = vperm.slane %v9059, %v9101
  %v9104 = vunpack.c.l.s4 1987475062
  %v9105 = vunpack.c.0.s8 %v9104
  %v9106 = vperm.slane %v9059, %v9105
  %v9108 = vunpack.c.l.s4 269488144
  %v9109 = vunpack.c.0.s8 %v9108
  %v9110 = vperm.slane %v9060, %v9109
  %v9112 = vunpack.c.l.s4 842150450
  %v9113 = vunpack.c.0.s8 %v9112
  %v9114 = vperm.slane %v9060, %v9113
  %v9116 = vunpack.c.l.s4 1414812756
  %v9117 = vunpack.c.0.s8 %v9116
  %v9118 = vperm.slane %v9060, %v9117
  %v9120 = vunpack.c.l.s4 1987475062
  %v9121 = vunpack.c.0.s8 %v9120
  %v9122 = vperm.slane %v9060, %v9121
  %v9124 = vunpack.c.l.s4 269488144
  %v9125 = vunpack.c.0.s8 %v9124
  %v9126 = vperm.slane %v9061, %v9125
  %v9128 = vunpack.c.l.s4 842150450
  %v9129 = vunpack.c.0.s8 %v9128
  %v9130 = vperm.slane %v9061, %v9129
  %v9132 = vunpack.c.l.s4 1414812756
  %v9133 = vunpack.c.0.s8 %v9132
  %v9134 = vperm.slane %v9061, %v9133
  %v9136 = vunpack.c.l.s4 1987475062
  %v9137 = vunpack.c.0.s8 %v9136
  %v9138 = vperm.slane %v9061, %v9137
  %v9140 = vunpack.c.l.s4 269488144
  %v9141 = vunpack.c.0.s8 %v9140
  %v9142 = vperm.slane %v9062, %v9141
  %v9144 = vunpack.c.l.s4 842150450
  %v9145 = vunpack.c.0.s8 %v9144
  %v9146 = vperm.slane %v9062, %v9145
  %v9148 = vunpack.c.l.s4 1414812756
  %v9149 = vunpack.c.0.s8 %v9148
  %v9150 = vperm.slane %v9062, %v9149
  %v9152 = vunpack.c.l.s4 1987475062
  %v9153 = vunpack.c.0.s8 %v9152
  %v9154 = vperm.slane %v9062, %v9153
  %v9156 = vunpack.c.l.s4 269488144
  %v9157 = vunpack.c.0.s8 %v9156
  %v9158 = vperm.slane %v9063, %v9157
  %v9160 = vunpack.c.l.s4 842150450
  %v9161 = vunpack.c.0.s8 %v9160
  %v9162 = vperm.slane %v9063, %v9161
  %v9164 = vunpack.c.l.s4 1414812756
  %v9165 = vunpack.c.0.s8 %v9164
  %v9166 = vperm.slane %v9063, %v9165
  %v9168 = vunpack.c.l.s4 1987475062
  %v9169 = vunpack.c.0.s8 %v9168
  %v9170 = vperm.slane %v9063, %v9169
  %v9172 = vunpack.c.l.s4 269488144
  %v9173 = vunpack.c.0.s8 %v9172
  %v9174 = vperm.slane %v9064, %v9173
  %v9176 = vunpack.c.l.s4 842150450
  %v9177 = vunpack.c.0.s8 %v9176
  %v9178 = vperm.slane %v9064, %v9177
  %v9180 = vunpack.c.l.s4 1414812756
  %v9181 = vunpack.c.0.s8 %v9180
  %v9182 = vperm.slane %v9064, %v9181
  %v9184 = vunpack.c.l.s4 1987475062
  %v9185 = vunpack.c.0.s8 %v9184
  %v9186 = vperm.slane %v9064, %v9185
  %v9188 = vunpack.c.l.s4 269488144
  %v9189 = vunpack.c.0.s8 %v9188
  %v9190 = vperm.slane %v9065, %v9189
  %v9192 = vunpack.c.l.s4 842150450
  %v9193 = vunpack.c.0.s8 %v9192
  %v9194 = vperm.slane %v9065, %v9193
  %v9196 = vunpack.c.l.s4 1414812756
  %v9197 = vunpack.c.0.s8 %v9196
  %v9198 = vperm.slane %v9065, %v9197
  %v9200 = vunpack.c.l.s4 1987475062
  %v9201 = vunpack.c.0.s8 %v9200
  %v9202 = vperm.slane %v9065, %v9201
  %v9204 = vunpack.c.l.s4 269488144
  %v9205 = vunpack.c.0.s8 %v9204
  %v9206 = vperm.slane %v9066, %v9205
  %v9208 = vunpack.c.l.s4 842150450
  %v9209 = vunpack.c.0.s8 %v9208
  %v9210 = vperm.slane %v9066, %v9209
  %v9212 = vunpack.c.l.s4 1414812756
  %v9213 = vunpack.c.0.s8 %v9212
  %v9214 = vperm.slane %v9066, %v9213
  %v9216 = vunpack.c.l.s4 1987475062
  %v9217 = vunpack.c.0.s8 %v9216
  %v9218 = vperm.slane %v9066, %v9217
  %v9220 = vunpack.c.l.s4 269488144
  %v9221 = vunpack.c.0.s8 %v9220
  %v9222 = vperm.slane %v9067, %v9221
  %v9224 = vunpack.c.l.s4 842150450
  %v9225 = vunpack.c.0.s8 %v9224
  %v9226 = vperm.slane %v9067, %v9225
  %v9228 = vunpack.c.l.s4 1414812756
  %v9229 = vunpack.c.0.s8 %v9228
  %v9230 = vperm.slane %v9067, %v9229
  %v9232 = vunpack.c.l.s4 1987475062
  %v9233 = vunpack.c.0.s8 %v9232
  %v9234 = vperm.slane %v9067, %v9233
  %v9236 = vunpack.c.l.s4 269488144
  %v9237 = vunpack.c.0.s8 %v9236
  %v9238 = vperm.slane %v9068, %v9237
  %v9240 = vunpack.c.l.s4 842150450
  %v9241 = vunpack.c.0.s8 %v9240
  %v9242 = vperm.slane %v9068, %v9241
  %v9244 = vunpack.c.l.s4 1414812756
  %v9245 = vunpack.c.0.s8 %v9244
  %v9246 = vperm.slane %v9068, %v9245
  %v9248 = vunpack.c.l.s4 1987475062
  %v9249 = vunpack.c.0.s8 %v9248
  %v9250 = vperm.slane %v9068, %v9249
  %v9252 = vunpack.c.l.s4 269488144
  %v9253 = vunpack.c.0.s8 %v9252
  %v9254 = vperm.slane %v9069, %v9253
  %v9256 = vunpack.c.l.s4 842150450
  %v9257 = vunpack.c.0.s8 %v9256
  %v9258 = vperm.slane %v9069, %v9257
  %v9260 = vunpack.c.l.s4 1414812756
  %v9261 = vunpack.c.0.s8 %v9260
  %v9262 = vperm.slane %v9069, %v9261
  %v9264 = vunpack.c.l.s4 1987475062
  %v9265 = vunpack.c.0.s8 %v9264
  %v9266 = vperm.slane %v9069, %v9265
  %v9268 = vunpack.c.l.s4 269488144
  %v9269 = vunpack.c.0.s8 %v9268
  %v9270 = vperm.slane %v9070, %v9269
  %v9272 = vunpack.c.l.s4 842150450
  %v9273 = vunpack.c.0.s8 %v9272
  %v9274 = vperm.slane %v9070, %v9273
  %v9276 = vunpack.c.l.s4 1414812756
  %v9277 = vunpack.c.0.s8 %v9276
  %v9278 = vperm.slane %v9070, %v9277
  %v9280 = vunpack.c.l.s4 1987475062
  %v9281 = vunpack.c.0.s8 %v9280
  %v9282 = vperm.slane %v9070, %v9281
  %v9284 = vunpack.c.l.s4 269488144
  %v9285 = vunpack.c.0.s8 %v9284
  %v9286 = vperm.slane %v9071, %v9285
  %v9288 = vunpack.c.l.s4 842150450
  %v9289 = vunpack.c.0.s8 %v9288
  %v9290 = vperm.slane %v9071, %v9289
  %v9292 = vunpack.c.l.s4 1414812756
  %v9293 = vunpack.c.0.s8 %v9292
  %v9294 = vperm.slane %v9071, %v9293
  %v9296 = vunpack.c.l.s4 1987475062
  %v9297 = vunpack.c.0.s8 %v9296
  %v9298 = vperm.slane %v9071, %v9297
  %v9300 = vunpack.c.l.s4 269488144
  %v9301 = vunpack.c.0.s8 %v9300
  %v9302 = vperm.slane %v9072, %v9301
  %v9304 = vunpack.c.l.s4 842150450
  %v9305 = vunpack.c.0.s8 %v9304
  %v9306 = vperm.slane %v9072, %v9305
  %v9308 = vunpack.c.l.s4 1414812756
  %v9309 = vunpack.c.0.s8 %v9308
  %v9310 = vperm.slane %v9072, %v9309
  %v9312 = vunpack.c.l.s4 1987475062
  %v9313 = vunpack.c.0.s8 %v9312
  %v9314 = vperm.slane %v9072, %v9313
  %v9316 = vunpack.c.l.s4 269488144
  %v9317 = vunpack.c.0.s8 %v9316
  %v9318 = vperm.slane %v9073, %v9317
  %v9320 = vunpack.c.l.s4 842150450
  %v9321 = vunpack.c.0.s8 %v9320
  %v9322 = vperm.slane %v9073, %v9321
  %v9324 = vunpack.c.l.s4 1414812756
  %v9325 = vunpack.c.0.s8 %v9324
  %v9326 = vperm.slane %v9073, %v9325
  %v9328 = vunpack.c.l.s4 1987475062
  %v9329 = vunpack.c.0.s8 %v9328
  %v9330 = vperm.slane %v9073, %v9329
  %v9332 = vunpack.c.l.s4 269488144
  %v9333 = vunpack.c.0.s8 %v9332
  %v9334 = vperm.slane %v9074, %v9333
  %v9336 = vunpack.c.l.s4 842150450
  %v9337 = vunpack.c.0.s8 %v9336
  %v9338 = vperm.slane %v9074, %v9337
  %v9340 = vunpack.c.l.s4 1414812756
  %v9341 = vunpack.c.0.s8 %v9340
  %v9342 = vperm.slane %v9074, %v9341
  %v9344 = vunpack.c.l.s4 1987475062
  %v9345 = vunpack.c.0.s8 %v9344
  %v9346 = vperm.slane %v9074, %v9345
  %v9347 = vrot.slane %v9094, 1
  %v9348 = vrot.slane %v9098, 1
  %v9349 = vrot.slane %v9102, 1
  %v9350 = vrot.slane %v9106, 1
  %v9351 = vrot.slane %v9110, 1
  %v9352 = vrot.slane %v9114, 1
  %v9353 = vrot.slane %v9118, 1
  %v9354 = vrot.slane %v9122, 1
  %v9355 = vrot.slane %v9126, 1
  %v9356 = vrot.slane %v9130, 1
  %v9357 = vrot.slane %v9134, 1
  %v9358 = vrot.slane %v9138, 1
  %v9359 = vrot.slane %v9142, 1
  %v9360 = vrot.slane %v9146, 1
  %v9361 = vrot.slane %v9150, 1
  %v9362 = vrot.slane %v9154, 1
  %v9363 = vrot.slane %v9158, 1
  %v9364 = vrot.slane %v9162, 1
  %v9365 = vrot.slane %v9166, 1
  %v9366 = vrot.slane %v9170, 1
  %v9367 = vrot.slane %v9174, 1
  %v9368 = vrot.slane %v9178, 1
  %v9369 = vrot.slane %v9182, 1
  %v9370 = vrot.slane %v9186, 1
  %v9371 = vrot.slane %v9190, 1
  %v9372 = vrot.slane %v9194, 1
  %v9373 = vrot.slane %v9198, 1
  %v9374 = vrot.slane %v9202, 1
  %v9375 = vrot.slane %v9206, 1
  %v9376 = vrot.slane %v9210, 1
  %v9377 = vrot.slane %v9214, 1
  %v9378 = vrot.slane %v9218, 1
  %v9379 = vrot.slane %v9222, 1
  %v9380 = vrot.slane %v9226, 1
  %v9381 = vrot.slane %v9230, 1
  %v9382 = vrot.slane %v9234, 1
  %v9383 = vrot.slane %v9238, 1
  %v9384 = vrot.slane %v9242, 1
  %v9385 = vrot.slane %v9246, 1
  %v9386 = vrot.slane %v9250, 1
  %v9387 = vrot.slane %v9254, 1
  %v9388 = vrot.slane %v9258, 1
  %v9389 = vrot.slane %v9262, 1
  %v9390 = vrot.slane %v9266, 1
  %v9391 = vrot.slane %v9270, 1
  %v9392 = vrot.slane %v9274, 1
  %v9393 = vrot.slane %v9278, 1
  %v9394 = vrot.slane %v9282, 1
  %v9395 = vrot.slane %v9286, 1
  %v9396 = vrot.slane %v9290, 1
  %v9397 = vrot.slane %v9294, 1
  %v9398 = vrot.slane %v9298, 1
  %v9399 = vrot.slane %v9302, 1
  %v9400 = vrot.slane %v9306, 1
  %v9401 = vrot.slane %v9310, 1
  %v9402 = vrot.slane %v9314, 1
  %v9403 = vrot.slane %v9318, 1
  %v9404 = vrot.slane %v9322, 1
  %v9405 = vrot.slane %v9326, 1
  %v9406 = vrot.slane %v9330, 1
  %v9407 = vrot.slane %v9334, 1
  %v9408 = vrot.slane %v9338, 1
  %v9409 = vrot.slane %v9342, 1
  %v9410 = vrot.slane %v9346, 1
  %v9539 = vsub.f32 %v8482, %v9094
  %v9540 = vsub.f32 %v8483, %v9347
  %v9541 = vsub.f32 %v8484, %v9098
  %v9542 = vsub.f32 %v8485, %v9348
  %v9543 = vsub.f32 %v8486, %v9102
  %v9544 = vsub.f32 %v8487, %v9349
  %v9545 = vsub.f32 %v8488, %v9106
  %v9546 = vsub.f32 %v8489, %v9350
  %v9547 = vsub.f32 %v8490, %v9110
  %v9548 = vsub.f32 %v8491, %v9351
  %v9549 = vsub.f32 %v8492, %v9114
  %v9550 = vsub.f32 %v8493, %v9352
  %v9551 = vsub.f32 %v8494, %v9118
  %v9552 = vsub.f32 %v8495, %v9353
  %v9553 = vsub.f32 %v8496, %v9122
  %v9554 = vsub.f32 %v8497, %v9354
  %v9555 = vsub.f32 %v8498, %v9126
  %v9556 = vsub.f32 %v8499, %v9355
  %v9557 = vsub.f32 %v8500, %v9130
  %v9558 = vsub.f32 %v8501, %v9356
  %v9559 = vsub.f32 %v8502, %v9134
  %v9560 = vsub.f32 %v8503, %v9357
  %v9561 = vsub.f32 %v8504, %v9138
  %v9562 = vsub.f32 %v8505, %v9358
  %v9563 = vsub.f32 %v8506, %v9142
  %v9564 = vsub.f32 %v8507, %v9359
  %v9565 = vsub.f32 %v8508, %v9146
  %v9566 = vsub.f32 %v8509, %v9360
  %v9567 = vsub.f32 %v8510, %v9150
  %v9568 = vsub.f32 %v8511, %v9361
  %v9569 = vsub.f32 %v8512, %v9154
  %v9570 = vsub.f32 %v8513, %v9362
  %v9571 = vsub.f32 %v8514, %v9158
  %v9572 = vsub.f32 %v8515, %v9363
  %v9573 = vsub.f32 %v8516, %v9162
  %v9574 = vsub.f32 %v8517, %v9364
  %v9575 = vsub.f32 %v8518, %v9166
  %v9576 = vsub.f32 %v8519, %v9365
  %v9577 = vsub.f32 %v8520, %v9170
  %v9578 = vsub.f32 %v8521, %v9366
  %v9579 = vsub.f32 %v8522, %v9174
  %v9580 = vsub.f32 %v8523, %v9367
  %v9581 = vsub.f32 %v8524, %v9178
  %v9582 = vsub.f32 %v8525, %v9368
  %v9583 = vsub.f32 %v8526, %v9182
  %v9584 = vsub.f32 %v8527, %v9369
  %v9585 = vsub.f32 %v8528, %v9186
  %v9586 = vsub.f32 %v8529, %v9370
  %v9587 = vsub.f32 %v8530, %v9190
  %v9588 = vsub.f32 %v8531, %v9371
  %v9589 = vsub.f32 %v8532, %v9194
  %v9590 = vsub.f32 %v8533, %v9372
  %v9591 = vsub.f32 %v8534, %v9198
  %v9592 = vsub.f32 %v8535, %v9373
  %v9593 = vsub.f32 %v8536, %v9202
  %v9594 = vsub.f32 %v8537, %v9374
  %v9595 = vsub.f32 %v8538, %v9206
  %v9596 = vsub.f32 %v8539, %v9375
  %v9597 = vsub.f32 %v8540, %v9210
  %v9598 = vsub.f32 %v8541, %v9376
  %v9599 = vsub.f32 %v8542, %v9214
  %v9600 = vsub.f32 %v8543, %v9377
  %v9601 = vsub.f32 %v8544, %v9218
  %v9602 = vsub.f32 %v8545, %v9378
  %v9603 = vsub.f32 %v8546, %v9222
  %v9604 = vsub.f32 %v8547, %v9379
  %v9605 = vsub.f32 %v8548, %v9226
  %v9606 = vsub.f32 %v8549, %v9380
  %v9607 = vsub.f32 %v8550, %v9230
  %v9608 = vsub.f32 %v8551, %v9381
  %v9609 = vsub.f32 %v8552, %v9234
  %v9610 = vsub.f32 %v8553, %v9382
  %v9611 = vsub.f32 %v8554, %v9238
  %v9612 = vsub.f32 %v8555, %v9383
  %v9613 = vsub.f32 %v8556, %v9242
  %v9614 = vsub.f32 %v8557, %v9384
  %v9615 = vsub.f32 %v8558, %v9246
  %v9616 = vsub.f32 %v8559, %v9385
  %v9617 = vsub.f32 %v8560, %v9250
  %v9618 = vsub.f32 %v8561, %v9386
  %v9619 = vsub.f32 %v8562, %v9254
  %v9620 = vsub.f32 %v8563, %v9387
  %v9621 = vsub.f32 %v8564, %v9258
  %v9622 = vsub.f32 %v8565, %v9388
  %v9623 = vsub.f32 %v8566, %v9262
  %v9624 = vsub.f32 %v8567, %v9389
  %v9625 = vsub.f32 %v8568, %v9266
  %v9626 = vsub.f32 %v8569, %v9390
  %v9627 = vsub.f32 %v8570, %v9270
  %v9628 = vsub.f32 %v8571, %v9391
  %v9629 = vsub.f32 %v8572, %v9274
  %v9630 = vsub.f32 %v8573, %v9392
  %v9631 = vsub.f32 %v8574, %v9278
  %v9632 = vsub.f32 %v8575, %v9393
  %v9633 = vsub.f32 %v8576, %v9282
  %v9634 = vsub.f32 %v8577, %v9394
  %v9635 = vsub.f32 %v8578, %v9286
  %v9636 = vsub.f32 %v8579, %v9395
  %v9637 = vsub.f32 %v8580, %v9290
  %v9638 = vsub.f32 %v8581, %v9396
  %v9639 = vsub.f32 %v8582, %v9294
  %v9640 = vsub.f32 %v8583, %v9397
  %v9641 = vsub.f32 %v8584, %v9298
  %v9642 = vsub.f32 %v8585, %v9398
  %v9643 = vsub.f32 %v8586, %v9302
  %v9644 = vsub.f32 %v8587, %v9399
  %v9645 = vsub.f32 %v8588, %v9306
  %v9646 = vsub.f32 %v8589, %v9400
  %v9647 = vsub.f32 %v8590, %v9310
  %v9648 = vsub.f32 %v8591, %v9401
  %v9649 = vsub.f32 %v8592, %v9314
  %v9650 = vsub.f32 %v8593, %v9402
  %v9651 = vsub.f32 %v8594, %v9318
  %v9652 = vsub.f32 %v8595, %v9403
  %v9653 = vsub.f32 %v8596, %v9322
  %v9654 = vsub.f32 %v8597, %v9404
  %v9655 = vsub.f32 %v8598, %v9326
  %v9656 = vsub.f32 %v8599, %v9405
  %v9657 = vsub.f32 %v8600, %v9330
  %v9658 = vsub.f32 %v8601, %v9406
  %v9659 = vsub.f32 %v8602, %v9334
  %v9660 = vsub.f32 %v8603, %v9407
  %v9661 = vsub.f32 %v8604, %v9338
  %v9662 = vsub.f32 %v8605, %v9408
  %v9663 = vsub.f32 %v8606, %v9342
  %v9664 = vsub.f32 %v8607, %v9409
  %v9665 = vsub.f32 %v8608, %v9346
  %v9666 = vsub.f32 %v8609, %v9410
  %v9667 = vmul.f32 %v9539, %v9539
  %v9668 = vmul.f32 %v9540, %v9540
  %v9669 = vmul.f32 %v9541, %v9541
  %v9670 = vmul.f32 %v9542, %v9542
  %v9671 = vmul.f32 %v9543, %v9543
  %v9672 = vmul.f32 %v9544, %v9544
  %v9673 = vmul.f32 %v9545, %v9545
  %v9674 = vmul.f32 %v9546, %v9546
  %v9675 = vmul.f32 %v9547, %v9547
  %v9676 = vmul.f32 %v9548, %v9548
  %v9677 = vmul.f32 %v9549, %v9549
  %v9678 = vmul.f32 %v9550, %v9550
  %v9679 = vmul.f32 %v9551, %v9551
  %v9680 = vmul.f32 %v9552, %v9552
  %v9681 = vmul.f32 %v9553, %v9553
  %v9682 = vmul.f32 %v9554, %v9554
  %v9683 = vmul.f32 %v9555, %v9555
  %v9684 = vmul.f32 %v9556, %v9556
  %v9685 = vmul.f32 %v9557, %v9557
  %v9686 = vmul.f32 %v9558, %v9558
  %v9687 = vmul.f32 %v9559, %v9559
  %v9688 = vmul.f32 %v9560, %v9560
  %v9689 = vmul.f32 %v9561, %v9561
  %v9690 = vmul.f32 %v9562, %v9562
  %v9691 = vmul.f32 %v9563, %v9563
  %v9692 = vmul.f32 %v9564, %v9564
  %v9693 = vmul.f32 %v9565, %v9565
  %v9694 = vmul.f32 %v9566, %v9566
  %v9695 = vmul.f32 %v9567, %v9567
  %v9696 = vmul.f32 %v9568, %v9568
  %v9697 = vmul.f32 %v9569, %v9569
  %v9698 = vmul.f32 %v9570, %v9570
  %v9699 = vmul.f32 %v9571, %v9571
  %v9700 = vmul.f32 %v9572, %v9572
  %v9701 = vmul.f32 %v9573, %v9573
  %v9702 = vmul.f32 %v9574, %v9574
  %v9703 = vmul.f32 %v9575, %v9575
  %v9704 = vmul.f32 %v9576, %v9576
  %v9705 = vmul.f32 %v9577, %v9577
  %v9706 = vmul.f32 %v9578, %v9578
  %v9707 = vmul.f32 %v9579, %v9579
  %v9708 = vmul.f32 %v9580, %v9580
  %v9709 = vmul.f32 %v9581, %v9581
  %v9710 = vmul.f32 %v9582, %v9582
  %v9711 = vmul.f32 %v9583, %v9583
  %v9712 = vmul.f32 %v9584, %v9584
  %v9713 = vmul.f32 %v9585, %v9585
  %v9714 = vmul.f32 %v9586, %v9586
  %v9715 = vmul.f32 %v9587, %v9587
  %v9716 = vmul.f32 %v9588, %v9588
  %v9717 = vmul.f32 %v9589, %v9589
  %v9718 = vmul.f32 %v9590, %v9590
  %v9719 = vmul.f32 %v9591, %v9591
  %v9720 = vmul.f32 %v9592, %v9592
  %v9721 = vmul.f32 %v9593, %v9593
  %v9722 = vmul.f32 %v9594, %v9594
  %v9723 = vmul.f32 %v9595, %v9595
  %v9724 = vmul.f32 %v9596, %v9596
  %v9725 = vmul.f32 %v9597, %v9597
  %v9726 = vmul.f32 %v9598, %v9598
  %v9727 = vmul.f32 %v9599, %v9599
  %v9728 = vmul.f32 %v9600, %v9600
  %v9729 = vmul.f32 %v9601, %v9601
  %v9730 = vmul.f32 %v9602, %v9602
  %v9731 = vmul.f32 %v9603, %v9603
  %v9732 = vmul.f32 %v9604, %v9604
  %v9733 = vmul.f32 %v9605, %v9605
  %v9734 = vmul.f32 %v9606, %v9606
  %v9735 = vmul.f32 %v9607, %v9607
  %v9736 = vmul.f32 %v9608, %v9608
  %v9737 = vmul.f32 %v9609, %v9609
  %v9738 = vmul.f32 %v9610, %v9610
  %v9739 = vmul.f32 %v9611, %v9611
  %v9740 = vmul.f32 %v9612, %v9612
  %v9741 = vmul.f32 %v9613, %v9613
  %v9742 = vmul.f32 %v9614, %v9614
  %v9743 = vmul.f32 %v9615, %v9615
  %v9744 = vmul.f32 %v9616, %v9616
  %v9745 = vmul.f32 %v9617, %v9617
  %v9746 = vmul.f32 %v9618, %v9618
  %v9747 = vmul.f32 %v9619, %v9619
  %v9748 = vmul.f32 %v9620, %v9620
  %v9749 = vmul.f32 %v9621, %v9621
  %v9750 = vmul.f32 %v9622, %v9622
  %v9751 = vmul.f32 %v9623, %v9623
  %v9752 = vmul.f32 %v9624, %v9624
  %v9753 = vmul.f32 %v9625, %v9625
  %v9754 = vmul.f32 %v9626, %v9626
  %v9755 = vmul.f32 %v9627, %v9627
  %v9756 = vmul.f32 %v9628, %v9628
  %v9757 = vmul.f32 %v9629, %v9629
  %v9758 = vmul.f32 %v9630, %v9630
  %v9759 = vmul.f32 %v9631, %v9631
  %v9760 = vmul.f32 %v9632, %v9632
  %v9761 = vmul.f32 %v9633, %v9633
  %v9762 = vmul.f32 %v9634, %v9634
  %v9763 = vmul.f32 %v9635, %v9635
  %v9764 = vmul.f32 %v9636, %v9636
  %v9765 = vmul.f32 %v9637, %v9637
  %v9766 = vmul.f32 %v9638, %v9638
  %v9767 = vmul.f32 %v9639, %v9639
  %v9768 = vmul.f32 %v9640, %v9640
  %v9769 = vmul.f32 %v9641, %v9641
  %v9770 = vmul.f32 %v9642, %v9642
  %v9771 = vmul.f32 %v9643, %v9643
  %v9772 = vmul.f32 %v9644, %v9644
  %v9773 = vmul.f32 %v9645, %v9645
  %v9774 = vmul.f32 %v9646, %v9646
  %v9775 = vmul.f32 %v9647, %v9647
  %v9776 = vmul.f32 %v9648, %v9648
  %v9777 = vmul.f32 %v9649, %v9649
  %v9778 = vmul.f32 %v9650, %v9650
  %v9779 = vmul.f32 %v9651, %v9651
  %v9780 = vmul.f32 %v9652, %v9652
  %v9781 = vmul.f32 %v9653, %v9653
  %v9782 = vmul.f32 %v9654, %v9654
  %v9783 = vmul.f32 %v9655, %v9655
  %v9784 = vmul.f32 %v9656, %v9656
  %v9785 = vmul.f32 %v9657, %v9657
  %v9786 = vmul.f32 %v9658, %v9658
  %v9787 = vmul.f32 %v9659, %v9659
  %v9788 = vmul.f32 %v9660, %v9660
  %v9789 = vmul.f32 %v9661, %v9661
  %v9790 = vmul.f32 %v9662, %v9662
  %v9791 = vmul.f32 %v9663, %v9663
  %v9792 = vmul.f32 %v9664, %v9664
  %v9793 = vmul.f32 %v9665, %v9665
  %v9794 = vmul.f32 %v9666, %v9666
  %v9923 = vperm.slane %v9667, 0
  %v9924 = vperm.slane %v9668, 0
  %v9925 = vperm.slane %v9669, 0
  %v9926 = vperm.slane %v9670, 0
  %v9927 = vperm.slane %v9671, 0
  %v9928 = vperm.slane %v9672, 0
  %v9929 = vperm.slane %v9673, 0
  %v9930 = vperm.slane %v9674, 0
  %v9931 = vperm.slane %v9675, 0
  %v9932 = vperm.slane %v9676, 0
  %v9933 = vperm.slane %v9677, 0
  %v9934 = vperm.slane %v9678, 0
  %v9935 = vperm.slane %v9679, 0
  %v9936 = vperm.slane %v9680, 0
  %v9937 = vperm.slane %v9681, 0
  %v9938 = vperm.slane %v9682, 0
  %v9939 = vperm.slane %v9683, 0
  %v9940 = vperm.slane %v9684, 0
  %v9941 = vperm.slane %v9685, 0
  %v9942 = vperm.slane %v9686, 0
  %v9943 = vperm.slane %v9687, 0
  %v9944 = vperm.slane %v9688, 0
  %v9945 = vperm.slane %v9689, 0
  %v9946 = vperm.slane %v9690, 0
  %v9947 = vperm.slane %v9691, 0
  %v9948 = vperm.slane %v9692, 0
  %v9949 = vperm.slane %v9693, 0
  %v9950 = vperm.slane %v9694, 0
  %v9951 = vperm.slane %v9695, 0
  %v9952 = vperm.slane %v9696, 0
  %v9953 = vperm.slane %v9697, 0
  %v9954 = vperm.slane %v9698, 0
  %v9955 = vperm.slane %v9699, 0
  %v9956 = vperm.slane %v9700, 0
  %v9957 = vperm.slane %v9701, 0
  %v9958 = vperm.slane %v9702, 0
  %v9959 = vperm.slane %v9703, 0
  %v9960 = vperm.slane %v9704, 0
  %v9961 = vperm.slane %v9705, 0
  %v9962 = vperm.slane %v9706, 0
  %v9963 = vperm.slane %v9707, 0
  %v9964 = vperm.slane %v9708, 0
  %v9965 = vperm.slane %v9709, 0
  %v9966 = vperm.slane %v9710, 0
  %v9967 = vperm.slane %v9711, 0
  %v9968 = vperm.slane %v9712, 0
  %v9969 = vperm.slane %v9713, 0
  %v9970 = vperm.slane %v9714, 0
  %v9971 = vperm.slane %v9715, 0
  %v9972 = vperm.slane %v9716, 0
  %v9973 = vperm.slane %v9717, 0
  %v9974 = vperm.slane %v9718, 0
  %v9975 = vperm.slane %v9719, 0
  %v9976 = vperm.slane %v9720, 0
  %v9977 = vperm.slane %v9721, 0
  %v9978 = vperm.slane %v9722, 0
  %v9979 = vperm.slane %v9723, 0
  %v9980 = vperm.slane %v9724, 0
  %v9981 = vperm.slane %v9725, 0
  %v9982 = vperm.slane %v9726, 0
  %v9983 = vperm.slane %v9727, 0
  %v9984 = vperm.slane %v9728, 0
  %v9985 = vperm.slane %v9729, 0
  %v9986 = vperm.slane %v9730, 0
  %v9987 = vperm.slane %v9731, 0
  %v9988 = vperm.slane %v9732, 0
  %v9989 = vperm.slane %v9733, 0
  %v9990 = vperm.slane %v9734, 0
  %v9991 = vperm.slane %v9735, 0
  %v9992 = vperm.slane %v9736, 0
  %v9993 = vperm.slane %v9737, 0
  %v9994 = vperm.slane %v9738, 0
  %v9995 = vperm.slane %v9739, 0
  %v9996 = vperm.slane %v9740, 0
  %v9997 = vperm.slane %v9741, 0
  %v9998 = vperm.slane %v9742, 0
  %v9999 = vperm.slane %v9743, 0
  %v10000 = vperm.slane %v9744, 0
  %v10001 = vperm.slane %v9745, 0
  %v10002 = vperm.slane %v9746, 0
  %v10003 = vperm.slane %v9747, 0
  %v10004 = vperm.slane %v9748, 0
  %v10005 = vperm.slane %v9749, 0
  %v10006 = vperm.slane %v9750, 0
  %v10007 = vperm.slane %v9751, 0
  %v10008 = vperm.slane %v9752, 0
  %v10009 = vperm.slane %v9753, 0
  %v10010 = vperm.slane %v9754, 0
  %v10011 = vperm.slane %v9755, 0
  %v10012 = vperm.slane %v9756, 0
  %v10013 = vperm.slane %v9757, 0
  %v10014 = vperm.slane %v9758, 0
  %v10015 = vperm.slane %v9759, 0
  %v10016 = vperm.slane %v9760, 0
  %v10017 = vperm.slane %v9761, 0
  %v10018 = vperm.slane %v9762, 0
  %v10019 = vperm.slane %v9763, 0
  %v10020 = vperm.slane %v9764, 0
  %v10021 = vperm.slane %v9765, 0
  %v10022 = vperm.slane %v9766, 0
  %v10023 = vperm.slane %v9767, 0
  %v10024 = vperm.slane %v9768, 0
  %v10025 = vperm.slane %v9769, 0
  %v10026 = vperm.slane %v9770, 0
  %v10027 = vperm.slane %v9771, 0
  %v10028 = vperm.slane %v9772, 0
  %v10029 = vperm.slane %v9773, 0
  %v10030 = vperm.slane %v9774, 0
  %v10031 = vperm.slane %v9775, 0
  %v10032 = vperm.slane %v9776, 0
  %v10033 = vperm.slane %v9777, 0
  %v10034 = vperm.slane %v9778, 0
  %v10035 = vperm.slane %v9779, 0
  %v10036 = vperm.slane %v9780, 0
  %v10037 = vperm.slane %v9781, 0
  %v10038 = vperm.slane %v9782, 0
  %v10039 = vperm.slane %v9783, 0
  %v10040 = vperm.slane %v9784, 0
  %v10041 = vperm.slane %v9785, 0
  %v10042 = vperm.slane %v9786, 0
  %v10043 = vperm.slane %v9787, 0
  %v10044 = vperm.slane %v9788, 0
  %v10045 = vperm.slane %v9789, 0
  %v10046 = vperm.slane %v9790, 0
  %v10047 = vperm.slane %v9791, 0
  %v10048 = vperm.slane %v9792, 0
  %v10049 = vperm.slane %v9793, 0
  %v10050 = vperm.slane %v9794, 0
  %v10051 = vsel %vm8868, %v9924, %v9923
  %v10052 = vsel %vm8870, %v9925, %v10051
  %v10053 = vsel %vm8872, %v9926, %v10052
  %v10054 = vsel %vm8874, %v9927, %v10053
  %v10055 = vsel %vm8876, %v9928, %v10054
  %v10056 = vsel %vm8878, %v9929, %v10055
  %v10057 = vsel %vm8880, %v9930, %v10056
  %v10058 = vsel %vm8868, %v9932, %v9931
  %v10059 = vsel %vm8870, %v9933, %v10058
  %v10060 = vsel %vm8872, %v9934, %v10059
  %v10061 = vsel %vm8874, %v9935, %v10060
  %v10062 = vsel %vm8876, %v9936, %v10061
  %v10063 = vsel %vm8878, %v9937, %v10062
  %v10064 = vsel %vm8880, %v9938, %v10063
  %v10065 = vsel %vm8868, %v9940, %v9939
  %v10066 = vsel %vm8870, %v9941, %v10065
  %v10067 = vsel %vm8872, %v9942, %v10066
  %v10068 = vsel %vm8874, %v9943, %v10067
  %v10069 = vsel %vm8876, %v9944, %v10068
  %v10070 = vsel %vm8878, %v9945, %v10069
  %v10071 = vsel %vm8880, %v9946, %v10070
  %v10072 = vsel %vm8868, %v9948, %v9947
  %v10073 = vsel %vm8870, %v9949, %v10072
  %v10074 = vsel %vm8872, %v9950, %v10073
  %v10075 = vsel %vm8874, %v9951, %v10074
  %v10076 = vsel %vm8876, %v9952, %v10075
  %v10077 = vsel %vm8878, %v9953, %v10076
  %v10078 = vsel %vm8880, %v9954, %v10077
  %v10079 = vsel %vm8868, %v9956, %v9955
  %v10080 = vsel %vm8870, %v9957, %v10079
  %v10081 = vsel %vm8872, %v9958, %v10080
  %v10082 = vsel %vm8874, %v9959, %v10081
  %v10083 = vsel %vm8876, %v9960, %v10082
  %v10084 = vsel %vm8878, %v9961, %v10083
  %v10085 = vsel %vm8880, %v9962, %v10084
  %v10086 = vsel %vm8868, %v9964, %v9963
  %v10087 = vsel %vm8870, %v9965, %v10086
  %v10088 = vsel %vm8872, %v9966, %v10087
  %v10089 = vsel %vm8874, %v9967, %v10088
  %v10090 = vsel %vm8876, %v9968, %v10089
  %v10091 = vsel %vm8878, %v9969, %v10090
  %v10092 = vsel %vm8880, %v9970, %v10091
  %v10093 = vsel %vm8868, %v9972, %v9971
  %v10094 = vsel %vm8870, %v9973, %v10093
  %v10095 = vsel %vm8872, %v9974, %v10094
  %v10096 = vsel %vm8874, %v9975, %v10095
  %v10097 = vsel %vm8876, %v9976, %v10096
  %v10098 = vsel %vm8878, %v9977, %v10097
  %v10099 = vsel %vm8880, %v9978, %v10098
  %v10100 = vsel %vm8868, %v9980, %v9979
  %v10101 = vsel %vm8870, %v9981, %v10100
  %v10102 = vsel %vm8872, %v9982, %v10101
  %v10103 = vsel %vm8874, %v9983, %v10102
  %v10104 = vsel %vm8876, %v9984, %v10103
  %v10105 = vsel %vm8878, %v9985, %v10104
  %v10106 = vsel %vm8880, %v9986, %v10105
  %v10107 = vsel %vm8868, %v9988, %v9987
  %v10108 = vsel %vm8870, %v9989, %v10107
  %v10109 = vsel %vm8872, %v9990, %v10108
  %v10110 = vsel %vm8874, %v9991, %v10109
  %v10111 = vsel %vm8876, %v9992, %v10110
  %v10112 = vsel %vm8878, %v9993, %v10111
  %v10113 = vsel %vm8880, %v9994, %v10112
  %v10114 = vsel %vm8868, %v9996, %v9995
  %v10115 = vsel %vm8870, %v9997, %v10114
  %v10116 = vsel %vm8872, %v9998, %v10115
  %v10117 = vsel %vm8874, %v9999, %v10116
  %v10118 = vsel %vm8876, %v10000, %v10117
  %v10119 = vsel %vm8878, %v10001, %v10118
  %v10120 = vsel %vm8880, %v10002, %v10119
  %v10121 = vsel %vm8868, %v10004, %v10003
  %v10122 = vsel %vm8870, %v10005, %v10121
  %v10123 = vsel %vm8872, %v10006, %v10122
  %v10124 = vsel %vm8874, %v10007, %v10123
  %v10125 = vsel %vm8876, %v10008, %v10124
  %v10126 = vsel %vm8878, %v10009, %v10125
  %v10127 = vsel %vm8880, %v10010, %v10126
  %v10128 = vsel %vm8868, %v10012, %v10011
  %v10129 = vsel %vm8870, %v10013, %v10128
  %v10130 = vsel %vm8872, %v10014, %v10129
  %v10131 = vsel %vm8874, %v10015, %v10130
  %v10132 = vsel %vm8876, %v10016, %v10131
  %v10133 = vsel %vm8878, %v10017, %v10132
  %v10134 = vsel %vm8880, %v10018, %v10133
  %v10135 = vsel %vm8868, %v10020, %v10019
  %v10136 = vsel %vm8870, %v10021, %v10135
  %v10137 = vsel %vm8872, %v10022, %v10136
  %v10138 = vsel %vm8874, %v10023, %v10137
  %v10139 = vsel %vm8876, %v10024, %v10138
  %v10140 = vsel %vm8878, %v10025, %v10139
  %v10141 = vsel %vm8880, %v10026, %v10140
  %v10142 = vsel %vm8868, %v10028, %v10027
  %v10143 = vsel %vm8870, %v10029, %v10142
  %v10144 = vsel %vm8872, %v10030, %v10143
  %v10145 = vsel %vm8874, %v10031, %v10144
  %v10146 = vsel %vm8876, %v10032, %v10145
  %v10147 = vsel %vm8878, %v10033, %v10146
  %v10148 = vsel %vm8880, %v10034, %v10147
  %v10149 = vsel %vm8868, %v10036, %v10035
  %v10150 = vsel %vm8870, %v10037, %v10149
  %v10151 = vsel %vm8872, %v10038, %v10150
  %v10152 = vsel %vm8874, %v10039, %v10151
  %v10153 = vsel %vm8876, %v10040, %v10152
  %v10154 = vsel %vm8878, %v10041, %v10153
  %v10155 = vsel %vm8880, %v10042, %v10154
  %v10156 = vsel %vm8868, %v10044, %v10043
  %v10157 = vsel %vm8870, %v10045, %v10156
  %v10158 = vsel %vm8872, %v10046, %v10157
  %v10159 = vsel %vm8874, %v10047, %v10158
  %v10160 = vsel %vm8876, %v10048, %v10159
  %v10161 = vsel %vm8878, %v10049, %v10160
  %v10162 = vsel %vm8880, %v10050, %v10161
  %v10179 = vsel %vm9003, %v10057, 0.0
  %10180 = vadd.xlane.f32.xlu0 %v10179
  %v10181 = vpop.xlane.xlu0 %10180
  %v10182 = vsel %vm9003, %v10064, 0.0
  %10183 = vadd.xlane.f32.xlu0 %v10182
  %v10184 = vpop.xlane.xlu0 %10183
  %v10185 = vsel %vm9003, %v10071, 0.0
  %10186 = vadd.xlane.f32.xlu0 %v10185
  %v10187 = vpop.xlane.xlu0 %10186
  %v10188 = vsel %vm9003, %v10078, 0.0
  %10189 = vadd.xlane.f32.xlu0 %v10188
  %v10190 = vpop.xlane.xlu0 %10189
  %v10191 = vsel %vm9003, %v10085, 0.0
  %10192 = vadd.xlane.f32.xlu0 %v10191
  %v10193 = vpop.xlane.xlu0 %10192
  %v10194 = vsel %vm9003, %v10092, 0.0
  %10195 = vadd.xlane.f32.xlu0 %v10194
  %v10196 = vpop.xlane.xlu0 %10195
  %v10197 = vsel %vm9003, %v10099, 0.0
  %10198 = vadd.xlane.f32.xlu0 %v10197
  %v10199 = vpop.xlane.xlu0 %10198
  %v10200 = vsel %vm9003, %v10106, 0.0
  %10201 = vadd.xlane.f32.xlu0 %v10200
  %v10202 = vpop.xlane.xlu0 %10201
  %v10203 = vsel %vm9003, %v10113, 0.0
  %10204 = vadd.xlane.f32.xlu0 %v10203
  %v10205 = vpop.xlane.xlu0 %10204
  %v10206 = vsel %vm9003, %v10120, 0.0
  %10207 = vadd.xlane.f32.xlu0 %v10206
  %v10208 = vpop.xlane.xlu0 %10207
  %v10209 = vsel %vm9003, %v10127, 0.0
  %10210 = vadd.xlane.f32.xlu0 %v10209
  %v10211 = vpop.xlane.xlu0 %10210
  %v10212 = vsel %vm9003, %v10134, 0.0
  %10213 = vadd.xlane.f32.xlu0 %v10212
  %v10214 = vpop.xlane.xlu0 %10213
  %v10215 = vsel %vm9003, %v10141, 0.0
  %10216 = vadd.xlane.f32.xlu0 %v10215
  %v10217 = vpop.xlane.xlu0 %10216
  %v10218 = vsel %vm9003, %v10148, 0.0
  %10219 = vadd.xlane.f32.xlu0 %v10218
  %v10220 = vpop.xlane.xlu0 %10219
  %v10221 = vsel %vm9003, %v10155, 0.0
  %10222 = vadd.xlane.f32.xlu0 %v10221
  %v10223 = vpop.xlane.xlu0 %10222
  %v10224 = vsel %vm9003, %v10162, 0.0
  %10225 = vadd.xlane.f32.xlu0 %v10224
  %v10226 = vpop.xlane.xlu0 %10225
  %v10227 = vmul.f32 %v10181, %v9058
  %v10228 = vmul.f32 %v10184, %v9058
  %v10229 = vmul.f32 %v10187, %v9058
  %v10230 = vmul.f32 %v10190, %v9058
  %v10231 = vmul.f32 %v10193, %v9058
  %v10232 = vmul.f32 %v10196, %v9058
  %v10233 = vmul.f32 %v10199, %v9058
  %v10234 = vmul.f32 %v10202, %v9058
  %v10235 = vmul.f32 %v10205, %v9058
  %v10236 = vmul.f32 %v10208, %v9058
  %v10237 = vmul.f32 %v10211, %v9058
  %v10238 = vmul.f32 %v10214, %v9058
  %v10239 = vmul.f32 %v10217, %v9058
  %v10240 = vmul.f32 %v10220, %v9058
  %v10241 = vmul.f32 %v10223, %v9058
  %v10242 = vmul.f32 %v10226, %v9058
  %v10243 = vadd.f32 %v10227, 1e-05
  %v10244 = vadd.f32 %v10228, 1e-05
  %v10245 = vadd.f32 %v10229, 1e-05
  %v10246 = vadd.f32 %v10230, 1e-05
  %v10247 = vadd.f32 %v10231, 1e-05
  %v10248 = vadd.f32 %v10232, 1e-05
  %v10249 = vadd.f32 %v10233, 1e-05
  %v10250 = vadd.f32 %v10234, 1e-05
  %v10251 = vadd.f32 %v10235, 1e-05
  %v10252 = vadd.f32 %v10236, 1e-05
  %v10253 = vadd.f32 %v10237, 1e-05
  %v10254 = vadd.f32 %v10238, 1e-05
  %v10255 = vadd.f32 %v10239, 1e-05
  %v10256 = vadd.f32 %v10240, 1e-05
  %v10257 = vadd.f32 %v10241, 1e-05
  %v10258 = vadd.f32 %v10242, 1e-05
  %v10259 = vrsqrt.pop %v10243
  %v10260 = vmul.f32 %v10259, %v10243
  %v10261 = vmul.f32 %v10260, %v10259
  %v10262 = vmul.f32 0.5, %v10261
  %v10263 = vsub.f32 1.5, %v10262
  %v10264 = vmul.f32 %v10259, %v10263
  %vm10265 = vweird.f32 %v10243
  %vm10266 = vweird.f32 %v10259
  %vm10267 = vmor %vm10265, %vm10266
  %v10268 = vsel %vm10267, %v10259, %v10264
  %v10269 = vrsqrt.pop %v10244
  %v10270 = vmul.f32 %v10269, %v10244
  %v10271 = vmul.f32 %v10270, %v10269
  %v10272 = vmul.f32 0.5, %v10271
  %v10273 = vsub.f32 1.5, %v10272
  %v10274 = vmul.f32 %v10269, %v10273
  %vm10275 = vweird.f32 %v10244
  %vm10276 = vweird.f32 %v10269
  %vm10277 = vmor %vm10275, %vm10276
  %v10278 = vsel %vm10277, %v10269, %v10274
  %v10279 = vrsqrt.pop %v10245
  %v10280 = vmul.f32 %v10279, %v10245
  %v10281 = vmul.f32 %v10280, %v10279
  %v10282 = vmul.f32 0.5, %v10281
  %v10283 = vsub.f32 1.5, %v10282
  %v10284 = vmul.f32 %v10279, %v10283
  %vm10285 = vweird.f32 %v10245
  %vm10286 = vweird.f32 %v10279
  %vm10287 = vmor %vm10285, %vm10286
  %v10288 = vsel %vm10287, %v10279, %v10284
  %v10289 = vrsqrt.pop %v10246
  %v10290 = vmul.f32 %v10289, %v10246
  %v10291 = vmul.f32 %v10290, %v10289
  %v10292 = vmul.f32 0.5, %v10291
  %v10293 = vsub.f32 1.5, %v10292
  %v10294 = vmul.f32 %v10289, %v10293
  %vm10295 = vweird.f32 %v10246
  %vm10296 = vweird.f32 %v10289
  %vm10297 = vmor %vm10295, %vm10296
  %v10298 = vsel %vm10297, %v10289, %v10294
  %v10299 = vrsqrt.pop %v10247
  %v10300 = vmul.f32 %v10299, %v10247
  %v10301 = vmul.f32 %v10300, %v10299
  %v10302 = vmul.f32 0.5, %v10301
  %v10303 = vsub.f32 1.5, %v10302
  %v10304 = vmul.f32 %v10299, %v10303
  %vm10305 = vweird.f32 %v10247
  %vm10306 = vweird.f32 %v10299
  %vm10307 = vmor %vm10305, %vm10306
  %v10308 = vsel %vm10307, %v10299, %v10304
  %v10309 = vrsqrt.pop %v10248
  %v10310 = vmul.f32 %v10309, %v10248
  %v10311 = vmul.f32 %v10310, %v10309
  %v10312 = vmul.f32 0.5, %v10311
  %v10313 = vsub.f32 1.5, %v10312
  %v10314 = vmul.f32 %v10309, %v10313
  %vm10315 = vweird.f32 %v10248
  %vm10316 = vweird.f32 %v10309
  %vm10317 = vmor %vm10315, %vm10316
  %v10318 = vsel %vm10317, %v10309, %v10314
  %v10319 = vrsqrt.pop %v10249
  %v10320 = vmul.f32 %v10319, %v10249
  %v10321 = vmul.f32 %v10320, %v10319
  %v10322 = vmul.f32 0.5, %v10321
  %v10323 = vsub.f32 1.5, %v10322
  %v10324 = vmul.f32 %v10319, %v10323
  %vm10325 = vweird.f32 %v10249
  %vm10326 = vweird.f32 %v10319
  %vm10327 = vmor %vm10325, %vm10326
  %v10328 = vsel %vm10327, %v10319, %v10324
  %v10329 = vrsqrt.pop %v10250
  %v10330 = vmul.f32 %v10329, %v10250
  %v10331 = vmul.f32 %v10330, %v10329
  %v10332 = vmul.f32 0.5, %v10331
  %v10333 = vsub.f32 1.5, %v10332
  %v10334 = vmul.f32 %v10329, %v10333
  %vm10335 = vweird.f32 %v10250
  %vm10336 = vweird.f32 %v10329
  %vm10337 = vmor %vm10335, %vm10336
  %v10338 = vsel %vm10337, %v10329, %v10334
  %v10339 = vrsqrt.pop %v10251
  %v10340 = vmul.f32 %v10339, %v10251
  %v10341 = vmul.f32 %v10340, %v10339
  %v10342 = vmul.f32 0.5, %v10341
  %v10343 = vsub.f32 1.5, %v10342
  %v10344 = vmul.f32 %v10339, %v10343
  %vm10345 = vweird.f32 %v10251
  %vm10346 = vweird.f32 %v10339
  %vm10347 = vmor %vm10345, %vm10346
  %v10348 = vsel %vm10347, %v10339, %v10344
  %v10349 = vrsqrt.pop %v10252
  %v10350 = vmul.f32 %v10349, %v10252
  %v10351 = vmul.f32 %v10350, %v10349
  %v10352 = vmul.f32 0.5, %v10351
  %v10353 = vsub.f32 1.5, %v10352
  %v10354 = vmul.f32 %v10349, %v10353
  %vm10355 = vweird.f32 %v10252
  %vm10356 = vweird.f32 %v10349
  %vm10357 = vmor %vm10355, %vm10356
  %v10358 = vsel %vm10357, %v10349, %v10354
  %v10359 = vrsqrt.pop %v10253
  %v10360 = vmul.f32 %v10359, %v10253
  %v10361 = vmul.f32 %v10360, %v10359
  %v10362 = vmul.f32 0.5, %v10361
  %v10363 = vsub.f32 1.5, %v10362
  %v10364 = vmul.f32 %v10359, %v10363
  %vm10365 = vweird.f32 %v10253
  %vm10366 = vweird.f32 %v10359
  %vm10367 = vmor %vm10365, %vm10366
  %v10368 = vsel %vm10367, %v10359, %v10364
  %v10369 = vrsqrt.pop %v10254
  %v10370 = vmul.f32 %v10369, %v10254
  %v10371 = vmul.f32 %v10370, %v10369
  %v10372 = vmul.f32 0.5, %v10371
  %v10373 = vsub.f32 1.5, %v10372
  %v10374 = vmul.f32 %v10369, %v10373
  %vm10375 = vweird.f32 %v10254
  %vm10376 = vweird.f32 %v10369
  %vm10377 = vmor %vm10375, %vm10376
  %v10378 = vsel %vm10377, %v10369, %v10374
  %v10379 = vrsqrt.pop %v10255
  %v10380 = vmul.f32 %v10379, %v10255
  %v10381 = vmul.f32 %v10380, %v10379
  %v10382 = vmul.f32 0.5, %v10381
  %v10383 = vsub.f32 1.5, %v10382
  %v10384 = vmul.f32 %v10379, %v10383
  %vm10385 = vweird.f32 %v10255
  %vm10386 = vweird.f32 %v10379
  %vm10387 = vmor %vm10385, %vm10386
  %v10388 = vsel %vm10387, %v10379, %v10384
  %v10389 = vrsqrt.pop %v10256
  %v10390 = vmul.f32 %v10389, %v10256
  %v10391 = vmul.f32 %v10390, %v10389
  %v10392 = vmul.f32 0.5, %v10391
  %v10393 = vsub.f32 1.5, %v10392
  %v10394 = vmul.f32 %v10389, %v10393
  %vm10395 = vweird.f32 %v10256
  %vm10396 = vweird.f32 %v10389
  %vm10397 = vmor %vm10395, %vm10396
  %v10398 = vsel %vm10397, %v10389, %v10394
  %v10399 = vrsqrt.pop %v10257
  %v10400 = vmul.f32 %v10399, %v10257
  %v10401 = vmul.f32 %v10400, %v10399
  %v10402 = vmul.f32 0.5, %v10401
  %v10403 = vsub.f32 1.5, %v10402
  %v10404 = vmul.f32 %v10399, %v10403
  %vm10405 = vweird.f32 %v10257
  %vm10406 = vweird.f32 %v10399
  %vm10407 = vmor %vm10405, %vm10406
  %v10408 = vsel %vm10407, %v10399, %v10404
  %v10409 = vrsqrt.pop %v10258
  %v10410 = vmul.f32 %v10409, %v10258
  %v10411 = vmul.f32 %v10410, %v10409
  %v10412 = vmul.f32 0.5, %v10411
  %v10413 = vsub.f32 1.5, %v10412
  %v10414 = vmul.f32 %v10409, %v10413
  %vm10415 = vweird.f32 %v10258
  %vm10416 = vweird.f32 %v10409
  %vm10417 = vmor %vm10415, %vm10416
  %v10418 = vsel %vm10417, %v10409, %v10414
  %v10436 = vunpack.c.l.s4 269488144
  %v10437 = vunpack.c.0.s8 %v10436
  %v10438 = vperm.slane %v10268, %v10437
  %v10440 = vunpack.c.l.s4 842150450
  %v10441 = vunpack.c.0.s8 %v10440
  %v10442 = vperm.slane %v10268, %v10441
  %v10444 = vunpack.c.l.s4 1414812756
  %v10445 = vunpack.c.0.s8 %v10444
  %v10446 = vperm.slane %v10268, %v10445
  %v10448 = vunpack.c.l.s4 1987475062
  %v10449 = vunpack.c.0.s8 %v10448
  %v10450 = vperm.slane %v10268, %v10449
  %v10452 = vunpack.c.l.s4 269488144
  %v10453 = vunpack.c.0.s8 %v10452
  %v10454 = vperm.slane %v10278, %v10453
  %v10456 = vunpack.c.l.s4 842150450
  %v10457 = vunpack.c.0.s8 %v10456
  %v10458 = vperm.slane %v10278, %v10457
  %v10460 = vunpack.c.l.s4 1414812756
  %v10461 = vunpack.c.0.s8 %v10460
  %v10462 = vperm.slane %v10278, %v10461
  %v10464 = vunpack.c.l.s4 1987475062
  %v10465 = vunpack.c.0.s8 %v10464
  %v10466 = vperm.slane %v10278, %v10465
  %v10468 = vunpack.c.l.s4 269488144
  %v10469 = vunpack.c.0.s8 %v10468
  %v10470 = vperm.slane %v10288, %v10469
  %v10472 = vunpack.c.l.s4 842150450
  %v10473 = vunpack.c.0.s8 %v10472
  %v10474 = vperm.slane %v10288, %v10473
  %v10476 = vunpack.c.l.s4 1414812756
  %v10477 = vunpack.c.0.s8 %v10476
  %v10478 = vperm.slane %v10288, %v10477
  %v10480 = vunpack.c.l.s4 1987475062
  %v10481 = vunpack.c.0.s8 %v10480
  %v10482 = vperm.slane %v10288, %v10481
  %v10484 = vunpack.c.l.s4 269488144
  %v10485 = vunpack.c.0.s8 %v10484
  %v10486 = vperm.slane %v10298, %v10485
  %v10488 = vunpack.c.l.s4 842150450
  %v10489 = vunpack.c.0.s8 %v10488
  %v10490 = vperm.slane %v10298, %v10489
  %v10492 = vunpack.c.l.s4 1414812756
  %v10493 = vunpack.c.0.s8 %v10492
  %v10494 = vperm.slane %v10298, %v10493
  %v10496 = vunpack.c.l.s4 1987475062
  %v10497 = vunpack.c.0.s8 %v10496
  %v10498 = vperm.slane %v10298, %v10497
  %v10500 = vunpack.c.l.s4 269488144
  %v10501 = vunpack.c.0.s8 %v10500
  %v10502 = vperm.slane %v10308, %v10501
  %v10504 = vunpack.c.l.s4 842150450
  %v10505 = vunpack.c.0.s8 %v10504
  %v10506 = vperm.slane %v10308, %v10505
  %v10508 = vunpack.c.l.s4 1414812756
  %v10509 = vunpack.c.0.s8 %v10508
  %v10510 = vperm.slane %v10308, %v10509
  %v10512 = vunpack.c.l.s4 1987475062
  %v10513 = vunpack.c.0.s8 %v10512
  %v10514 = vperm.slane %v10308, %v10513
  %v10516 = vunpack.c.l.s4 269488144
  %v10517 = vunpack.c.0.s8 %v10516
  %v10518 = vperm.slane %v10318, %v10517
  %v10520 = vunpack.c.l.s4 842150450
  %v10521 = vunpack.c.0.s8 %v10520
  %v10522 = vperm.slane %v10318, %v10521
  %v10524 = vunpack.c.l.s4 1414812756
  %v10525 = vunpack.c.0.s8 %v10524
  %v10526 = vperm.slane %v10318, %v10525
  %v10528 = vunpack.c.l.s4 1987475062
  %v10529 = vunpack.c.0.s8 %v10528
  %v10530 = vperm.slane %v10318, %v10529
  %v10532 = vunpack.c.l.s4 269488144
  %v10533 = vunpack.c.0.s8 %v10532
  %v10534 = vperm.slane %v10328, %v10533
  %v10536 = vunpack.c.l.s4 842150450
  %v10537 = vunpack.c.0.s8 %v10536
  %v10538 = vperm.slane %v10328, %v10537
  %v10540 = vunpack.c.l.s4 1414812756
  %v10541 = vunpack.c.0.s8 %v10540
  %v10542 = vperm.slane %v10328, %v10541
  %v10544 = vunpack.c.l.s4 1987475062
  %v10545 = vunpack.c.0.s8 %v10544
  %v10546 = vperm.slane %v10328, %v10545
  %v10548 = vunpack.c.l.s4 269488144
  %v10549 = vunpack.c.0.s8 %v10548
  %v10550 = vperm.slane %v10338, %v10549
  %v10552 = vunpack.c.l.s4 842150450
  %v10553 = vunpack.c.0.s8 %v10552
  %v10554 = vperm.slane %v10338, %v10553
  %v10556 = vunpack.c.l.s4 1414812756
  %v10557 = vunpack.c.0.s8 %v10556
  %v10558 = vperm.slane %v10338, %v10557
  %v10560 = vunpack.c.l.s4 1987475062
  %v10561 = vunpack.c.0.s8 %v10560
  %v10562 = vperm.slane %v10338, %v10561
  %v10564 = vunpack.c.l.s4 269488144
  %v10565 = vunpack.c.0.s8 %v10564
  %v10566 = vperm.slane %v10348, %v10565
  %v10568 = vunpack.c.l.s4 842150450
  %v10569 = vunpack.c.0.s8 %v10568
  %v10570 = vperm.slane %v10348, %v10569
  %v10572 = vunpack.c.l.s4 1414812756
  %v10573 = vunpack.c.0.s8 %v10572
  %v10574 = vperm.slane %v10348, %v10573
  %v10576 = vunpack.c.l.s4 1987475062
  %v10577 = vunpack.c.0.s8 %v10576
  %v10578 = vperm.slane %v10348, %v10577
  %v10580 = vunpack.c.l.s4 269488144
  %v10581 = vunpack.c.0.s8 %v10580
  %v10582 = vperm.slane %v10358, %v10581
  %v10584 = vunpack.c.l.s4 842150450
  %v10585 = vunpack.c.0.s8 %v10584
  %v10586 = vperm.slane %v10358, %v10585
  %v10588 = vunpack.c.l.s4 1414812756
  %v10589 = vunpack.c.0.s8 %v10588
  %v10590 = vperm.slane %v10358, %v10589
  %v10592 = vunpack.c.l.s4 1987475062
  %v10593 = vunpack.c.0.s8 %v10592
  %v10594 = vperm.slane %v10358, %v10593
  %v10596 = vunpack.c.l.s4 269488144
  %v10597 = vunpack.c.0.s8 %v10596
  %v10598 = vperm.slane %v10368, %v10597
  %v10600 = vunpack.c.l.s4 842150450
  %v10601 = vunpack.c.0.s8 %v10600
  %v10602 = vperm.slane %v10368, %v10601
  %v10604 = vunpack.c.l.s4 1414812756
  %v10605 = vunpack.c.0.s8 %v10604
  %v10606 = vperm.slane %v10368, %v10605
  %v10608 = vunpack.c.l.s4 1987475062
  %v10609 = vunpack.c.0.s8 %v10608
  %v10610 = vperm.slane %v10368, %v10609
  %v10612 = vunpack.c.l.s4 269488144
  %v10613 = vunpack.c.0.s8 %v10612
  %v10614 = vperm.slane %v10378, %v10613
  %v10616 = vunpack.c.l.s4 842150450
  %v10617 = vunpack.c.0.s8 %v10616
  %v10618 = vperm.slane %v10378, %v10617
  %v10620 = vunpack.c.l.s4 1414812756
  %v10621 = vunpack.c.0.s8 %v10620
  %v10622 = vperm.slane %v10378, %v10621
  %v10624 = vunpack.c.l.s4 1987475062
  %v10625 = vunpack.c.0.s8 %v10624
  %v10626 = vperm.slane %v10378, %v10625
  %v10628 = vunpack.c.l.s4 269488144
  %v10629 = vunpack.c.0.s8 %v10628
  %v10630 = vperm.slane %v10388, %v10629
  %v10632 = vunpack.c.l.s4 842150450
  %v10633 = vunpack.c.0.s8 %v10632
  %v10634 = vperm.slane %v10388, %v10633
  %v10636 = vunpack.c.l.s4 1414812756
  %v10637 = vunpack.c.0.s8 %v10636
  %v10638 = vperm.slane %v10388, %v10637
  %v10640 = vunpack.c.l.s4 1987475062
  %v10641 = vunpack.c.0.s8 %v10640
  %v10642 = vperm.slane %v10388, %v10641
  %v10644 = vunpack.c.l.s4 269488144
  %v10645 = vunpack.c.0.s8 %v10644
  %v10646 = vperm.slane %v10398, %v10645
  %v10648 = vunpack.c.l.s4 842150450
  %v10649 = vunpack.c.0.s8 %v10648
  %v10650 = vperm.slane %v10398, %v10649
  %v10652 = vunpack.c.l.s4 1414812756
  %v10653 = vunpack.c.0.s8 %v10652
  %v10654 = vperm.slane %v10398, %v10653
  %v10656 = vunpack.c.l.s4 1987475062
  %v10657 = vunpack.c.0.s8 %v10656
  %v10658 = vperm.slane %v10398, %v10657
  %v10660 = vunpack.c.l.s4 269488144
  %v10661 = vunpack.c.0.s8 %v10660
  %v10662 = vperm.slane %v10408, %v10661
  %v10664 = vunpack.c.l.s4 842150450
  %v10665 = vunpack.c.0.s8 %v10664
  %v10666 = vperm.slane %v10408, %v10665
  %v10668 = vunpack.c.l.s4 1414812756
  %v10669 = vunpack.c.0.s8 %v10668
  %v10670 = vperm.slane %v10408, %v10669
  %v10672 = vunpack.c.l.s4 1987475062
  %v10673 = vunpack.c.0.s8 %v10672
  %v10674 = vperm.slane %v10408, %v10673
  %v10676 = vunpack.c.l.s4 269488144
  %v10677 = vunpack.c.0.s8 %v10676
  %v10678 = vperm.slane %v10418, %v10677
  %v10680 = vunpack.c.l.s4 842150450
  %v10681 = vunpack.c.0.s8 %v10680
  %v10682 = vperm.slane %v10418, %v10681
  %v10684 = vunpack.c.l.s4 1414812756
  %v10685 = vunpack.c.0.s8 %v10684
  %v10686 = vperm.slane %v10418, %v10685
  %v10688 = vunpack.c.l.s4 1987475062
  %v10689 = vunpack.c.0.s8 %v10688
  %v10690 = vperm.slane %v10418, %v10689
  %v10691 = vrot.slane %v10438, 1
  %v10692 = vrot.slane %v10442, 1
  %v10693 = vrot.slane %v10446, 1
  %v10694 = vrot.slane %v10450, 1
  %v10695 = vrot.slane %v10454, 1
  %v10696 = vrot.slane %v10458, 1
  %v10697 = vrot.slane %v10462, 1
  %v10698 = vrot.slane %v10466, 1
  %v10699 = vrot.slane %v10470, 1
  %v10700 = vrot.slane %v10474, 1
  %v10701 = vrot.slane %v10478, 1
  %v10702 = vrot.slane %v10482, 1
  %v10703 = vrot.slane %v10486, 1
  %v10704 = vrot.slane %v10490, 1
  %v10705 = vrot.slane %v10494, 1
  %v10706 = vrot.slane %v10498, 1
  %v10707 = vrot.slane %v10502, 1
  %v10708 = vrot.slane %v10506, 1
  %v10709 = vrot.slane %v10510, 1
  %v10710 = vrot.slane %v10514, 1
  %v10711 = vrot.slane %v10518, 1
  %v10712 = vrot.slane %v10522, 1
  %v10713 = vrot.slane %v10526, 1
  %v10714 = vrot.slane %v10530, 1
  %v10715 = vrot.slane %v10534, 1
  %v10716 = vrot.slane %v10538, 1
  %v10717 = vrot.slane %v10542, 1
  %v10718 = vrot.slane %v10546, 1
  %v10719 = vrot.slane %v10550, 1
  %v10720 = vrot.slane %v10554, 1
  %v10721 = vrot.slane %v10558, 1
  %v10722 = vrot.slane %v10562, 1
  %v10723 = vrot.slane %v10566, 1
  %v10724 = vrot.slane %v10570, 1
  %v10725 = vrot.slane %v10574, 1
  %v10726 = vrot.slane %v10578, 1
  %v10727 = vrot.slane %v10582, 1
  %v10728 = vrot.slane %v10586, 1
  %v10729 = vrot.slane %v10590, 1
  %v10730 = vrot.slane %v10594, 1
  %v10731 = vrot.slane %v10598, 1
  %v10732 = vrot.slane %v10602, 1
  %v10733 = vrot.slane %v10606, 1
  %v10734 = vrot.slane %v10610, 1
  %v10735 = vrot.slane %v10614, 1
  %v10736 = vrot.slane %v10618, 1
  %v10737 = vrot.slane %v10622, 1
  %v10738 = vrot.slane %v10626, 1
  %v10739 = vrot.slane %v10630, 1
  %v10740 = vrot.slane %v10634, 1
  %v10741 = vrot.slane %v10638, 1
  %v10742 = vrot.slane %v10642, 1
  %v10743 = vrot.slane %v10646, 1
  %v10744 = vrot.slane %v10650, 1
  %v10745 = vrot.slane %v10654, 1
  %v10746 = vrot.slane %v10658, 1
  %v10747 = vrot.slane %v10662, 1
  %v10748 = vrot.slane %v10666, 1
  %v10749 = vrot.slane %v10670, 1
  %v10750 = vrot.slane %v10674, 1
  %v10751 = vrot.slane %v10678, 1
  %v10752 = vrot.slane %v10682, 1
  %v10753 = vrot.slane %v10686, 1
  %v10754 = vrot.slane %v10690, 1
  %v10883 = vmul.f32 %v9539, %v10438
  %v10884 = vmul.f32 %v9540, %v10691
  %v10885 = vmul.f32 %v9541, %v10442
  %v10886 = vmul.f32 %v9542, %v10692
  %v10887 = vmul.f32 %v9543, %v10446
  %v10888 = vmul.f32 %v9544, %v10693
  %v10889 = vmul.f32 %v9545, %v10450
  %v10890 = vmul.f32 %v9546, %v10694
  %v10891 = vmul.f32 %v9547, %v10454
  %v10892 = vmul.f32 %v9548, %v10695
  %v10893 = vmul.f32 %v9549, %v10458
  %v10894 = vmul.f32 %v9550, %v10696
  %v10895 = vmul.f32 %v9551, %v10462
  %v10896 = vmul.f32 %v9552, %v10697
  %v10897 = vmul.f32 %v9553, %v10466
  %v10898 = vmul.f32 %v9554, %v10698
  %v10899 = vmul.f32 %v9555, %v10470
  %v10900 = vmul.f32 %v9556, %v10699
  %v10901 = vmul.f32 %v9557, %v10474
  %v10902 = vmul.f32 %v9558, %v10700
  %v10903 = vmul.f32 %v9559, %v10478
  %v10904 = vmul.f32 %v9560, %v10701
  %v10905 = vmul.f32 %v9561, %v10482
  %v10906 = vmul.f32 %v9562, %v10702
  %v10907 = vmul.f32 %v9563, %v10486
  %v10908 = vmul.f32 %v9564, %v10703
  %v10909 = vmul.f32 %v9565, %v10490
  %v10910 = vmul.f32 %v9566, %v10704
  %v10911 = vmul.f32 %v9567, %v10494
  %v10912 = vmul.f32 %v9568, %v10705
  %v10913 = vmul.f32 %v9569, %v10498
  %v10914 = vmul.f32 %v9570, %v10706
  %v10915 = vmul.f32 %v9571, %v10502
  %v10916 = vmul.f32 %v9572, %v10707
  %v10917 = vmul.f32 %v9573, %v10506
  %v10918 = vmul.f32 %v9574, %v10708
  %v10919 = vmul.f32 %v9575, %v10510
  %v10920 = vmul.f32 %v9576, %v10709
  %v10921 = vmul.f32 %v9577, %v10514
  %v10922 = vmul.f32 %v9578, %v10710
  %v10923 = vmul.f32 %v9579, %v10518
  %v10924 = vmul.f32 %v9580, %v10711
  %v10925 = vmul.f32 %v9581, %v10522
  %v10926 = vmul.f32 %v9582, %v10712
  %v10927 = vmul.f32 %v9583, %v10526
  %v10928 = vmul.f32 %v9584, %v10713
  %v10929 = vmul.f32 %v9585, %v10530
  %v10930 = vmul.f32 %v9586, %v10714
  %v10931 = vmul.f32 %v9587, %v10534
  %v10932 = vmul.f32 %v9588, %v10715
  %v10933 = vmul.f32 %v9589, %v10538
  %v10934 = vmul.f32 %v9590, %v10716
  %v10935 = vmul.f32 %v9591, %v10542
  %v10936 = vmul.f32 %v9592, %v10717
  %v10937 = vmul.f32 %v9593, %v10546
  %v10938 = vmul.f32 %v9594, %v10718
  %v10939 = vmul.f32 %v9595, %v10550
  %v10940 = vmul.f32 %v9596, %v10719
  %v10941 = vmul.f32 %v9597, %v10554
  %v10942 = vmul.f32 %v9598, %v10720
  %v10943 = vmul.f32 %v9599, %v10558
  %v10944 = vmul.f32 %v9600, %v10721
  %v10945 = vmul.f32 %v9601, %v10562
  %v10946 = vmul.f32 %v9602, %v10722
  %v10947 = vmul.f32 %v9603, %v10566
  %v10948 = vmul.f32 %v9604, %v10723
  %v10949 = vmul.f32 %v9605, %v10570
  %v10950 = vmul.f32 %v9606, %v10724
  %v10951 = vmul.f32 %v9607, %v10574
  %v10952 = vmul.f32 %v9608, %v10725
  %v10953 = vmul.f32 %v9609, %v10578
  %v10954 = vmul.f32 %v9610, %v10726
  %v10955 = vmul.f32 %v9611, %v10582
  %v10956 = vmul.f32 %v9612, %v10727
  %v10957 = vmul.f32 %v9613, %v10586
  %v10958 = vmul.f32 %v9614, %v10728
  %v10959 = vmul.f32 %v9615, %v10590
  %v10960 = vmul.f32 %v9616, %v10729
  %v10961 = vmul.f32 %v9617, %v10594
  %v10962 = vmul.f32 %v9618, %v10730
  %v10963 = vmul.f32 %v9619, %v10598
  %v10964 = vmul.f32 %v9620, %v10731
  %v10965 = vmul.f32 %v9621, %v10602
  %v10966 = vmul.f32 %v9622, %v10732
  %v10967 = vmul.f32 %v9623, %v10606
  %v10968 = vmul.f32 %v9624, %v10733
  %v10969 = vmul.f32 %v9625, %v10610
  %v10970 = vmul.f32 %v9626, %v10734
  %v10971 = vmul.f32 %v9627, %v10614
  %v10972 = vmul.f32 %v9628, %v10735
  %v10973 = vmul.f32 %v9629, %v10618
  %v10974 = vmul.f32 %v9630, %v10736
  %v10975 = vmul.f32 %v9631, %v10622
  %v10976 = vmul.f32 %v9632, %v10737
  %v10977 = vmul.f32 %v9633, %v10626
  %v10978 = vmul.f32 %v9634, %v10738
  %v10979 = vmul.f32 %v9635, %v10630
  %v10980 = vmul.f32 %v9636, %v10739
  %v10981 = vmul.f32 %v9637, %v10634
  %v10982 = vmul.f32 %v9638, %v10740
  %v10983 = vmul.f32 %v9639, %v10638
  %v10984 = vmul.f32 %v9640, %v10741
  %v10985 = vmul.f32 %v9641, %v10642
  %v10986 = vmul.f32 %v9642, %v10742
  %v10987 = vmul.f32 %v9643, %v10646
  %v10988 = vmul.f32 %v9644, %v10743
  %v10989 = vmul.f32 %v9645, %v10650
  %v10990 = vmul.f32 %v9646, %v10744
  %v10991 = vmul.f32 %v9647, %v10654
  %v10992 = vmul.f32 %v9648, %v10745
  %v10993 = vmul.f32 %v9649, %v10658
  %v10994 = vmul.f32 %v9650, %v10746
  %v10995 = vmul.f32 %v9651, %v10662
  %v10996 = vmul.f32 %v9652, %v10747
  %v10997 = vmul.f32 %v9653, %v10666
  %v10998 = vmul.f32 %v9654, %v10748
  %v10999 = vmul.f32 %v9655, %v10670
  %v11000 = vmul.f32 %v9656, %v10749
  %v11001 = vmul.f32 %v9657, %v10674
  %v11002 = vmul.f32 %v9658, %v10750
  %v11003 = vmul.f32 %v9659, %v10678
  %v11004 = vmul.f32 %v9660, %v10751
  %v11005 = vmul.f32 %v9661, %v10682
  %v11006 = vmul.f32 %v9662, %v10752
  %v11007 = vmul.f32 %v9663, %v10686
  %v11008 = vmul.f32 %v9664, %v10753
  %v11009 = vmul.f32 %v9665, %v10690
  %v11010 = vmul.f32 %v9666, %v10754
  %v11012 = vperm.slane %v8610, 0
  %v11013 = vrot.slane %v11012, 2
  %v11014 = vrot.slane %v11012, 4
  %v11015 = vrot.slane %v11012, 6
  %v11016 = vrot.slane %v11012, 1
  %v11017 = vrot.slane %v11013, 1
  %v11018 = vrot.slane %v11014, 1
  %v11019 = vrot.slane %v11015, 1
  %v11028 = vmul.f32 %v10883, %v11012
  %v11029 = vmul.f32 %v10884, %v11016
  %v11030 = vmul.f32 %v10885, %v11013
  %v11031 = vmul.f32 %v10886, %v11017
  %v11032 = vmul.f32 %v10887, %v11014
  %v11033 = vmul.f32 %v10888, %v11018
  %v11034 = vmul.f32 %v10889, %v11015
  %v11035 = vmul.f32 %v10890, %v11019
  %v11036 = vmul.f32 %v10891, %v11012
  %v11037 = vmul.f32 %v10892, %v11016
  %v11038 = vmul.f32 %v10893, %v11013
  %v11039 = vmul.f32 %v10894, %v11017
  %v11040 = vmul.f32 %v10895, %v11014
  %v11041 = vmul.f32 %v10896, %v11018
  %v11042 = vmul.f32 %v10897, %v11015
  %v11043 = vmul.f32 %v10898, %v11019
  %v11044 = vmul.f32 %v10899, %v11012
  %v11045 = vmul.f32 %v10900, %v11016
  %v11046 = vmul.f32 %v10901, %v11013
  %v11047 = vmul.f32 %v10902, %v11017
  %v11048 = vmul.f32 %v10903, %v11014
  %v11049 = vmul.f32 %v10904, %v11018
  %v11050 = vmul.f32 %v10905, %v11015
  %v11051 = vmul.f32 %v10906, %v11019
  %v11052 = vmul.f32 %v10907, %v11012
  %v11053 = vmul.f32 %v10908, %v11016
  %v11054 = vmul.f32 %v10909, %v11013
  %v11055 = vmul.f32 %v10910, %v11017
  %v11056 = vmul.f32 %v10911, %v11014
  %v11057 = vmul.f32 %v10912, %v11018
  %v11058 = vmul.f32 %v10913, %v11015
  %v11059 = vmul.f32 %v10914, %v11019
  %v11060 = vmul.f32 %v10915, %v11012
  %v11061 = vmul.f32 %v10916, %v11016
  %v11062 = vmul.f32 %v10917, %v11013
  %v11063 = vmul.f32 %v10918, %v11017
  %v11064 = vmul.f32 %v10919, %v11014
  %v11065 = vmul.f32 %v10920, %v11018
  %v11066 = vmul.f32 %v10921, %v11015
  %v11067 = vmul.f32 %v10922, %v11019
  %v11068 = vmul.f32 %v10923, %v11012
  %v11069 = vmul.f32 %v10924, %v11016
  %v11070 = vmul.f32 %v10925, %v11013
  %v11071 = vmul.f32 %v10926, %v11017
  %v11072 = vmul.f32 %v10927, %v11014
  %v11073 = vmul.f32 %v10928, %v11018
  %v11074 = vmul.f32 %v10929, %v11015
  %v11075 = vmul.f32 %v10930, %v11019
  %v11076 = vmul.f32 %v10931, %v11012
  %v11077 = vmul.f32 %v10932, %v11016
  %v11078 = vmul.f32 %v10933, %v11013
  %v11079 = vmul.f32 %v10934, %v11017
  %v11080 = vmul.f32 %v10935, %v11014
  %v11081 = vmul.f32 %v10936, %v11018
  %v11082 = vmul.f32 %v10937, %v11015
  %v11083 = vmul.f32 %v10938, %v11019
  %v11084 = vmul.f32 %v10939, %v11012
  %v11085 = vmul.f32 %v10940, %v11016
  %v11086 = vmul.f32 %v10941, %v11013
  %v11087 = vmul.f32 %v10942, %v11017
  %v11088 = vmul.f32 %v10943, %v11014
  %v11089 = vmul.f32 %v10944, %v11018
  %v11090 = vmul.f32 %v10945, %v11015
  %v11091 = vmul.f32 %v10946, %v11019
  %v11092 = vmul.f32 %v10947, %v11012
  %v11093 = vmul.f32 %v10948, %v11016
  %v11094 = vmul.f32 %v10949, %v11013
  %v11095 = vmul.f32 %v10950, %v11017
  %v11096 = vmul.f32 %v10951, %v11014
  %v11097 = vmul.f32 %v10952, %v11018
  %v11098 = vmul.f32 %v10953, %v11015
  %v11099 = vmul.f32 %v10954, %v11019
  %v11100 = vmul.f32 %v10955, %v11012
  %v11101 = vmul.f32 %v10956, %v11016
  %v11102 = vmul.f32 %v10957, %v11013
  %v11103 = vmul.f32 %v10958, %v11017
  %v11104 = vmul.f32 %v10959, %v11014
  %v11105 = vmul.f32 %v10960, %v11018
  %v11106 = vmul.f32 %v10961, %v11015
  %v11107 = vmul.f32 %v10962, %v11019
  %v11108 = vmul.f32 %v10963, %v11012
  %v11109 = vmul.f32 %v10964, %v11016
  %v11110 = vmul.f32 %v10965, %v11013
  %v11111 = vmul.f32 %v10966, %v11017
  %v11112 = vmul.f32 %v10967, %v11014
  %v11113 = vmul.f32 %v10968, %v11018
  %v11114 = vmul.f32 %v10969, %v11015
  %v11115 = vmul.f32 %v10970, %v11019
  %v11116 = vmul.f32 %v10971, %v11012
  %v11117 = vmul.f32 %v10972, %v11016
  %v11118 = vmul.f32 %v10973, %v11013
  %v11119 = vmul.f32 %v10974, %v11017
  %v11120 = vmul.f32 %v10975, %v11014
  %v11121 = vmul.f32 %v10976, %v11018
  %v11122 = vmul.f32 %v10977, %v11015
  %v11123 = vmul.f32 %v10978, %v11019
  %v11124 = vmul.f32 %v10979, %v11012
  %v11125 = vmul.f32 %v10980, %v11016
  %v11126 = vmul.f32 %v10981, %v11013
  %v11127 = vmul.f32 %v10982, %v11017
  %v11128 = vmul.f32 %v10983, %v11014
  %v11129 = vmul.f32 %v10984, %v11018
  %v11130 = vmul.f32 %v10985, %v11015
  %v11131 = vmul.f32 %v10986, %v11019
  %v11132 = vmul.f32 %v10987, %v11012
  %v11133 = vmul.f32 %v10988, %v11016
  %v11134 = vmul.f32 %v10989, %v11013
  %v11135 = vmul.f32 %v10990, %v11017
  %v11136 = vmul.f32 %v10991, %v11014
  %v11137 = vmul.f32 %v10992, %v11018
  %v11138 = vmul.f32 %v10993, %v11015
  %v11139 = vmul.f32 %v10994, %v11019
  %v11140 = vmul.f32 %v10995, %v11012
  %v11141 = vmul.f32 %v10996, %v11016
  %v11142 = vmul.f32 %v10997, %v11013
  %v11143 = vmul.f32 %v10998, %v11017
  %v11144 = vmul.f32 %v10999, %v11014
  %v11145 = vmul.f32 %v11000, %v11018
  %v11146 = vmul.f32 %v11001, %v11015
  %v11147 = vmul.f32 %v11002, %v11019
  %v11148 = vmul.f32 %v11003, %v11012
  %v11149 = vmul.f32 %v11004, %v11016
  %v11150 = vmul.f32 %v11005, %v11013
  %v11151 = vmul.f32 %v11006, %v11017
  %v11152 = vmul.f32 %v11007, %v11014
  %v11153 = vmul.f32 %v11008, %v11018
  %v11154 = vmul.f32 %v11009, %v11015
  %v11155 = vmul.f32 %v11010, %v11019
  %v11157 = vperm.slane %v8611, 0
  %v11158 = vrot.slane %v11157, 2
  %v11159 = vrot.slane %v11157, 4
  %v11160 = vrot.slane %v11157, 6
  %v11161 = vrot.slane %v11157, 1
  %v11162 = vrot.slane %v11158, 1
  %v11163 = vrot.slane %v11159, 1
  %v11164 = vrot.slane %v11160, 1
  %v11173 = vadd.f32 %v11028, %v11157
  %v11174 = vadd.f32 %v11029, %v11161
  %v11175 = vadd.f32 %v11030, %v11158
  %v11176 = vadd.f32 %v11031, %v11162
  %v11177 = vadd.f32 %v11032, %v11159
  %v11178 = vadd.f32 %v11033, %v11163
  %v11179 = vadd.f32 %v11034, %v11160
  %v11180 = vadd.f32 %v11035, %v11164
  %v11181 = vadd.f32 %v11036, %v11157
  %v11182 = vadd.f32 %v11037, %v11161
  %v11183 = vadd.f32 %v11038, %v11158
  %v11184 = vadd.f32 %v11039, %v11162
  %v11185 = vadd.f32 %v11040, %v11159
  %v11186 = vadd.f32 %v11041, %v11163
  %v11187 = vadd.f32 %v11042, %v11160
  %v11188 = vadd.f32 %v11043, %v11164
  %v11189 = vadd.f32 %v11044, %v11157
  %v11190 = vadd.f32 %v11045, %v11161
  %v11191 = vadd.f32 %v11046, %v11158
  %v11192 = vadd.f32 %v11047, %v11162
  %v11193 = vadd.f32 %v11048, %v11159
  %v11194 = vadd.f32 %v11049, %v11163
  %v11195 = vadd.f32 %v11050, %v11160
  %v11196 = vadd.f32 %v11051, %v11164
  %v11197 = vadd.f32 %v11052, %v11157
  %v11198 = vadd.f32 %v11053, %v11161
  %v11199 = vadd.f32 %v11054, %v11158
  %v11200 = vadd.f32 %v11055, %v11162
  %v11201 = vadd.f32 %v11056, %v11159
  %v11202 = vadd.f32 %v11057, %v11163
  %v11203 = vadd.f32 %v11058, %v11160
  %v11204 = vadd.f32 %v11059, %v11164
  %v11205 = vadd.f32 %v11060, %v11157
  %v11206 = vadd.f32 %v11061, %v11161
  %v11207 = vadd.f32 %v11062, %v11158
  %v11208 = vadd.f32 %v11063, %v11162
  %v11209 = vadd.f32 %v11064, %v11159
  %v11210 = vadd.f32 %v11065, %v11163
  %v11211 = vadd.f32 %v11066, %v11160
  %v11212 = vadd.f32 %v11067, %v11164
  %v11213 = vadd.f32 %v11068, %v11157
  %v11214 = vadd.f32 %v11069, %v11161
  %v11215 = vadd.f32 %v11070, %v11158
  %v11216 = vadd.f32 %v11071, %v11162
  %v11217 = vadd.f32 %v11072, %v11159
  %v11218 = vadd.f32 %v11073, %v11163
  %v11219 = vadd.f32 %v11074, %v11160
  %v11220 = vadd.f32 %v11075, %v11164
  %v11221 = vadd.f32 %v11076, %v11157
  %v11222 = vadd.f32 %v11077, %v11161
  %v11223 = vadd.f32 %v11078, %v11158
  %v11224 = vadd.f32 %v11079, %v11162
  %v11225 = vadd.f32 %v11080, %v11159
  %v11226 = vadd.f32 %v11081, %v11163
  %v11227 = vadd.f32 %v11082, %v11160
  %v11228 = vadd.f32 %v11083, %v11164
  %v11229 = vadd.f32 %v11084, %v11157
  %v11230 = vadd.f32 %v11085, %v11161
  %v11231 = vadd.f32 %v11086, %v11158
  %v11232 = vadd.f32 %v11087, %v11162
  %v11233 = vadd.f32 %v11088, %v11159
  %v11234 = vadd.f32 %v11089, %v11163
  %v11235 = vadd.f32 %v11090, %v11160
  %v11236 = vadd.f32 %v11091, %v11164
  %v11237 = vadd.f32 %v11092, %v11157
  %v11238 = vadd.f32 %v11093, %v11161
  %v11239 = vadd.f32 %v11094, %v11158
  %v11240 = vadd.f32 %v11095, %v11162
  %v11241 = vadd.f32 %v11096, %v11159
  %v11242 = vadd.f32 %v11097, %v11163
  %v11243 = vadd.f32 %v11098, %v11160
  %v11244 = vadd.f32 %v11099, %v11164
  %v11245 = vadd.f32 %v11100, %v11157
  %v11246 = vadd.f32 %v11101, %v11161
  %v11247 = vadd.f32 %v11102, %v11158
  %v11248 = vadd.f32 %v11103, %v11162
  %v11249 = vadd.f32 %v11104, %v11159
  %v11250 = vadd.f32 %v11105, %v11163
  %v11251 = vadd.f32 %v11106, %v11160
  %v11252 = vadd.f32 %v11107, %v11164
  %v11253 = vadd.f32 %v11108, %v11157
  %v11254 = vadd.f32 %v11109, %v11161
  %v11255 = vadd.f32 %v11110, %v11158
  %v11256 = vadd.f32 %v11111, %v11162
  %v11257 = vadd.f32 %v11112, %v11159
  %v11258 = vadd.f32 %v11113, %v11163
  %v11259 = vadd.f32 %v11114, %v11160
  %v11260 = vadd.f32 %v11115, %v11164
  %v11261 = vadd.f32 %v11116, %v11157
  %v11262 = vadd.f32 %v11117, %v11161
  %v11263 = vadd.f32 %v11118, %v11158
  %v11264 = vadd.f32 %v11119, %v11162
  %v11265 = vadd.f32 %v11120, %v11159
  %v11266 = vadd.f32 %v11121, %v11163
  %v11267 = vadd.f32 %v11122, %v11160
  %v11268 = vadd.f32 %v11123, %v11164
  %v11269 = vadd.f32 %v11124, %v11157
  %v11270 = vadd.f32 %v11125, %v11161
  %v11271 = vadd.f32 %v11126, %v11158
  %v11272 = vadd.f32 %v11127, %v11162
  %v11273 = vadd.f32 %v11128, %v11159
  %v11274 = vadd.f32 %v11129, %v11163
  %v11275 = vadd.f32 %v11130, %v11160
  %v11276 = vadd.f32 %v11131, %v11164
  %v11277 = vadd.f32 %v11132, %v11157
  %v11278 = vadd.f32 %v11133, %v11161
  %v11279 = vadd.f32 %v11134, %v11158
  %v11280 = vadd.f32 %v11135, %v11162
  %v11281 = vadd.f32 %v11136, %v11159
  %v11282 = vadd.f32 %v11137, %v11163
  %v11283 = vadd.f32 %v11138, %v11160
  %v11284 = vadd.f32 %v11139, %v11164
  %v11285 = vadd.f32 %v11140, %v11157
  %v11286 = vadd.f32 %v11141, %v11161
  %v11287 = vadd.f32 %v11142, %v11158
  %v11288 = vadd.f32 %v11143, %v11162
  %v11289 = vadd.f32 %v11144, %v11159
  %v11290 = vadd.f32 %v11145, %v11163
  %v11291 = vadd.f32 %v11146, %v11160
  %v11292 = vadd.f32 %v11147, %v11164
  %v11293 = vadd.f32 %v11148, %v11157
  %v11294 = vadd.f32 %v11149, %v11161
  %v11295 = vadd.f32 %v11150, %v11158
  %v11296 = vadd.f32 %v11151, %v11162
  %v11297 = vadd.f32 %v11152, %v11159
  %v11298 = vadd.f32 %v11153, %v11163
  %v11299 = vadd.f32 %v11154, %v11160
  %v11300 = vadd.f32 %v11155, %v11164
  %11301 = vrot.lane.b32.xlu0 %v8881, 96
  %v11302 = vpop.permute.xlu0 %11301
  %11303 = vrot.lane.b32.xlu0 %v8888, 96
  %v11304 = vpop.permute.xlu0 %11303
  %11305 = vrot.lane.b32.xlu0 %v8895, 96
  %v11306 = vpop.permute.xlu0 %11305
  %11307 = vrot.lane.b32.xlu0 %v8902, 96
  %v11308 = vpop.permute.xlu0 %11307
  %11309 = vrot.lane.b32.xlu0 %v8909, 96
  %v11310 = vpop.permute.xlu0 %11309
  %11311 = vrot.lane.b32.xlu0 %v8916, 96
  %v11312 = vpop.permute.xlu0 %11311
  %11313 = vrot.lane.b32.xlu0 %v8923, 96
  %v11314 = vpop.permute.xlu0 %11313
  %11315 = vrot.lane.b32.xlu0 %v8930, 96
  %v11316 = vpop.permute.xlu0 %11315
  %11317 = vrot.lane.b32.xlu0 %v8937, 96
  %v11318 = vpop.permute.xlu0 %11317
  %11319 = vrot.lane.b32.xlu0 %v8944, 96
  %v11320 = vpop.permute.xlu0 %11319
  %11321 = vrot.lane.b32.xlu0 %v8951, 96
  %v11322 = vpop.permute.xlu0 %11321
  %11323 = vrot.lane.b32.xlu0 %v8958, 96
  %v11324 = vpop.permute.xlu0 %11323
  %11325 = vrot.lane.b32.xlu0 %v8965, 96
  %v11326 = vpop.permute.xlu0 %11325
  %11327 = vrot.lane.b32.xlu0 %v8972, 96
  %v11328 = vpop.permute.xlu0 %11327
  %11329 = vrot.lane.b32.xlu0 %v8979, 96
  %v11330 = vpop.permute.xlu0 %11329
  %11331 = vrot.lane.b32.xlu0 %v8986, 96
  %v11332 = vpop.permute.xlu0 %11331
  %v11349 = vsel %vm9003, %v11302, 0.0
  %11350 = vadd.xlane.f32.xlu0 %v11349
  %v11351 = vpop.xlane.xlu0 %11350
  %v11352 = vsel %vm9003, %v11304, 0.0
  %11353 = vadd.xlane.f32.xlu0 %v11352
  %v11354 = vpop.xlane.xlu0 %11353
  %v11355 = vsel %vm9003, %v11306, 0.0
  %11356 = vadd.xlane.f32.xlu0 %v11355
  %v11357 = vpop.xlane.xlu0 %11356
  %v11358 = vsel %vm9003, %v11308, 0.0
  %11359 = vadd.xlane.f32.xlu0 %v11358
  %v11360 = vpop.xlane.xlu0 %11359
  %v11361 = vsel %vm9003, %v11310, 0.0
  %11362 = vadd.xlane.f32.xlu0 %v11361
  %v11363 = vpop.xlane.xlu0 %11362
  %v11364 = vsel %vm9003, %v11312, 0.0
  %11365 = vadd.xlane.f32.xlu0 %v11364
  %v11366 = vpop.xlane.xlu0 %11365
  %v11367 = vsel %vm9003, %v11314, 0.0
  %11368 = vadd.xlane.f32.xlu0 %v11367
  %v11369 = vpop.xlane.xlu0 %11368
  %v11370 = vsel %vm9003, %v11316, 0.0
  %11371 = vadd.xlane.f32.xlu0 %v11370
  %v11372 = vpop.xlane.xlu0 %11371
  %v11373 = vsel %vm9003, %v11318, 0.0
  %11374 = vadd.xlane.f32.xlu0 %v11373
  %v11375 = vpop.xlane.xlu0 %11374
  %v11376 = vsel %vm9003, %v11320, 0.0
  %11377 = vadd.xlane.f32.xlu0 %v11376
  %v11378 = vpop.xlane.xlu0 %11377
  %v11379 = vsel %vm9003, %v11322, 0.0
  %11380 = vadd.xlane.f32.xlu0 %v11379
  %v11381 = vpop.xlane.xlu0 %11380
  %v11382 = vsel %vm9003, %v11324, 0.0
  %11383 = vadd.xlane.f32.xlu0 %v11382
  %v11384 = vpop.xlane.xlu0 %11383
  %v11385 = vsel %vm9003, %v11326, 0.0
  %11386 = vadd.xlane.f32.xlu0 %v11385
  %v11387 = vpop.xlane.xlu0 %11386
  %v11388 = vsel %vm9003, %v11328, 0.0
  %11389 = vadd.xlane.f32.xlu0 %v11388
  %v11390 = vpop.xlane.xlu0 %11389
  %v11391 = vsel %vm9003, %v11330, 0.0
  %11392 = vadd.xlane.f32.xlu0 %v11391
  %v11393 = vpop.xlane.xlu0 %11392
  %v11394 = vsel %vm9003, %v11332, 0.0
  %11395 = vadd.xlane.f32.xlu0 %v11394
  %v11396 = vpop.xlane.xlu0 %11395
  %v11397 = vmul.f32 %v11351, %v9058
  %v11398 = vmul.f32 %v11354, %v9058
  %v11399 = vmul.f32 %v11357, %v9058
  %v11400 = vmul.f32 %v11360, %v9058
  %v11401 = vmul.f32 %v11363, %v9058
  %v11402 = vmul.f32 %v11366, %v9058
  %v11403 = vmul.f32 %v11369, %v9058
  %v11404 = vmul.f32 %v11372, %v9058
  %v11405 = vmul.f32 %v11375, %v9058
  %v11406 = vmul.f32 %v11378, %v9058
  %v11407 = vmul.f32 %v11381, %v9058
  %v11408 = vmul.f32 %v11384, %v9058
  %v11409 = vmul.f32 %v11387, %v9058
  %v11410 = vmul.f32 %v11390, %v9058
  %v11411 = vmul.f32 %v11393, %v9058
  %v11412 = vmul.f32 %v11396, %v9058
  %v11430 = vunpack.c.l.s4 269488144
  %v11431 = vunpack.c.0.s8 %v11430
  %v11432 = vperm.slane %v11397, %v11431
  %v11434 = vunpack.c.l.s4 842150450
  %v11435 = vunpack.c.0.s8 %v11434
  %v11436 = vperm.slane %v11397, %v11435
  %v11438 = vunpack.c.l.s4 1414812756
  %v11439 = vunpack.c.0.s8 %v11438
  %v11440 = vperm.slane %v11397, %v11439
  %v11442 = vunpack.c.l.s4 1987475062
  %v11443 = vunpack.c.0.s8 %v11442
  %v11444 = vperm.slane %v11397, %v11443
  %v11446 = vunpack.c.l.s4 269488144
  %v11447 = vunpack.c.0.s8 %v11446
  %v11448 = vperm.slane %v11398, %v11447
  %v11450 = vunpack.c.l.s4 842150450
  %v11451 = vunpack.c.0.s8 %v11450
  %v11452 = vperm.slane %v11398, %v11451
  %v11454 = vunpack.c.l.s4 1414812756
  %v11455 = vunpack.c.0.s8 %v11454
  %v11456 = vperm.slane %v11398, %v11455
  %v11458 = vunpack.c.l.s4 1987475062
  %v11459 = vunpack.c.0.s8 %v11458
  %v11460 = vperm.slane %v11398, %v11459
  %v11462 = vunpack.c.l.s4 269488144
  %v11463 = vunpack.c.0.s8 %v11462
  %v11464 = vperm.slane %v11399, %v11463
  %v11466 = vunpack.c.l.s4 842150450
  %v11467 = vunpack.c.0.s8 %v11466
  %v11468 = vperm.slane %v11399, %v11467
  %v11470 = vunpack.c.l.s4 1414812756
  %v11471 = vunpack.c.0.s8 %v11470
  %v11472 = vperm.slane %v11399, %v11471
  %v11474 = vunpack.c.l.s4 1987475062
  %v11475 = vunpack.c.0.s8 %v11474
  %v11476 = vperm.slane %v11399, %v11475
  %v11478 = vunpack.c.l.s4 269488144
  %v11479 = vunpack.c.0.s8 %v11478
  %v11480 = vperm.slane %v11400, %v11479
  %v11482 = vunpack.c.l.s4 842150450
  %v11483 = vunpack.c.0.s8 %v11482
  %v11484 = vperm.slane %v11400, %v11483
  %v11486 = vunpack.c.l.s4 1414812756
  %v11487 = vunpack.c.0.s8 %v11486
  %v11488 = vperm.slane %v11400, %v11487
  %v11490 = vunpack.c.l.s4 1987475062
  %v11491 = vunpack.c.0.s8 %v11490
  %v11492 = vperm.slane %v11400, %v11491
  %v11494 = vunpack.c.l.s4 269488144
  %v11495 = vunpack.c.0.s8 %v11494
  %v11496 = vperm.slane %v11401, %v11495
  %v11498 = vunpack.c.l.s4 842150450
  %v11499 = vunpack.c.0.s8 %v11498
  %v11500 = vperm.slane %v11401, %v11499
  %v11502 = vunpack.c.l.s4 1414812756
  %v11503 = vunpack.c.0.s8 %v11502
  %v11504 = vperm.slane %v11401, %v11503
  %v11506 = vunpack.c.l.s4 1987475062
  %v11507 = vunpack.c.0.s8 %v11506
  %v11508 = vperm.slane %v11401, %v11507
  %v11510 = vunpack.c.l.s4 269488144
  %v11511 = vunpack.c.0.s8 %v11510
  %v11512 = vperm.slane %v11402, %v11511
  %v11514 = vunpack.c.l.s4 842150450
  %v11515 = vunpack.c.0.s8 %v11514
  %v11516 = vperm.slane %v11402, %v11515
  %v11518 = vunpack.c.l.s4 1414812756
  %v11519 = vunpack.c.0.s8 %v11518
  %v11520 = vperm.slane %v11402, %v11519
  %v11522 = vunpack.c.l.s4 1987475062
  %v11523 = vunpack.c.0.s8 %v11522
  %v11524 = vperm.slane %v11402, %v11523
  %v11526 = vunpack.c.l.s4 269488144
  %v11527 = vunpack.c.0.s8 %v11526
  %v11528 = vperm.slane %v11403, %v11527
  %v11530 = vunpack.c.l.s4 842150450
  %v11531 = vunpack.c.0.s8 %v11530
  %v11532 = vperm.slane %v11403, %v11531
  %v11534 = vunpack.c.l.s4 1414812756
  %v11535 = vunpack.c.0.s8 %v11534
  %v11536 = vperm.slane %v11403, %v11535
  %v11538 = vunpack.c.l.s4 1987475062
  %v11539 = vunpack.c.0.s8 %v11538
  %v11540 = vperm.slane %v11403, %v11539
  %v11542 = vunpack.c.l.s4 269488144
  %v11543 = vunpack.c.0.s8 %v11542
  %v11544 = vperm.slane %v11404, %v11543
  %v11546 = vunpack.c.l.s4 842150450
  %v11547 = vunpack.c.0.s8 %v11546
  %v11548 = vperm.slane %v11404, %v11547
  %v11550 = vunpack.c.l.s4 1414812756
  %v11551 = vunpack.c.0.s8 %v11550
  %v11552 = vperm.slane %v11404, %v11551
  %v11554 = vunpack.c.l.s4 1987475062
  %v11555 = vunpack.c.0.s8 %v11554
  %v11556 = vperm.slane %v11404, %v11555
  %v11558 = vunpack.c.l.s4 269488144
  %v11559 = vunpack.c.0.s8 %v11558
  %v11560 = vperm.slane %v11405, %v11559
  %v11562 = vunpack.c.l.s4 842150450
  %v11563 = vunpack.c.0.s8 %v11562
  %v11564 = vperm.slane %v11405, %v11563
  %v11566 = vunpack.c.l.s4 1414812756
  %v11567 = vunpack.c.0.s8 %v11566
  %v11568 = vperm.slane %v11405, %v11567
  %v11570 = vunpack.c.l.s4 1987475062
  %v11571 = vunpack.c.0.s8 %v11570
  %v11572 = vperm.slane %v11405, %v11571
  %v11574 = vunpack.c.l.s4 269488144
  %v11575 = vunpack.c.0.s8 %v11574
  %v11576 = vperm.slane %v11406, %v11575
  %v11578 = vunpack.c.l.s4 842150450
  %v11579 = vunpack.c.0.s8 %v11578
  %v11580 = vperm.slane %v11406, %v11579
  %v11582 = vunpack.c.l.s4 1414812756
  %v11583 = vunpack.c.0.s8 %v11582
  %v11584 = vperm.slane %v11406, %v11583
  %v11586 = vunpack.c.l.s4 1987475062
  %v11587 = vunpack.c.0.s8 %v11586
  %v11588 = vperm.slane %v11406, %v11587
  %v11590 = vunpack.c.l.s4 269488144
  %v11591 = vunpack.c.0.s8 %v11590
  %v11592 = vperm.slane %v11407, %v11591
  %v11594 = vunpack.c.l.s4 842150450
  %v11595 = vunpack.c.0.s8 %v11594
  %v11596 = vperm.slane %v11407, %v11595
  %v11598 = vunpack.c.l.s4 1414812756
  %v11599 = vunpack.c.0.s8 %v11598
  %v11600 = vperm.slane %v11407, %v11599
  %v11602 = vunpack.c.l.s4 1987475062
  %v11603 = vunpack.c.0.s8 %v11602
  %v11604 = vperm.slane %v11407, %v11603
  %v11606 = vunpack.c.l.s4 269488144
  %v11607 = vunpack.c.0.s8 %v11606
  %v11608 = vperm.slane %v11408, %v11607
  %v11610 = vunpack.c.l.s4 842150450
  %v11611 = vunpack.c.0.s8 %v11610
  %v11612 = vperm.slane %v11408, %v11611
  %v11614 = vunpack.c.l.s4 1414812756
  %v11615 = vunpack.c.0.s8 %v11614
  %v11616 = vperm.slane %v11408, %v11615
  %v11618 = vunpack.c.l.s4 1987475062
  %v11619 = vunpack.c.0.s8 %v11618
  %v11620 = vperm.slane %v11408, %v11619
  %v11622 = vunpack.c.l.s4 269488144
  %v11623 = vunpack.c.0.s8 %v11622
  %v11624 = vperm.slane %v11409, %v11623
  %v11626 = vunpack.c.l.s4 842150450
  %v11627 = vunpack.c.0.s8 %v11626
  %v11628 = vperm.slane %v11409, %v11627
  %v11630 = vunpack.c.l.s4 1414812756
  %v11631 = vunpack.c.0.s8 %v11630
  %v11632 = vperm.slane %v11409, %v11631
  %v11634 = vunpack.c.l.s4 1987475062
  %v11635 = vunpack.c.0.s8 %v11634
  %v11636 = vperm.slane %v11409, %v11635
  %v11638 = vunpack.c.l.s4 269488144
  %v11639 = vunpack.c.0.s8 %v11638
  %v11640 = vperm.slane %v11410, %v11639
  %v11642 = vunpack.c.l.s4 842150450
  %v11643 = vunpack.c.0.s8 %v11642
  %v11644 = vperm.slane %v11410, %v11643
  %v11646 = vunpack.c.l.s4 1414812756
  %v11647 = vunpack.c.0.s8 %v11646
  %v11648 = vperm.slane %v11410, %v11647
  %v11650 = vunpack.c.l.s4 1987475062
  %v11651 = vunpack.c.0.s8 %v11650
  %v11652 = vperm.slane %v11410, %v11651
  %v11654 = vunpack.c.l.s4 269488144
  %v11655 = vunpack.c.0.s8 %v11654
  %v11656 = vperm.slane %v11411, %v11655
  %v11658 = vunpack.c.l.s4 842150450
  %v11659 = vunpack.c.0.s8 %v11658
  %v11660 = vperm.slane %v11411, %v11659
  %v11662 = vunpack.c.l.s4 1414812756
  %v11663 = vunpack.c.0.s8 %v11662
  %v11664 = vperm.slane %v11411, %v11663
  %v11666 = vunpack.c.l.s4 1987475062
  %v11667 = vunpack.c.0.s8 %v11666
  %v11668 = vperm.slane %v11411, %v11667
  %v11670 = vunpack.c.l.s4 269488144
  %v11671 = vunpack.c.0.s8 %v11670
  %v11672 = vperm.slane %v11412, %v11671
  %v11674 = vunpack.c.l.s4 842150450
  %v11675 = vunpack.c.0.s8 %v11674
  %v11676 = vperm.slane %v11412, %v11675
  %v11678 = vunpack.c.l.s4 1414812756
  %v11679 = vunpack.c.0.s8 %v11678
  %v11680 = vperm.slane %v11412, %v11679
  %v11682 = vunpack.c.l.s4 1987475062
  %v11683 = vunpack.c.0.s8 %v11682
  %v11684 = vperm.slane %v11412, %v11683
  %v11685 = vrot.slane %v11432, 1
  %v11686 = vrot.slane %v11436, 1
  %v11687 = vrot.slane %v11440, 1
  %v11688 = vrot.slane %v11444, 1
  %v11689 = vrot.slane %v11448, 1
  %v11690 = vrot.slane %v11452, 1
  %v11691 = vrot.slane %v11456, 1
  %v11692 = vrot.slane %v11460, 1
  %v11693 = vrot.slane %v11464, 1
  %v11694 = vrot.slane %v11468, 1
  %v11695 = vrot.slane %v11472, 1
  %v11696 = vrot.slane %v11476, 1
  %v11697 = vrot.slane %v11480, 1
  %v11698 = vrot.slane %v11484, 1
  %v11699 = vrot.slane %v11488, 1
  %v11700 = vrot.slane %v11492, 1
  %v11701 = vrot.slane %v11496, 1
  %v11702 = vrot.slane %v11500, 1
  %v11703 = vrot.slane %v11504, 1
  %v11704 = vrot.slane %v11508, 1
  %v11705 = vrot.slane %v11512, 1
  %v11706 = vrot.slane %v11516, 1
  %v11707 = vrot.slane %v11520, 1
  %v11708 = vrot.slane %v11524, 1
  %v11709 = vrot.slane %v11528, 1
  %v11710 = vrot.slane %v11532, 1
  %v11711 = vrot.slane %v11536, 1
  %v11712 = vrot.slane %v11540, 1
  %v11713 = vrot.slane %v11544, 1
  %v11714 = vrot.slane %v11548, 1
  %v11715 = vrot.slane %v11552, 1
  %v11716 = vrot.slane %v11556, 1
  %v11717 = vrot.slane %v11560, 1
  %v11718 = vrot.slane %v11564, 1
  %v11719 = vrot.slane %v11568, 1
  %v11720 = vrot.slane %v11572, 1
  %v11721 = vrot.slane %v11576, 1
  %v11722 = vrot.slane %v11580, 1
  %v11723 = vrot.slane %v11584, 1
  %v11724 = vrot.slane %v11588, 1
  %v11725 = vrot.slane %v11592, 1
  %v11726 = vrot.slane %v11596, 1
  %v11727 = vrot.slane %v11600, 1
  %v11728 = vrot.slane %v11604, 1
  %v11729 = vrot.slane %v11608, 1
  %v11730 = vrot.slane %v11612, 1
  %v11731 = vrot.slane %v11616, 1
  %v11732 = vrot.slane %v11620, 1
  %v11733 = vrot.slane %v11624, 1
  %v11734 = vrot.slane %v11628, 1
  %v11735 = vrot.slane %v11632, 1
  %v11736 = vrot.slane %v11636, 1
  %v11737 = vrot.slane %v11640, 1
  %v11738 = vrot.slane %v11644, 1
  %v11739 = vrot.slane %v11648, 1
  %v11740 = vrot.slane %v11652, 1
  %v11741 = vrot.slane %v11656, 1
  %v11742 = vrot.slane %v11660, 1
  %v11743 = vrot.slane %v11664, 1
  %v11744 = vrot.slane %v11668, 1
  %v11745 = vrot.slane %v11672, 1
  %v11746 = vrot.slane %v11676, 1
  %v11747 = vrot.slane %v11680, 1
  %v11748 = vrot.slane %v11684, 1
  %v11877 = vsub.f32 %v8482, %v11432
  %v11878 = vsub.f32 %v8483, %v11685
  %v11879 = vsub.f32 %v8484, %v11436
  %v11880 = vsub.f32 %v8485, %v11686
  %v11881 = vsub.f32 %v8486, %v11440
  %v11882 = vsub.f32 %v8487, %v11687
  %v11883 = vsub.f32 %v8488, %v11444
  %v11884 = vsub.f32 %v8489, %v11688
  %v11885 = vsub.f32 %v8490, %v11448
  %v11886 = vsub.f32 %v8491, %v11689
  %v11887 = vsub.f32 %v8492, %v11452
  %v11888 = vsub.f32 %v8493, %v11690
  %v11889 = vsub.f32 %v8494, %v11456
  %v11890 = vsub.f32 %v8495, %v11691
  %v11891 = vsub.f32 %v8496, %v11460
  %v11892 = vsub.f32 %v8497, %v11692
  %v11893 = vsub.f32 %v8498, %v11464
  %v11894 = vsub.f32 %v8499, %v11693
  %v11895 = vsub.f32 %v8500, %v11468
  %v11896 = vsub.f32 %v8501, %v11694
  %v11897 = vsub.f32 %v8502, %v11472
  %v11898 = vsub.f32 %v8503, %v11695
  %v11899 = vsub.f32 %v8504, %v11476
  %v11900 = vsub.f32 %v8505, %v11696
  %v11901 = vsub.f32 %v8506, %v11480
  %v11902 = vsub.f32 %v8507, %v11697
  %v11903 = vsub.f32 %v8508, %v11484
  %v11904 = vsub.f32 %v8509, %v11698
  %v11905 = vsub.f32 %v8510, %v11488
  %v11906 = vsub.f32 %v8511, %v11699
  %v11907 = vsub.f32 %v8512, %v11492
  %v11908 = vsub.f32 %v8513, %v11700
  %v11909 = vsub.f32 %v8514, %v11496
  %v11910 = vsub.f32 %v8515, %v11701
  %v11911 = vsub.f32 %v8516, %v11500
  %v11912 = vsub.f32 %v8517, %v11702
  %v11913 = vsub.f32 %v8518, %v11504
  %v11914 = vsub.f32 %v8519, %v11703
  %v11915 = vsub.f32 %v8520, %v11508
  %v11916 = vsub.f32 %v8521, %v11704
  %v11917 = vsub.f32 %v8522, %v11512
  %v11918 = vsub.f32 %v8523, %v11705
  %v11919 = vsub.f32 %v8524, %v11516
  %v11920 = vsub.f32 %v8525, %v11706
  %v11921 = vsub.f32 %v8526, %v11520
  %v11922 = vsub.f32 %v8527, %v11707
  %v11923 = vsub.f32 %v8528, %v11524
  %v11924 = vsub.f32 %v8529, %v11708
  %v11925 = vsub.f32 %v8530, %v11528
  %v11926 = vsub.f32 %v8531, %v11709
  %v11927 = vsub.f32 %v8532, %v11532
  %v11928 = vsub.f32 %v8533, %v11710
  %v11929 = vsub.f32 %v8534, %v11536
  %v11930 = vsub.f32 %v8535, %v11711
  %v11931 = vsub.f32 %v8536, %v11540
  %v11932 = vsub.f32 %v8537, %v11712
  %v11933 = vsub.f32 %v8538, %v11544
  %v11934 = vsub.f32 %v8539, %v11713
  %v11935 = vsub.f32 %v8540, %v11548
  %v11936 = vsub.f32 %v8541, %v11714
  %v11937 = vsub.f32 %v8542, %v11552
  %v11938 = vsub.f32 %v8543, %v11715
  %v11939 = vsub.f32 %v8544, %v11556
  %v11940 = vsub.f32 %v8545, %v11716
  %v11941 = vsub.f32 %v8546, %v11560
  %v11942 = vsub.f32 %v8547, %v11717
  %v11943 = vsub.f32 %v8548, %v11564
  %v11944 = vsub.f32 %v8549, %v11718
  %v11945 = vsub.f32 %v8550, %v11568
  %v11946 = vsub.f32 %v8551, %v11719
  %v11947 = vsub.f32 %v8552, %v11572
  %v11948 = vsub.f32 %v8553, %v11720
  %v11949 = vsub.f32 %v8554, %v11576
  %v11950 = vsub.f32 %v8555, %v11721
  %v11951 = vsub.f32 %v8556, %v11580
  %v11952 = vsub.f32 %v8557, %v11722
  %v11953 = vsub.f32 %v8558, %v11584
  %v11954 = vsub.f32 %v8559, %v11723
  %v11955 = vsub.f32 %v8560, %v11588
  %v11956 = vsub.f32 %v8561, %v11724
  %v11957 = vsub.f32 %v8562, %v11592
  %v11958 = vsub.f32 %v8563, %v11725
  %v11959 = vsub.f32 %v8564, %v11596
  %v11960 = vsub.f32 %v8565, %v11726
  %v11961 = vsub.f32 %v8566, %v11600
  %v11962 = vsub.f32 %v8567, %v11727
  %v11963 = vsub.f32 %v8568, %v11604
  %v11964 = vsub.f32 %v8569, %v11728
  %v11965 = vsub.f32 %v8570, %v11608
  %v11966 = vsub.f32 %v8571, %v11729
  %v11967 = vsub.f32 %v8572, %v11612
  %v11968 = vsub.f32 %v8573, %v11730
  %v11969 = vsub.f32 %v8574, %v11616
  %v11970 = vsub.f32 %v8575, %v11731
  %v11971 = vsub.f32 %v8576, %v11620
  %v11972 = vsub.f32 %v8577, %v11732
  %v11973 = vsub.f32 %v8578, %v11624
  %v11974 = vsub.f32 %v8579, %v11733
  %v11975 = vsub.f32 %v8580, %v11628
  %v11976 = vsub.f32 %v8581, %v11734
  %v11977 = vsub.f32 %v8582, %v11632
  %v11978 = vsub.f32 %v8583, %v11735
  %v11979 = vsub.f32 %v8584, %v11636
  %v11980 = vsub.f32 %v8585, %v11736
  %v11981 = vsub.f32 %v8586, %v11640
  %v11982 = vsub.f32 %v8587, %v11737
  %v11983 = vsub.f32 %v8588, %v11644
  %v11984 = vsub.f32 %v8589, %v11738
  %v11985 = vsub.f32 %v8590, %v11648
  %v11986 = vsub.f32 %v8591, %v11739
  %v11987 = vsub.f32 %v8592, %v11652
  %v11988 = vsub.f32 %v8593, %v11740
  %v11989 = vsub.f32 %v8594, %v11656
  %v11990 = vsub.f32 %v8595, %v11741
  %v11991 = vsub.f32 %v8596, %v11660
  %v11992 = vsub.f32 %v8597, %v11742
  %v11993 = vsub.f32 %v8598, %v11664
  %v11994 = vsub.f32 %v8599, %v11743
  %v11995 = vsub.f32 %v8600, %v11668
  %v11996 = vsub.f32 %v8601, %v11744
  %v11997 = vsub.f32 %v8602, %v11672
  %v11998 = vsub.f32 %v8603, %v11745
  %v11999 = vsub.f32 %v8604, %v11676
  %v12000 = vsub.f32 %v8605, %v11746
  %v12001 = vsub.f32 %v8606, %v11680
  %v12002 = vsub.f32 %v8607, %v11747
  %v12003 = vsub.f32 %v8608, %v11684
  %v12004 = vsub.f32 %v8609, %v11748
  %v12005 = vmul.f32 %v11877, %v11877
  %v12006 = vmul.f32 %v11878, %v11878
  %v12007 = vmul.f32 %v11879, %v11879
  %v12008 = vmul.f32 %v11880, %v11880
  %v12009 = vmul.f32 %v11881, %v11881
  %v12010 = vmul.f32 %v11882, %v11882
  %v12011 = vmul.f32 %v11883, %v11883
  %v12012 = vmul.f32 %v11884, %v11884
  %v12013 = vmul.f32 %v11885, %v11885
  %v12014 = vmul.f32 %v11886, %v11886
  %v12015 = vmul.f32 %v11887, %v11887
  %v12016 = vmul.f32 %v11888, %v11888
  %v12017 = vmul.f32 %v11889, %v11889
  %v12018 = vmul.f32 %v11890, %v11890
  %v12019 = vmul.f32 %v11891, %v11891
  %v12020 = vmul.f32 %v11892, %v11892
  %v12021 = vmul.f32 %v11893, %v11893
  %v12022 = vmul.f32 %v11894, %v11894
  %v12023 = vmul.f32 %v11895, %v11895
  %v12024 = vmul.f32 %v11896, %v11896
  %v12025 = vmul.f32 %v11897, %v11897
  %v12026 = vmul.f32 %v11898, %v11898
  %v12027 = vmul.f32 %v11899, %v11899
  %v12028 = vmul.f32 %v11900, %v11900
  %v12029 = vmul.f32 %v11901, %v11901
  %v12030 = vmul.f32 %v11902, %v11902
  %v12031 = vmul.f32 %v11903, %v11903
  %v12032 = vmul.f32 %v11904, %v11904
  %v12033 = vmul.f32 %v11905, %v11905
  %v12034 = vmul.f32 %v11906, %v11906
  %v12035 = vmul.f32 %v11907, %v11907
  %v12036 = vmul.f32 %v11908, %v11908
  %v12037 = vmul.f32 %v11909, %v11909
  %v12038 = vmul.f32 %v11910, %v11910
  %v12039 = vmul.f32 %v11911, %v11911
  %v12040 = vmul.f32 %v11912, %v11912
  %v12041 = vmul.f32 %v11913, %v11913
  %v12042 = vmul.f32 %v11914, %v11914
  %v12043 = vmul.f32 %v11915, %v11915
  %v12044 = vmul.f32 %v11916, %v11916
  %v12045 = vmul.f32 %v11917, %v11917
  %v12046 = vmul.f32 %v11918, %v11918
  %v12047 = vmul.f32 %v11919, %v11919
  %v12048 = vmul.f32 %v11920, %v11920
  %v12049 = vmul.f32 %v11921, %v11921
  %v12050 = vmul.f32 %v11922, %v11922
  %v12051 = vmul.f32 %v11923, %v11923
  %v12052 = vmul.f32 %v11924, %v11924
  %v12053 = vmul.f32 %v11925, %v11925
  %v12054 = vmul.f32 %v11926, %v11926
  %v12055 = vmul.f32 %v11927, %v11927
  %v12056 = vmul.f32 %v11928, %v11928
  %v12057 = vmul.f32 %v11929, %v11929
  %v12058 = vmul.f32 %v11930, %v11930
  %v12059 = vmul.f32 %v11931, %v11931
  %v12060 = vmul.f32 %v11932, %v11932
  %v12061 = vmul.f32 %v11933, %v11933
  %v12062 = vmul.f32 %v11934, %v11934
  %v12063 = vmul.f32 %v11935, %v11935
  %v12064 = vmul.f32 %v11936, %v11936
  %v12065 = vmul.f32 %v11937, %v11937
  %v12066 = vmul.f32 %v11938, %v11938
  %v12067 = vmul.f32 %v11939, %v11939
  %v12068 = vmul.f32 %v11940, %v11940
  %v12069 = vmul.f32 %v11941, %v11941
  %v12070 = vmul.f32 %v11942, %v11942
  %v12071 = vmul.f32 %v11943, %v11943
  %v12072 = vmul.f32 %v11944, %v11944
  %v12073 = vmul.f32 %v11945, %v11945
  %v12074 = vmul.f32 %v11946, %v11946
  %v12075 = vmul.f32 %v11947, %v11947
  %v12076 = vmul.f32 %v11948, %v11948
  %v12077 = vmul.f32 %v11949, %v11949
  %v12078 = vmul.f32 %v11950, %v11950
  %v12079 = vmul.f32 %v11951, %v11951
  %v12080 = vmul.f32 %v11952, %v11952
  %v12081 = vmul.f32 %v11953, %v11953
  %v12082 = vmul.f32 %v11954, %v11954
  %v12083 = vmul.f32 %v11955, %v11955
  %v12084 = vmul.f32 %v11956, %v11956
  %v12085 = vmul.f32 %v11957, %v11957
  %v12086 = vmul.f32 %v11958, %v11958
  %v12087 = vmul.f32 %v11959, %v11959
  %v12088 = vmul.f32 %v11960, %v11960
  %v12089 = vmul.f32 %v11961, %v11961
  %v12090 = vmul.f32 %v11962, %v11962
  %v12091 = vmul.f32 %v11963, %v11963
  %v12092 = vmul.f32 %v11964, %v11964
  %v12093 = vmul.f32 %v11965, %v11965
  %v12094 = vmul.f32 %v11966, %v11966
  %v12095 = vmul.f32 %v11967, %v11967
  %v12096 = vmul.f32 %v11968, %v11968
  %v12097 = vmul.f32 %v11969, %v11969
  %v12098 = vmul.f32 %v11970, %v11970
  %v12099 = vmul.f32 %v11971, %v11971
  %v12100 = vmul.f32 %v11972, %v11972
  %v12101 = vmul.f32 %v11973, %v11973
  %v12102 = vmul.f32 %v11974, %v11974
  %v12103 = vmul.f32 %v11975, %v11975
  %v12104 = vmul.f32 %v11976, %v11976
  %v12105 = vmul.f32 %v11977, %v11977
  %v12106 = vmul.f32 %v11978, %v11978
  %v12107 = vmul.f32 %v11979, %v11979
  %v12108 = vmul.f32 %v11980, %v11980
  %v12109 = vmul.f32 %v11981, %v11981
  %v12110 = vmul.f32 %v11982, %v11982
  %v12111 = vmul.f32 %v11983, %v11983
  %v12112 = vmul.f32 %v11984, %v11984
  %v12113 = vmul.f32 %v11985, %v11985
  %v12114 = vmul.f32 %v11986, %v11986
  %v12115 = vmul.f32 %v11987, %v11987
  %v12116 = vmul.f32 %v11988, %v11988
  %v12117 = vmul.f32 %v11989, %v11989
  %v12118 = vmul.f32 %v11990, %v11990
  %v12119 = vmul.f32 %v11991, %v11991
  %v12120 = vmul.f32 %v11992, %v11992
  %v12121 = vmul.f32 %v11993, %v11993
  %v12122 = vmul.f32 %v11994, %v11994
  %v12123 = vmul.f32 %v11995, %v11995
  %v12124 = vmul.f32 %v11996, %v11996
  %v12125 = vmul.f32 %v11997, %v11997
  %v12126 = vmul.f32 %v11998, %v11998
  %v12127 = vmul.f32 %v11999, %v11999
  %v12128 = vmul.f32 %v12000, %v12000
  %v12129 = vmul.f32 %v12001, %v12001
  %v12130 = vmul.f32 %v12002, %v12002
  %v12131 = vmul.f32 %v12003, %v12003
  %v12132 = vmul.f32 %v12004, %v12004
  %v12261 = vperm.slane %v12005, 0
  %v12262 = vperm.slane %v12006, 0
  %v12263 = vperm.slane %v12007, 0
  %v12264 = vperm.slane %v12008, 0
  %v12265 = vperm.slane %v12009, 0
  %v12266 = vperm.slane %v12010, 0
  %v12267 = vperm.slane %v12011, 0
  %v12268 = vperm.slane %v12012, 0
  %v12269 = vperm.slane %v12013, 0
  %v12270 = vperm.slane %v12014, 0
  %v12271 = vperm.slane %v12015, 0
  %v12272 = vperm.slane %v12016, 0
  %v12273 = vperm.slane %v12017, 0
  %v12274 = vperm.slane %v12018, 0
  %v12275 = vperm.slane %v12019, 0
  %v12276 = vperm.slane %v12020, 0
  %v12277 = vperm.slane %v12021, 0
  %v12278 = vperm.slane %v12022, 0
  %v12279 = vperm.slane %v12023, 0
  %v12280 = vperm.slane %v12024, 0
  %v12281 = vperm.slane %v12025, 0
  %v12282 = vperm.slane %v12026, 0
  %v12283 = vperm.slane %v12027, 0
  %v12284 = vperm.slane %v12028, 0
  %v12285 = vperm.slane %v12029, 0
  %v12286 = vperm.slane %v12030, 0
  %v12287 = vperm.slane %v12031, 0
  %v12288 = vperm.slane %v12032, 0
  %v12289 = vperm.slane %v12033, 0
  %v12290 = vperm.slane %v12034, 0
  %v12291 = vperm.slane %v12035, 0
  %v12292 = vperm.slane %v12036, 0
  %v12293 = vperm.slane %v12037, 0
  %v12294 = vperm.slane %v12038, 0
  %v12295 = vperm.slane %v12039, 0
  %v12296 = vperm.slane %v12040, 0
  %v12297 = vperm.slane %v12041, 0
  %v12298 = vperm.slane %v12042, 0
  %v12299 = vperm.slane %v12043, 0
  %v12300 = vperm.slane %v12044, 0
  %v12301 = vperm.slane %v12045, 0
  %v12302 = vperm.slane %v12046, 0
  %v12303 = vperm.slane %v12047, 0
  %v12304 = vperm.slane %v12048, 0
  %v12305 = vperm.slane %v12049, 0
  %v12306 = vperm.slane %v12050, 0
  %v12307 = vperm.slane %v12051, 0
  %v12308 = vperm.slane %v12052, 0
  %v12309 = vperm.slane %v12053, 0
  %v12310 = vperm.slane %v12054, 0
  %v12311 = vperm.slane %v12055, 0
  %v12312 = vperm.slane %v12056, 0
  %v12313 = vperm.slane %v12057, 0
  %v12314 = vperm.slane %v12058, 0
  %v12315 = vperm.slane %v12059, 0
  %v12316 = vperm.slane %v12060, 0
  %v12317 = vperm.slane %v12061, 0
  %v12318 = vperm.slane %v12062, 0
  %v12319 = vperm.slane %v12063, 0
  %v12320 = vperm.slane %v12064, 0
  %v12321 = vperm.slane %v12065, 0
  %v12322 = vperm.slane %v12066, 0
  %v12323 = vperm.slane %v12067, 0
  %v12324 = vperm.slane %v12068, 0
  %v12325 = vperm.slane %v12069, 0
  %v12326 = vperm.slane %v12070, 0
  %v12327 = vperm.slane %v12071, 0
  %v12328 = vperm.slane %v12072, 0
  %v12329 = vperm.slane %v12073, 0
  %v12330 = vperm.slane %v12074, 0
  %v12331 = vperm.slane %v12075, 0
  %v12332 = vperm.slane %v12076, 0
  %v12333 = vperm.slane %v12077, 0
  %v12334 = vperm.slane %v12078, 0
  %v12335 = vperm.slane %v12079, 0
  %v12336 = vperm.slane %v12080, 0
  %v12337 = vperm.slane %v12081, 0
  %v12338 = vperm.slane %v12082, 0
  %v12339 = vperm.slane %v12083, 0
  %v12340 = vperm.slane %v12084, 0
  %v12341 = vperm.slane %v12085, 0
  %v12342 = vperm.slane %v12086, 0
  %v12343 = vperm.slane %v12087, 0
  %v12344 = vperm.slane %v12088, 0
  %v12345 = vperm.slane %v12089, 0
  %v12346 = vperm.slane %v12090, 0
  %v12347 = vperm.slane %v12091, 0
  %v12348 = vperm.slane %v12092, 0
  %v12349 = vperm.slane %v12093, 0
  %v12350 = vperm.slane %v12094, 0
  %v12351 = vperm.slane %v12095, 0
  %v12352 = vperm.slane %v12096, 0
  %v12353 = vperm.slane %v12097, 0
  %v12354 = vperm.slane %v12098, 0
  %v12355 = vperm.slane %v12099, 0
  %v12356 = vperm.slane %v12100, 0
  %v12357 = vperm.slane %v12101, 0
  %v12358 = vperm.slane %v12102, 0
  %v12359 = vperm.slane %v12103, 0
  %v12360 = vperm.slane %v12104, 0
  %v12361 = vperm.slane %v12105, 0
  %v12362 = vperm.slane %v12106, 0
  %v12363 = vperm.slane %v12107, 0
  %v12364 = vperm.slane %v12108, 0
  %v12365 = vperm.slane %v12109, 0
  %v12366 = vperm.slane %v12110, 0
  %v12367 = vperm.slane %v12111, 0
  %v12368 = vperm.slane %v12112, 0
  %v12369 = vperm.slane %v12113, 0
  %v12370 = vperm.slane %v12114, 0
  %v12371 = vperm.slane %v12115, 0
  %v12372 = vperm.slane %v12116, 0
  %v12373 = vperm.slane %v12117, 0
  %v12374 = vperm.slane %v12118, 0
  %v12375 = vperm.slane %v12119, 0
  %v12376 = vperm.slane %v12120, 0
  %v12377 = vperm.slane %v12121, 0
  %v12378 = vperm.slane %v12122, 0
  %v12379 = vperm.slane %v12123, 0
  %v12380 = vperm.slane %v12124, 0
  %v12381 = vperm.slane %v12125, 0
  %v12382 = vperm.slane %v12126, 0
  %v12383 = vperm.slane %v12127, 0
  %v12384 = vperm.slane %v12128, 0
  %v12385 = vperm.slane %v12129, 0
  %v12386 = vperm.slane %v12130, 0
  %v12387 = vperm.slane %v12131, 0
  %v12388 = vperm.slane %v12132, 0
  %v12389 = vsel %vm8868, %v12262, %v12261
  %v12390 = vsel %vm8870, %v12263, %v12389
  %v12391 = vsel %vm8872, %v12264, %v12390
  %v12392 = vsel %vm8874, %v12265, %v12391
  %v12393 = vsel %vm8876, %v12266, %v12392
  %v12394 = vsel %vm8878, %v12267, %v12393
  %v12395 = vsel %vm8880, %v12268, %v12394
  %v12396 = vsel %vm8868, %v12270, %v12269
  %v12397 = vsel %vm8870, %v12271, %v12396
  %v12398 = vsel %vm8872, %v12272, %v12397
  %v12399 = vsel %vm8874, %v12273, %v12398
  %v12400 = vsel %vm8876, %v12274, %v12399
  %v12401 = vsel %vm8878, %v12275, %v12400
  %v12402 = vsel %vm8880, %v12276, %v12401
  %v12403 = vsel %vm8868, %v12278, %v12277
  %v12404 = vsel %vm8870, %v12279, %v12403
  %v12405 = vsel %vm8872, %v12280, %v12404
  %v12406 = vsel %vm8874, %v12281, %v12405
  %v12407 = vsel %vm8876, %v12282, %v12406
  %v12408 = vsel %vm8878, %v12283, %v12407
  %v12409 = vsel %vm8880, %v12284, %v12408
  %v12410 = vsel %vm8868, %v12286, %v12285
  %v12411 = vsel %vm8870, %v12287, %v12410
  %v12412 = vsel %vm8872, %v12288, %v12411
  %v12413 = vsel %vm8874, %v12289, %v12412
  %v12414 = vsel %vm8876, %v12290, %v12413
  %v12415 = vsel %vm8878, %v12291, %v12414
  %v12416 = vsel %vm8880, %v12292, %v12415
  %v12417 = vsel %vm8868, %v12294, %v12293
  %v12418 = vsel %vm8870, %v12295, %v12417
  %v12419 = vsel %vm8872, %v12296, %v12418
  %v12420 = vsel %vm8874, %v12297, %v12419
  %v12421 = vsel %vm8876, %v12298, %v12420
  %v12422 = vsel %vm8878, %v12299, %v12421
  %v12423 = vsel %vm8880, %v12300, %v12422
  %v12424 = vsel %vm8868, %v12302, %v12301
  %v12425 = vsel %vm8870, %v12303, %v12424
  %v12426 = vsel %vm8872, %v12304, %v12425
  %v12427 = vsel %vm8874, %v12305, %v12426
  %v12428 = vsel %vm8876, %v12306, %v12427
  %v12429 = vsel %vm8878, %v12307, %v12428
  %v12430 = vsel %vm8880, %v12308, %v12429
  %v12431 = vsel %vm8868, %v12310, %v12309
  %v12432 = vsel %vm8870, %v12311, %v12431
  %v12433 = vsel %vm8872, %v12312, %v12432
  %v12434 = vsel %vm8874, %v12313, %v12433
  %v12435 = vsel %vm8876, %v12314, %v12434
  %v12436 = vsel %vm8878, %v12315, %v12435
  %v12437 = vsel %vm8880, %v12316, %v12436
  %v12438 = vsel %vm8868, %v12318, %v12317
  %v12439 = vsel %vm8870, %v12319, %v12438
  %v12440 = vsel %vm8872, %v12320, %v12439
  %v12441 = vsel %vm8874, %v12321, %v12440
  %v12442 = vsel %vm8876, %v12322, %v12441
  %v12443 = vsel %vm8878, %v12323, %v12442
  %v12444 = vsel %vm8880, %v12324, %v12443
  %v12445 = vsel %vm8868, %v12326, %v12325
  %v12446 = vsel %vm8870, %v12327, %v12445
  %v12447 = vsel %vm8872, %v12328, %v12446
  %v12448 = vsel %vm8874, %v12329, %v12447
  %v12449 = vsel %vm8876, %v12330, %v12448
  %v12450 = vsel %vm8878, %v12331, %v12449
  %v12451 = vsel %vm8880, %v12332, %v12450
  %v12452 = vsel %vm8868, %v12334, %v12333
  %v12453 = vsel %vm8870, %v12335, %v12452
  %v12454 = vsel %vm8872, %v12336, %v12453
  %v12455 = vsel %vm8874, %v12337, %v12454
  %v12456 = vsel %vm8876, %v12338, %v12455
  %v12457 = vsel %vm8878, %v12339, %v12456
  %v12458 = vsel %vm8880, %v12340, %v12457
  %v12459 = vsel %vm8868, %v12342, %v12341
  %v12460 = vsel %vm8870, %v12343, %v12459
  %v12461 = vsel %vm8872, %v12344, %v12460
  %v12462 = vsel %vm8874, %v12345, %v12461
  %v12463 = vsel %vm8876, %v12346, %v12462
  %v12464 = vsel %vm8878, %v12347, %v12463
  %v12465 = vsel %vm8880, %v12348, %v12464
  %v12466 = vsel %vm8868, %v12350, %v12349
  %v12467 = vsel %vm8870, %v12351, %v12466
  %v12468 = vsel %vm8872, %v12352, %v12467
  %v12469 = vsel %vm8874, %v12353, %v12468
  %v12470 = vsel %vm8876, %v12354, %v12469
  %v12471 = vsel %vm8878, %v12355, %v12470
  %v12472 = vsel %vm8880, %v12356, %v12471
  %v12473 = vsel %vm8868, %v12358, %v12357
  %v12474 = vsel %vm8870, %v12359, %v12473
  %v12475 = vsel %vm8872, %v12360, %v12474
  %v12476 = vsel %vm8874, %v12361, %v12475
  %v12477 = vsel %vm8876, %v12362, %v12476
  %v12478 = vsel %vm8878, %v12363, %v12477
  %v12479 = vsel %vm8880, %v12364, %v12478
  %v12480 = vsel %vm8868, %v12366, %v12365
  %v12481 = vsel %vm8870, %v12367, %v12480
  %v12482 = vsel %vm8872, %v12368, %v12481
  %v12483 = vsel %vm8874, %v12369, %v12482
  %v12484 = vsel %vm8876, %v12370, %v12483
  %v12485 = vsel %vm8878, %v12371, %v12484
  %v12486 = vsel %vm8880, %v12372, %v12485
  %v12487 = vsel %vm8868, %v12374, %v12373
  %v12488 = vsel %vm8870, %v12375, %v12487
  %v12489 = vsel %vm8872, %v12376, %v12488
  %v12490 = vsel %vm8874, %v12377, %v12489
  %v12491 = vsel %vm8876, %v12378, %v12490
  %v12492 = vsel %vm8878, %v12379, %v12491
  %v12493 = vsel %vm8880, %v12380, %v12492
  %v12494 = vsel %vm8868, %v12382, %v12381
  %v12495 = vsel %vm8870, %v12383, %v12494
  %v12496 = vsel %vm8872, %v12384, %v12495
  %v12497 = vsel %vm8874, %v12385, %v12496
  %v12498 = vsel %vm8876, %v12386, %v12497
  %v12499 = vsel %vm8878, %v12387, %v12498
  %v12500 = vsel %vm8880, %v12388, %v12499
  %12501 = vrot.lane.b32.xlu0 %v12395, 96
  %v12502 = vpop.permute.xlu0 %12501
  %12503 = vrot.lane.b32.xlu0 %v12402, 96
  %v12504 = vpop.permute.xlu0 %12503
  %12505 = vrot.lane.b32.xlu0 %v12409, 96
  %v12506 = vpop.permute.xlu0 %12505
  %12507 = vrot.lane.b32.xlu0 %v12416, 96
  %v12508 = vpop.permute.xlu0 %12507
  %12509 = vrot.lane.b32.xlu0 %v12423, 96
  %v12510 = vpop.permute.xlu0 %12509
  %12511 = vrot.lane.b32.xlu0 %v12430, 96
  %v12512 = vpop.permute.xlu0 %12511
  %12513 = vrot.lane.b32.xlu0 %v12437, 96
  %v12514 = vpop.permute.xlu0 %12513
  %12515 = vrot.lane.b32.xlu0 %v12444, 96
  %v12516 = vpop.permute.xlu0 %12515
  %12517 = vrot.lane.b32.xlu0 %v12451, 96
  %v12518 = vpop.permute.xlu0 %12517
  %12519 = vrot.lane.b32.xlu0 %v12458, 96
  %v12520 = vpop.permute.xlu0 %12519
  %12521 = vrot.lane.b32.xlu0 %v12465, 96
  %v12522 = vpop.permute.xlu0 %12521
  %12523 = vrot.lane.b32.xlu0 %v12472, 96
  %v12524 = vpop.permute.xlu0 %12523
  %12525 = vrot.lane.b32.xlu0 %v12479, 96
  %v12526 = vpop.permute.xlu0 %12525
  %12527 = vrot.lane.b32.xlu0 %v12486, 96
  %v12528 = vpop.permute.xlu0 %12527
  %12529 = vrot.lane.b32.xlu0 %v12493, 96
  %v12530 = vpop.permute.xlu0 %12529
  %12531 = vrot.lane.b32.xlu0 %v12500, 96
  %v12532 = vpop.permute.xlu0 %12531
  %v12549 = vsel %vm9003, %v12502, 0.0
  %12550 = vadd.xlane.f32.xlu0 %v12549
  %v12551 = vpop.xlane.xlu0 %12550
  %v12552 = vsel %vm9003, %v12504, 0.0
  %12553 = vadd.xlane.f32.xlu0 %v12552
  %v12554 = vpop.xlane.xlu0 %12553
  %v12555 = vsel %vm9003, %v12506, 0.0
  %12556 = vadd.xlane.f32.xlu0 %v12555
  %v12557 = vpop.xlane.xlu0 %12556
  %v12558 = vsel %vm9003, %v12508, 0.0
  %12559 = vadd.xlane.f32.xlu0 %v12558
  %v12560 = vpop.xlane.xlu0 %12559
  %v12561 = vsel %vm9003, %v12510, 0.0
  %12562 = vadd.xlane.f32.xlu0 %v12561
  %v12563 = vpop.xlane.xlu0 %12562
  %v12564 = vsel %vm9003, %v12512, 0.0
  %12565 = vadd.xlane.f32.xlu0 %v12564
  %v12566 = vpop.xlane.xlu0 %12565
  %v12567 = vsel %vm9003, %v12514, 0.0
  %12568 = vadd.xlane.f32.xlu0 %v12567
  %v12569 = vpop.xlane.xlu0 %12568
  %v12570 = vsel %vm9003, %v12516, 0.0
  %12571 = vadd.xlane.f32.xlu0 %v12570
  %v12572 = vpop.xlane.xlu0 %12571
  %v12573 = vsel %vm9003, %v12518, 0.0
  %12574 = vadd.xlane.f32.xlu0 %v12573
  %v12575 = vpop.xlane.xlu0 %12574
  %v12576 = vsel %vm9003, %v12520, 0.0
  %12577 = vadd.xlane.f32.xlu0 %v12576
  %v12578 = vpop.xlane.xlu0 %12577
  %v12579 = vsel %vm9003, %v12522, 0.0
  %12580 = vadd.xlane.f32.xlu0 %v12579
  %v12581 = vpop.xlane.xlu0 %12580
  %v12582 = vsel %vm9003, %v12524, 0.0
  %12583 = vadd.xlane.f32.xlu0 %v12582
  %v12584 = vpop.xlane.xlu0 %12583
  %v12585 = vsel %vm9003, %v12526, 0.0
  %12586 = vadd.xlane.f32.xlu0 %v12585
  %v12587 = vpop.xlane.xlu0 %12586
  %v12588 = vsel %vm9003, %v12528, 0.0
  %12589 = vadd.xlane.f32.xlu0 %v12588
  %v12590 = vpop.xlane.xlu0 %12589
  %v12591 = vsel %vm9003, %v12530, 0.0
  %12592 = vadd.xlane.f32.xlu0 %v12591
  %v12593 = vpop.xlane.xlu0 %12592
  %v12594 = vsel %vm9003, %v12532, 0.0
  %12595 = vadd.xlane.f32.xlu0 %v12594
  %v12596 = vpop.xlane.xlu0 %12595
  %v12597 = vmul.f32 %v12551, %v9058
  %v12598 = vmul.f32 %v12554, %v9058
  %v12599 = vmul.f32 %v12557, %v9058
  %v12600 = vmul.f32 %v12560, %v9058
  %v12601 = vmul.f32 %v12563, %v9058
  %v12602 = vmul.f32 %v12566, %v9058
  %v12603 = vmul.f32 %v12569, %v9058
  %v12604 = vmul.f32 %v12572, %v9058
  %v12605 = vmul.f32 %v12575, %v9058
  %v12606 = vmul.f32 %v12578, %v9058
  %v12607 = vmul.f32 %v12581, %v9058
  %v12608 = vmul.f32 %v12584, %v9058
  %v12609 = vmul.f32 %v12587, %v9058
  %v12610 = vmul.f32 %v12590, %v9058
  %v12611 = vmul.f32 %v12593, %v9058
  %v12612 = vmul.f32 %v12596, %v9058
  %v12613 = vadd.f32 %v12597, 1e-05
  %v12614 = vadd.f32 %v12598, 1e-05
  %v12615 = vadd.f32 %v12599, 1e-05
  %v12616 = vadd.f32 %v12600, 1e-05
  %v12617 = vadd.f32 %v12601, 1e-05
  %v12618 = vadd.f32 %v12602, 1e-05
  %v12619 = vadd.f32 %v12603, 1e-05
  %v12620 = vadd.f32 %v12604, 1e-05
  %v12621 = vadd.f32 %v12605, 1e-05
  %v12622 = vadd.f32 %v12606, 1e-05
  %v12623 = vadd.f32 %v12607, 1e-05
  %v12624 = vadd.f32 %v12608, 1e-05
  %v12625 = vadd.f32 %v12609, 1e-05
  %v12626 = vadd.f32 %v12610, 1e-05
  %v12627 = vadd.f32 %v12611, 1e-05
  %v12628 = vadd.f32 %v12612, 1e-05
  %v12629 = vrsqrt.pop %v12613
  %v12630 = vmul.f32 %v12629, %v12613
  %v12631 = vmul.f32 %v12630, %v12629
  %v12632 = vmul.f32 0.5, %v12631
  %v12633 = vsub.f32 1.5, %v12632
  %v12634 = vmul.f32 %v12629, %v12633
  %vm12635 = vweird.f32 %v12613
  %vm12636 = vweird.f32 %v12629
  %vm12637 = vmor %vm12635, %vm12636
  %v12638 = vsel %vm12637, %v12629, %v12634
  %v12639 = vrsqrt.pop %v12614
  %v12640 = vmul.f32 %v12639, %v12614
  %v12641 = vmul.f32 %v12640, %v12639
  %v12642 = vmul.f32 0.5, %v12641
  %v12643 = vsub.f32 1.5, %v12642
  %v12644 = vmul.f32 %v12639, %v12643
  %vm12645 = vweird.f32 %v12614
  %vm12646 = vweird.f32 %v12639
  %vm12647 = vmor %vm12645, %vm12646
  %v12648 = vsel %vm12647, %v12639, %v12644
  %v12649 = vrsqrt.pop %v12615
  %v12650 = vmul.f32 %v12649, %v12615
  %v12651 = vmul.f32 %v12650, %v12649
  %v12652 = vmul.f32 0.5, %v12651
  %v12653 = vsub.f32 1.5, %v12652
  %v12654 = vmul.f32 %v12649, %v12653
  %vm12655 = vweird.f32 %v12615
  %vm12656 = vweird.f32 %v12649
  %vm12657 = vmor %vm12655, %vm12656
  %v12658 = vsel %vm12657, %v12649, %v12654
  %v12659 = vrsqrt.pop %v12616
  %v12660 = vmul.f32 %v12659, %v12616
  %v12661 = vmul.f32 %v12660, %v12659
  %v12662 = vmul.f32 0.5, %v12661
  %v12663 = vsub.f32 1.5, %v12662
  %v12664 = vmul.f32 %v12659, %v12663
  %vm12665 = vweird.f32 %v12616
  %vm12666 = vweird.f32 %v12659
  %vm12667 = vmor %vm12665, %vm12666
  %v12668 = vsel %vm12667, %v12659, %v12664
  %v12669 = vrsqrt.pop %v12617
  %v12670 = vmul.f32 %v12669, %v12617
  %v12671 = vmul.f32 %v12670, %v12669
  %v12672 = vmul.f32 0.5, %v12671
  %v12673 = vsub.f32 1.5, %v12672
  %v12674 = vmul.f32 %v12669, %v12673
  %vm12675 = vweird.f32 %v12617
  %vm12676 = vweird.f32 %v12669
  %vm12677 = vmor %vm12675, %vm12676
  %v12678 = vsel %vm12677, %v12669, %v12674
  %v12679 = vrsqrt.pop %v12618
  %v12680 = vmul.f32 %v12679, %v12618
  %v12681 = vmul.f32 %v12680, %v12679
  %v12682 = vmul.f32 0.5, %v12681
  %v12683 = vsub.f32 1.5, %v12682
  %v12684 = vmul.f32 %v12679, %v12683
  %vm12685 = vweird.f32 %v12618
  %vm12686 = vweird.f32 %v12679
  %vm12687 = vmor %vm12685, %vm12686
  %v12688 = vsel %vm12687, %v12679, %v12684
  %v12689 = vrsqrt.pop %v12619
  %v12690 = vmul.f32 %v12689, %v12619
  %v12691 = vmul.f32 %v12690, %v12689
  %v12692 = vmul.f32 0.5, %v12691
  %v12693 = vsub.f32 1.5, %v12692
  %v12694 = vmul.f32 %v12689, %v12693
  %vm12695 = vweird.f32 %v12619
  %vm12696 = vweird.f32 %v12689
  %vm12697 = vmor %vm12695, %vm12696
  %v12698 = vsel %vm12697, %v12689, %v12694
  %v12699 = vrsqrt.pop %v12620
  %v12700 = vmul.f32 %v12699, %v12620
  %v12701 = vmul.f32 %v12700, %v12699
  %v12702 = vmul.f32 0.5, %v12701
  %v12703 = vsub.f32 1.5, %v12702
  %v12704 = vmul.f32 %v12699, %v12703
  %vm12705 = vweird.f32 %v12620
  %vm12706 = vweird.f32 %v12699
  %vm12707 = vmor %vm12705, %vm12706
  %v12708 = vsel %vm12707, %v12699, %v12704
  %v12709 = vrsqrt.pop %v12621
  %v12710 = vmul.f32 %v12709, %v12621
  %v12711 = vmul.f32 %v12710, %v12709
  %v12712 = vmul.f32 0.5, %v12711
  %v12713 = vsub.f32 1.5, %v12712
  %v12714 = vmul.f32 %v12709, %v12713
  %vm12715 = vweird.f32 %v12621
  %vm12716 = vweird.f32 %v12709
  %vm12717 = vmor %vm12715, %vm12716
  %v12718 = vsel %vm12717, %v12709, %v12714
  %v12719 = vrsqrt.pop %v12622
  %v12720 = vmul.f32 %v12719, %v12622
  %v12721 = vmul.f32 %v12720, %v12719
  %v12722 = vmul.f32 0.5, %v12721
  %v12723 = vsub.f32 1.5, %v12722
  %v12724 = vmul.f32 %v12719, %v12723
  %vm12725 = vweird.f32 %v12622
  %vm12726 = vweird.f32 %v12719
  %vm12727 = vmor %vm12725, %vm12726
  %v12728 = vsel %vm12727, %v12719, %v12724
  %v12729 = vrsqrt.pop %v12623
  %v12730 = vmul.f32 %v12729, %v12623
  %v12731 = vmul.f32 %v12730, %v12729
  %v12732 = vmul.f32 0.5, %v12731
  %v12733 = vsub.f32 1.5, %v12732
  %v12734 = vmul.f32 %v12729, %v12733
  %vm12735 = vweird.f32 %v12623
  %vm12736 = vweird.f32 %v12729
  %vm12737 = vmor %vm12735, %vm12736
  %v12738 = vsel %vm12737, %v12729, %v12734
  %v12739 = vrsqrt.pop %v12624
  %v12740 = vmul.f32 %v12739, %v12624
  %v12741 = vmul.f32 %v12740, %v12739
  %v12742 = vmul.f32 0.5, %v12741
  %v12743 = vsub.f32 1.5, %v12742
  %v12744 = vmul.f32 %v12739, %v12743
  %vm12745 = vweird.f32 %v12624
  %vm12746 = vweird.f32 %v12739
  %vm12747 = vmor %vm12745, %vm12746
  %v12748 = vsel %vm12747, %v12739, %v12744
  %v12749 = vrsqrt.pop %v12625
  %v12750 = vmul.f32 %v12749, %v12625
  %v12751 = vmul.f32 %v12750, %v12749
  %v12752 = vmul.f32 0.5, %v12751
  %v12753 = vsub.f32 1.5, %v12752
  %v12754 = vmul.f32 %v12749, %v12753
  %vm12755 = vweird.f32 %v12625
  %vm12756 = vweird.f32 %v12749
  %vm12757 = vmor %vm12755, %vm12756
  %v12758 = vsel %vm12757, %v12749, %v12754
  %v12759 = vrsqrt.pop %v12626
  %v12760 = vmul.f32 %v12759, %v12626
  %v12761 = vmul.f32 %v12760, %v12759
  %v12762 = vmul.f32 0.5, %v12761
  %v12763 = vsub.f32 1.5, %v12762
  %v12764 = vmul.f32 %v12759, %v12763
  %vm12765 = vweird.f32 %v12626
  %vm12766 = vweird.f32 %v12759
  %vm12767 = vmor %vm12765, %vm12766
  %v12768 = vsel %vm12767, %v12759, %v12764
  %v12769 = vrsqrt.pop %v12627
  %v12770 = vmul.f32 %v12769, %v12627
  %v12771 = vmul.f32 %v12770, %v12769
  %v12772 = vmul.f32 0.5, %v12771
  %v12773 = vsub.f32 1.5, %v12772
  %v12774 = vmul.f32 %v12769, %v12773
  %vm12775 = vweird.f32 %v12627
  %vm12776 = vweird.f32 %v12769
  %vm12777 = vmor %vm12775, %vm12776
  %v12778 = vsel %vm12777, %v12769, %v12774
  %v12779 = vrsqrt.pop %v12628
  %v12780 = vmul.f32 %v12779, %v12628
  %v12781 = vmul.f32 %v12780, %v12779
  %v12782 = vmul.f32 0.5, %v12781
  %v12783 = vsub.f32 1.5, %v12782
  %v12784 = vmul.f32 %v12779, %v12783
  %vm12785 = vweird.f32 %v12628
  %vm12786 = vweird.f32 %v12779
  %vm12787 = vmor %vm12785, %vm12786
  %v12788 = vsel %vm12787, %v12779, %v12784
  %v12806 = vunpack.c.l.s4 269488144
  %v12807 = vunpack.c.0.s8 %v12806
  %v12808 = vperm.slane %v12638, %v12807
  %v12810 = vunpack.c.l.s4 842150450
  %v12811 = vunpack.c.0.s8 %v12810
  %v12812 = vperm.slane %v12638, %v12811
  %v12814 = vunpack.c.l.s4 1414812756
  %v12815 = vunpack.c.0.s8 %v12814
  %v12816 = vperm.slane %v12638, %v12815
  %v12818 = vunpack.c.l.s4 1987475062
  %v12819 = vunpack.c.0.s8 %v12818
  %v12820 = vperm.slane %v12638, %v12819
  %v12822 = vunpack.c.l.s4 269488144
  %v12823 = vunpack.c.0.s8 %v12822
  %v12824 = vperm.slane %v12648, %v12823
  %v12826 = vunpack.c.l.s4 842150450
  %v12827 = vunpack.c.0.s8 %v12826
  %v12828 = vperm.slane %v12648, %v12827
  %v12830 = vunpack.c.l.s4 1414812756
  %v12831 = vunpack.c.0.s8 %v12830
  %v12832 = vperm.slane %v12648, %v12831
  %v12834 = vunpack.c.l.s4 1987475062
  %v12835 = vunpack.c.0.s8 %v12834
  %v12836 = vperm.slane %v12648, %v12835
  %v12838 = vunpack.c.l.s4 269488144
  %v12839 = vunpack.c.0.s8 %v12838
  %v12840 = vperm.slane %v12658, %v12839
  %v12842 = vunpack.c.l.s4 842150450
  %v12843 = vunpack.c.0.s8 %v12842
  %v12844 = vperm.slane %v12658, %v12843
  %v12846 = vunpack.c.l.s4 1414812756
  %v12847 = vunpack.c.0.s8 %v12846
  %v12848 = vperm.slane %v12658, %v12847
  %v12850 = vunpack.c.l.s4 1987475062
  %v12851 = vunpack.c.0.s8 %v12850
  %v12852 = vperm.slane %v12658, %v12851
  %v12854 = vunpack.c.l.s4 269488144
  %v12855 = vunpack.c.0.s8 %v12854
  %v12856 = vperm.slane %v12668, %v12855
  %v12858 = vunpack.c.l.s4 842150450
  %v12859 = vunpack.c.0.s8 %v12858
  %v12860 = vperm.slane %v12668, %v12859
  %v12862 = vunpack.c.l.s4 1414812756
  %v12863 = vunpack.c.0.s8 %v12862
  %v12864 = vperm.slane %v12668, %v12863
  %v12866 = vunpack.c.l.s4 1987475062
  %v12867 = vunpack.c.0.s8 %v12866
  %v12868 = vperm.slane %v12668, %v12867
  %v12870 = vunpack.c.l.s4 269488144
  %v12871 = vunpack.c.0.s8 %v12870
  %v12872 = vperm.slane %v12678, %v12871
  %v12874 = vunpack.c.l.s4 842150450
  %v12875 = vunpack.c.0.s8 %v12874
  %v12876 = vperm.slane %v12678, %v12875
  %v12878 = vunpack.c.l.s4 1414812756
  %v12879 = vunpack.c.0.s8 %v12878
  %v12880 = vperm.slane %v12678, %v12879
  %v12882 = vunpack.c.l.s4 1987475062
  %v12883 = vunpack.c.0.s8 %v12882
  %v12884 = vperm.slane %v12678, %v12883
  %v12886 = vunpack.c.l.s4 269488144
  %v12887 = vunpack.c.0.s8 %v12886
  %v12888 = vperm.slane %v12688, %v12887
  %v12890 = vunpack.c.l.s4 842150450
  %v12891 = vunpack.c.0.s8 %v12890
  %v12892 = vperm.slane %v12688, %v12891
  %v12894 = vunpack.c.l.s4 1414812756
  %v12895 = vunpack.c.0.s8 %v12894
  %v12896 = vperm.slane %v12688, %v12895
  %v12898 = vunpack.c.l.s4 1987475062
  %v12899 = vunpack.c.0.s8 %v12898
  %v12900 = vperm.slane %v12688, %v12899
  %v12902 = vunpack.c.l.s4 269488144
  %v12903 = vunpack.c.0.s8 %v12902
  %v12904 = vperm.slane %v12698, %v12903
  %v12906 = vunpack.c.l.s4 842150450
  %v12907 = vunpack.c.0.s8 %v12906
  %v12908 = vperm.slane %v12698, %v12907
  %v12910 = vunpack.c.l.s4 1414812756
  %v12911 = vunpack.c.0.s8 %v12910
  %v12912 = vperm.slane %v12698, %v12911
  %v12914 = vunpack.c.l.s4 1987475062
  %v12915 = vunpack.c.0.s8 %v12914
  %v12916 = vperm.slane %v12698, %v12915
  %v12918 = vunpack.c.l.s4 269488144
  %v12919 = vunpack.c.0.s8 %v12918
  %v12920 = vperm.slane %v12708, %v12919
  %v12922 = vunpack.c.l.s4 842150450
  %v12923 = vunpack.c.0.s8 %v12922
  %v12924 = vperm.slane %v12708, %v12923
  %v12926 = vunpack.c.l.s4 1414812756
  %v12927 = vunpack.c.0.s8 %v12926
  %v12928 = vperm.slane %v12708, %v12927
  %v12930 = vunpack.c.l.s4 1987475062
  %v12931 = vunpack.c.0.s8 %v12930
  %v12932 = vperm.slane %v12708, %v12931
  %v12934 = vunpack.c.l.s4 269488144
  %v12935 = vunpack.c.0.s8 %v12934
  %v12936 = vperm.slane %v12718, %v12935
  %v12938 = vunpack.c.l.s4 842150450
  %v12939 = vunpack.c.0.s8 %v12938
  %v12940 = vperm.slane %v12718, %v12939
  %v12942 = vunpack.c.l.s4 1414812756
  %v12943 = vunpack.c.0.s8 %v12942
  %v12944 = vperm.slane %v12718, %v12943
  %v12946 = vunpack.c.l.s4 1987475062
  %v12947 = vunpack.c.0.s8 %v12946
  %v12948 = vperm.slane %v12718, %v12947
  %v12950 = vunpack.c.l.s4 269488144
  %v12951 = vunpack.c.0.s8 %v12950
  %v12952 = vperm.slane %v12728, %v12951
  %v12954 = vunpack.c.l.s4 842150450
  %v12955 = vunpack.c.0.s8 %v12954
  %v12956 = vperm.slane %v12728, %v12955
  %v12958 = vunpack.c.l.s4 1414812756
  %v12959 = vunpack.c.0.s8 %v12958
  %v12960 = vperm.slane %v12728, %v12959
  %v12962 = vunpack.c.l.s4 1987475062
  %v12963 = vunpack.c.0.s8 %v12962
  %v12964 = vperm.slane %v12728, %v12963
  %v12966 = vunpack.c.l.s4 269488144
  %v12967 = vunpack.c.0.s8 %v12966
  %v12968 = vperm.slane %v12738, %v12967
  %v12970 = vunpack.c.l.s4 842150450
  %v12971 = vunpack.c.0.s8 %v12970
  %v12972 = vperm.slane %v12738, %v12971
  %v12974 = vunpack.c.l.s4 1414812756
  %v12975 = vunpack.c.0.s8 %v12974
  %v12976 = vperm.slane %v12738, %v12975
  %v12978 = vunpack.c.l.s4 1987475062
  %v12979 = vunpack.c.0.s8 %v12978
  %v12980 = vperm.slane %v12738, %v12979
  %v12982 = vunpack.c.l.s4 269488144
  %v12983 = vunpack.c.0.s8 %v12982
  %v12984 = vperm.slane %v12748, %v12983
  %v12986 = vunpack.c.l.s4 842150450
  %v12987 = vunpack.c.0.s8 %v12986
  %v12988 = vperm.slane %v12748, %v12987
  %v12990 = vunpack.c.l.s4 1414812756
  %v12991 = vunpack.c.0.s8 %v12990
  %v12992 = vperm.slane %v12748, %v12991
  %v12994 = vunpack.c.l.s4 1987475062
  %v12995 = vunpack.c.0.s8 %v12994
  %v12996 = vperm.slane %v12748, %v12995
  %v12998 = vunpack.c.l.s4 269488144
  %v12999 = vunpack.c.0.s8 %v12998
  %v13000 = vperm.slane %v12758, %v12999
  %v13002 = vunpack.c.l.s4 842150450
  %v13003 = vunpack.c.0.s8 %v13002
  %v13004 = vperm.slane %v12758, %v13003
  %v13006 = vunpack.c.l.s4 1414812756
  %v13007 = vunpack.c.0.s8 %v13006
  %v13008 = vperm.slane %v12758, %v13007
  %v13010 = vunpack.c.l.s4 1987475062
  %v13011 = vunpack.c.0.s8 %v13010
  %v13012 = vperm.slane %v12758, %v13011
  %v13014 = vunpack.c.l.s4 269488144
  %v13015 = vunpack.c.0.s8 %v13014
  %v13016 = vperm.slane %v12768, %v13015
  %v13018 = vunpack.c.l.s4 842150450
  %v13019 = vunpack.c.0.s8 %v13018
  %v13020 = vperm.slane %v12768, %v13019
  %v13022 = vunpack.c.l.s4 1414812756
  %v13023 = vunpack.c.0.s8 %v13022
  %v13024 = vperm.slane %v12768, %v13023
  %v13026 = vunpack.c.l.s4 1987475062
  %v13027 = vunpack.c.0.s8 %v13026
  %v13028 = vperm.slane %v12768, %v13027
  %v13030 = vunpack.c.l.s4 269488144
  %v13031 = vunpack.c.0.s8 %v13030
  %v13032 = vperm.slane %v12778, %v13031
  %v13034 = vunpack.c.l.s4 842150450
  %v13035 = vunpack.c.0.s8 %v13034
  %v13036 = vperm.slane %v12778, %v13035
  %v13038 = vunpack.c.l.s4 1414812756
  %v13039 = vunpack.c.0.s8 %v13038
  %v13040 = vperm.slane %v12778, %v13039
  %v13042 = vunpack.c.l.s4 1987475062
  %v13043 = vunpack.c.0.s8 %v13042
  %v13044 = vperm.slane %v12778, %v13043
  %v13046 = vunpack.c.l.s4 269488144
  %v13047 = vunpack.c.0.s8 %v13046
  %v13048 = vperm.slane %v12788, %v13047
  %v13050 = vunpack.c.l.s4 842150450
  %v13051 = vunpack.c.0.s8 %v13050
  %v13052 = vperm.slane %v12788, %v13051
  %v13054 = vunpack.c.l.s4 1414812756
  %v13055 = vunpack.c.0.s8 %v13054
  %v13056 = vperm.slane %v12788, %v13055
  %v13058 = vunpack.c.l.s4 1987475062
  %v13059 = vunpack.c.0.s8 %v13058
  %v13060 = vperm.slane %v12788, %v13059
  %v13061 = vrot.slane %v12808, 1
  %v13062 = vrot.slane %v12812, 1
  %v13063 = vrot.slane %v12816, 1
  %v13064 = vrot.slane %v12820, 1
  %v13065 = vrot.slane %v12824, 1
  %v13066 = vrot.slane %v12828, 1
  %v13067 = vrot.slane %v12832, 1
  %v13068 = vrot.slane %v12836, 1
  %v13069 = vrot.slane %v12840, 1
  %v13070 = vrot.slane %v12844, 1
  %v13071 = vrot.slane %v12848, 1
  %v13072 = vrot.slane %v12852, 1
  %v13073 = vrot.slane %v12856, 1
  %v13074 = vrot.slane %v12860, 1
  %v13075 = vrot.slane %v12864, 1
  %v13076 = vrot.slane %v12868, 1
  %v13077 = vrot.slane %v12872, 1
  %v13078 = vrot.slane %v12876, 1
  %v13079 = vrot.slane %v12880, 1
  %v13080 = vrot.slane %v12884, 1
  %v13081 = vrot.slane %v12888, 1
  %v13082 = vrot.slane %v12892, 1
  %v13083 = vrot.slane %v12896, 1
  %v13084 = vrot.slane %v12900, 1
  %v13085 = vrot.slane %v12904, 1
  %v13086 = vrot.slane %v12908, 1
  %v13087 = vrot.slane %v12912, 1
  %v13088 = vrot.slane %v12916, 1
  %v13089 = vrot.slane %v12920, 1
  %v13090 = vrot.slane %v12924, 1
  %v13091 = vrot.slane %v12928, 1
  %v13092 = vrot.slane %v12932, 1
  %v13093 = vrot.slane %v12936, 1
  %v13094 = vrot.slane %v12940, 1
  %v13095 = vrot.slane %v12944, 1
  %v13096 = vrot.slane %v12948, 1
  %v13097 = vrot.slane %v12952, 1
  %v13098 = vrot.slane %v12956, 1
  %v13099 = vrot.slane %v12960, 1
  %v13100 = vrot.slane %v12964, 1
  %v13101 = vrot.slane %v12968, 1
  %v13102 = vrot.slane %v12972, 1
  %v13103 = vrot.slane %v12976, 1
  %v13104 = vrot.slane %v12980, 1
  %v13105 = vrot.slane %v12984, 1
  %v13106 = vrot.slane %v12988, 1
  %v13107 = vrot.slane %v12992, 1
  %v13108 = vrot.slane %v12996, 1
  %v13109 = vrot.slane %v13000, 1
  %v13110 = vrot.slane %v13004, 1
  %v13111 = vrot.slane %v13008, 1
  %v13112 = vrot.slane %v13012, 1
  %v13113 = vrot.slane %v13016, 1
  %v13114 = vrot.slane %v13020, 1
  %v13115 = vrot.slane %v13024, 1
  %v13116 = vrot.slane %v13028, 1
  %v13117 = vrot.slane %v13032, 1
  %v13118 = vrot.slane %v13036, 1
  %v13119 = vrot.slane %v13040, 1
  %v13120 = vrot.slane %v13044, 1
  %v13121 = vrot.slane %v13048, 1
  %v13122 = vrot.slane %v13052, 1
  %v13123 = vrot.slane %v13056, 1
  %v13124 = vrot.slane %v13060, 1
  %v13253 = vmul.f32 %v11877, %v12808
  %v13254 = vmul.f32 %v11878, %v13061
  %v13255 = vmul.f32 %v11879, %v12812
  %v13256 = vmul.f32 %v11880, %v13062
  %v13257 = vmul.f32 %v11881, %v12816
  %v13258 = vmul.f32 %v11882, %v13063
  %v13259 = vmul.f32 %v11883, %v12820
  %v13260 = vmul.f32 %v11884, %v13064
  %v13261 = vmul.f32 %v11885, %v12824
  %v13262 = vmul.f32 %v11886, %v13065
  %v13263 = vmul.f32 %v11887, %v12828
  %v13264 = vmul.f32 %v11888, %v13066
  %v13265 = vmul.f32 %v11889, %v12832
  %v13266 = vmul.f32 %v11890, %v13067
  %v13267 = vmul.f32 %v11891, %v12836
  %v13268 = vmul.f32 %v11892, %v13068
  %v13269 = vmul.f32 %v11893, %v12840
  %v13270 = vmul.f32 %v11894, %v13069
  %v13271 = vmul.f32 %v11895, %v12844
  %v13272 = vmul.f32 %v11896, %v13070
  %v13273 = vmul.f32 %v11897, %v12848
  %v13274 = vmul.f32 %v11898, %v13071
  %v13275 = vmul.f32 %v11899, %v12852
  %v13276 = vmul.f32 %v11900, %v13072
  %v13277 = vmul.f32 %v11901, %v12856
  %v13278 = vmul.f32 %v11902, %v13073
  %v13279 = vmul.f32 %v11903, %v12860
  %v13280 = vmul.f32 %v11904, %v13074
  %v13281 = vmul.f32 %v11905, %v12864
  %v13282 = vmul.f32 %v11906, %v13075
  %v13283 = vmul.f32 %v11907, %v12868
  %v13284 = vmul.f32 %v11908, %v13076
  %v13285 = vmul.f32 %v11909, %v12872
  %v13286 = vmul.f32 %v11910, %v13077
  %v13287 = vmul.f32 %v11911, %v12876
  %v13288 = vmul.f32 %v11912, %v13078
  %v13289 = vmul.f32 %v11913, %v12880
  %v13290 = vmul.f32 %v11914, %v13079
  %v13291 = vmul.f32 %v11915, %v12884
  %v13292 = vmul.f32 %v11916, %v13080
  %v13293 = vmul.f32 %v11917, %v12888
  %v13294 = vmul.f32 %v11918, %v13081
  %v13295 = vmul.f32 %v11919, %v12892
  %v13296 = vmul.f32 %v11920, %v13082
  %v13297 = vmul.f32 %v11921, %v12896
  %v13298 = vmul.f32 %v11922, %v13083
  %v13299 = vmul.f32 %v11923, %v12900
  %v13300 = vmul.f32 %v11924, %v13084
  %v13301 = vmul.f32 %v11925, %v12904
  %v13302 = vmul.f32 %v11926, %v13085
  %v13303 = vmul.f32 %v11927, %v12908
  %v13304 = vmul.f32 %v11928, %v13086
  %v13305 = vmul.f32 %v11929, %v12912
  %v13306 = vmul.f32 %v11930, %v13087
  %v13307 = vmul.f32 %v11931, %v12916
  %v13308 = vmul.f32 %v11932, %v13088
  %v13309 = vmul.f32 %v11933, %v12920
  %v13310 = vmul.f32 %v11934, %v13089
  %v13311 = vmul.f32 %v11935, %v12924
  %v13312 = vmul.f32 %v11936, %v13090
  %v13313 = vmul.f32 %v11937, %v12928
  %v13314 = vmul.f32 %v11938, %v13091
  %v13315 = vmul.f32 %v11939, %v12932
  %v13316 = vmul.f32 %v11940, %v13092
  %v13317 = vmul.f32 %v11941, %v12936
  %v13318 = vmul.f32 %v11942, %v13093
  %v13319 = vmul.f32 %v11943, %v12940
  %v13320 = vmul.f32 %v11944, %v13094
  %v13321 = vmul.f32 %v11945, %v12944
  %v13322 = vmul.f32 %v11946, %v13095
  %v13323 = vmul.f32 %v11947, %v12948
  %v13324 = vmul.f32 %v11948, %v13096
  %v13325 = vmul.f32 %v11949, %v12952
  %v13326 = vmul.f32 %v11950, %v13097
  %v13327 = vmul.f32 %v11951, %v12956
  %v13328 = vmul.f32 %v11952, %v13098
  %v13329 = vmul.f32 %v11953, %v12960
  %v13330 = vmul.f32 %v11954, %v13099
  %v13331 = vmul.f32 %v11955, %v12964
  %v13332 = vmul.f32 %v11956, %v13100
  %v13333 = vmul.f32 %v11957, %v12968
  %v13334 = vmul.f32 %v11958, %v13101
  %v13335 = vmul.f32 %v11959, %v12972
  %v13336 = vmul.f32 %v11960, %v13102
  %v13337 = vmul.f32 %v11961, %v12976
  %v13338 = vmul.f32 %v11962, %v13103
  %v13339 = vmul.f32 %v11963, %v12980
  %v13340 = vmul.f32 %v11964, %v13104
  %v13341 = vmul.f32 %v11965, %v12984
  %v13342 = vmul.f32 %v11966, %v13105
  %v13343 = vmul.f32 %v11967, %v12988
  %v13344 = vmul.f32 %v11968, %v13106
  %v13345 = vmul.f32 %v11969, %v12992
  %v13346 = vmul.f32 %v11970, %v13107
  %v13347 = vmul.f32 %v11971, %v12996
  %v13348 = vmul.f32 %v11972, %v13108
  %v13349 = vmul.f32 %v11973, %v13000
  %v13350 = vmul.f32 %v11974, %v13109
  %v13351 = vmul.f32 %v11975, %v13004
  %v13352 = vmul.f32 %v11976, %v13110
  %v13353 = vmul.f32 %v11977, %v13008
  %v13354 = vmul.f32 %v11978, %v13111
  %v13355 = vmul.f32 %v11979, %v13012
  %v13356 = vmul.f32 %v11980, %v13112
  %v13357 = vmul.f32 %v11981, %v13016
  %v13358 = vmul.f32 %v11982, %v13113
  %v13359 = vmul.f32 %v11983, %v13020
  %v13360 = vmul.f32 %v11984, %v13114
  %v13361 = vmul.f32 %v11985, %v13024
  %v13362 = vmul.f32 %v11986, %v13115
  %v13363 = vmul.f32 %v11987, %v13028
  %v13364 = vmul.f32 %v11988, %v13116
  %v13365 = vmul.f32 %v11989, %v13032
  %v13366 = vmul.f32 %v11990, %v13117
  %v13367 = vmul.f32 %v11991, %v13036
  %v13368 = vmul.f32 %v11992, %v13118
  %v13369 = vmul.f32 %v11993, %v13040
  %v13370 = vmul.f32 %v11994, %v13119
  %v13371 = vmul.f32 %v11995, %v13044
  %v13372 = vmul.f32 %v11996, %v13120
  %v13373 = vmul.f32 %v11997, %v13048
  %v13374 = vmul.f32 %v11998, %v13121
  %v13375 = vmul.f32 %v11999, %v13052
  %v13376 = vmul.f32 %v12000, %v13122
  %v13377 = vmul.f32 %v12001, %v13056
  %v13378 = vmul.f32 %v12002, %v13123
  %v13379 = vmul.f32 %v12003, %v13060
  %v13380 = vmul.f32 %v12004, %v13124
  %13381 = vrot.lane.b32.xlu0 %v11012, 32
  %v13382 = vpop.permute.xlu0 %13381
  %13383 = vrot.lane.b32.xlu0 %v11016, 32
  %v13384 = vpop.permute.xlu0 %13383
  %13385 = vrot.lane.b32.xlu0 %v11013, 32
  %v13386 = vpop.permute.xlu0 %13385
  %13387 = vrot.lane.b32.xlu0 %v11017, 32
  %v13388 = vpop.permute.xlu0 %13387
  %13389 = vrot.lane.b32.xlu0 %v11014, 32
  %v13390 = vpop.permute.xlu0 %13389
  %13391 = vrot.lane.b32.xlu0 %v11018, 32
  %v13392 = vpop.permute.xlu0 %13391
  %13393 = vrot.lane.b32.xlu0 %v11015, 32
  %v13394 = vpop.permute.xlu0 %13393
  %13395 = vrot.lane.b32.xlu0 %v11019, 32
  %v13396 = vpop.permute.xlu0 %13395
  %v13405 = vmul.f32 %v13253, %v13382
  %v13406 = vmul.f32 %v13254, %v13384
  %v13407 = vmul.f32 %v13255, %v13386
  %v13408 = vmul.f32 %v13256, %v13388
  %v13409 = vmul.f32 %v13257, %v13390
  %v13410 = vmul.f32 %v13258, %v13392
  %v13411 = vmul.f32 %v13259, %v13394
  %v13412 = vmul.f32 %v13260, %v13396
  %v13413 = vmul.f32 %v13261, %v13382
  %v13414 = vmul.f32 %v13262, %v13384
  %v13415 = vmul.f32 %v13263, %v13386
  %v13416 = vmul.f32 %v13264, %v13388
  %v13417 = vmul.f32 %v13265, %v13390
  %v13418 = vmul.f32 %v13266, %v13392
  %v13419 = vmul.f32 %v13267, %v13394
  %v13420 = vmul.f32 %v13268, %v13396
  %v13421 = vmul.f32 %v13269, %v13382
  %v13422 = vmul.f32 %v13270, %v13384
  %v13423 = vmul.f32 %v13271, %v13386
  %v13424 = vmul.f32 %v13272, %v13388
  %v13425 = vmul.f32 %v13273, %v13390
  %v13426 = vmul.f32 %v13274, %v13392
  %v13427 = vmul.f32 %v13275, %v13394
  %v13428 = vmul.f32 %v13276, %v13396
  %v13429 = vmul.f32 %v13277, %v13382
  %v13430 = vmul.f32 %v13278, %v13384
  %v13431 = vmul.f32 %v13279, %v13386
  %v13432 = vmul.f32 %v13280, %v13388
  %v13433 = vmul.f32 %v13281, %v13390
  %v13434 = vmul.f32 %v13282, %v13392
  %v13435 = vmul.f32 %v13283, %v13394
  %v13436 = vmul.f32 %v13284, %v13396
  %v13437 = vmul.f32 %v13285, %v13382
  %v13438 = vmul.f32 %v13286, %v13384
  %v13439 = vmul.f32 %v13287, %v13386
  %v13440 = vmul.f32 %v13288, %v13388
  %v13441 = vmul.f32 %v13289, %v13390
  %v13442 = vmul.f32 %v13290, %v13392
  %v13443 = vmul.f32 %v13291, %v13394
  %v13444 = vmul.f32 %v13292, %v13396
  %v13445 = vmul.f32 %v13293, %v13382
  %v13446 = vmul.f32 %v13294, %v13384
  %v13447 = vmul.f32 %v13295, %v13386
  %v13448 = vmul.f32 %v13296, %v13388
  %v13449 = vmul.f32 %v13297, %v13390
  %v13450 = vmul.f32 %v13298, %v13392
  %v13451 = vmul.f32 %v13299, %v13394
  %v13452 = vmul.f32 %v13300, %v13396
  %v13453 = vmul.f32 %v13301, %v13382
  %v13454 = vmul.f32 %v13302, %v13384
  %v13455 = vmul.f32 %v13303, %v13386
  %v13456 = vmul.f32 %v13304, %v13388
  %v13457 = vmul.f32 %v13305, %v13390
  %v13458 = vmul.f32 %v13306, %v13392
  %v13459 = vmul.f32 %v13307, %v13394
  %v13460 = vmul.f32 %v13308, %v13396
  %v13461 = vmul.f32 %v13309, %v13382
  %v13462 = vmul.f32 %v13310, %v13384
  %v13463 = vmul.f32 %v13311, %v13386
  %v13464 = vmul.f32 %v13312, %v13388
  %v13465 = vmul.f32 %v13313, %v13390
  %v13466 = vmul.f32 %v13314, %v13392
  %v13467 = vmul.f32 %v13315, %v13394
  %v13468 = vmul.f32 %v13316, %v13396
  %v13469 = vmul.f32 %v13317, %v13382
  %v13470 = vmul.f32 %v13318, %v13384
  %v13471 = vmul.f32 %v13319, %v13386
  %v13472 = vmul.f32 %v13320, %v13388
  %v13473 = vmul.f32 %v13321, %v13390
  %v13474 = vmul.f32 %v13322, %v13392
  %v13475 = vmul.f32 %v13323, %v13394
  %v13476 = vmul.f32 %v13324, %v13396
  %v13477 = vmul.f32 %v13325, %v13382
  %v13478 = vmul.f32 %v13326, %v13384
  %v13479 = vmul.f32 %v13327, %v13386
  %v13480 = vmul.f32 %v13328, %v13388
  %v13481 = vmul.f32 %v13329, %v13390
  %v13482 = vmul.f32 %v13330, %v13392
  %v13483 = vmul.f32 %v13331, %v13394
  %v13484 = vmul.f32 %v13332, %v13396
  %v13485 = vmul.f32 %v13333, %v13382
  %v13486 = vmul.f32 %v13334, %v13384
  %v13487 = vmul.f32 %v13335, %v13386
  %v13488 = vmul.f32 %v13336, %v13388
  %v13489 = vmul.f32 %v13337, %v13390
  %v13490 = vmul.f32 %v13338, %v13392
  %v13491 = vmul.f32 %v13339, %v13394
  %v13492 = vmul.f32 %v13340, %v13396
  %v13493 = vmul.f32 %v13341, %v13382
  %v13494 = vmul.f32 %v13342, %v13384
  %v13495 = vmul.f32 %v13343, %v13386
  %v13496 = vmul.f32 %v13344, %v13388
  %v13497 = vmul.f32 %v13345, %v13390
  %v13498 = vmul.f32 %v13346, %v13392
  %v13499 = vmul.f32 %v13347, %v13394
  %v13500 = vmul.f32 %v13348, %v13396
  %v13501 = vmul.f32 %v13349, %v13382
  %v13502 = vmul.f32 %v13350, %v13384
  %v13503 = vmul.f32 %v13351, %v13386
  %v13504 = vmul.f32 %v13352, %v13388
  %v13505 = vmul.f32 %v13353, %v13390
  %v13506 = vmul.f32 %v13354, %v13392
  %v13507 = vmul.f32 %v13355, %v13394
  %v13508 = vmul.f32 %v13356, %v13396
  %v13509 = vmul.f32 %v13357, %v13382
  %v13510 = vmul.f32 %v13358, %v13384
  %v13511 = vmul.f32 %v13359, %v13386
  %v13512 = vmul.f32 %v13360, %v13388
  %v13513 = vmul.f32 %v13361, %v13390
  %v13514 = vmul.f32 %v13362, %v13392
  %v13515 = vmul.f32 %v13363, %v13394
  %v13516 = vmul.f32 %v13364, %v13396
  %v13517 = vmul.f32 %v13365, %v13382
  %v13518 = vmul.f32 %v13366, %v13384
  %v13519 = vmul.f32 %v13367, %v13386
  %v13520 = vmul.f32 %v13368, %v13388
  %v13521 = vmul.f32 %v13369, %v13390
  %v13522 = vmul.f32 %v13370, %v13392
  %v13523 = vmul.f32 %v13371, %v13394
  %v13524 = vmul.f32 %v13372, %v13396
  %v13525 = vmul.f32 %v13373, %v13382
  %v13526 = vmul.f32 %v13374, %v13384
  %v13527 = vmul.f32 %v13375, %v13386
  %v13528 = vmul.f32 %v13376, %v13388
  %v13529 = vmul.f32 %v13377, %v13390
  %v13530 = vmul.f32 %v13378, %v13392
  %v13531 = vmul.f32 %v13379, %v13394
  %v13532 = vmul.f32 %v13380, %v13396
  %13533 = vrot.lane.b32.xlu0 %v11157, 32
  %v13534 = vpop.permute.xlu0 %13533
  %13535 = vrot.lane.b32.xlu0 %v11161, 32
  %v13536 = vpop.permute.xlu0 %13535
  %13537 = vrot.lane.b32.xlu0 %v11158, 32
  %v13538 = vpop.permute.xlu0 %13537
  %13539 = vrot.lane.b32.xlu0 %v11162, 32
  %v13540 = vpop.permute.xlu0 %13539
  %13541 = vrot.lane.b32.xlu0 %v11159, 32
  %v13542 = vpop.permute.xlu0 %13541
  %13543 = vrot.lane.b32.xlu0 %v11163, 32
  %v13544 = vpop.permute.xlu0 %13543
  %13545 = vrot.lane.b32.xlu0 %v11160, 32
  %v13546 = vpop.permute.xlu0 %13545
  %13547 = vrot.lane.b32.xlu0 %v11164, 32
  %v13548 = vpop.permute.xlu0 %13547
  %v13557 = vadd.f32 %v13405, %v13534
  %v13558 = vadd.f32 %v13406, %v13536
  %v13559 = vadd.f32 %v13407, %v13538
  %v13560 = vadd.f32 %v13408, %v13540
  %v13561 = vadd.f32 %v13409, %v13542
  %v13562 = vadd.f32 %v13410, %v13544
  %v13563 = vadd.f32 %v13411, %v13546
  %v13564 = vadd.f32 %v13412, %v13548
  %v13565 = vadd.f32 %v13413, %v13534
  %v13566 = vadd.f32 %v13414, %v13536
  %v13567 = vadd.f32 %v13415, %v13538
  %v13568 = vadd.f32 %v13416, %v13540
  %v13569 = vadd.f32 %v13417, %v13542
  %v13570 = vadd.f32 %v13418, %v13544
  %v13571 = vadd.f32 %v13419, %v13546
  %v13572 = vadd.f32 %v13420, %v13548
  %v13573 = vadd.f32 %v13421, %v13534
  %v13574 = vadd.f32 %v13422, %v13536
  %v13575 = vadd.f32 %v13423, %v13538
  %v13576 = vadd.f32 %v13424, %v13540
  %v13577 = vadd.f32 %v13425, %v13542
  %v13578 = vadd.f32 %v13426, %v13544
  %v13579 = vadd.f32 %v13427, %v13546
  %v13580 = vadd.f32 %v13428, %v13548
  %v13581 = vadd.f32 %v13429, %v13534
  %v13582 = vadd.f32 %v13430, %v13536
  %v13583 = vadd.f32 %v13431, %v13538
  %v13584 = vadd.f32 %v13432, %v13540
  %v13585 = vadd.f32 %v13433, %v13542
  %v13586 = vadd.f32 %v13434, %v13544
  %v13587 = vadd.f32 %v13435, %v13546
  %v13588 = vadd.f32 %v13436, %v13548
  %v13589 = vadd.f32 %v13437, %v13534
  %v13590 = vadd.f32 %v13438, %v13536
  %v13591 = vadd.f32 %v13439, %v13538
  %v13592 = vadd.f32 %v13440, %v13540
  %v13593 = vadd.f32 %v13441, %v13542
  %v13594 = vadd.f32 %v13442, %v13544
  %v13595 = vadd.f32 %v13443, %v13546
  %v13596 = vadd.f32 %v13444, %v13548
  %v13597 = vadd.f32 %v13445, %v13534
  %v13598 = vadd.f32 %v13446, %v13536
  %v13599 = vadd.f32 %v13447, %v13538
  %v13600 = vadd.f32 %v13448, %v13540
  %v13601 = vadd.f32 %v13449, %v13542
  %v13602 = vadd.f32 %v13450, %v13544
  %v13603 = vadd.f32 %v13451, %v13546
  %v13604 = vadd.f32 %v13452, %v13548
  %v13605 = vadd.f32 %v13453, %v13534
  %v13606 = vadd.f32 %v13454, %v13536
  %v13607 = vadd.f32 %v13455, %v13538
  %v13608 = vadd.f32 %v13456, %v13540
  %v13609 = vadd.f32 %v13457, %v13542
  %v13610 = vadd.f32 %v13458, %v13544
  %v13611 = vadd.f32 %v13459, %v13546
  %v13612 = vadd.f32 %v13460, %v13548
  %v13613 = vadd.f32 %v13461, %v13534
  %v13614 = vadd.f32 %v13462, %v13536
  %v13615 = vadd.f32 %v13463, %v13538
  %v13616 = vadd.f32 %v13464, %v13540
  %v13617 = vadd.f32 %v13465, %v13542
  %v13618 = vadd.f32 %v13466, %v13544
  %v13619 = vadd.f32 %v13467, %v13546
  %v13620 = vadd.f32 %v13468, %v13548
  %v13621 = vadd.f32 %v13469, %v13534
  %v13622 = vadd.f32 %v13470, %v13536
  %v13623 = vadd.f32 %v13471, %v13538
  %v13624 = vadd.f32 %v13472, %v13540
  %v13625 = vadd.f32 %v13473, %v13542
  %v13626 = vadd.f32 %v13474, %v13544
  %v13627 = vadd.f32 %v13475, %v13546
  %v13628 = vadd.f32 %v13476, %v13548
  %v13629 = vadd.f32 %v13477, %v13534
  %v13630 = vadd.f32 %v13478, %v13536
  %v13631 = vadd.f32 %v13479, %v13538
  %v13632 = vadd.f32 %v13480, %v13540
  %v13633 = vadd.f32 %v13481, %v13542
  %v13634 = vadd.f32 %v13482, %v13544
  %v13635 = vadd.f32 %v13483, %v13546
  %v13636 = vadd.f32 %v13484, %v13548
  %v13637 = vadd.f32 %v13485, %v13534
  %v13638 = vadd.f32 %v13486, %v13536
  %v13639 = vadd.f32 %v13487, %v13538
  %v13640 = vadd.f32 %v13488, %v13540
  %v13641 = vadd.f32 %v13489, %v13542
  %v13642 = vadd.f32 %v13490, %v13544
  %v13643 = vadd.f32 %v13491, %v13546
  %v13644 = vadd.f32 %v13492, %v13548
  %v13645 = vadd.f32 %v13493, %v13534
  %v13646 = vadd.f32 %v13494, %v13536
  %v13647 = vadd.f32 %v13495, %v13538
  %v13648 = vadd.f32 %v13496, %v13540
  %v13649 = vadd.f32 %v13497, %v13542
  %v13650 = vadd.f32 %v13498, %v13544
  %v13651 = vadd.f32 %v13499, %v13546
  %v13652 = vadd.f32 %v13500, %v13548
  %v13653 = vadd.f32 %v13501, %v13534
  %v13654 = vadd.f32 %v13502, %v13536
  %v13655 = vadd.f32 %v13503, %v13538
  %v13656 = vadd.f32 %v13504, %v13540
  %v13657 = vadd.f32 %v13505, %v13542
  %v13658 = vadd.f32 %v13506, %v13544
  %v13659 = vadd.f32 %v13507, %v13546
  %v13660 = vadd.f32 %v13508, %v13548
  %v13661 = vadd.f32 %v13509, %v13534
  %v13662 = vadd.f32 %v13510, %v13536
  %v13663 = vadd.f32 %v13511, %v13538
  %v13664 = vadd.f32 %v13512, %v13540
  %v13665 = vadd.f32 %v13513, %v13542
  %v13666 = vadd.f32 %v13514, %v13544
  %v13667 = vadd.f32 %v13515, %v13546
  %v13668 = vadd.f32 %v13516, %v13548
  %v13669 = vadd.f32 %v13517, %v13534
  %v13670 = vadd.f32 %v13518, %v13536
  %v13671 = vadd.f32 %v13519, %v13538
  %v13672 = vadd.f32 %v13520, %v13540
  %v13673 = vadd.f32 %v13521, %v13542
  %v13674 = vadd.f32 %v13522, %v13544
  %v13675 = vadd.f32 %v13523, %v13546
  %v13676 = vadd.f32 %v13524, %v13548
  %v13677 = vadd.f32 %v13525, %v13534
  %v13678 = vadd.f32 %v13526, %v13536
  %v13679 = vadd.f32 %v13527, %v13538
  %v13680 = vadd.f32 %v13528, %v13540
  %v13681 = vadd.f32 %v13529, %v13542
  %v13682 = vadd.f32 %v13530, %v13544
  %v13683 = vadd.f32 %v13531, %v13546
  %v13684 = vadd.f32 %v13532, %v13548
  %v13813 = vsel %vm8874, %v11173, %v11173
  %v13814 = vsel %vm8878, %v11173, %v13813
  %v13815 = vrot.slane %v11174, 7
  %v13816 = vsel %vm8868, %v13815, %v13814
  %v13817 = vsel %vm8872, %v13815, %v13816
  %v13818 = vsel %vm8876, %v13815, %v13817
  %v13819 = vsel %vm8880, %v13815, %v13818
  %v13820 = vsel %vm8874, %v11175, %v11175
  %v13821 = vsel %vm8878, %v11175, %v13820
  %v13822 = vrot.slane %v11176, 7
  %v13823 = vsel %vm8868, %v13822, %v13821
  %v13824 = vsel %vm8872, %v13822, %v13823
  %v13825 = vsel %vm8876, %v13822, %v13824
  %v13826 = vsel %vm8880, %v13822, %v13825
  %v13827 = vsel %vm8874, %v11177, %v11177
  %v13828 = vsel %vm8878, %v11177, %v13827
  %v13829 = vrot.slane %v11178, 7
  %v13830 = vsel %vm8868, %v13829, %v13828
  %v13831 = vsel %vm8872, %v13829, %v13830
  %v13832 = vsel %vm8876, %v13829, %v13831
  %v13833 = vsel %vm8880, %v13829, %v13832
  %v13834 = vsel %vm8874, %v11179, %v11179
  %v13835 = vsel %vm8878, %v11179, %v13834
  %v13836 = vrot.slane %v11180, 7
  %v13837 = vsel %vm8868, %v13836, %v13835
  %v13838 = vsel %vm8872, %v13836, %v13837
  %v13839 = vsel %vm8876, %v13836, %v13838
  %v13840 = vsel %vm8880, %v13836, %v13839
  %v13841 = vsel %vm8874, %v11181, %v11181
  %v13842 = vsel %vm8878, %v11181, %v13841
  %v13843 = vrot.slane %v11182, 7
  %v13844 = vsel %vm8868, %v13843, %v13842
  %v13845 = vsel %vm8872, %v13843, %v13844
  %v13846 = vsel %vm8876, %v13843, %v13845
  %v13847 = vsel %vm8880, %v13843, %v13846
  %v13848 = vsel %vm8874, %v11183, %v11183
  %v13849 = vsel %vm8878, %v11183, %v13848
  %v13850 = vrot.slane %v11184, 7
  %v13851 = vsel %vm8868, %v13850, %v13849
  %v13852 = vsel %vm8872, %v13850, %v13851
  %v13853 = vsel %vm8876, %v13850, %v13852
  %v13854 = vsel %vm8880, %v13850, %v13853
  %v13855 = vsel %vm8874, %v11185, %v11185
  %v13856 = vsel %vm8878, %v11185, %v13855
  %v13857 = vrot.slane %v11186, 7
  %v13858 = vsel %vm8868, %v13857, %v13856
  %v13859 = vsel %vm8872, %v13857, %v13858
  %v13860 = vsel %vm8876, %v13857, %v13859
  %v13861 = vsel %vm8880, %v13857, %v13860
  %v13862 = vsel %vm8874, %v11187, %v11187
  %v13863 = vsel %vm8878, %v11187, %v13862
  %v13864 = vrot.slane %v11188, 7
  %v13865 = vsel %vm8868, %v13864, %v13863
  %v13866 = vsel %vm8872, %v13864, %v13865
  %v13867 = vsel %vm8876, %v13864, %v13866
  %v13868 = vsel %vm8880, %v13864, %v13867
  %v13869 = vsel %vm8874, %v11189, %v11189
  %v13870 = vsel %vm8878, %v11189, %v13869
  %v13871 = vrot.slane %v11190, 7
  %v13872 = vsel %vm8868, %v13871, %v13870
  %v13873 = vsel %vm8872, %v13871, %v13872
  %v13874 = vsel %vm8876, %v13871, %v13873
  %v13875 = vsel %vm8880, %v13871, %v13874
  %v13876 = vsel %vm8874, %v11191, %v11191
  %v13877 = vsel %vm8878, %v11191, %v13876
  %v13878 = vrot.slane %v11192, 7
  %v13879 = vsel %vm8868, %v13878, %v13877
  %v13880 = vsel %vm8872, %v13878, %v13879
  %v13881 = vsel %vm8876, %v13878, %v13880
  %v13882 = vsel %vm8880, %v13878, %v13881
  %v13883 = vsel %vm8874, %v11193, %v11193
  %v13884 = vsel %vm8878, %v11193, %v13883
  %v13885 = vrot.slane %v11194, 7
  %v13886 = vsel %vm8868, %v13885, %v13884
  %v13887 = vsel %vm8872, %v13885, %v13886
  %v13888 = vsel %vm8876, %v13885, %v13887
  %v13889 = vsel %vm8880, %v13885, %v13888
  %v13890 = vsel %vm8874, %v11195, %v11195
  %v13891 = vsel %vm8878, %v11195, %v13890
  %v13892 = vrot.slane %v11196, 7
  %v13893 = vsel %vm8868, %v13892, %v13891
  %v13894 = vsel %vm8872, %v13892, %v13893
  %v13895 = vsel %vm8876, %v13892, %v13894
  %v13896 = vsel %vm8880, %v13892, %v13895
  %v13897 = vsel %vm8874, %v11197, %v11197
  %v13898 = vsel %vm8878, %v11197, %v13897
  %v13899 = vrot.slane %v11198, 7
  %v13900 = vsel %vm8868, %v13899, %v13898
  %v13901 = vsel %vm8872, %v13899, %v13900
  %v13902 = vsel %vm8876, %v13899, %v13901
  %v13903 = vsel %vm8880, %v13899, %v13902
  %v13904 = vsel %vm8874, %v11199, %v11199
  %v13905 = vsel %vm8878, %v11199, %v13904
  %v13906 = vrot.slane %v11200, 7
  %v13907 = vsel %vm8868, %v13906, %v13905
  %v13908 = vsel %vm8872, %v13906, %v13907
  %v13909 = vsel %vm8876, %v13906, %v13908
  %v13910 = vsel %vm8880, %v13906, %v13909
  %v13911 = vsel %vm8874, %v11201, %v11201
  %v13912 = vsel %vm8878, %v11201, %v13911
  %v13913 = vrot.slane %v11202, 7
  %v13914 = vsel %vm8868, %v13913, %v13912
  %v13915 = vsel %vm8872, %v13913, %v13914
  %v13916 = vsel %vm8876, %v13913, %v13915
  %v13917 = vsel %vm8880, %v13913, %v13916
  %v13918 = vsel %vm8874, %v11203, %v11203
  %v13919 = vsel %vm8878, %v11203, %v13918
  %v13920 = vrot.slane %v11204, 7
  %v13921 = vsel %vm8868, %v13920, %v13919
  %v13922 = vsel %vm8872, %v13920, %v13921
  %v13923 = vsel %vm8876, %v13920, %v13922
  %v13924 = vsel %vm8880, %v13920, %v13923
  %v13925 = vsel %vm8874, %v11205, %v11205
  %v13926 = vsel %vm8878, %v11205, %v13925
  %v13927 = vrot.slane %v11206, 7
  %v13928 = vsel %vm8868, %v13927, %v13926
  %v13929 = vsel %vm8872, %v13927, %v13928
  %v13930 = vsel %vm8876, %v13927, %v13929
  %v13931 = vsel %vm8880, %v13927, %v13930
  %v13932 = vsel %vm8874, %v11207, %v11207
  %v13933 = vsel %vm8878, %v11207, %v13932
  %v13934 = vrot.slane %v11208, 7
  %v13935 = vsel %vm8868, %v13934, %v13933
  %v13936 = vsel %vm8872, %v13934, %v13935
  %v13937 = vsel %vm8876, %v13934, %v13936
  %v13938 = vsel %vm8880, %v13934, %v13937
  %v13939 = vsel %vm8874, %v11209, %v11209
  %v13940 = vsel %vm8878, %v11209, %v13939
  %v13941 = vrot.slane %v11210, 7
  %v13942 = vsel %vm8868, %v13941, %v13940
  %v13943 = vsel %vm8872, %v13941, %v13942
  %v13944 = vsel %vm8876, %v13941, %v13943
  %v13945 = vsel %vm8880, %v13941, %v13944
  %v13946 = vsel %vm8874, %v11211, %v11211
  %v13947 = vsel %vm8878, %v11211, %v13946
  %v13948 = vrot.slane %v11212, 7
  %v13949 = vsel %vm8868, %v13948, %v13947
  %v13950 = vsel %vm8872, %v13948, %v13949
  %v13951 = vsel %vm8876, %v13948, %v13950
  %v13952 = vsel %vm8880, %v13948, %v13951
  %v13953 = vsel %vm8874, %v11213, %v11213
  %v13954 = vsel %vm8878, %v11213, %v13953
  %v13955 = vrot.slane %v11214, 7
  %v13956 = vsel %vm8868, %v13955, %v13954
  %v13957 = vsel %vm8872, %v13955, %v13956
  %v13958 = vsel %vm8876, %v13955, %v13957
  %v13959 = vsel %vm8880, %v13955, %v13958
  %v13960 = vsel %vm8874, %v11215, %v11215
  %v13961 = vsel %vm8878, %v11215, %v13960
  %v13962 = vrot.slane %v11216, 7
  %v13963 = vsel %vm8868, %v13962, %v13961
  %v13964 = vsel %vm8872, %v13962, %v13963
  %v13965 = vsel %vm8876, %v13962, %v13964
  %v13966 = vsel %vm8880, %v13962, %v13965
  %v13967 = vsel %vm8874, %v11217, %v11217
  %v13968 = vsel %vm8878, %v11217, %v13967
  %v13969 = vrot.slane %v11218, 7
  %v13970 = vsel %vm8868, %v13969, %v13968
  %v13971 = vsel %vm8872, %v13969, %v13970
  %v13972 = vsel %vm8876, %v13969, %v13971
  %v13973 = vsel %vm8880, %v13969, %v13972
  %v13974 = vsel %vm8874, %v11219, %v11219
  %v13975 = vsel %vm8878, %v11219, %v13974
  %v13976 = vrot.slane %v11220, 7
  %v13977 = vsel %vm8868, %v13976, %v13975
  %v13978 = vsel %vm8872, %v13976, %v13977
  %v13979 = vsel %vm8876, %v13976, %v13978
  %v13980 = vsel %vm8880, %v13976, %v13979
  %v13981 = vsel %vm8874, %v11221, %v11221
  %v13982 = vsel %vm8878, %v11221, %v13981
  %v13983 = vrot.slane %v11222, 7
  %v13984 = vsel %vm8868, %v13983, %v13982
  %v13985 = vsel %vm8872, %v13983, %v13984
  %v13986 = vsel %vm8876, %v13983, %v13985
  %v13987 = vsel %vm8880, %v13983, %v13986
  %v13988 = vsel %vm8874, %v11223, %v11223
  %v13989 = vsel %vm8878, %v11223, %v13988
  %v13990 = vrot.slane %v11224, 7
  %v13991 = vsel %vm8868, %v13990, %v13989
  %v13992 = vsel %vm8872, %v13990, %v13991
  %v13993 = vsel %vm8876, %v13990, %v13992
  %v13994 = vsel %vm8880, %v13990, %v13993
  %v13995 = vsel %vm8874, %v11225, %v11225
  %v13996 = vsel %vm8878, %v11225, %v13995
  %v13997 = vrot.slane %v11226, 7
  %v13998 = vsel %vm8868, %v13997, %v13996
  %v13999 = vsel %vm8872, %v13997, %v13998
  %v14000 = vsel %vm8876, %v13997, %v13999
  %v14001 = vsel %vm8880, %v13997, %v14000
  %v14002 = vsel %vm8874, %v11227, %v11227
  %v14003 = vsel %vm8878, %v11227, %v14002
  %v14004 = vrot.slane %v11228, 7
  %v14005 = vsel %vm8868, %v14004, %v14003
  %v14006 = vsel %vm8872, %v14004, %v14005
  %v14007 = vsel %vm8876, %v14004, %v14006
  %v14008 = vsel %vm8880, %v14004, %v14007
  %v14009 = vsel %vm8874, %v11229, %v11229
  %v14010 = vsel %vm8878, %v11229, %v14009
  %v14011 = vrot.slane %v11230, 7
  %v14012 = vsel %vm8868, %v14011, %v14010
  %v14013 = vsel %vm8872, %v14011, %v14012
  %v14014 = vsel %vm8876, %v14011, %v14013
  %v14015 = vsel %vm8880, %v14011, %v14014
  %v14016 = vsel %vm8874, %v11231, %v11231
  %v14017 = vsel %vm8878, %v11231, %v14016
  %v14018 = vrot.slane %v11232, 7
  %v14019 = vsel %vm8868, %v14018, %v14017
  %v14020 = vsel %vm8872, %v14018, %v14019
  %v14021 = vsel %vm8876, %v14018, %v14020
  %v14022 = vsel %vm8880, %v14018, %v14021
  %v14023 = vsel %vm8874, %v11233, %v11233
  %v14024 = vsel %vm8878, %v11233, %v14023
  %v14025 = vrot.slane %v11234, 7
  %v14026 = vsel %vm8868, %v14025, %v14024
  %v14027 = vsel %vm8872, %v14025, %v14026
  %v14028 = vsel %vm8876, %v14025, %v14027
  %v14029 = vsel %vm8880, %v14025, %v14028
  %v14030 = vsel %vm8874, %v11235, %v11235
  %v14031 = vsel %vm8878, %v11235, %v14030
  %v14032 = vrot.slane %v11236, 7
  %v14033 = vsel %vm8868, %v14032, %v14031
  %v14034 = vsel %vm8872, %v14032, %v14033
  %v14035 = vsel %vm8876, %v14032, %v14034
  %v14036 = vsel %vm8880, %v14032, %v14035
  %v14037 = vsel %vm8874, %v11237, %v11237
  %v14038 = vsel %vm8878, %v11237, %v14037
  %v14039 = vrot.slane %v11238, 7
  %v14040 = vsel %vm8868, %v14039, %v14038
  %v14041 = vsel %vm8872, %v14039, %v14040
  %v14042 = vsel %vm8876, %v14039, %v14041
  %v14043 = vsel %vm8880, %v14039, %v14042
  %v14044 = vsel %vm8874, %v11239, %v11239
  %v14045 = vsel %vm8878, %v11239, %v14044
  %v14046 = vrot.slane %v11240, 7
  %v14047 = vsel %vm8868, %v14046, %v14045
  %v14048 = vsel %vm8872, %v14046, %v14047
  %v14049 = vsel %vm8876, %v14046, %v14048
  %v14050 = vsel %vm8880, %v14046, %v14049
  %v14051 = vsel %vm8874, %v11241, %v11241
  %v14052 = vsel %vm8878, %v11241, %v14051
  %v14053 = vrot.slane %v11242, 7
  %v14054 = vsel %vm8868, %v14053, %v14052
  %v14055 = vsel %vm8872, %v14053, %v14054
  %v14056 = vsel %vm8876, %v14053, %v14055
  %v14057 = vsel %vm8880, %v14053, %v14056
  %v14058 = vsel %vm8874, %v11243, %v11243
  %v14059 = vsel %vm8878, %v11243, %v14058
  %v14060 = vrot.slane %v11244, 7
  %v14061 = vsel %vm8868, %v14060, %v14059
  %v14062 = vsel %vm8872, %v14060, %v14061
  %v14063 = vsel %vm8876, %v14060, %v14062
  %v14064 = vsel %vm8880, %v14060, %v14063
  %v14065 = vsel %vm8874, %v11245, %v11245
  %v14066 = vsel %vm8878, %v11245, %v14065
  %v14067 = vrot.slane %v11246, 7
  %v14068 = vsel %vm8868, %v14067, %v14066
  %v14069 = vsel %vm8872, %v14067, %v14068
  %v14070 = vsel %vm8876, %v14067, %v14069
  %v14071 = vsel %vm8880, %v14067, %v14070
  %v14072 = vsel %vm8874, %v11247, %v11247
  %v14073 = vsel %vm8878, %v11247, %v14072
  %v14074 = vrot.slane %v11248, 7
  %v14075 = vsel %vm8868, %v14074, %v14073
  %v14076 = vsel %vm8872, %v14074, %v14075
  %v14077 = vsel %vm8876, %v14074, %v14076
  %v14078 = vsel %vm8880, %v14074, %v14077
  %v14079 = vsel %vm8874, %v11249, %v11249
  %v14080 = vsel %vm8878, %v11249, %v14079
  %v14081 = vrot.slane %v11250, 7
  %v14082 = vsel %vm8868, %v14081, %v14080
  %v14083 = vsel %vm8872, %v14081, %v14082
  %v14084 = vsel %vm8876, %v14081, %v14083
  %v14085 = vsel %vm8880, %v14081, %v14084
  %v14086 = vsel %vm8874, %v11251, %v11251
  %v14087 = vsel %vm8878, %v11251, %v14086
  %v14088 = vrot.slane %v11252, 7
  %v14089 = vsel %vm8868, %v14088, %v14087
  %v14090 = vsel %vm8872, %v14088, %v14089
  %v14091 = vsel %vm8876, %v14088, %v14090
  %v14092 = vsel %vm8880, %v14088, %v14091
  %v14093 = vsel %vm8874, %v11253, %v11253
  %v14094 = vsel %vm8878, %v11253, %v14093
  %v14095 = vrot.slane %v11254, 7
  %v14096 = vsel %vm8868, %v14095, %v14094
  %v14097 = vsel %vm8872, %v14095, %v14096
  %v14098 = vsel %vm8876, %v14095, %v14097
  %v14099 = vsel %vm8880, %v14095, %v14098
  %v14100 = vsel %vm8874, %v11255, %v11255
  %v14101 = vsel %vm8878, %v11255, %v14100
  %v14102 = vrot.slane %v11256, 7
  %v14103 = vsel %vm8868, %v14102, %v14101
  %v14104 = vsel %vm8872, %v14102, %v14103
  %v14105 = vsel %vm8876, %v14102, %v14104
  %v14106 = vsel %vm8880, %v14102, %v14105
  %v14107 = vsel %vm8874, %v11257, %v11257
  %v14108 = vsel %vm8878, %v11257, %v14107
  %v14109 = vrot.slane %v11258, 7
  %v14110 = vsel %vm8868, %v14109, %v14108
  %v14111 = vsel %vm8872, %v14109, %v14110
  %v14112 = vsel %vm8876, %v14109, %v14111
  %v14113 = vsel %vm8880, %v14109, %v14112
  %v14114 = vsel %vm8874, %v11259, %v11259
  %v14115 = vsel %vm8878, %v11259, %v14114
  %v14116 = vrot.slane %v11260, 7
  %v14117 = vsel %vm8868, %v14116, %v14115
  %v14118 = vsel %vm8872, %v14116, %v14117
  %v14119 = vsel %vm8876, %v14116, %v14118
  %v14120 = vsel %vm8880, %v14116, %v14119
  %v14121 = vsel %vm8874, %v11261, %v11261
  %v14122 = vsel %vm8878, %v11261, %v14121
  %v14123 = vrot.slane %v11262, 7
  %v14124 = vsel %vm8868, %v14123, %v14122
  %v14125 = vsel %vm8872, %v14123, %v14124
  %v14126 = vsel %vm8876, %v14123, %v14125
  %v14127 = vsel %vm8880, %v14123, %v14126
  %v14128 = vsel %vm8874, %v11263, %v11263
  %v14129 = vsel %vm8878, %v11263, %v14128
  %v14130 = vrot.slane %v11264, 7
  %v14131 = vsel %vm8868, %v14130, %v14129
  %v14132 = vsel %vm8872, %v14130, %v14131
  %v14133 = vsel %vm8876, %v14130, %v14132
  %v14134 = vsel %vm8880, %v14130, %v14133
  %v14135 = vsel %vm8874, %v11265, %v11265
  %v14136 = vsel %vm8878, %v11265, %v14135
  %v14137 = vrot.slane %v11266, 7
  %v14138 = vsel %vm8868, %v14137, %v14136
  %v14139 = vsel %vm8872, %v14137, %v14138
  %v14140 = vsel %vm8876, %v14137, %v14139
  %v14141 = vsel %vm8880, %v14137, %v14140
  %v14142 = vsel %vm8874, %v11267, %v11267
  %v14143 = vsel %vm8878, %v11267, %v14142
  %v14144 = vrot.slane %v11268, 7
  %v14145 = vsel %vm8868, %v14144, %v14143
  %v14146 = vsel %vm8872, %v14144, %v14145
  %v14147 = vsel %vm8876, %v14144, %v14146
  %v14148 = vsel %vm8880, %v14144, %v14147
  %v14149 = vsel %vm8874, %v11269, %v11269
  %v14150 = vsel %vm8878, %v11269, %v14149
  %v14151 = vrot.slane %v11270, 7
  %v14152 = vsel %vm8868, %v14151, %v14150
  %v14153 = vsel %vm8872, %v14151, %v14152
  %v14154 = vsel %vm8876, %v14151, %v14153
  %v14155 = vsel %vm8880, %v14151, %v14154
  %v14156 = vsel %vm8874, %v11271, %v11271
  %v14157 = vsel %vm8878, %v11271, %v14156
  %v14158 = vrot.slane %v11272, 7
  %v14159 = vsel %vm8868, %v14158, %v14157
  %v14160 = vsel %vm8872, %v14158, %v14159
  %v14161 = vsel %vm8876, %v14158, %v14160
  %v14162 = vsel %vm8880, %v14158, %v14161
  %v14163 = vsel %vm8874, %v11273, %v11273
  %v14164 = vsel %vm8878, %v11273, %v14163
  %v14165 = vrot.slane %v11274, 7
  %v14166 = vsel %vm8868, %v14165, %v14164
  %v14167 = vsel %vm8872, %v14165, %v14166
  %v14168 = vsel %vm8876, %v14165, %v14167
  %v14169 = vsel %vm8880, %v14165, %v14168
  %v14170 = vsel %vm8874, %v11275, %v11275
  %v14171 = vsel %vm8878, %v11275, %v14170
  %v14172 = vrot.slane %v11276, 7
  %v14173 = vsel %vm8868, %v14172, %v14171
  %v14174 = vsel %vm8872, %v14172, %v14173
  %v14175 = vsel %vm8876, %v14172, %v14174
  %v14176 = vsel %vm8880, %v14172, %v14175
  %v14177 = vsel %vm8874, %v11277, %v11277
  %v14178 = vsel %vm8878, %v11277, %v14177
  %v14179 = vrot.slane %v11278, 7
  %v14180 = vsel %vm8868, %v14179, %v14178
  %v14181 = vsel %vm8872, %v14179, %v14180
  %v14182 = vsel %vm8876, %v14179, %v14181
  %v14183 = vsel %vm8880, %v14179, %v14182
  %v14184 = vsel %vm8874, %v11279, %v11279
  %v14185 = vsel %vm8878, %v11279, %v14184
  %v14186 = vrot.slane %v11280, 7
  %v14187 = vsel %vm8868, %v14186, %v14185
  %v14188 = vsel %vm8872, %v14186, %v14187
  %v14189 = vsel %vm8876, %v14186, %v14188
  %v14190 = vsel %vm8880, %v14186, %v14189
  %v14191 = vsel %vm8874, %v11281, %v11281
  %v14192 = vsel %vm8878, %v11281, %v14191
  %v14193 = vrot.slane %v11282, 7
  %v14194 = vsel %vm8868, %v14193, %v14192
  %v14195 = vsel %vm8872, %v14193, %v14194
  %v14196 = vsel %vm8876, %v14193, %v14195
  %v14197 = vsel %vm8880, %v14193, %v14196
  %v14198 = vsel %vm8874, %v11283, %v11283
  %v14199 = vsel %vm8878, %v11283, %v14198
  %v14200 = vrot.slane %v11284, 7
  %v14201 = vsel %vm8868, %v14200, %v14199
  %v14202 = vsel %vm8872, %v14200, %v14201
  %v14203 = vsel %vm8876, %v14200, %v14202
  %v14204 = vsel %vm8880, %v14200, %v14203
  %v14205 = vsel %vm8874, %v11285, %v11285
  %v14206 = vsel %vm8878, %v11285, %v14205
  %v14207 = vrot.slane %v11286, 7
  %v14208 = vsel %vm8868, %v14207, %v14206
  %v14209 = vsel %vm8872, %v14207, %v14208
  %v14210 = vsel %vm8876, %v14207, %v14209
  %v14211 = vsel %vm8880, %v14207, %v14210
  %v14212 = vsel %vm8874, %v11287, %v11287
  %v14213 = vsel %vm8878, %v11287, %v14212
  %v14214 = vrot.slane %v11288, 7
  %v14215 = vsel %vm8868, %v14214, %v14213
  %v14216 = vsel %vm8872, %v14214, %v14215
  %v14217 = vsel %vm8876, %v14214, %v14216
  %v14218 = vsel %vm8880, %v14214, %v14217
  %v14219 = vsel %vm8874, %v11289, %v11289
  %v14220 = vsel %vm8878, %v11289, %v14219
  %v14221 = vrot.slane %v11290, 7
  %v14222 = vsel %vm8868, %v14221, %v14220
  %v14223 = vsel %vm8872, %v14221, %v14222
  %v14224 = vsel %vm8876, %v14221, %v14223
  %v14225 = vsel %vm8880, %v14221, %v14224
  %v14226 = vsel %vm8874, %v11291, %v11291
  %v14227 = vsel %vm8878, %v11291, %v14226
  %v14228 = vrot.slane %v11292, 7
  %v14229 = vsel %vm8868, %v14228, %v14227
  %v14230 = vsel %vm8872, %v14228, %v14229
  %v14231 = vsel %vm8876, %v14228, %v14230
  %v14232 = vsel %vm8880, %v14228, %v14231
  %v14233 = vsel %vm8874, %v11293, %v11293
  %v14234 = vsel %vm8878, %v11293, %v14233
  %v14235 = vrot.slane %v11294, 7
  %v14236 = vsel %vm8868, %v14235, %v14234
  %v14237 = vsel %vm8872, %v14235, %v14236
  %v14238 = vsel %vm8876, %v14235, %v14237
  %v14239 = vsel %vm8880, %v14235, %v14238
  %v14240 = vsel %vm8874, %v11295, %v11295
  %v14241 = vsel %vm8878, %v11295, %v14240
  %v14242 = vrot.slane %v11296, 7
  %v14243 = vsel %vm8868, %v14242, %v14241
  %v14244 = vsel %vm8872, %v14242, %v14243
  %v14245 = vsel %vm8876, %v14242, %v14244
  %v14246 = vsel %vm8880, %v14242, %v14245
  %v14247 = vsel %vm8874, %v11297, %v11297
  %v14248 = vsel %vm8878, %v11297, %v14247
  %v14249 = vrot.slane %v11298, 7
  %v14250 = vsel %vm8868, %v14249, %v14248
  %v14251 = vsel %vm8872, %v14249, %v14250
  %v14252 = vsel %vm8876, %v14249, %v14251
  %v14253 = vsel %vm8880, %v14249, %v14252
  %v14254 = vsel %vm8874, %v11299, %v11299
  %v14255 = vsel %vm8878, %v11299, %v14254
  %v14256 = vrot.slane %v11300, 7
  %v14257 = vsel %vm8868, %v14256, %v14255
  %v14258 = vsel %vm8872, %v14256, %v14257
  %v14259 = vsel %vm8876, %v14256, %v14258
  %v14260 = vsel %vm8880, %v14256, %v14259
  %v14325 = vrot.slane %v13847, 4
  %vm14326 = vcmask 1047556
  %v14327 = vsel %vm14326, %v14325, %v13819
  %v14329 = vunpack.c.l.s4 1934713408
  %v14330 = vunpack.c.0.s8 %v14329
  %v14331 = vperm.slane %v14327, %v14330
  %v14332 = vrot.slane %v14331, 4
  %v14333 = vsel %vm14326, 0.0, %v14332
  %v14334 = vrot.slane %v13903, 4
  %v14335 = vsel %vm14326, %v14334, %v13875
  %v14337 = vunpack.c.l.s4 1934713408
  %v14338 = vunpack.c.0.s8 %v14337
  %v14339 = vperm.slane %v14335, %v14338
  %v14340 = vrot.slane %v14339, 4
  %v14341 = vsel %vm14326, 0.0, %v14340
  %v14342 = vrot.slane %v13959, 4
  %v14343 = vsel %vm14326, %v14342, %v13931
  %v14345 = vunpack.c.l.s4 1934713408
  %v14346 = vunpack.c.0.s8 %v14345
  %v14347 = vperm.slane %v14343, %v14346
  %v14348 = vrot.slane %v14347, 4
  %v14349 = vsel %vm14326, 0.0, %v14348
  %v14350 = vrot.slane %v14015, 4
  %v14351 = vsel %vm14326, %v14350, %v13987
  %v14353 = vunpack.c.l.s4 1934713408
  %v14354 = vunpack.c.0.s8 %v14353
  %v14355 = vperm.slane %v14351, %v14354
  %v14356 = vrot.slane %v14355, 4
  %v14357 = vsel %vm14326, 0.0, %v14356
  %v14358 = vrot.slane %v13854, 4
  %v14359 = vsel %vm14326, %v14358, %v13826
  %v14361 = vunpack.c.l.s4 1934713408
  %v14362 = vunpack.c.0.s8 %v14361
  %v14363 = vperm.slane %v14359, %v14362
  %v14364 = vrot.slane %v14363, 4
  %v14365 = vsel %vm14326, 0.0, %v14364
  %v14366 = vrot.slane %v13910, 4
  %v14367 = vsel %vm14326, %v14366, %v13882
  %v14369 = vunpack.c.l.s4 1934713408
  %v14370 = vunpack.c.0.s8 %v14369
  %v14371 = vperm.slane %v14367, %v14370
  %v14372 = vrot.slane %v14371, 4
  %v14373 = vsel %vm14326, 0.0, %v14372
  %v14374 = vrot.slane %v13966, 4
  %v14375 = vsel %vm14326, %v14374, %v13938
  %v14377 = vunpack.c.l.s4 1934713408
  %v14378 = vunpack.c.0.s8 %v14377
  %v14379 = vperm.slane %v14375, %v14378
  %v14380 = vrot.slane %v14379, 4
  %v14381 = vsel %vm14326, 0.0, %v14380
  %v14382 = vrot.slane %v14022, 4
  %v14383 = vsel %vm14326, %v14382, %v13994
  %v14385 = vunpack.c.l.s4 1934713408
  %v14386 = vunpack.c.0.s8 %v14385
  %v14387 = vperm.slane %v14383, %v14386
  %v14388 = vrot.slane %v14387, 4
  %v14389 = vsel %vm14326, 0.0, %v14388
  %v14390 = vrot.slane %v13861, 4
  %v14391 = vsel %vm14326, %v14390, %v13833
  %v14393 = vunpack.c.l.s4 1934713408
  %v14394 = vunpack.c.0.s8 %v14393
  %v14395 = vperm.slane %v14391, %v14394
  %v14396 = vrot.slane %v14395, 4
  %v14397 = vsel %vm14326, 0.0, %v14396
  %v14398 = vrot.slane %v13917, 4
  %v14399 = vsel %vm14326, %v14398, %v13889
  %v14401 = vunpack.c.l.s4 1934713408
  %v14402 = vunpack.c.0.s8 %v14401
  %v14403 = vperm.slane %v14399, %v14402
  %v14404 = vrot.slane %v14403, 4
  %v14405 = vsel %vm14326, 0.0, %v14404
  %v14406 = vrot.slane %v13973, 4
  %v14407 = vsel %vm14326, %v14406, %v13945
  %v14409 = vunpack.c.l.s4 1934713408
  %v14410 = vunpack.c.0.s8 %v14409
  %v14411 = vperm.slane %v14407, %v14410
  %v14412 = vrot.slane %v14411, 4
  %v14413 = vsel %vm14326, 0.0, %v14412
  %v14414 = vrot.slane %v14029, 4
  %v14415 = vsel %vm14326, %v14414, %v14001
  %v14417 = vunpack.c.l.s4 1934713408
  %v14418 = vunpack.c.0.s8 %v14417
  %v14419 = vperm.slane %v14415, %v14418
  %v14420 = vrot.slane %v14419, 4
  %v14421 = vsel %vm14326, 0.0, %v14420
  %v14422 = vrot.slane %v13868, 4
  %v14423 = vsel %vm14326, %v14422, %v13840
  %v14425 = vunpack.c.l.s4 1934713408
  %v14426 = vunpack.c.0.s8 %v14425
  %v14427 = vperm.slane %v14423, %v14426
  %v14428 = vrot.slane %v14427, 4
  %v14429 = vsel %vm14326, 0.0, %v14428
  %v14430 = vrot.slane %v13924, 4
  %v14431 = vsel %vm14326, %v14430, %v13896
  %v14433 = vunpack.c.l.s4 1934713408
  %v14434 = vunpack.c.0.s8 %v14433
  %v14435 = vperm.slane %v14431, %v14434
  %v14436 = vrot.slane %v14435, 4
  %v14437 = vsel %vm14326, 0.0, %v14436
  %v14438 = vrot.slane %v13980, 4
  %v14439 = vsel %vm14326, %v14438, %v13952
  %v14441 = vunpack.c.l.s4 1934713408
  %v14442 = vunpack.c.0.s8 %v14441
  %v14443 = vperm.slane %v14439, %v14442
  %v14444 = vrot.slane %v14443, 4
  %v14445 = vsel %vm14326, 0.0, %v14444
  %v14446 = vrot.slane %v14036, 4
  %v14447 = vsel %vm14326, %v14446, %v14008
  %v14449 = vunpack.c.l.s4 1934713408
  %v14450 = vunpack.c.0.s8 %v14449
  %v14451 = vperm.slane %v14447, %v14450
  %v14452 = vrot.slane %v14451, 4
  %v14453 = vsel %vm14326, 0.0, %v14452
  %v14454 = vrot.slane %v14071, 4
  %v14455 = vsel %vm14326, %v14454, %v14043
  %v14457 = vunpack.c.l.s4 1934713408
  %v14458 = vunpack.c.0.s8 %v14457
  %v14459 = vperm.slane %v14455, %v14458
  %v14460 = vrot.slane %v14459, 4
  %v14461 = vsel %vm14326, 0.0, %v14460
  %v14462 = vrot.slane %v14127, 4
  %v14463 = vsel %vm14326, %v14462, %v14099
  %v14465 = vunpack.c.l.s4 1934713408
  %v14466 = vunpack.c.0.s8 %v14465
  %v14467 = vperm.slane %v14463, %v14466
  %v14468 = vrot.slane %v14467, 4
  %v14469 = vsel %vm14326, 0.0, %v14468
  %v14470 = vrot.slane %v14183, 4
  %v14471 = vsel %vm14326, %v14470, %v14155
  %v14473 = vunpack.c.l.s4 1934713408
  %v14474 = vunpack.c.0.s8 %v14473
  %v14475 = vperm.slane %v14471, %v14474
  %v14476 = vrot.slane %v14475, 4
  %v14477 = vsel %vm14326, 0.0, %v14476
  %v14478 = vrot.slane %v14239, 4
  %v14479 = vsel %vm14326, %v14478, %v14211
  %v14481 = vunpack.c.l.s4 1934713408
  %v14482 = vunpack.c.0.s8 %v14481
  %v14483 = vperm.slane %v14479, %v14482
  %v14484 = vrot.slane %v14483, 4
  %v14485 = vsel %vm14326, 0.0, %v14484
  %v14486 = vrot.slane %v14078, 4
  %v14487 = vsel %vm14326, %v14486, %v14050
  %v14489 = vunpack.c.l.s4 1934713408
  %v14490 = vunpack.c.0.s8 %v14489
  %v14491 = vperm.slane %v14487, %v14490
  %v14492 = vrot.slane %v14491, 4
  %v14493 = vsel %vm14326, 0.0, %v14492
  %v14494 = vrot.slane %v14134, 4
  %v14495 = vsel %vm14326, %v14494, %v14106
  %v14497 = vunpack.c.l.s4 1934713408
  %v14498 = vunpack.c.0.s8 %v14497
  %v14499 = vperm.slane %v14495, %v14498
  %v14500 = vrot.slane %v14499, 4
  %v14501 = vsel %vm14326, 0.0, %v14500
  %v14502 = vrot.slane %v14190, 4
  %v14503 = vsel %vm14326, %v14502, %v14162
  %v14505 = vunpack.c.l.s4 1934713408
  %v14506 = vunpack.c.0.s8 %v14505
  %v14507 = vperm.slane %v14503, %v14506
  %v14508 = vrot.slane %v14507, 4
  %v14509 = vsel %vm14326, 0.0, %v14508
  %v14510 = vrot.slane %v14246, 4
  %v14511 = vsel %vm14326, %v14510, %v14218
  %v14513 = vunpack.c.l.s4 1934713408
  %v14514 = vunpack.c.0.s8 %v14513
  %v14515 = vperm.slane %v14511, %v14514
  %v14516 = vrot.slane %v14515, 4
  %v14517 = vsel %vm14326, 0.0, %v14516
  %v14518 = vrot.slane %v14085, 4
  %v14519 = vsel %vm14326, %v14518, %v14057
  %v14521 = vunpack.c.l.s4 1934713408
  %v14522 = vunpack.c.0.s8 %v14521
  %v14523 = vperm.slane %v14519, %v14522
  %v14524 = vrot.slane %v14523, 4
  %v14525 = vsel %vm14326, 0.0, %v14524
  %v14526 = vrot.slane %v14141, 4
  %v14527 = vsel %vm14326, %v14526, %v14113
  %v14529 = vunpack.c.l.s4 1934713408
  %v14530 = vunpack.c.0.s8 %v14529
  %v14531 = vperm.slane %v14527, %v14530
  %v14532 = vrot.slane %v14531, 4
  %v14533 = vsel %vm14326, 0.0, %v14532
  %v14534 = vrot.slane %v14197, 4
  %v14535 = vsel %vm14326, %v14534, %v14169
  %v14537 = vunpack.c.l.s4 1934713408
  %v14538 = vunpack.c.0.s8 %v14537
  %v14539 = vperm.slane %v14535, %v14538
  %v14540 = vrot.slane %v14539, 4
  %v14541 = vsel %vm14326, 0.0, %v14540
  %v14542 = vrot.slane %v14253, 4
  %v14543 = vsel %vm14326, %v14542, %v14225
  %v14545 = vunpack.c.l.s4 1934713408
  %v14546 = vunpack.c.0.s8 %v14545
  %v14547 = vperm.slane %v14543, %v14546
  %v14548 = vrot.slane %v14547, 4
  %v14549 = vsel %vm14326, 0.0, %v14548
  %v14550 = vrot.slane %v14092, 4
  %v14551 = vsel %vm14326, %v14550, %v14064
  %v14553 = vunpack.c.l.s4 1934713408
  %v14554 = vunpack.c.0.s8 %v14553
  %v14555 = vperm.slane %v14551, %v14554
  %v14556 = vrot.slane %v14555, 4
  %v14557 = vsel %vm14326, 0.0, %v14556
  %v14558 = vrot.slane %v14148, 4
  %v14559 = vsel %vm14326, %v14558, %v14120
  %v14561 = vunpack.c.l.s4 1934713408
  %v14562 = vunpack.c.0.s8 %v14561
  %v14563 = vperm.slane %v14559, %v14562
  %v14564 = vrot.slane %v14563, 4
  %v14565 = vsel %vm14326, 0.0, %v14564
  %v14566 = vrot.slane %v14204, 4
  %v14567 = vsel %vm14326, %v14566, %v14176
  %v14569 = vunpack.c.l.s4 1934713408
  %v14570 = vunpack.c.0.s8 %v14569
  %v14571 = vperm.slane %v14567, %v14570
  %v14572 = vrot.slane %v14571, 4
  %v14573 = vsel %vm14326, 0.0, %v14572
  %v14574 = vrot.slane %v14260, 4
  %v14575 = vsel %vm14326, %v14574, %v14232
  %v14577 = vunpack.c.l.s4 1934713408
  %v14578 = vunpack.c.0.s8 %v14577
  %v14579 = vperm.slane %v14575, %v14578
  %v14580 = vrot.slane %v14579, 4
  %v14581 = vsel %vm14326, 0.0, %v14580
  %14590 = vst [vmem:[#allocation1] ss:$4 sm:$0xff] %v14331
  %s14591 = scalar_lea.vmem [#allocation1], 1
  %14592 = vst [vmem:[%s14591] ss:$4 sm:$0xff] %v14339
  %s14593 = scalar_lea.vmem [#allocation1], 2
  %14594 = vst [vmem:[%s14593] ss:$4 sm:$0xff] %v14347
  %s14595 = scalar_lea.vmem [#allocation1], 3
  %14596 = vst [vmem:[%s14595] ss:$4 sm:$0xff] %v14355
  %v14597 = vld.sshfl [vmem:[#allocation1] sm:$0xff pattern:$0x73625140]
  %s14598 = scalar_lea.vmem [#allocation1], 32
  %14599 = vst [vmem:[%s14598] ss:$4 sm:$0xff] %v14459
  %s14600 = scalar_lea.vmem [#allocation1], 33
  %14601 = vst [vmem:[%s14600] ss:$4 sm:$0xff] %v14467
  %s14602 = scalar_lea.vmem [#allocation1], 34
  %14603 = vst [vmem:[%s14602] ss:$4 sm:$0xff] %v14475
  %s14604 = scalar_lea.vmem [#allocation1], 35
  %14605 = vst [vmem:[%s14604] ss:$4 sm:$0xff] %v14483
  %v14606 = vld.sshfl [vmem:[#allocation1 + $0x20] sm:$0xff pattern:$0x73625140]
  %14617 = vst [vmem:[#allocation1] ss:$4 sm:$0xff] %v14333
  %s14618 = scalar_lea.vmem [#allocation1], 1
  %14619 = vst [vmem:[%s14618] ss:$4 sm:$0xff] %v14341
  %s14620 = scalar_lea.vmem [#allocation1], 2
  %14621 = vst [vmem:[%s14620] ss:$4 sm:$0xff] %v14349
  %s14622 = scalar_lea.vmem [#allocation1], 3
  %14623 = vst [vmem:[%s14622] ss:$4 sm:$0xff] %v14357
  %v14624 = vld.sshfl [vmem:[#allocation1] sm:$0xff pattern:$0x73625140]
  %s14625 = scalar_lea.vmem [#allocation1], 32
  %14626 = vst [vmem:[%s14625] ss:$4 sm:$0xff] %v14461
  %s14627 = scalar_lea.vmem [#allocation1], 33
  %14628 = vst [vmem:[%s14627] ss:$4 sm:$0xff] %v14469
  %s14629 = scalar_lea.vmem [#allocation1], 34
  %14630 = vst [vmem:[%s14629] ss:$4 sm:$0xff] %v14477
  %s14631 = scalar_lea.vmem [#allocation1], 35
  %14632 = vst [vmem:[%s14631] ss:$4 sm:$0xff] %v14485
  %v14633 = vld.sshfl [vmem:[#allocation1 + $0x20] sm:$0xff pattern:$0x73625140]
  %14634 = vrot.lane.b32.xlu0 %v14624, 32
  %v14635 = vpop.permute.xlu0 %14634
  %14636 = vrot.lane.b32.xlu0 %v14633, 32
  %v14637 = vpop.permute.xlu0 %14636
  %14648 = vst [vmem:[#allocation1] ss:$4 sm:$0xff] %v14363
  %s14649 = scalar_lea.vmem [#allocation1], 1
  %14650 = vst [vmem:[%s14649] ss:$4 sm:$0xff] %v14371
  %s14651 = scalar_lea.vmem [#allocation1], 2
  %14652 = vst [vmem:[%s14651] ss:$4 sm:$0xff] %v14379
  %s14653 = scalar_lea.vmem [#allocation1], 3
  %14654 = vst [vmem:[%s14653] ss:$4 sm:$0xff] %v14387
  %v14655 = vld.sshfl [vmem:[#allocation1] sm:$0xff pattern:$0x73625140]
  %s14656 = scalar_lea.vmem [#allocation1], 32
  %14657 = vst [vmem:[%s14656] ss:$4 sm:$0xff] %v14491
  %s14658 = scalar_lea.vmem [#allocation1], 33
  %14659 = vst [vmem:[%s14658] ss:$4 sm:$0xff] %v14499
  %s14660 = scalar_lea.vmem [#allocation1], 34
  %14661 = vst [vmem:[%s14660] ss:$4 sm:$0xff] %v14507
  %s14662 = scalar_lea.vmem [#allocation1], 35
  %14663 = vst [vmem:[%s14662] ss:$4 sm:$0xff] %v14515
  %v14664 = vld.sshfl [vmem:[#allocation1 + $0x20] sm:$0xff pattern:$0x73625140]
  %14665 = vrot.lane.b32.xlu0 %v14655, 64
  %v14666 = vpop.permute.xlu0 %14665
  %14667 = vrot.lane.b32.xlu0 %v14664, 64
  %v14668 = vpop.permute.xlu0 %14667
  %14679 = vst [vmem:[#allocation1] ss:$4 sm:$0xff] %v14365
  %s14680 = scalar_lea.vmem [#allocation1], 1
  %14681 = vst [vmem:[%s14680] ss:$4 sm:$0xff] %v14373
  %s14682 = scalar_lea.vmem [#allocation1], 2
  %14683 = vst [vmem:[%s14682] ss:$4 sm:$0xff] %v14381
  %s14684 = scalar_lea.vmem [#allocation1], 3
  %14685 = vst [vmem:[%s14684] ss:$4 sm:$0xff] %v14389
  %v14686 = vld.sshfl [vmem:[#allocation1] sm:$0xff pattern:$0x73625140]
  %s14687 = scalar_lea.vmem [#allocation1], 32
  %14688 = vst [vmem:[%s14687] ss:$4 sm:$0xff] %v14493
  %s14689 = scalar_lea.vmem [#allocation1], 33
  %14690 = vst [vmem:[%s14689] ss:$4 sm:$0xff] %v14501
  %s14691 = scalar_lea.vmem [#allocation1], 34
  %14692 = vst [vmem:[%s14691] ss:$4 sm:$0xff] %v14509
  %s14693 = scalar_lea.vmem [#allocation1], 35
  %14694 = vst [vmem:[%s14693] ss:$4 sm:$0xff] %v14517
  %v14695 = vld.sshfl [vmem:[#allocation1 + $0x20] sm:$0xff pattern:$0x73625140]
  %14696 = vrot.lane.b32.xlu0 %v14686, 96
  %v14697 = vpop.permute.xlu0 %14696
  %14698 = vrot.lane.b32.xlu0 %v14695, 96
  %v14699 = vpop.permute.xlu0 %14698
  %14710 = vst [vmem:[#allocation1] ss:$4 sm:$0xff] %v14395
  %s14711 = scalar_lea.vmem [#allocation1], 1
  %14712 = vst [vmem:[%s14711] ss:$4 sm:$0xff] %v14403
  %s14713 = scalar_lea.vmem [#allocation1], 2
  %14714 = vst [vmem:[%s14713] ss:$4 sm:$0xff] %v14411
  %s14715 = scalar_lea.vmem [#allocation1], 3
  %14716 = vst [vmem:[%s14715] ss:$4 sm:$0xff] %v14419
  %v14717 = vld.sshfl [vmem:[#allocation1] sm:$0xff pattern:$0x73625140]
  %s14718 = scalar_lea.vmem [#allocation1], 32
  %14719 = vst [vmem:[%s14718] ss:$4 sm:$0xff] %v14523
  %s14720 = scalar_lea.vmem [#allocation1], 33
  %14721 = vst [vmem:[%s14720] ss:$4 sm:$0xff] %v14531
  %s14722 = scalar_lea.vmem [#allocation1], 34
  %14723 = vst [vmem:[%s14722] ss:$4 sm:$0xff] %v14539
  %s14724 = scalar_lea.vmem [#allocation1], 35
  %14725 = vst [vmem:[%s14724] ss:$4 sm:$0xff] %v14547
  %v14726 = vld.sshfl [vmem:[#allocation1 + $0x20] sm:$0xff pattern:$0x73625140]
  %14737 = vst [vmem:[#allocation1] ss:$4 sm:$0xff] %v14397
  %s14738 = scalar_lea.vmem [#allocation1], 1
  %14739 = vst [vmem:[%s14738] ss:$4 sm:$0xff] %v14405
  %s14740 = scalar_lea.vmem [#allocation1], 2
  %14741 = vst [vmem:[%s14740] ss:$4 sm:$0xff] %v14413
  %s14742 = scalar_lea.vmem [#allocation1], 3
  %14743 = vst [vmem:[%s14742] ss:$4 sm:$0xff] %v14421
  %v14744 = vld.sshfl [vmem:[#allocation1] sm:$0xff pattern:$0x73625140]
  %s14745 = scalar_lea.vmem [#allocation1], 32
  %14746 = vst [vmem:[%s14745] ss:$4 sm:$0xff] %v14525
  %s14747 = scalar_lea.vmem [#allocation1], 33
  %14748 = vst [vmem:[%s14747] ss:$4 sm:$0xff] %v14533
  %s14749 = scalar_lea.vmem [#allocation1], 34
  %14750 = vst [vmem:[%s14749] ss:$4 sm:$0xff] %v14541
  %s14751 = scalar_lea.vmem [#allocation1], 35
  %14752 = vst [vmem:[%s14751] ss:$4 sm:$0xff] %v14549
  %v14753 = vld.sshfl [vmem:[#allocation1 + $0x20] sm:$0xff pattern:$0x73625140]
  %14754 = vrot.lane.b32.xlu0 %v14744, 32
  %v14755 = vpop.permute.xlu0 %14754
  %14756 = vrot.lane.b32.xlu0 %v14753, 32
  %v14757 = vpop.permute.xlu0 %14756
  %14768 = vst [vmem:[#allocation1] ss:$4 sm:$0xff] %v14427
  %s14769 = scalar_lea.vmem [#allocation1], 1
  %14770 = vst [vmem:[%s14769] ss:$4 sm:$0xff] %v14435
  %s14771 = scalar_lea.vmem [#allocation1], 2
  %14772 = vst [vmem:[%s14771] ss:$4 sm:$0xff] %v14443
  %s14773 = scalar_lea.vmem [#allocation1], 3
  %14774 = vst [vmem:[%s14773] ss:$4 sm:$0xff] %v14451
  %v14775 = vld.sshfl [vmem:[#allocation1] sm:$0xff pattern:$0x73625140]
  %s14776 = scalar_lea.vmem [#allocation1], 32
  %14777 = vst [vmem:[%s14776] ss:$4 sm:$0xff] %v14555
  %s14778 = scalar_lea.vmem [#allocation1], 33
  %14779 = vst [vmem:[%s14778] ss:$4 sm:$0xff] %v14563
  %s14780 = scalar_lea.vmem [#allocation1], 34
  %14781 = vst [vmem:[%s14780] ss:$4 sm:$0xff] %v14571
  %s14782 = scalar_lea.vmem [#allocation1], 35
  %14783 = vst [vmem:[%s14782] ss:$4 sm:$0xff] %v14579
  %v14784 = vld.sshfl [vmem:[#allocation1 + $0x20] sm:$0xff pattern:$0x73625140]
  %14785 = vrot.lane.b32.xlu0 %v14775, 64
  %v14786 = vpop.permute.xlu0 %14785
  %14787 = vrot.lane.b32.xlu0 %v14784, 64
  %v14788 = vpop.permute.xlu0 %14787
  %14799 = vst [vmem:[#allocation1] ss:$4 sm:$0xff] %v14429
  %s14800 = scalar_lea.vmem [#allocation1], 1
  %14801 = vst [vmem:[%s14800] ss:$4 sm:$0xff] %v14437
  %s14802 = scalar_lea.vmem [#allocation1], 2
  %14803 = vst [vmem:[%s14802] ss:$4 sm:$0xff] %v14445
  %s14804 = scalar_lea.vmem [#allocation1], 3
  %14805 = vst [vmem:[%s14804] ss:$4 sm:$0xff] %v14453
  %v14806 = vld.sshfl [vmem:[#allocation1] sm:$0xff pattern:$0x73625140]
  %s14807 = scalar_lea.vmem [#allocation1], 32
  %14808 = vst [vmem:[%s14807] ss:$4 sm:$0xff] %v14557
  %s14809 = scalar_lea.vmem [#allocation1], 33
  %14810 = vst [vmem:[%s14809] ss:$4 sm:$0xff] %v14565
  %s14811 = scalar_lea.vmem [#allocation1], 34
  %14812 = vst [vmem:[%s14811] ss:$4 sm:$0xff] %v14573
  %s14813 = scalar_lea.vmem [#allocation1], 35
  %14814 = vst [vmem:[%s14813] ss:$4 sm:$0xff] %v14581
  %v14815 = vld.sshfl [vmem:[#allocation1 + $0x20] sm:$0xff pattern:$0x73625140]
  %14816 = vrot.lane.b32.xlu0 %v14806, 96
  %v14817 = vpop.permute.xlu0 %14816
  %14818 = vrot.lane.b32.xlu0 %v14815, 96
  %v14819 = vpop.permute.xlu0 %14818
  %v14822 = vsel %vm9003, %v14597, %v14635
  %v14823 = vsel %vm9003, %v14606, %v14637
  %vm14824 = vcmask 523264
  %v14825 = vsel %vm14824, %v14822, %v14666
  %v14826 = vsel %vm14824, %v14823, %v14668
  %vm14827 = vcmask 785408
  %v14828 = vsel %vm14827, %v14825, %v14697
  %v14829 = vsel %vm14827, %v14826, %v14699
  %v14830 = vsel %vm9003, %v14717, %v14755
  %v14831 = vsel %vm9003, %v14726, %v14757
  %v14832 = vsel %vm14824, %v14830, %v14786
  %v14833 = vsel %vm14824, %v14831, %v14788
  %v14834 = vsel %vm14827, %v14832, %v14817
  %v14835 = vsel %vm14827, %v14833, %v14819
  %14836 = vst [vmem:[%s7] sm:$0xff] %v14828
  %14837 = vst [vmem:[%s7 + $0x8] sm:$0xff] %v14834
  %14838 = vst [vmem:[%s7 + $0x20] sm:$0xff] %v14829
  %14839 = vst [vmem:[%s7 + $0x28] sm:$0xff] %v14835
  %v14968 = vsel %vm8874, %v13557, %v13557
  %v14969 = vsel %vm8878, %v13557, %v14968
  %v14970 = vrot.slane %v13558, 7
  %v14971 = vsel %vm8868, %v14970, %v14969
  %v14972 = vsel %vm8872, %v14970, %v14971
  %v14973 = vsel %vm8876, %v14970, %v14972
  %v14974 = vsel %vm8880, %v14970, %v14973
  %v14975 = vsel %vm8874, %v13559, %v13559
  %v14976 = vsel %vm8878, %v13559, %v14975
  %v14977 = vrot.slane %v13560, 7
  %v14978 = vsel %vm8868, %v14977, %v14976
  %v14979 = vsel %vm8872, %v14977, %v14978
  %v14980 = vsel %vm8876, %v14977, %v14979
  %v14981 = vsel %vm8880, %v14977, %v14980
  %v14982 = vsel %vm8874, %v13561, %v13561
  %v14983 = vsel %vm8878, %v13561, %v14982
  %v14984 = vrot.slane %v13562, 7
  %v14985 = vsel %vm8868, %v14984, %v14983
  %v14986 = vsel %vm8872, %v14984, %v14985
  %v14987 = vsel %vm8876, %v14984, %v14986
  %v14988 = vsel %vm8880, %v14984, %v14987
  %v14989 = vsel %vm8874, %v13563, %v13563
  %v14990 = vsel %vm8878, %v13563, %v14989
  %v14991 = vrot.slane %v13564, 7
  %v14992 = vsel %vm8868, %v14991, %v14990
  %v14993 = vsel %vm8872, %v14991, %v14992
  %v14994 = vsel %vm8876, %v14991, %v14993
  %v14995 = vsel %vm8880, %v14991, %v14994
  %v14996 = vsel %vm8874, %v13565, %v13565
  %v14997 = vsel %vm8878, %v13565, %v14996
  %v14998 = vrot.slane %v13566, 7
  %v14999 = vsel %vm8868, %v14998, %v14997
  %v15000 = vsel %vm8872, %v14998, %v14999
  %v15001 = vsel %vm8876, %v14998, %v15000
  %v15002 = vsel %vm8880, %v14998, %v15001
  %v15003 = vsel %vm8874, %v13567, %v13567
  %v15004 = vsel %vm8878, %v13567, %v15003
  %v15005 = vrot.slane %v13568, 7
  %v15006 = vsel %vm8868, %v15005, %v15004
  %v15007 = vsel %vm8872, %v15005, %v15006
  %v15008 = vsel %vm8876, %v15005, %v15007
  %v15009 = vsel %vm8880, %v15005, %v15008
  %v15010 = vsel %vm8874, %v13569, %v13569
  %v15011 = vsel %vm8878, %v13569, %v15010
  %v15012 = vrot.slane %v13570, 7
  %v15013 = vsel %vm8868, %v15012, %v15011
  %v15014 = vsel %vm8872, %v15012, %v15013
  %v15015 = vsel %vm8876, %v15012, %v15014
  %v15016 = vsel %vm8880, %v15012, %v15015
  %v15017 = vsel %vm8874, %v13571, %v13571
  %v15018 = vsel %vm8878, %v13571, %v15017
  %v15019 = vrot.slane %v13572, 7
  %v15020 = vsel %vm8868, %v15019, %v15018
  %v15021 = vsel %vm8872, %v15019, %v15020
  %v15022 = vsel %vm8876, %v15019, %v15021
  %v15023 = vsel %vm8880, %v15019, %v15022
  %v15024 = vsel %vm8874, %v13573, %v13573
  %v15025 = vsel %vm8878, %v13573, %v15024
  %v15026 = vrot.slane %v13574, 7
  %v15027 = vsel %vm8868, %v15026, %v15025
  %v15028 = vsel %vm8872, %v15026, %v15027
  %v15029 = vsel %vm8876, %v15026, %v15028
  %v15030 = vsel %vm8880, %v15026, %v15029
  %v15031 = vsel %vm8874, %v13575, %v13575
  %v15032 = vsel %vm8878, %v13575, %v15031
  %v15033 = vrot.slane %v13576, 7
  %v15034 = vsel %vm8868, %v15033, %v15032
  %v15035 = vsel %vm8872, %v15033, %v15034
  %v15036 = vsel %vm8876, %v15033, %v15035
  %v15037 = vsel %vm8880, %v15033, %v15036
  %v15038 = vsel %vm8874, %v13577, %v13577
  %v15039 = vsel %vm8878, %v13577, %v15038
  %v15040 = vrot.slane %v13578, 7
  %v15041 = vsel %vm8868, %v15040, %v15039
  %v15042 = vsel %vm8872, %v15040, %v15041
  %v15043 = vsel %vm8876, %v15040, %v15042
  %v15044 = vsel %vm8880, %v15040, %v15043
  %v15045 = vsel %vm8874, %v13579, %v13579
  %v15046 = vsel %vm8878, %v13579, %v15045
  %v15047 = vrot.slane %v13580, 7
  %v15048 = vsel %vm8868, %v15047, %v15046
  %v15049 = vsel %vm8872, %v15047, %v15048
  %v15050 = vsel %vm8876, %v15047, %v15049
  %v15051 = vsel %vm8880, %v15047, %v15050
  %v15052 = vsel %vm8874, %v13581, %v13581
  %v15053 = vsel %vm8878, %v13581, %v15052
  %v15054 = vrot.slane %v13582, 7
  %v15055 = vsel %vm8868, %v15054, %v15053
  %v15056 = vsel %vm8872, %v15054, %v15055
  %v15057 = vsel %vm8876, %v15054, %v15056
  %v15058 = vsel %vm8880, %v15054, %v15057
  %v15059 = vsel %vm8874, %v13583, %v13583
  %v15060 = vsel %vm8878, %v13583, %v15059
  %v15061 = vrot.slane %v13584, 7
  %v15062 = vsel %vm8868, %v15061, %v15060
  %v15063 = vsel %vm8872, %v15061, %v15062
  %v15064 = vsel %vm8876, %v15061, %v15063
  %v15065 = vsel %vm8880, %v15061, %v15064
  %v15066 = vsel %vm8874, %v13585, %v13585
  %v15067 = vsel %vm8878, %v13585, %v15066
  %v15068 = vrot.slane %v13586, 7
  %v15069 = vsel %vm8868, %v15068, %v15067
  %v15070 = vsel %vm8872, %v15068, %v15069
  %v15071 = vsel %vm8876, %v15068, %v15070
  %v15072 = vsel %vm8880, %v15068, %v15071
  %v15073 = vsel %vm8874, %v13587, %v13587
  %v15074 = vsel %vm8878, %v13587, %v15073
  %v15075 = vrot.slane %v13588, 7
  %v15076 = vsel %vm8868, %v15075, %v15074
  %v15077 = vsel %vm8872, %v15075, %v15076
  %v15078 = vsel %vm8876, %v15075, %v15077
  %v15079 = vsel %vm8880, %v15075, %v15078
  %v15080 = vsel %vm8874, %v13589, %v13589
  %v15081 = vsel %vm8878, %v13589, %v15080
  %v15082 = vrot.slane %v13590, 7
  %v15083 = vsel %vm8868, %v15082, %v15081
  %v15084 = vsel %vm8872, %v15082, %v15083
  %v15085 = vsel %vm8876, %v15082, %v15084
  %v15086 = vsel %vm8880, %v15082, %v15085
  %v15087 = vsel %vm8874, %v13591, %v13591
  %v15088 = vsel %vm8878, %v13591, %v15087
  %v15089 = vrot.slane %v13592, 7
  %v15090 = vsel %vm8868, %v15089, %v15088
  %v15091 = vsel %vm8872, %v15089, %v15090
  %v15092 = vsel %vm8876, %v15089, %v15091
  %v15093 = vsel %vm8880, %v15089, %v15092
  %v15094 = vsel %vm8874, %v13593, %v13593
  %v15095 = vsel %vm8878, %v13593, %v15094
  %v15096 = vrot.slane %v13594, 7
  %v15097 = vsel %vm8868, %v15096, %v15095
  %v15098 = vsel %vm8872, %v15096, %v15097
  %v15099 = vsel %vm8876, %v15096, %v15098
  %v15100 = vsel %vm8880, %v15096, %v15099
  %v15101 = vsel %vm8874, %v13595, %v13595
  %v15102 = vsel %vm8878, %v13595, %v15101
  %v15103 = vrot.slane %v13596, 7
  %v15104 = vsel %vm8868, %v15103, %v15102
  %v15105 = vsel %vm8872, %v15103, %v15104
  %v15106 = vsel %vm8876, %v15103, %v15105
  %v15107 = vsel %vm8880, %v15103, %v15106
  %v15108 = vsel %vm8874, %v13597, %v13597
  %v15109 = vsel %vm8878, %v13597, %v15108
  %v15110 = vrot.slane %v13598, 7
  %v15111 = vsel %vm8868, %v15110, %v15109
  %v15112 = vsel %vm8872, %v15110, %v15111
  %v15113 = vsel %vm8876, %v15110, %v15112
  %v15114 = vsel %vm8880, %v15110, %v15113
  %v15115 = vsel %vm8874, %v13599, %v13599
  %v15116 = vsel %vm8878, %v13599, %v15115
  %v15117 = vrot.slane %v13600, 7
  %v15118 = vsel %vm8868, %v15117, %v15116
  %v15119 = vsel %vm8872, %v15117, %v15118
  %v15120 = vsel %vm8876, %v15117, %v15119
  %v15121 = vsel %vm8880, %v15117, %v15120
  %v15122 = vsel %vm8874, %v13601, %v13601
  %v15123 = vsel %vm8878, %v13601, %v15122
  %v15124 = vrot.slane %v13602, 7
  %v15125 = vsel %vm8868, %v15124, %v15123
  %v15126 = vsel %vm8872, %v15124, %v15125
  %v15127 = vsel %vm8876, %v15124, %v15126
  %v15128 = vsel %vm8880, %v15124, %v15127
  %v15129 = vsel %vm8874, %v13603, %v13603
  %v15130 = vsel %vm8878, %v13603, %v15129
  %v15131 = vrot.slane %v13604, 7
  %v15132 = vsel %vm8868, %v15131, %v15130
  %v15133 = vsel %vm8872, %v15131, %v15132
  %v15134 = vsel %vm8876, %v15131, %v15133
  %v15135 = vsel %vm8880, %v15131, %v15134
  %v15136 = vsel %vm8874, %v13605, %v13605
  %v15137 = vsel %vm8878, %v13605, %v15136
  %v15138 = vrot.slane %v13606, 7
  %v15139 = vsel %vm8868, %v15138, %v15137
  %v15140 = vsel %vm8872, %v15138, %v15139
  %v15141 = vsel %vm8876, %v15138, %v15140
  %v15142 = vsel %vm8880, %v15138, %v15141
  %v15143 = vsel %vm8874, %v13607, %v13607
  %v15144 = vsel %vm8878, %v13607, %v15143
  %v15145 = vrot.slane %v13608, 7
  %v15146 = vsel %vm8868, %v15145, %v15144
  %v15147 = vsel %vm8872, %v15145, %v15146
  %v15148 = vsel %vm8876, %v15145, %v15147
  %v15149 = vsel %vm8880, %v15145, %v15148
  %v15150 = vsel %vm8874, %v13609, %v13609
  %v15151 = vsel %vm8878, %v13609, %v15150
  %v15152 = vrot.slane %v13610, 7
  %v15153 = vsel %vm8868, %v15152, %v15151
  %v15154 = vsel %vm8872, %v15152, %v15153
  %v15155 = vsel %vm8876, %v15152, %v15154
  %v15156 = vsel %vm8880, %v15152, %v15155
  %v15157 = vsel %vm8874, %v13611, %v13611
  %v15158 = vsel %vm8878, %v13611, %v15157
  %v15159 = vrot.slane %v13612, 7
  %v15160 = vsel %vm8868, %v15159, %v15158
  %v15161 = vsel %vm8872, %v15159, %v15160
  %v15162 = vsel %vm8876, %v15159, %v15161
  %v15163 = vsel %vm8880, %v15159, %v15162
  %v15164 = vsel %vm8874, %v13613, %v13613
  %v15165 = vsel %vm8878, %v13613, %v15164
  %v15166 = vrot.slane %v13614, 7
  %v15167 = vsel %vm8868, %v15166, %v15165
  %v15168 = vsel %vm8872, %v15166, %v15167
  %v15169 = vsel %vm8876, %v15166, %v15168
  %v15170 = vsel %vm8880, %v15166, %v15169
  %v15171 = vsel %vm8874, %v13615, %v13615
  %v15172 = vsel %vm8878, %v13615, %v15171
  %v15173 = vrot.slane %v13616, 7
  %v15174 = vsel %vm8868, %v15173, %v15172
  %v15175 = vsel %vm8872, %v15173, %v15174
  %v15176 = vsel %vm8876, %v15173, %v15175
  %v15177 = vsel %vm8880, %v15173, %v15176
  %v15178 = vsel %vm8874, %v13617, %v13617
  %v15179 = vsel %vm8878, %v13617, %v15178
  %v15180 = vrot.slane %v13618, 7
  %v15181 = vsel %vm8868, %v15180, %v15179
  %v15182 = vsel %vm8872, %v15180, %v15181
  %v15183 = vsel %vm8876, %v15180, %v15182
  %v15184 = vsel %vm8880, %v15180, %v15183
  %v15185 = vsel %vm8874, %v13619, %v13619
  %v15186 = vsel %vm8878, %v13619, %v15185
  %v15187 = vrot.slane %v13620, 7
  %v15188 = vsel %vm8868, %v15187, %v15186
  %v15189 = vsel %vm8872, %v15187, %v15188
  %v15190 = vsel %vm8876, %v15187, %v15189
  %v15191 = vsel %vm8880, %v15187, %v15190
  %v15192 = vsel %vm8874, %v13621, %v13621
  %v15193 = vsel %vm8878, %v13621, %v15192
  %v15194 = vrot.slane %v13622, 7
  %v15195 = vsel %vm8868, %v15194, %v15193
  %v15196 = vsel %vm8872, %v15194, %v15195
  %v15197 = vsel %vm8876, %v15194, %v15196
  %v15198 = vsel %vm8880, %v15194, %v15197
  %v15199 = vsel %vm8874, %v13623, %v13623
  %v15200 = vsel %vm8878, %v13623, %v15199
  %v15201 = vrot.slane %v13624, 7
  %v15202 = vsel %vm8868, %v15201, %v15200
  %v15203 = vsel %vm8872, %v15201, %v15202
  %v15204 = vsel %vm8876, %v15201, %v15203
  %v15205 = vsel %vm8880, %v15201, %v15204
  %v15206 = vsel %vm8874, %v13625, %v13625
  %v15207 = vsel %vm8878, %v13625, %v15206
  %v15208 = vrot.slane %v13626, 7
  %v15209 = vsel %vm8868, %v15208, %v15207
  %v15210 = vsel %vm8872, %v15208, %v15209
  %v15211 = vsel %vm8876, %v15208, %v15210
  %v15212 = vsel %vm8880, %v15208, %v15211
  %v15213 = vsel %vm8874, %v13627, %v13627
  %v15214 = vsel %vm8878, %v13627, %v15213
  %v15215 = vrot.slane %v13628, 7
  %v15216 = vsel %vm8868, %v15215, %v15214
  %v15217 = vsel %vm8872, %v15215, %v15216
  %v15218 = vsel %vm8876, %v15215, %v15217
  %v15219 = vsel %vm8880, %v15215, %v15218
  %v15220 = vsel %vm8874, %v13629, %v13629
  %v15221 = vsel %vm8878, %v13629, %v15220
  %v15222 = vrot.slane %v13630, 7
  %v15223 = vsel %vm8868, %v15222, %v15221
  %v15224 = vsel %vm8872, %v15222, %v15223
  %v15225 = vsel %vm8876, %v15222, %v15224
  %v15226 = vsel %vm8880, %v15222, %v15225
  %v15227 = vsel %vm8874, %v13631, %v13631
  %v15228 = vsel %vm8878, %v13631, %v15227
  %v15229 = vrot.slane %v13632, 7
  %v15230 = vsel %vm8868, %v15229, %v15228
  %v15231 = vsel %vm8872, %v15229, %v15230
  %v15232 = vsel %vm8876, %v15229, %v15231
  %v15233 = vsel %vm8880, %v15229, %v15232
  %v15234 = vsel %vm8874, %v13633, %v13633
  %v15235 = vsel %vm8878, %v13633, %v15234
  %v15236 = vrot.slane %v13634, 7
  %v15237 = vsel %vm8868, %v15236, %v15235
  %v15238 = vsel %vm8872, %v15236, %v15237
  %v15239 = vsel %vm8876, %v15236, %v15238
  %v15240 = vsel %vm8880, %v15236, %v15239
  %v15241 = vsel %vm8874, %v13635, %v13635
  %v15242 = vsel %vm8878, %v13635, %v15241
  %v15243 = vrot.slane %v13636, 7
  %v15244 = vsel %vm8868, %v15243, %v15242
  %v15245 = vsel %vm8872, %v15243, %v15244
  %v15246 = vsel %vm8876, %v15243, %v15245
  %v15247 = vsel %vm8880, %v15243, %v15246
  %v15248 = vsel %vm8874, %v13637, %v13637
  %v15249 = vsel %vm8878, %v13637, %v15248
  %v15250 = vrot.slane %v13638, 7
  %v15251 = vsel %vm8868, %v15250, %v15249
  %v15252 = vsel %vm8872, %v15250, %v15251
  %v15253 = vsel %vm8876, %v15250, %v15252
  %v15254 = vsel %vm8880, %v15250, %v15253
  %v15255 = vsel %vm8874, %v13639, %v13639
  %v15256 = vsel %vm8878, %v13639, %v15255
  %v15257 = vrot.slane %v13640, 7
  %v15258 = vsel %vm8868, %v15257, %v15256
  %v15259 = vsel %vm8872, %v15257, %v15258
  %v15260 = vsel %vm8876, %v15257, %v15259
  %v15261 = vsel %vm8880, %v15257, %v15260
  %v15262 = vsel %vm8874, %v13641, %v13641
  %v15263 = vsel %vm8878, %v13641, %v15262
  %v15264 = vrot.slane %v13642, 7
  %v15265 = vsel %vm8868, %v15264, %v15263
  %v15266 = vsel %vm8872, %v15264, %v15265
  %v15267 = vsel %vm8876, %v15264, %v15266
  %v15268 = vsel %vm8880, %v15264, %v15267
  %v15269 = vsel %vm8874, %v13643, %v13643
  %v15270 = vsel %vm8878, %v13643, %v15269
  %v15271 = vrot.slane %v13644, 7
  %v15272 = vsel %vm8868, %v15271, %v15270
  %v15273 = vsel %vm8872, %v15271, %v15272
  %v15274 = vsel %vm8876, %v15271, %v15273
  %v15275 = vsel %vm8880, %v15271, %v15274
  %v15276 = vsel %vm8874, %v13645, %v13645
  %v15277 = vsel %vm8878, %v13645, %v15276
  %v15278 = vrot.slane %v13646, 7
  %v15279 = vsel %vm8868, %v15278, %v15277
  %v15280 = vsel %vm8872, %v15278, %v15279
  %v15281 = vsel %vm8876, %v15278, %v15280
  %v15282 = vsel %vm8880, %v15278, %v15281
  %v15283 = vsel %vm8874, %v13647, %v13647
  %v15284 = vsel %vm8878, %v13647, %v15283
  %v15285 = vrot.slane %v13648, 7
  %v15286 = vsel %vm8868, %v15285, %v15284
  %v15287 = vsel %vm8872, %v15285, %v15286
  %v15288 = vsel %vm8876, %v15285, %v15287
  %v15289 = vsel %vm8880, %v15285, %v15288
  %v15290 = vsel %vm8874, %v13649, %v13649
  %v15291 = vsel %vm8878, %v13649, %v15290
  %v15292 = vrot.slane %v13650, 7
  %v15293 = vsel %vm8868, %v15292, %v15291
  %v15294 = vsel %vm8872, %v15292, %v15293
  %v15295 = vsel %vm8876, %v15292, %v15294
  %v15296 = vsel %vm8880, %v15292, %v15295
  %v15297 = vsel %vm8874, %v13651, %v13651
  %v15298 = vsel %vm8878, %v13651, %v15297
  %v15299 = vrot.slane %v13652, 7
  %v15300 = vsel %vm8868, %v15299, %v15298
  %v15301 = vsel %vm8872, %v15299, %v15300
  %v15302 = vsel %vm8876, %v15299, %v15301
  %v15303 = vsel %vm8880, %v15299, %v15302
  %v15304 = vsel %vm8874, %v13653, %v13653
  %v15305 = vsel %vm8878, %v13653, %v15304
  %v15306 = vrot.slane %v13654, 7
  %v15307 = vsel %vm8868, %v15306, %v15305
  %v15308 = vsel %vm8872, %v15306, %v15307
  %v15309 = vsel %vm8876, %v15306, %v15308
  %v15310 = vsel %vm8880, %v15306, %v15309
  %v15311 = vsel %vm8874, %v13655, %v13655
  %v15312 = vsel %vm8878, %v13655, %v15311
  %v15313 = vrot.slane %v13656, 7
  %v15314 = vsel %vm8868, %v15313, %v15312
  %v15315 = vsel %vm8872, %v15313, %v15314
  %v15316 = vsel %vm8876, %v15313, %v15315
  %v15317 = vsel %vm8880, %v15313, %v15316
  %v15318 = vsel %vm8874, %v13657, %v13657
  %v15319 = vsel %vm8878, %v13657, %v15318
  %v15320 = vrot.slane %v13658, 7
  %v15321 = vsel %vm8868, %v15320, %v15319
  %v15322 = vsel %vm8872, %v15320, %v15321
  %v15323 = vsel %vm8876, %v15320, %v15322
  %v15324 = vsel %vm8880, %v15320, %v15323
  %v15325 = vsel %vm8874, %v13659, %v13659
  %v15326 = vsel %vm8878, %v13659, %v15325
  %v15327 = vrot.slane %v13660, 7
  %v15328 = vsel %vm8868, %v15327, %v15326
  %v15329 = vsel %vm8872, %v15327, %v15328
  %v15330 = vsel %vm8876, %v15327, %v15329
  %v15331 = vsel %vm8880, %v15327, %v15330
  %v15332 = vsel %vm8874, %v13661, %v13661
  %v15333 = vsel %vm8878, %v13661, %v15332
  %v15334 = vrot.slane %v13662, 7
  %v15335 = vsel %vm8868, %v15334, %v15333
  %v15336 = vsel %vm8872, %v15334, %v15335
  %v15337 = vsel %vm8876, %v15334, %v15336
  %v15338 = vsel %vm8880, %v15334, %v15337
  %v15339 = vsel %vm8874, %v13663, %v13663
  %v15340 = vsel %vm8878, %v13663, %v15339
  %v15341 = vrot.slane %v13664, 7
  %v15342 = vsel %vm8868, %v15341, %v15340
  %v15343 = vsel %vm8872, %v15341, %v15342
  %v15344 = vsel %vm8876, %v15341, %v15343
  %v15345 = vsel %vm8880, %v15341, %v15344
  %v15346 = vsel %vm8874, %v13665, %v13665
  %v15347 = vsel %vm8878, %v13665, %v15346
  %v15348 = vrot.slane %v13666, 7
  %v15349 = vsel %vm8868, %v15348, %v15347
  %v15350 = vsel %vm8872, %v15348, %v15349
  %v15351 = vsel %vm8876, %v15348, %v15350
  %v15352 = vsel %vm8880, %v15348, %v15351
  %v15353 = vsel %vm8874, %v13667, %v13667
  %v15354 = vsel %vm8878, %v13667, %v15353
  %v15355 = vrot.slane %v13668, 7
  %v15356 = vsel %vm8868, %v15355, %v15354
  %v15357 = vsel %vm8872, %v15355, %v15356
  %v15358 = vsel %vm8876, %v15355, %v15357
  %v15359 = vsel %vm8880, %v15355, %v15358
  %v15360 = vsel %vm8874, %v13669, %v13669
  %v15361 = vsel %vm8878, %v13669, %v15360
  %v15362 = vrot.slane %v13670, 7
  %v15363 = vsel %vm8868, %v15362, %v15361
  %v15364 = vsel %vm8872, %v15362, %v15363
  %v15365 = vsel %vm8876, %v15362, %v15364
  %v15366 = vsel %vm8880, %v15362, %v15365
  %v15367 = vsel %vm8874, %v13671, %v13671
  %v15368 = vsel %vm8878, %v13671, %v15367
  %v15369 = vrot.slane %v13672, 7
  %v15370 = vsel %vm8868, %v15369, %v15368
  %v15371 = vsel %vm8872, %v15369, %v15370
  %v15372 = vsel %vm8876, %v15369, %v15371
  %v15373 = vsel %vm8880, %v15369, %v15372
  %v15374 = vsel %vm8874, %v13673, %v13673
  %v15375 = vsel %vm8878, %v13673, %v15374
  %v15376 = vrot.slane %v13674, 7
  %v15377 = vsel %vm8868, %v15376, %v15375
  %v15378 = vsel %vm8872, %v15376, %v15377
  %v15379 = vsel %vm8876, %v15376, %v15378
  %v15380 = vsel %vm8880, %v15376, %v15379
  %v15381 = vsel %vm8874, %v13675, %v13675
  %v15382 = vsel %vm8878, %v13675, %v15381
  %v15383 = vrot.slane %v13676, 7
  %v15384 = vsel %vm8868, %v15383, %v15382
  %v15385 = vsel %vm8872, %v15383, %v15384
  %v15386 = vsel %vm8876, %v15383, %v15385
  %v15387 = vsel %vm8880, %v15383, %v15386
  %v15388 = vsel %vm8874, %v13677, %v13677
  %v15389 = vsel %vm8878, %v13677, %v15388
  %v15390 = vrot.slane %v13678, 7
  %v15391 = vsel %vm8868, %v15390, %v15389
  %v15392 = vsel %vm8872, %v15390, %v15391
  %v15393 = vsel %vm8876, %v15390, %v15392
  %v15394 = vsel %vm8880, %v15390, %v15393
  %v15395 = vsel %vm8874, %v13679, %v13679
  %v15396 = vsel %vm8878, %v13679, %v15395
  %v15397 = vrot.slane %v13680, 7
  %v15398 = vsel %vm8868, %v15397, %v15396
  %v15399 = vsel %vm8872, %v15397, %v15398
  %v15400 = vsel %vm8876, %v15397, %v15399
  %v15401 = vsel %vm8880, %v15397, %v15400
  %v15402 = vsel %vm8874, %v13681, %v13681
  %v15403 = vsel %vm8878, %v13681, %v15402
  %v15404 = vrot.slane %v13682, 7
  %v15405 = vsel %vm8868, %v15404, %v15403
  %v15406 = vsel %vm8872, %v15404, %v15405
  %v15407 = vsel %vm8876, %v15404, %v15406
  %v15408 = vsel %vm8880, %v15404, %v15407
  %v15409 = vsel %vm8874, %v13683, %v13683
  %v15410 = vsel %vm8878, %v13683, %v15409
  %v15411 = vrot.slane %v13684, 7
  %v15412 = vsel %vm8868, %v15411, %v15410
  %v15413 = vsel %vm8872, %v15411, %v15412
  %v15414 = vsel %vm8876, %v15411, %v15413
  %v15415 = vsel %vm8880, %v15411, %v15414
  %15416 = vrot.lane.b32.xlu0 %v14974, 96
  %v15417 = vpop.permute.xlu0 %15416
  %15418 = vrot.lane.b32.xlu0 %v14981, 96
  %v15419 = vpop.permute.xlu0 %15418
  %15420 = vrot.lane.b32.xlu0 %v14988, 96
  %v15421 = vpop.permute.xlu0 %15420
  %15422 = vrot.lane.b32.xlu0 %v14995, 96
  %v15423 = vpop.permute.xlu0 %15422
  %15424 = vrot.lane.b32.xlu0 %v15002, 96
  %v15425 = vpop.permute.xlu0 %15424
  %15426 = vrot.lane.b32.xlu0 %v15009, 96
  %v15427 = vpop.permute.xlu0 %15426
  %15428 = vrot.lane.b32.xlu0 %v15016, 96
  %v15429 = vpop.permute.xlu0 %15428
  %15430 = vrot.lane.b32.xlu0 %v15023, 96
  %v15431 = vpop.permute.xlu0 %15430
  %15432 = vrot.lane.b32.xlu0 %v15030, 96
  %v15433 = vpop.permute.xlu0 %15432
  %15434 = vrot.lane.b32.xlu0 %v15037, 96
  %v15435 = vpop.permute.xlu0 %15434
  %15436 = vrot.lane.b32.xlu0 %v15044, 96
  %v15437 = vpop.permute.xlu0 %15436
  %15438 = vrot.lane.b32.xlu0 %v15051, 96
  %v15439 = vpop.permute.xlu0 %15438
  %15440 = vrot.lane.b32.xlu0 %v15058, 96
  %v15441 = vpop.permute.xlu0 %15440
  %15442 = vrot.lane.b32.xlu0 %v15065, 96
  %v15443 = vpop.permute.xlu0 %15442
  %15444 = vrot.lane.b32.xlu0 %v15072, 96
  %v15445 = vpop.permute.xlu0 %15444
  %15446 = vrot.lane.b32.xlu0 %v15079, 96
  %v15447 = vpop.permute.xlu0 %15446
  %15448 = vrot.lane.b32.xlu0 %v15086, 96
  %v15449 = vpop.permute.xlu0 %15448
  %15450 = vrot.lane.b32.xlu0 %v15093, 96
  %v15451 = vpop.permute.xlu0 %15450
  %15452 = vrot.lane.b32.xlu0 %v15100, 96
  %v15453 = vpop.permute.xlu0 %15452
  %15454 = vrot.lane.b32.xlu0 %v15107, 96
  %v15455 = vpop.permute.xlu0 %15454
  %15456 = vrot.lane.b32.xlu0 %v15114, 96
  %v15457 = vpop.permute.xlu0 %15456
  %15458 = vrot.lane.b32.xlu0 %v15121, 96
  %v15459 = vpop.permute.xlu0 %15458
  %15460 = vrot.lane.b32.xlu0 %v15128, 96
  %v15461 = vpop.permute.xlu0 %15460
  %15462 = vrot.lane.b32.xlu0 %v15135, 96
  %v15463 = vpop.permute.xlu0 %15462
  %15464 = vrot.lane.b32.xlu0 %v15142, 96
  %v15465 = vpop.permute.xlu0 %15464
  %15466 = vrot.lane.b32.xlu0 %v15149, 96
  %v15467 = vpop.permute.xlu0 %15466
  %15468 = vrot.lane.b32.xlu0 %v15156, 96
  %v15469 = vpop.permute.xlu0 %15468
  %15470 = vrot.lane.b32.xlu0 %v15163, 96
  %v15471 = vpop.permute.xlu0 %15470
  %15472 = vrot.lane.b32.xlu0 %v15170, 96
  %v15473 = vpop.permute.xlu0 %15472
  %15474 = vrot.lane.b32.xlu0 %v15177, 96
  %v15475 = vpop.permute.xlu0 %15474
  %15476 = vrot.lane.b32.xlu0 %v15184, 96
  %v15477 = vpop.permute.xlu0 %15476
  %15478 = vrot.lane.b32.xlu0 %v15191, 96
  %v15479 = vpop.permute.xlu0 %15478
  %15480 = vrot.lane.b32.xlu0 %v15198, 96
  %v15481 = vpop.permute.xlu0 %15480
  %15482 = vrot.lane.b32.xlu0 %v15205, 96
  %v15483 = vpop.permute.xlu0 %15482
  %15484 = vrot.lane.b32.xlu0 %v15212, 96
  %v15485 = vpop.permute.xlu0 %15484
  %15486 = vrot.lane.b32.xlu0 %v15219, 96
  %v15487 = vpop.permute.xlu0 %15486
  %15488 = vrot.lane.b32.xlu0 %v15226, 96
  %v15489 = vpop.permute.xlu0 %15488
  %15490 = vrot.lane.b32.xlu0 %v15233, 96
  %v15491 = vpop.permute.xlu0 %15490
  %15492 = vrot.lane.b32.xlu0 %v15240, 96
  %v15493 = vpop.permute.xlu0 %15492
  %15494 = vrot.lane.b32.xlu0 %v15247, 96
  %v15495 = vpop.permute.xlu0 %15494
  %15496 = vrot.lane.b32.xlu0 %v15254, 96
  %v15497 = vpop.permute.xlu0 %15496
  %15498 = vrot.lane.b32.xlu0 %v15261, 96
  %v15499 = vpop.permute.xlu0 %15498
  %15500 = vrot.lane.b32.xlu0 %v15268, 96
  %v15501 = vpop.permute.xlu0 %15500
  %15502 = vrot.lane.b32.xlu0 %v15275, 96
  %v15503 = vpop.permute.xlu0 %15502
  %15504 = vrot.lane.b32.xlu0 %v15282, 96
  %v15505 = vpop.permute.xlu0 %15504
  %15506 = vrot.lane.b32.xlu0 %v15289, 96
  %v15507 = vpop.permute.xlu0 %15506
  %15508 = vrot.lane.b32.xlu0 %v15296, 96
  %v15509 = vpop.permute.xlu0 %15508
  %15510 = vrot.lane.b32.xlu0 %v15303, 96
  %v15511 = vpop.permute.xlu0 %15510
  %15512 = vrot.lane.b32.xlu0 %v15310, 96
  %v15513 = vpop.permute.xlu0 %15512
  %15514 = vrot.lane.b32.xlu0 %v15317, 96
  %v15515 = vpop.permute.xlu0 %15514
  %15516 = vrot.lane.b32.xlu0 %v15324, 96
  %v15517 = vpop.permute.xlu0 %15516
  %15518 = vrot.lane.b32.xlu0 %v15331, 96
  %v15519 = vpop.permute.xlu0 %15518
  %15520 = vrot.lane.b32.xlu0 %v15338, 96
  %v15521 = vpop.permute.xlu0 %15520
  %15522 = vrot.lane.b32.xlu0 %v15345, 96
  %v15523 = vpop.permute.xlu0 %15522
  %15524 = vrot.lane.b32.xlu0 %v15352, 96
  %v15525 = vpop.permute.xlu0 %15524
  %15526 = vrot.lane.b32.xlu0 %v15359, 96
  %v15527 = vpop.permute.xlu0 %15526
  %15528 = vrot.lane.b32.xlu0 %v15366, 96
  %v15529 = vpop.permute.xlu0 %15528
  %15530 = vrot.lane.b32.xlu0 %v15373, 96
  %v15531 = vpop.permute.xlu0 %15530
  %15532 = vrot.lane.b32.xlu0 %v15380, 96
  %v15533 = vpop.permute.xlu0 %15532
  %15534 = vrot.lane.b32.xlu0 %v15387, 96
  %v15535 = vpop.permute.xlu0 %15534
  %15536 = vrot.lane.b32.xlu0 %v15394, 96
  %v15537 = vpop.permute.xlu0 %15536
  %15538 = vrot.lane.b32.xlu0 %v15401, 96
  %v15539 = vpop.permute.xlu0 %15538
  %15540 = vrot.lane.b32.xlu0 %v15408, 96
  %v15541 = vpop.permute.xlu0 %15540
  %15542 = vrot.lane.b32.xlu0 %v15415, 96
  %v15543 = vpop.permute.xlu0 %15542
  %v15608 = vrot.slane %v15425, 4
  %v15609 = vsel %vm14326, %v15608, %v15417
  %v15611 = vunpack.c.l.s4 1934713408
  %v15612 = vunpack.c.0.s8 %v15611
  %v15613 = vperm.slane %v15609, %v15612
  %v15614 = vrot.slane %v15613, 4
  %v15615 = vsel %vm14326, 0.0, %v15614
  %v15616 = vrot.slane %v15441, 4
  %v15617 = vsel %vm14326, %v15616, %v15433
  %v15619 = vunpack.c.l.s4 1934713408
  %v15620 = vunpack.c.0.s8 %v15619
  %v15621 = vperm.slane %v15617, %v15620
  %v15622 = vrot.slane %v15621, 4
  %v15623 = vsel %vm14326, 0.0, %v15622
  %v15624 = vrot.slane %v15457, 4
  %v15625 = vsel %vm14326, %v15624, %v15449
  %v15627 = vunpack.c.l.s4 1934713408
  %v15628 = vunpack.c.0.s8 %v15627
  %v15629 = vperm.slane %v15625, %v15628
  %v15630 = vrot.slane %v15629, 4
  %v15631 = vsel %vm14326, 0.0, %v15630
  %v15632 = vrot.slane %v15473, 4
  %v15633 = vsel %vm14326, %v15632, %v15465
  %v15635 = vunpack.c.l.s4 1934713408
  %v15636 = vunpack.c.0.s8 %v15635
  %v15637 = vperm.slane %v15633, %v15636
  %v15638 = vrot.slane %v15637, 4
  %v15639 = vsel %vm14326, 0.0, %v15638
  %v15640 = vrot.slane %v15427, 4
  %v15641 = vsel %vm14326, %v15640, %v15419
  %v15643 = vunpack.c.l.s4 1934713408
  %v15644 = vunpack.c.0.s8 %v15643
  %v15645 = vperm.slane %v15641, %v15644
  %v15646 = vrot.slane %v15645, 4
  %v15647 = vsel %vm14326, 0.0, %v15646
  %v15648 = vrot.slane %v15443, 4
  %v15649 = vsel %vm14326, %v15648, %v15435
  %v15651 = vunpack.c.l.s4 1934713408
  %v15652 = vunpack.c.0.s8 %v15651
  %v15653 = vperm.slane %v15649, %v15652
  %v15654 = vrot.slane %v15653, 4
  %v15655 = vsel %vm14326, 0.0, %v15654
  %v15656 = vrot.slane %v15459, 4
  %v15657 = vsel %vm14326, %v15656, %v15451
  %v15659 = vunpack.c.l.s4 1934713408
  %v15660 = vunpack.c.0.s8 %v15659
  %v15661 = vperm.slane %v15657, %v15660
  %v15662 = vrot.slane %v15661, 4
  %v15663 = vsel %vm14326, 0.0, %v15662
  %v15664 = vrot.slane %v15475, 4
  %v15665 = vsel %vm14326, %v15664, %v15467
  %v15667 = vunpack.c.l.s4 1934713408
  %v15668 = vunpack.c.0.s8 %v15667
  %v15669 = vperm.slane %v15665, %v15668
  %v15670 = vrot.slane %v15669, 4
  %v15671 = vsel %vm14326, 0.0, %v15670
  %v15672 = vrot.slane %v15429, 4
  %v15673 = vsel %vm14326, %v15672, %v15421
  %v15675 = vunpack.c.l.s4 1934713408
  %v15676 = vunpack.c.0.s8 %v15675
  %v15677 = vperm.slane %v15673, %v15676
  %v15678 = vrot.slane %v15677, 4
  %v15679 = vsel %vm14326, 0.0, %v15678
  %v15680 = vrot.slane %v15445, 4
  %v15681 = vsel %vm14326, %v15680, %v15437
  %v15683 = vunpack.c.l.s4 1934713408
  %v15684 = vunpack.c.0.s8 %v15683
  %v15685 = vperm.slane %v15681, %v15684
  %v15686 = vrot.slane %v15685, 4
  %v15687 = vsel %vm14326, 0.0, %v15686
  %v15688 = vrot.slane %v15461, 4
  %v15689 = vsel %vm14326, %v15688, %v15453
  %v15691 = vunpack.c.l.s4 1934713408
  %v15692 = vunpack.c.0.s8 %v15691
  %v15693 = vperm.slane %v15689, %v15692
  %v15694 = vrot.slane %v15693, 4
  %v15695 = vsel %vm14326, 0.0, %v15694
  %v15696 = vrot.slane %v15477, 4
  %v15697 = vsel %vm14326, %v15696, %v15469
  %v15699 = vunpack.c.l.s4 1934713408
  %v15700 = vunpack.c.0.s8 %v15699
  %v15701 = vperm.slane %v15697, %v15700
  %v15702 = vrot.slane %v15701, 4
  %v15703 = vsel %vm14326, 0.0, %v15702
  %v15704 = vrot.slane %v15431, 4
  %v15705 = vsel %vm14326, %v15704, %v15423
  %v15707 = vunpack.c.l.s4 1934713408
  %v15708 = vunpack.c.0.s8 %v15707
  %v15709 = vperm.slane %v15705, %v15708
  %v15710 = vrot.slane %v15709, 4
  %v15711 = vsel %vm14326, 0.0, %v15710
  %v15712 = vrot.slane %v15447, 4
  %v15713 = vsel %vm14326, %v15712, %v15439
  %v15715 = vunpack.c.l.s4 1934713408
  %v15716 = vunpack.c.0.s8 %v15715
  %v15717 = vperm.slane %v15713, %v15716
  %v15718 = vrot.slane %v15717, 4
  %v15719 = vsel %vm14326, 0.0, %v15718
  %v15720 = vrot.slane %v15463, 4
  %v15721 = vsel %vm14326, %v15720, %v15455
  %v15723 = vunpack.c.l.s4 1934713408
  %v15724 = vunpack.c.0.s8 %v15723
  %v15725 = vperm.slane %v15721, %v15724
  %v15726 = vrot.slane %v15725, 4
  %v15727 = vsel %vm14326, 0.0, %v15726
  %v15728 = vrot.slane %v15479, 4
  %v15729 = vsel %vm14326, %v15728, %v15471
  %v15731 = vunpack.c.l.s4 1934713408
  %v15732 = vunpack.c.0.s8 %v15731
  %v15733 = vperm.slane %v15729, %v15732
  %v15734 = vrot.slane %v15733, 4
  %v15735 = vsel %vm14326, 0.0, %v15734
  %v15736 = vrot.slane %v15489, 4
  %v15737 = vsel %vm14326, %v15736, %v15481
  %v15739 = vunpack.c.l.s4 1934713408
  %v15740 = vunpack.c.0.s8 %v15739
  %v15741 = vperm.slane %v15737, %v15740
  %v15742 = vrot.slane %v15741, 4
  %v15743 = vsel %vm14326, 0.0, %v15742
  %v15744 = vrot.slane %v15505, 4
  %v15745 = vsel %vm14326, %v15744, %v15497
  %v15747 = vunpack.c.l.s4 1934713408
  %v15748 = vunpack.c.0.s8 %v15747
  %v15749 = vperm.slane %v15745, %v15748
  %v15750 = vrot.slane %v15749, 4
  %v15751 = vsel %vm14326, 0.0, %v15750
  %v15752 = vrot.slane %v15521, 4
  %v15753 = vsel %vm14326, %v15752, %v15513
  %v15755 = vunpack.c.l.s4 1934713408
  %v15756 = vunpack.c.0.s8 %v15755
  %v15757 = vperm.slane %v15753, %v15756
  %v15758 = vrot.slane %v15757, 4
  %v15759 = vsel %vm14326, 0.0, %v15758
  %v15760 = vrot.slane %v15537, 4
  %v15761 = vsel %vm14326, %v15760, %v15529
  %v15763 = vunpack.c.l.s4 1934713408
  %v15764 = vunpack.c.0.s8 %v15763
  %v15765 = vperm.slane %v15761, %v15764
  %v15766 = vrot.slane %v15765, 4
  %v15767 = vsel %vm14326, 0.0, %v15766
  %v15768 = vrot.slane %v15491, 4
  %v15769 = vsel %vm14326, %v15768, %v15483
  %v15771 = vunpack.c.l.s4 1934713408
  %v15772 = vunpack.c.0.s8 %v15771
  %v15773 = vperm.slane %v15769, %v15772
  %v15774 = vrot.slane %v15773, 4
  %v15775 = vsel %vm14326, 0.0, %v15774
  %v15776 = vrot.slane %v15507, 4
  %v15777 = vsel %vm14326, %v15776, %v15499
  %v15779 = vunpack.c.l.s4 1934713408
  %v15780 = vunpack.c.0.s8 %v15779
  %v15781 = vperm.slane %v15777, %v15780
  %v15782 = vrot.slane %v15781, 4
  %v15783 = vsel %vm14326, 0.0, %v15782
  %v15784 = vrot.slane %v15523, 4
  %v15785 = vsel %vm14326, %v15784, %v15515
  %v15787 = vunpack.c.l.s4 1934713408
  %v15788 = vunpack.c.0.s8 %v15787
  %v15789 = vperm.slane %v15785, %v15788
  %v15790 = vrot.slane %v15789, 4
  %v15791 = vsel %vm14326, 0.0, %v15790
  %v15792 = vrot.slane %v15539, 4
  %v15793 = vsel %vm14326, %v15792, %v15531
  %v15795 = vunpack.c.l.s4 1934713408
  %v15796 = vunpack.c.0.s8 %v15795
  %v15797 = vperm.slane %v15793, %v15796
  %v15798 = vrot.slane %v15797, 4
  %v15799 = vsel %vm14326, 0.0, %v15798
  %v15800 = vrot.slane %v15493, 4
  %v15801 = vsel %vm14326, %v15800, %v15485
  %v15803 = vunpack.c.l.s4 1934713408
  %v15804 = vunpack.c.0.s8 %v15803
  %v15805 = vperm.slane %v15801, %v15804
  %v15806 = vrot.slane %v15805, 4
  %v15807 = vsel %vm14326, 0.0, %v15806
  %v15808 = vrot.slane %v15509, 4
  %v15809 = vsel %vm14326, %v15808, %v15501
  %v15811 = vunpack.c.l.s4 1934713408
  %v15812 = vunpack.c.0.s8 %v15811
  %v15813 = vperm.slane %v15809, %v15812
  %v15814 = vrot.slane %v15813, 4
  %v15815 = vsel %vm14326, 0.0, %v15814
  %v15816 = vrot.slane %v15525, 4
  %v15817 = vsel %vm14326, %v15816, %v15517
  %v15819 = vunpack.c.l.s4 1934713408
  %v15820 = vunpack.c.0.s8 %v15819
  %v15821 = vperm.slane %v15817, %v15820
  %v15822 = vrot.slane %v15821, 4
  %v15823 = vsel %vm14326, 0.0, %v15822
  %v15824 = vrot.slane %v15541, 4
  %v15825 = vsel %vm14326, %v15824, %v15533
  %v15827 = vunpack.c.l.s4 1934713408
  %v15828 = vunpack.c.0.s8 %v15827
  %v15829 = vperm.slane %v15825, %v15828
  %v15830 = vrot.slane %v15829, 4
  %v15831 = vsel %vm14326, 0.0, %v15830
  %v15832 = vrot.slane %v15495, 4
  %v15833 = vsel %vm14326, %v15832, %v15487
  %v15835 = vunpack.c.l.s4 1934713408
  %v15836 = vunpack.c.0.s8 %v15835
  %v15837 = vperm.slane %v15833, %v15836
  %v15838 = vrot.slane %v15837, 4
  %v15839 = vsel %vm14326, 0.0, %v15838
  %v15840 = vrot.slane %v15511, 4
  %v15841 = vsel %vm14326, %v15840, %v15503
  %v15843 = vunpack.c.l.s4 1934713408
  %v15844 = vunpack.c.0.s8 %v15843
  %v15845 = vperm.slane %v15841, %v15844
  %v15846 = vrot.slane %v15845, 4
  %v15847 = vsel %vm14326, 0.0, %v15846
  %v15848 = vrot.slane %v15527, 4
  %v15849 = vsel %vm14326, %v15848, %v15519
  %v15851 = vunpack.c.l.s4 1934713408
  %v15852 = vunpack.c.0.s8 %v15851
  %v15853 = vperm.slane %v15849, %v15852
  %v15854 = vrot.slane %v15853, 4
  %v15855 = vsel %vm14326, 0.0, %v15854
  %v15856 = vrot.slane %v15543, 4
  %v15857 = vsel %vm14326, %v15856, %v15535
  %v15859 = vunpack.c.l.s4 1934713408
  %v15860 = vunpack.c.0.s8 %v15859
  %v15861 = vperm.slane %v15857, %v15860
  %v15862 = vrot.slane %v15861, 4
  %v15863 = vsel %vm14326, 0.0, %v15862
  %15872 = vst [vmem:[#allocation1] ss:$4 sm:$0xff] %v15613
  %s15873 = scalar_lea.vmem [#allocation1], 1
  %15874 = vst [vmem:[%s15873] ss:$4 sm:$0xff] %v15621
  %s15875 = scalar_lea.vmem [#allocation1], 2
  %15876 = vst [vmem:[%s15875] ss:$4 sm:$0xff] %v15629
  %s15877 = scalar_lea.vmem [#allocation1], 3
  %15878 = vst [vmem:[%s15877] ss:$4 sm:$0xff] %v15637
  %v15879 = vld.sshfl [vmem:[#allocation1] sm:$0xff pattern:$0x73625140]
  %s15880 = scalar_lea.vmem [#allocation1], 32
  %15881 = vst [vmem:[%s15880] ss:$4 sm:$0xff] %v15741
  %s15882 = scalar_lea.vmem [#allocation1], 33
  %15883 = vst [vmem:[%s15882] ss:$4 sm:$0xff] %v15749
  %s15884 = scalar_lea.vmem [#allocation1], 34
  %15885 = vst [vmem:[%s15884] ss:$4 sm:$0xff] %v15757
  %s15886 = scalar_lea.vmem [#allocation1], 35
  %15887 = vst [vmem:[%s15886] ss:$4 sm:$0xff] %v15765
  %v15888 = vld.sshfl [vmem:[#allocation1 + $0x20] sm:$0xff pattern:$0x73625140]
  %15899 = vst [vmem:[#allocation1] ss:$4 sm:$0xff] %v15615
  %s15900 = scalar_lea.vmem [#allocation1], 1
  %15901 = vst [vmem:[%s15900] ss:$4 sm:$0xff] %v15623
  %s15902 = scalar_lea.vmem [#allocation1], 2
  %15903 = vst [vmem:[%s15902] ss:$4 sm:$0xff] %v15631
  %s15904 = scalar_lea.vmem [#allocation1], 3
  %15905 = vst [vmem:[%s15904] ss:$4 sm:$0xff] %v15639
  %v15906 = vld.sshfl [vmem:[#allocation1] sm:$0xff pattern:$0x73625140]
  %s15907 = scalar_lea.vmem [#allocation1], 32
  %15908 = vst [vmem:[%s15907] ss:$4 sm:$0xff] %v15743
  %s15909 = scalar_lea.vmem [#allocation1], 33
  %15910 = vst [vmem:[%s15909] ss:$4 sm:$0xff] %v15751
  %s15911 = scalar_lea.vmem [#allocation1], 34
  %15912 = vst [vmem:[%s15911] ss:$4 sm:$0xff] %v15759
  %s15913 = scalar_lea.vmem [#allocation1], 35
  %15914 = vst [vmem:[%s15913] ss:$4 sm:$0xff] %v15767
  %v15915 = vld.sshfl [vmem:[#allocation1 + $0x20] sm:$0xff pattern:$0x73625140]
  %15916 = vrot.lane.b32.xlu0 %v15906, 32
  %v15917 = vpop.permute.xlu0 %15916
  %15918 = vrot.lane.b32.xlu0 %v15915, 32
  %v15919 = vpop.permute.xlu0 %15918
  %15930 = vst [vmem:[#allocation1] ss:$4 sm:$0xff] %v15645
  %s15931 = scalar_lea.vmem [#allocation1], 1
  %15932 = vst [vmem:[%s15931] ss:$4 sm:$0xff] %v15653
  %s15933 = scalar_lea.vmem [#allocation1], 2
  %15934 = vst [vmem:[%s15933] ss:$4 sm:$0xff] %v15661
  %s15935 = scalar_lea.vmem [#allocation1], 3
  %15936 = vst [vmem:[%s15935] ss:$4 sm:$0xff] %v15669
  %v15937 = vld.sshfl [vmem:[#allocation1] sm:$0xff pattern:$0x73625140]
  %s15938 = scalar_lea.vmem [#allocation1], 32
  %15939 = vst [vmem:[%s15938] ss:$4 sm:$0xff] %v15773
  %s15940 = scalar_lea.vmem [#allocation1], 33
  %15941 = vst [vmem:[%s15940] ss:$4 sm:$0xff] %v15781
  %s15942 = scalar_lea.vmem [#allocation1], 34
  %15943 = vst [vmem:[%s15942] ss:$4 sm:$0xff] %v15789
  %s15944 = scalar_lea.vmem [#allocation1], 35
  %15945 = vst [vmem:[%s15944] ss:$4 sm:$0xff] %v15797
  %v15946 = vld.sshfl [vmem:[#allocation1 + $0x20] sm:$0xff pattern:$0x73625140]
  %15947 = vrot.lane.b32.xlu0 %v15937, 64
  %v15948 = vpop.permute.xlu0 %15947
  %15949 = vrot.lane.b32.xlu0 %v15946, 64
  %v15950 = vpop.permute.xlu0 %15949
  %15961 = vst [vmem:[#allocation1] ss:$4 sm:$0xff] %v15647
  %s15962 = scalar_lea.vmem [#allocation1], 1
  %15963 = vst [vmem:[%s15962] ss:$4 sm:$0xff] %v15655
  %s15964 = scalar_lea.vmem [#allocation1], 2
  %15965 = vst [vmem:[%s15964] ss:$4 sm:$0xff] %v15663
  %s15966 = scalar_lea.vmem [#allocation1], 3
  %15967 = vst [vmem:[%s15966] ss:$4 sm:$0xff] %v15671
  %v15968 = vld.sshfl [vmem:[#allocation1] sm:$0xff pattern:$0x73625140]
  %s15969 = scalar_lea.vmem [#allocation1], 32
  %15970 = vst [vmem:[%s15969] ss:$4 sm:$0xff] %v15775
  %s15971 = scalar_lea.vmem [#allocation1], 33
  %15972 = vst [vmem:[%s15971] ss:$4 sm:$0xff] %v15783
  %s15973 = scalar_lea.vmem [#allocation1], 34
  %15974 = vst [vmem:[%s15973] ss:$4 sm:$0xff] %v15791
  %s15975 = scalar_lea.vmem [#allocation1], 35
  %15976 = vst [vmem:[%s15975] ss:$4 sm:$0xff] %v15799
  %v15977 = vld.sshfl [vmem:[#allocation1 + $0x20] sm:$0xff pattern:$0x73625140]
  %15978 = vrot.lane.b32.xlu0 %v15968, 96
  %v15979 = vpop.permute.xlu0 %15978
  %15980 = vrot.lane.b32.xlu0 %v15977, 96
  %v15981 = vpop.permute.xlu0 %15980
  %15992 = vst [vmem:[#allocation1] ss:$4 sm:$0xff] %v15677
  %s15993 = scalar_lea.vmem [#allocation1], 1
  %15994 = vst [vmem:[%s15993] ss:$4 sm:$0xff] %v15685
  %s15995 = scalar_lea.vmem [#allocation1], 2
  %15996 = vst [vmem:[%s15995] ss:$4 sm:$0xff] %v15693
  %s15997 = scalar_lea.vmem [#allocation1], 3
  %15998 = vst [vmem:[%s15997] ss:$4 sm:$0xff] %v15701
  %v15999 = vld.sshfl [vmem:[#allocation1] sm:$0xff pattern:$0x73625140]
  %s16000 = scalar_lea.vmem [#allocation1], 32
  %16001 = vst [vmem:[%s16000] ss:$4 sm:$0xff] %v15805
  %s16002 = scalar_lea.vmem [#allocation1], 33
  %16003 = vst [vmem:[%s16002] ss:$4 sm:$0xff] %v15813
  %s16004 = scalar_lea.vmem [#allocation1], 34
  %16005 = vst [vmem:[%s16004] ss:$4 sm:$0xff] %v15821
  %s16006 = scalar_lea.vmem [#allocation1], 35
  %16007 = vst [vmem:[%s16006] ss:$4 sm:$0xff] %v15829
  %v16008 = vld.sshfl [vmem:[#allocation1 + $0x20] sm:$0xff pattern:$0x73625140]
  %16019 = vst [vmem:[#allocation1] ss:$4 sm:$0xff] %v15679
  %s16020 = scalar_lea.vmem [#allocation1], 1
  %16021 = vst [vmem:[%s16020] ss:$4 sm:$0xff] %v15687
  %s16022 = scalar_lea.vmem [#allocation1], 2
  %16023 = vst [vmem:[%s16022] ss:$4 sm:$0xff] %v15695
  %s16024 = scalar_lea.vmem [#allocation1], 3
  %16025 = vst [vmem:[%s16024] ss:$4 sm:$0xff] %v15703
  %v16026 = vld.sshfl [vmem:[#allocation1] sm:$0xff pattern:$0x73625140]
  %s16027 = scalar_lea.vmem [#allocation1], 32
  %16028 = vst [vmem:[%s16027] ss:$4 sm:$0xff] %v15807
  %s16029 = scalar_lea.vmem [#allocation1], 33
  %16030 = vst [vmem:[%s16029] ss:$4 sm:$0xff] %v15815
  %s16031 = scalar_lea.vmem [#allocation1], 34
  %16032 = vst [vmem:[%s16031] ss:$4 sm:$0xff] %v15823
  %s16033 = scalar_lea.vmem [#allocation1], 35
  %16034 = vst [vmem:[%s16033] ss:$4 sm:$0xff] %v15831
  %v16035 = vld.sshfl [vmem:[#allocation1 + $0x20] sm:$0xff pattern:$0x73625140]
  %16036 = vrot.lane.b32.xlu0 %v16026, 32
  %v16037 = vpop.permute.xlu0 %16036
  %16038 = vrot.lane.b32.xlu0 %v16035, 32
  %v16039 = vpop.permute.xlu0 %16038
  %16050 = vst [vmem:[#allocation1] ss:$4 sm:$0xff] %v15709
  %s16051 = scalar_lea.vmem [#allocation1], 1
  %16052 = vst [vmem:[%s16051] ss:$4 sm:$0xff] %v15717
  %s16053 = scalar_lea.vmem [#allocation1], 2
  %16054 = vst [vmem:[%s16053] ss:$4 sm:$0xff] %v15725
  %s16055 = scalar_lea.vmem [#allocation1], 3
  %16056 = vst [vmem:[%s16055] ss:$4 sm:$0xff] %v15733
  %v16057 = vld.sshfl [vmem:[#allocation1] sm:$0xff pattern:$0x73625140]
  %s16058 = scalar_lea.vmem [#allocation1], 32
  %16059 = vst [vmem:[%s16058] ss:$4 sm:$0xff] %v15837
  %s16060 = scalar_lea.vmem [#allocation1], 33
  %16061 = vst [vmem:[%s16060] ss:$4 sm:$0xff] %v15845
  %s16062 = scalar_lea.vmem [#allocation1], 34
  %16063 = vst [vmem:[%s16062] ss:$4 sm:$0xff] %v15853
  %s16064 = scalar_lea.vmem [#allocation1], 35
  %16065 = vst [vmem:[%s16064] ss:$4 sm:$0xff] %v15861
  %v16066 = vld.sshfl [vmem:[#allocation1 + $0x20] sm:$0xff pattern:$0x73625140]
  %16067 = vrot.lane.b32.xlu0 %v16057, 64
  %v16068 = vpop.permute.xlu0 %16067
  %16069 = vrot.lane.b32.xlu0 %v16066, 64
  %v16070 = vpop.permute.xlu0 %16069
  %16081 = vst [vmem:[#allocation1] ss:$4 sm:$0xff] %v15711
  %s16082 = scalar_lea.vmem [#allocation1], 1
  %16083 = vst [vmem:[%s16082] ss:$4 sm:$0xff] %v15719
  %s16084 = scalar_lea.vmem [#allocation1], 2
  %16085 = vst [vmem:[%s16084] ss:$4 sm:$0xff] %v15727
  %s16086 = scalar_lea.vmem [#allocation1], 3
  %16087 = vst [vmem:[%s16086] ss:$4 sm:$0xff] %v15735
  %v16088 = vld.sshfl [vmem:[#allocation1] sm:$0xff pattern:$0x73625140]
  %s16089 = scalar_lea.vmem [#allocation1], 32
  %16090 = vst [vmem:[%s16089] ss:$4 sm:$0xff] %v15839
  %s16091 = scalar_lea.vmem [#allocation1], 33
  %16092 = vst [vmem:[%s16091] ss:$4 sm:$0xff] %v15847
  %s16093 = scalar_lea.vmem [#allocation1], 34
  %16094 = vst [vmem:[%s16093] ss:$4 sm:$0xff] %v15855
  %s16095 = scalar_lea.vmem [#allocation1], 35
  %16096 = vst [vmem:[%s16095] ss:$4 sm:$0xff] %v15863
  %v16097 = vld.sshfl [vmem:[#allocation1 + $0x20] sm:$0xff pattern:$0x73625140]
  %16098 = vrot.lane.b32.xlu0 %v16088, 96
  %v16099 = vpop.permute.xlu0 %16098
  %16100 = vrot.lane.b32.xlu0 %v16097, 96
  %v16101 = vpop.permute.xlu0 %16100
  %v16104 = vsel %vm9003, %v15879, %v15917
  %v16105 = vsel %vm9003, %v15888, %v15919
  %v16106 = vsel %vm14824, %v16104, %v15948
  %v16107 = vsel %vm14824, %v16105, %v15950
  %v16108 = vsel %vm14827, %v16106, %v15979
  %v16109 = vsel %vm14827, %v16107, %v15981
  %v16110 = vsel %vm9003, %v15999, %v16037
  %v16111 = vsel %vm9003, %v16008, %v16039
  %v16112 = vsel %vm14824, %v16110, %v16068
  %v16113 = vsel %vm14824, %v16111, %v16070
  %v16114 = vsel %vm14827, %v16112, %v16099
  %v16115 = vsel %vm14827, %v16113, %v16101
  %16116 = vst [vmem:[%s7 + $0x10] sm:$0xff] %v16108
  %16117 = vst [vmem:[%s7 + $0x18] sm:$0xff] %v16114
  %16118 = vst [vmem:[%s7 + $0x30] sm:$0xff] %v16109
  %16119 = vst [vmem:[%s7 + $0x38] sm:$0xff] %v16115
  // Predicated region
  $region30: #{multires_block.1} parent=0 // pred_check
    _
  $region31: #{multires_block.1} parent=0 // pred_check_branch
    %16121 = sbr.rel (0) target = $region33
  $region32: #{multires_block.1} parent=0 // pred_region
    _
  $region33: #{multires_block.1} parent=0 // pred_fallthru
    _
  // Predicated region
  $region34: #{multires_block.1} parent=0 // pred_check
    _
  $region35: #{multires_block.1} parent=0 // pred_check_branch
    %16123 = sbr.rel (0) target = $region37
  $region36: #{multires_block.1} parent=0 // pred_region
    _
  $region37: #{multires_block.1} parent=0 // pred_fallthru
    _

</llo_original>
